<compile_context>
chip_gen: v6e
topology: v6e:2x2x1
jax: 0.10.0
libtpu: 0.0.40
codegen_flags: <defaults>
</compile_context>

<pallas_src>
import jax
import jax.numpy as jnp
from jax import lax
from jax.experimental import pallas as pl
from jax.experimental.pallas import tpu as pltpu


_WEIGHT_ORDER = ("w_in", "b_in", "wih1", "whh1", "b1",
                 "wih2", "whh2", "b2", "wcls", "b_cls")


def _round_up(x, m):
    return (x + m - 1) // m * m


# ----------------------------------------------------------------------------
# Kernel
# ----------------------------------------------------------------------------
def _make_ernn_kernel(H):
    """Builds the kernel closure; H (true hidden width) fixes the lane masks."""

    def kernel(x_ref,
               w_in_ref, b_in_ref,
               wih1_ref, whh1_ref, b1_ref,
               wih2_ref, whh2_ref, b2_ref,
               wcls_ref, bcls_ref,
               out_ref,
               g_ref, hA_ref, hB_ref):
        T, block_b, D = x_ref.shape
        W = wih1_ref.shape[1]                      # fused width = round_up(2H, 128)
        n = T * block_b
        f32, bf16 = jnp.float32, jnp.bfloat16

        # Lane masks: lanes [0:H) belong to the forward direction, [H:2H) to the
        # backward direction (pad lanes [2H:W) are exactly zero everywhere).
        fwd2 = lax.broadcasted_iota(jnp.int32, (block_b, W), 1) < H
        fwd3 = lax.broadcasted_iota(jnp.int32, (T, block_b, W), 2) < H

        # ---- input Linear for all timesteps at once (one MXU matmul, K=D) ----
        x2d = x_ref[...].reshape(n, D)                                   # bf16
        xh = jnp.dot(x2d, w_in_ref[...], preferred_element_type=f32) + b_in_ref[...]
        xh_bf = xh.astype(bf16)

        # ---- layer-1 input-to-hidden, both directions in ONE matmul ----------
        # columns [0:H)=forward gate pre-activations, [H:2H)=backward.
        g_ref[...] = (jnp.dot(xh_bf, wih1_ref[...], preferred_element_type=f32)
                      + b1_ref[...]).reshape(T, block_b, W)

        def fused_recurrence(whh_ref):
            # Block-diagonal (W, W) W_hh advances both directions per step:
            #   step s: forward consumes g[s], backward consumes g[T-1-s].
            whh = whh_ref[...]                                           # bf16

            def body(s, h):
                g_s = jnp.where(fwd2, g_ref[s], g_ref[T - 1 - s])        # f32
                h_new = jnp.tanh(
                    g_s + jnp.dot(h, whh, preferred_element_type=f32)
                ).astype(bf16)
                hA_ref[s] = h_new            # forward-time-indexed copy
                hB_ref[T - 1 - s] = h_new    # backward-time-indexed copy
                return h_new

            lax.fori_loop(0, T, body, jnp.zeros((block_b, W), bf16),
                          unroll=(True if T <= 8 else 4))

        # ---- layer-1 fused recurrence (zero initial state) --------------------
        fused_recurrence(whh1_ref)

        # ---- layer-2 input-to-hidden: one K=W matmul per tile -----------------
        # [h1_f[t] | h1_b[t]] = fwd lanes of hA[t] + bwd lanes of hB[t].
        l2in = jnp.where(fwd3, hA_ref[...], hB_ref[...]).reshape(n, W)   # bf16
        g_ref[...] = (jnp.dot(l2in, wih2_ref[...], preferred_element_type=f32)
                      + b2_ref[...]).reshape(T, block_b, W)

        # ---- layer-2 fused recurrence (h buffers reused) -----------------------
        fused_recurrence(whh2_ref)

        # ---- classifier head (single output unit): lane reduction -------------
        cls_in = jnp.where(fwd3, hA_ref[...], hB_ref[...]).astype(f32)   # (T,b,W)
        wcls = wcls_ref[...].astype(f32)                                 # (1, W)
        logits = jnp.sum(cls_in * wcls, axis=-1) + bcls_ref[...]         # (T, block_b)
        out_ref[...] = jnp.transpose(jax.nn.sigmoid(logits)).astype(out_ref.dtype)

    return kernel


# ----------------------------------------------------------------------------
# VMEM budgeting / tile choice
# ----------------------------------------------------------------------------
def _vmem_capacity_bytes():
    try:
        return int(pltpu.get_tpu_info().vmem_capacity_bytes)
    except Exception:
        return 64 << 20                     # conservative (v7x per-TC) fallback


def _tile_vmem_bytes(block_b, T, D, Hp_in, W):
    n = T * block_b
    scratch = n * W * 4 + 2 * n * W * 2           # g (f32) + hA/hB (bf16)
    x_tile = 2 * n * D * 2                        # double-buffered bf16 x tile
    out_tile = 2 * block_b * T * 4                # double-buffered f32 out tile
    weights = 2 * (D * Hp_in + Hp_in * W + 3 * W * W + W)   # bf16, single-buffered
    biases = 4 * (Hp_in + 2 * W + 1)
    temps = n * (6 * Hp_in + 8 * W)               # xh (f32+bf16), bulk/select temporaries
    return scratch + x_tile + out_tile + weights + biases + temps


def _choose_block_b(B, T, D, Hp_in, W, budget):
    # Cap block_b to bound vreg pressure in the unrolled recurrence
    # (bf16 carry of (block_b, W) must stay well under the 64-vreg file).
    cap_b = 256 if W <= 128 else 128
    cands = sorted({b for b in range(16, min(B, cap_b) + 1, 16) if B % b == 0},
                   reverse=True)
    if not cands:
        return B                                  # tiny/odd batch: one full tile
    fitting = [b for b in cands
               if _tile_vmem_bytes(b, T, D, Hp_in, W) <= budget] or [cands[-1]]
    even = [b for b in fitting if B // b >= 2 and (B // b) % 2 == 0]  # v7x: 2 TCs
    multi = [b for b in fitting if B // b >= 2]                        # pipelining
    return (even or multi or fitting)[0]


# ----------------------------------------------------------------------------
# Parameter init (PyTorch layout) and packing for the kernel
# ----------------------------------------------------------------------------
def init_ernn_params(key, num_in):
    """PyTorch-layout params with nn.Linear / nn.RNN default uniform init."""
    H = num_in
    keys = iter(jax.random.split(key, 20))

    def u(shape, bound):
        return jax.random.uniform(next(keys), shape, minval=-bound, maxval=bound,
                                  dtype=jnp.float32)

    p = {}
    b_lin = 1.0 / (num_in ** 0.5)
    p["lin_in_w"] = u((H, num_in), b_lin)              # (out, in)
    p["lin_in_b"] = u((H,), b_lin)

    b_rnn = 1.0 / (H ** 0.5)
    for suf, in_f in (("l0", H), ("l0_r", H), ("l1", 2 * H), ("l1_r", 2 * H)):
        p[f"w_ih_{suf}"] = u((H, in_f), b_rnn)
        p[f"w_hh_{suf}"] = u((H, H), b_rnn)
        p[f"b_ih_{suf}"] = u((H,), b_rnn)
        p[f"b_hh_{suf}"] = u((H,), b_rnn)

    b_cls = 1.0 / ((2 * H) ** 0.5)
    p["cls_w"] = u((1, 2 * H), b_cls)
    p["cls_b"] = u((1,), b_cls)
    return p


def pack_ernn_params(p):
    """Transpose to (in,out), lane-pack both RNN directions into one fused tile
    of width W = round_up(2H, 128) (block-diagonal W_hh), combine RNN biases,
    cast weights to bf16 / biases to f32."""
    H, D = p["lin_in_w"].shape
    Hp_in = _round_up(H, 128)              # layer-1 input width (Linear output)
    W = _round_up(2 * H, 128)              # fused [fwd | bwd] hidden width
    bf16, f32 = jnp.bfloat16, jnp.float32

    def place(shape, blocks, dtype):
        out = jnp.zeros(shape, f32)
        for (r, c), blk in blocks:
            out = out.at[r:r + blk.shape[0], c:c + blk.shape[1]].set(blk)
        return out.astype(dtype)

    k = {"dims": (D, H, Hp_in, W)}
    k["w_in"] = place((D, Hp_in), [((0, 0), p["lin_in_w"].T)], bf16)
    k["b_in"] = place((1, Hp_in), [((0, 0), p["lin_in_b"].reshape(1, -1))], f32)

    # layer 1: input = Linear output (H wide); fwd outputs -> lanes [0:H),
    # bwd outputs -> lanes [H:2H)
    k["wih1"] = place((Hp_in, W), [((0, 0), p["w_ih_l0"].T),
                                   ((0, H), p["w_ih_l0_r"].T)], bf16)
    k["whh1"] = place((W, W), [((0, 0), p["w_hh_l0"].T),
                               ((H, H), p["w_hh_l0_r"].T)], bf16)
    k["b1"] = place((1, W),
                    [((0, 0), (p["b_ih_l0"] + p["b_hh_l0"]).reshape(1, -1)),
                     ((0, H), (p["b_ih_l0_r"] + p["b_hh_l0_r"]).reshape(1, -1))], f32)

    # layer 2: input = [h1_f | h1_b] (2H wide, lanes [0:2H) of the fused tile)
    k["wih2"] = place((W, W), [((0, 0), p["w_ih_l1"].T),
                               ((0, H), p["w_ih_l1_r"].T)], bf16)
    k["whh2"] = place((W, W), [((0, 0), p["w_hh_l1"].T),
                               ((H, H), p["w_hh_l1_r"].T)], bf16)
    k["b2"] = place((1, W),
                    [((0, 0), (p["b_ih_l1"] + p["b_hh_l1"]).reshape(1, -1)),
                     ((0, H), (p["b_ih_l1_r"] + p["b_hh_l1_r"]).reshape(1, -1))], f32)

    k["wcls"] = place((1, W), [((0, 0), p["cls_w"])], bf16)
    k["b_cls"] = p["cls_b"].reshape(1, 1).astype(f32)
    return k


# ----------------------------------------------------------------------------
# Wrapper
# ----------------------------------------------------------------------------
def ernn_forward(x, packed, *, block_b=None):
    """x: (B, T, num_in) f32 -> (B, T, 1) f32."""
    D, H, Hp_in, W = packed["dims"]
    B, T, Din = x.shape
    assert Din == D, (Din, D)

    cap = _vmem_capacity_bytes()
    budget = int(cap * 0.70)               # ~90 MiB on v5e/v6e, ~44 MiB on v7x
    if block_b is None:
        block_b = _choose_block_b(B, T, D, Hp_in, W, budget)
    assert B % block_b == 0 and (block_b % 16 == 0 or block_b == B), block_b
    grid = (B // block_b,)

    # x stays unpadded in the feature dim (full-dim D block); only cast + make
    # it time-major so per-timestep slices inside the kernel are contiguous.
    xt = jnp.transpose(x.astype(jnp.bfloat16), (1, 0, 2))       # (T, B, D)

    weights = [packed[name] for name in _WEIGHT_ORDER]
    tile_bytes = _tile_vmem_bytes(block_b, T, D, Hp_in, W)
    n_total = B * T
    cost = pl.CostEstimate(
        flops=int(2 * n_total * (D * Hp_in + Hp_in * W + 3 * W * W + W)),
        transcendentals=int(n_total * (2 * W + 1)),
        bytes_accessed=int(xt.size * 2
                           + sum(int(w.size) * w.dtype.itemsize for w in weights)
                           + B * T * 4))

    kernel = _make_ernn_kernel(H)

    def build(single_buffer_weights):
        def const_spec(shape):
            index_map = lambda i, _nd=len(shape): (0,) * _nd
            if single_buffer_weights:
                # Weights never change across grid steps -> one VMEM copy only.
                return pl.BlockSpec(shape, index_map, pipeline_mode=pl.Buffered(1))
            return pl.BlockSpec(shape, index_map)

        in_specs = ([pl.BlockSpec((T, block_b, D), lambda i: (0, i, 0))]
                    + [const_spec(tuple(w.shape)) for w in weights])
        out_specs = pl.BlockSpec((block_b, T), lambda i: (i, 0))
        scratch = [pltpu.VMEM((T, block_b, W), jnp.float32),    # fused gate buffer
                   pltpu.VMEM((T, block_b, W), jnp.bfloat16),   # h, forward-indexed
                   pltpu.VMEM((T, block_b, W), jnp.bfloat16)]   # h, backward-indexed

        return pl.pallas_call(
            kernel,
            out_shape=jax.ShapeDtypeStruct((B, T), jnp.float32),
            grid_spec=pltpu.PrefetchScalarGridSpec(
                num_scalar_prefetch=0,
                grid=grid,
                in_specs=in_specs,
                out_specs=out_specs,
                scratch_shapes=scratch),
            compiler_params=pltpu.CompilerParams(
                dimension_semantics=("parallel",),
                vmem_limit_bytes=int(min(cap, max(32 << 20, tile_bytes + (16 << 20))))),
            cost_estimate=cost)

    try:
        out_bt = build(True)(xt, *weights)
    except Exception:
        # Narrow fallback: pl.Buffered(1) on weight specs is an optimization
        # only; retry with default double-buffered specs.  If this also fails,
        # the real error propagates.
        out_bt = build(False)(xt, *weights)

    return out_bt[..., None]                                    # (B, T, 1)


# ----------------------------------------------------------------------------
# Pure-JAX reference (PyTorch layout, same bf16-operand / f32-accum discipline)
# ----------------------------------------------------------------------------
def ernn_reference(x, params):
    bf16, f32 = jnp.bfloat16, jnp.float32

    def mm(a, w):            # a (..., k), w (m, k) PyTorch layout -> (..., m)
        return jnp.dot(a.astype(bf16), w.T.astype(bf16), preferred_element_type=f32)

    h = mm(x, params["lin_in_w"]) + params["lin_in_b"]          # (B, T, H)

    def rnn_layer(inp, suf, reverse):
        w_ih, w_hh = params[f"w_ih_{suf}"], params[f"w_hh_{suf}"]
        b = params[f"b_ih_{suf}"] + params[f"b_hh_{suf}"]
        gates = mm(inp, w_ih) + b                               # (B, T, H)
        Tn = inp.shape[1]
        h_t = jnp.zeros((inp.shape[0], w_hh.shape[0]), f32)
        outs = [None] * Tn
        ts = range(Tn - 1, -1, -1) if reverse else range(Tn)
        for t in ts:
            h_t = jnp.tanh(gates[:, t, :] + mm(h_t, w_hh))
            outs[t] = h_t
        return jnp.stack(outs, axis=1)                          # (B, T, H)

    l1 = jnp.concatenate([rnn_layer(h, "l0", False),
                          rnn_layer(h, "l0_r", True)], axis=-1)
    l2 = jnp.concatenate([rnn_layer(l1, "l1", False),
                          rnn_layer(l1, "l1_r", True)], axis=-1)   # (B, T, 2H)
    logits = mm(l2, params["cls_w"]) + params["cls_b"]             # (B, T, 1)
    return jax.nn.sigmoid(logits)


if __name__ == "__main__":
    key = jax.random.PRNGKey(0)
    k_param, k_x = jax.random.split(key)

    B, T, num_in = 32, 8, 32          # hidden = num_in = 32 -> fused width W = 128
    params = init_ernn_params(k_param, num_in)
    x = jax.random.normal(k_x, (B, T, num_in), dtype=jnp.float32)

    packed = pack_ernn_params(params)
    out = jax.block_until_ready(ernn_forward(x, packed))

    ref = ernn_reference(x, params)
    assert out.shape == (B, T, 1), out.shape
    err = float(jnp.max(jnp.abs(out - ref)))
    assert err < 2e-3, f"mismatch: max abs err {err}"
    print("KERNEL_OK")
</pallas_src>

<mosaic_0001>
module attributes {stable_mosaic.version = 11 : i64} {
  func.func @kernel(%arg0: i32, %arg1: memref<8x16x32xbf16, #tpu.memory_space<vmem>>, %arg2: memref<32x128xbf16, #tpu.memory_space<vmem>>, %arg3: memref<1x128xf32, #tpu.memory_space<vmem>>, %arg4: memref<128x128xbf16, #tpu.memory_space<vmem>>, %arg5: memref<128x128xbf16, #tpu.memory_space<vmem>>, %arg6: memref<1x128xf32, #tpu.memory_space<vmem>>, %arg7: memref<128x128xbf16, #tpu.memory_space<vmem>>, %arg8: memref<128x128xbf16, #tpu.memory_space<vmem>>, %arg9: memref<1x128xf32, #tpu.memory_space<vmem>>, %arg10: memref<1x128xbf16, #tpu.memory_space<vmem>>, %arg11: memref<1x1xf32, #tpu.memory_space<vmem>>, %arg12: memref<16x8xf32, #tpu.memory_space<vmem>>, %arg13: memref<8x16x128xf32, #tpu.memory_space<vmem>>, %arg14: memref<8x16x128xbf16, #tpu.memory_space<vmem>>, %arg15: memref<8x16x128xbf16, #tpu.memory_space<vmem>>) attributes {dimension_semantics = [#tpu.dimension_semantics<parallel>], iteration_bounds = array<i64: 2>, scalar_prefetch = 0 : i64, scratch_operands = 3 : i64, tpu.core_type = #tpu.core_type<tc>, window_params = [{transform_indices = @transform_0, window_bounds = array<i64: 8, 16, 32>}, {pipeline_mode = #tpu.pipeline_mode<synchronous>, transform_indices = @transform_1, window_bounds = array<i64: 32, 128>}, {pipeline_mode = #tpu.pipeline_mode<synchronous>, transform_indices = @transform_2, window_bounds = array<i64: 1, 128>}, {pipeline_mode = #tpu.pipeline_mode<synchronous>, transform_indices = @transform_3, window_bounds = array<i64: 128, 128>}, {pipeline_mode = #tpu.pipeline_mode<synchronous>, transform_indices = @transform_4, window_bounds = array<i64: 128, 128>}, {pipeline_mode = #tpu.pipeline_mode<synchronous>, transform_indices = @transform_5, window_bounds = array<i64: 1, 128>}, {pipeline_mode = #tpu.pipeline_mode<synchronous>, transform_indices = @transform_6, window_bounds = array<i64: 128, 128>}, {pipeline_mode = #tpu.pipeline_mode<synchronous>, transform_indices = @transform_7, window_bounds = array<i64: 128, 128>}, {pipeline_mode = #tpu.pipeline_mode<synchronous>, transform_indices = @transform_8, window_bounds = array<i64: 1, 128>}, {pipeline_mode = #tpu.pipeline_mode<synchronous>, transform_indices = @transform_9, window_bounds = array<i64: 1, 128>}, {pipeline_mode = #tpu.pipeline_mode<synchronous>, transform_indices = @transform_10, window_bounds = array<i64: 1, 1>}, {transform_indices = @transform_11, window_bounds = array<i64: 16, 8>}]} {
    %0 = tpu.iota {dimensions = array<i32: 1>} : vector<16x128xi32>
    %c32_i32 = arith.constant 32 : i32
    %1 = vector.broadcast %c32_i32 : i32 to vector<16x128xi32>
    %2 = arith.cmpi slt, %0, %1 : vector<16x128xi32>
    %3 = tpu.iota {dimensions = array<i32: 2>} : vector<8x16x128xi32>
    %c32_i32_0 = arith.constant 32 : i32
    %4 = vector.broadcast %c32_i32_0 : i32 to vector<8x16x128xi32>
    %5 = arith.cmpi slt, %3, %4 : vector<8x16x128xi32>
    %c0 = arith.constant 0 : index
    %c0_1 = arith.constant 0 : index
    %c0_2 = arith.constant 0 : index
    %6 = vector.load %arg1[%c0, %c0_1, %c0_2] : memref<8x16x32xbf16, #tpu.memory_space<vmem>>, vector<8x16x32xbf16>
    %7 = vector.shape_cast %6 : vector<8x16x32xbf16> to vector<128x32xbf16>
    %c0_3 = arith.constant 0 : index
    %c0_4 = arith.constant 0 : index
    %8 = vector.load %arg2[%c0_3, %c0_4] : memref<32x128xbf16, #tpu.memory_space<vmem>>, vector<32x128xbf16>
    %cst = arith.constant dense<0.000000e+00> : vector<128x128xf32>
    %9 = tpu.matmul %7, %8, %cst {dimension_numbers = #tpu.dot_dimension_numbers<[1], [0], [0], [1], [0, 0, 1, 1], [], []>} : vector<128x32xbf16>, vector<32x128xbf16>, vector<128x128xf32> -> vector<128x128xf32>
    %c0_5 = arith.constant 0 : index
    %c0_6 = arith.constant 0 : index
    %10 = vector.load %arg3[%c0_5, %c0_6] : memref<1x128xf32, #tpu.memory_space<vmem>>, vector<1x128xf32>
    %11 = vector.broadcast %10 : vector<1x128xf32> to vector<128x128xf32>
    %12 = arith.addf %9, %11 : vector<128x128xf32>
    %13 = arith.truncf %12 : vector<128x128xf32> to vector<128x128xbf16>
    %c0_7 = arith.constant 0 : index
    %c0_8 = arith.constant 0 : index
    %14 = vector.load %arg4[%c0_7, %c0_8] : memref<128x128xbf16, #tpu.memory_space<vmem>>, vector<128x128xbf16>
    %cst_9 = arith.constant dense<0.000000e+00> : vector<128x128xf32>
    %15 = tpu.matmul %13, %14, %cst_9 {dimension_numbers = #tpu.dot_dimension_numbers<[1], [0], [0], [1], [0, 0, 1, 1], [], []>} : vector<128x128xbf16>, vector<128x128xbf16>, vector<128x128xf32> -> vector<128x128xf32>
    %c0_10 = arith.constant 0 : index
    %c0_11 = arith.constant 0 : index
    %16 = vector.load %arg6[%c0_10, %c0_11] : memref<1x128xf32, #tpu.memory_space<vmem>>, vector<1x128xf32>
    %17 = vector.broadcast %16 : vector<1x128xf32> to vector<128x128xf32>
    %18 = arith.addf %15, %17 : vector<128x128xf32>
    %19 = vector.shape_cast %18 : vector<128x128xf32> to vector<8x16x128xf32>
    %c0_12 = arith.constant 0 : index
    %c0_13 = arith.constant 0 : index
    %c0_14 = arith.constant 0 : index
    %20 = vector.load %arg13[%c0_12, %c0_13, %c0_14] : memref<8x16x128xf32, #tpu.memory_space<vmem>>, vector<8x16x128xf32>
    tpu.vector_store %arg13[%c0_12, %c0_13, %c0_14], %19 {strides = array<i32>} : memref<8x16x128xf32, #tpu.memory_space<vmem>>, vector<8x16x128xf32>,
    %c0_15 = arith.constant 0 : index
    %c0_16 = arith.constant 0 : index
    %21 = vector.load %arg5[%c0_15, %c0_16] : memref<128x128xbf16, #tpu.memory_space<vmem>>, vector<128x128xbf16>
    %cst_17 = arith.constant 0.000000e+00 : bf16
    %22 = vector.broadcast %cst_17 : bf16 to vector<16x128xbf16>
    %c0_i32 = arith.constant 0 : i32
    %23 = arith.index_cast %c0_i32 : i32 to index
    %c0_18 = arith.constant 0 : index
    %c0_19 = arith.constant 0 : index
    %24 = vector.load %arg13[%23, %c0_18, %c0_19] : memref<8x16x128xf32, #tpu.memory_space<vmem>>, vector<1x16x128xf32>
    %25 = vector.shape_cast %24 : vector<1x16x128xf32> to vector<16x128xf32>
    %c7_i32 = arith.constant 7 : i32
    %26 = arith.subi %c7_i32, %c0_i32 : i32
    %27 = arith.index_cast %26 : i32 to index
    %c0_20 = arith.constant 0 : index
    %c0_21 = arith.constant 0 : index
    %28 = vector.load %arg13[%27, %c0_20, %c0_21] : memref<8x16x128xf32, #tpu.memory_space<vmem>>, vector<1x16x128xf32>
    %29 = vector.shape_cast %28 : vector<1x16x128xf32> to vector<16x128xf32>
    %30 = arith.select %2, %25, %29 : vector<16x128xi1>, vector<16x128xf32>
    %cst_22 = arith.constant dense<0.000000e+00> : vector<16x128xf32>
    %31 = tpu.matmul %22, %21, %cst_22 {dimension_numbers = #tpu.dot_dimension_numbers<[1], [0], [0], [1], [0, 0, 1, 1], [], []>} : vector<16x128xbf16>, vector<128x128xbf16>, vector<16x128xf32> -> vector<16x128xf32>
    %32 = arith.addf %30, %31 : vector<16x128xf32>
    %33 = math.tanh %32 : vector<16x128xf32>
    %34 = arith.truncf %33 : vector<16x128xf32> to vector<16x128xbf16>
    %35 = arith.index_cast %c0_i32 : i32 to index
    %c0_23 = arith.constant 0 : index
    %c0_24 = arith.constant 0 : index
    %36 = vector.load %arg14[%35, %c0_23, %c0_24] : memref<8x16x128xbf16, #tpu.memory_space<vmem>>, vector<1x16x128xbf16>
    %37 = vector.shape_cast %36 : vector<1x16x128xbf16> to vector<16x128xbf16>
    %38 = vector.shape_cast %34 : vector<16x128xbf16> to vector<1x16x128xbf16>
    tpu.vector_store %arg14[%35, %c0_23, %c0_24], %38 {strides = array<i32>} : memref<8x16x128xbf16, #tpu.memory_space<vmem>>, vector<1x16x128xbf16>,
    %c7_i32_25 = arith.constant 7 : i32
    %39 = arith.subi %c7_i32_25, %c0_i32 : i32
    %40 = arith.index_cast %39 : i32 to index
    %c0_26 = arith.constant 0 : index
    %c0_27 = arith.constant 0 : index
    %41 = vector.load %arg15[%40, %c0_26, %c0_27] : memref<8x16x128xbf16, #tpu.memory_space<vmem>>, vector<1x16x128xbf16>
    %42 = vector.shape_cast %41 : vector<1x16x128xbf16> to vector<16x128xbf16>
    %43 = vector.shape_cast %34 : vector<16x128xbf16> to vector<1x16x128xbf16>
    tpu.vector_store %arg15[%40, %c0_26, %c0_27], %43 {strides = array<i32>} : memref<8x16x128xbf16, #tpu.memory_space<vmem>>, vector<1x16x128xbf16>,
    %c1_i32 = arith.constant 1 : i32
    %44 = arith.index_cast %c1_i32 : i32 to index
    %c0_28 = arith.constant 0 : index
    %c0_29 = arith.constant 0 : index
    %45 = vector.load %arg13[%44, %c0_28, %c0_29] : memref<8x16x128xf32, #tpu.memory_space<vmem>>, vector<1x16x128xf32>
    %46 = vector.shape_cast %45 : vector<1x16x128xf32> to vector<16x128xf32>
    %c7_i32_30 = arith.constant 7 : i32
    %47 = arith.subi %c7_i32_30, %c1_i32 : i32
    %48 = arith.index_cast %47 : i32 to index
    %c0_31 = arith.constant 0 : index
    %c0_32 = arith.constant 0 : index
    %49 = vector.load %arg13[%48, %c0_31, %c0_32] : memref<8x16x128xf32, #tpu.memory_space<vmem>>, vector<1x16x128xf32>
    %50 = vector.shape_cast %49 : vector<1x16x128xf32> to vector<16x128xf32>
    %51 = arith.select %2, %46, %50 : vector<16x128xi1>, vector<16x128xf32>
    %cst_33 = arith.constant dense<0.000000e+00> : vector<16x128xf32>
    %52 = tpu.matmul %34, %21, %cst_33 {dimension_numbers = #tpu.dot_dimension_numbers<[1], [0], [0], [1], [0, 0, 1, 1], [], []>} : vector<16x128xbf16>, vector<128x128xbf16>, vector<16x128xf32> -> vector<16x128xf32>
    %53 = arith.addf %51, %52 : vector<16x128xf32>
    %54 = math.tanh %53 : vector<16x128xf32>
    %55 = arith.truncf %54 : vector<16x128xf32> to vector<16x128xbf16>
    %56 = arith.index_cast %c1_i32 : i32 to index
    %c0_34 = arith.constant 0 : index
    %c0_35 = arith.constant 0 : index
    %57 = vector.load %arg14[%56, %c0_34, %c0_35] : memref<8x16x128xbf16, #tpu.memory_space<vmem>>, vector<1x16x128xbf16>
    %58 = vector.shape_cast %57 : vector<1x16x128xbf16> to vector<16x128xbf16>
    %59 = vector.shape_cast %55 : vector<16x128xbf16> to vector<1x16x128xbf16>
    tpu.vector_store %arg14[%56, %c0_34, %c0_35], %59 {strides = array<i32>} : memref<8x16x128xbf16, #tpu.memory_space<vmem>>, vector<1x16x128xbf16>,
    %c7_i32_36 = arith.constant 7 : i32
    %60 = arith.subi %c7_i32_36, %c1_i32 : i32
    %61 = arith.index_cast %60 : i32 to index
    %c0_37 = arith.constant 0 : index
    %c0_38 = arith.constant 0 : index
    %62 = vector.load %arg15[%61, %c0_37, %c0_38] : memref<8x16x128xbf16, #tpu.memory_space<vmem>>, vector<1x16x128xbf16>
    %63 = vector.shape_cast %62 : vector<1x16x128xbf16> to vector<16x128xbf16>
    %64 = vector.shape_cast %55 : vector<16x128xbf16> to vector<1x16x128xbf16>
    tpu.vector_store %arg15[%61, %c0_37, %c0_38], %64 {strides = array<i32>} : memref<8x16x128xbf16, #tpu.memory_space<vmem>>, vector<1x16x128xbf16>,
    %c2_i32 = arith.constant 2 : i32
    %65 = arith.index_cast %c2_i32 : i32 to index
    %c0_39 = arith.constant 0 : index
    %c0_40 = arith.constant 0 : index
    %66 = vector.load %arg13[%65, %c0_39, %c0_40] : memref<8x16x128xf32, #tpu.memory_space<vmem>>, vector<1x16x128xf32>
    %67 = vector.shape_cast %66 : vector<1x16x128xf32> to vector<16x128xf32>
    %c7_i32_41 = arith.constant 7 : i32
    %68 = arith.subi %c7_i32_41, %c2_i32 : i32
    %69 = arith.index_cast %68 : i32 to index
    %c0_42 = arith.constant 0 : index
    %c0_43 = arith.constant 0 : index
    %70 = vector.load %arg13[%69, %c0_42, %c0_43] : memref<8x16x128xf32, #tpu.memory_space<vmem>>, vector<1x16x128xf32>
    %71 = vector.shape_cast %70 : vector<1x16x128xf32> to vector<16x128xf32>
    %72 = arith.select %2, %67, %71 : vector<16x128xi1>, vector<16x128xf32>
    %cst_44 = arith.constant dense<0.000000e+00> : vector<16x128xf32>
    %73 = tpu.matmul %55, %21, %cst_44 {dimension_numbers = #tpu.dot_dimension_numbers<[1], [0], [0], [1], [0, 0, 1, 1], [], []>} : vector<16x128xbf16>, vector<128x128xbf16>, vector<16x128xf32> -> vector<16x128xf32>
    %74 = arith.addf %72, %73 : vector<16x128xf32>
    %75 = math.tanh %74 : vector<16x128xf32>
    %76 = arith.truncf %75 : vector<16x128xf32> to vector<16x128xbf16>
    %77 = arith.index_cast %c2_i32 : i32 to index
    %c0_45 = arith.constant 0 : index
    %c0_46 = arith.constant 0 : index
    %78 = vector.load %arg14[%77, %c0_45, %c0_46] : memref<8x16x128xbf16, #tpu.memory_space<vmem>>, vector<1x16x128xbf16>
    %79 = vector.shape_cast %78 : vector<1x16x128xbf16> to vector<16x128xbf16>
    %80 = vector.shape_cast %76 : vector<16x128xbf16> to vector<1x16x128xbf16>
    tpu.vector_store %arg14[%77, %c0_45, %c0_46], %80 {strides = array<i32>} : memref<8x16x128xbf16, #tpu.memory_space<vmem>>, vector<1x16x128xbf16>,
    %c7_i32_47 = arith.constant 7 : i32
    %81 = arith.subi %c7_i32_47, %c2_i32 : i32
    %82 = arith.index_cast %81 : i32 to index
    %c0_48 = arith.constant 0 : index
    %c0_49 = arith.constant 0 : index
    %83 = vector.load %arg15[%82, %c0_48, %c0_49] : memref<8x16x128xbf16, #tpu.memory_space<vmem>>, vector<1x16x128xbf16>
    %84 = vector.shape_cast %83 : vector<1x16x128xbf16> to vector<16x128xbf16>
    %85 = vector.shape_cast %76 : vector<16x128xbf16> to vector<1x16x128xbf16>
    tpu.vector_store %arg15[%82, %c0_48, %c0_49], %85 {strides = array<i32>} : memref<8x16x128xbf16, #tpu.memory_space<vmem>>, vector<1x16x128xbf16>,
    %c3_i32 = arith.constant 3 : i32
    %86 = arith.index_cast %c3_i32 : i32 to index
    %c0_50 = arith.constant 0 : index
    %c0_51 = arith.constant 0 : index
    %87 = vector.load %arg13[%86, %c0_50, %c0_51] : memref<8x16x128xf32, #tpu.memory_space<vmem>>, vector<1x16x128xf32>
    %88 = vector.shape_cast %87 : vector<1x16x128xf32> to vector<16x128xf32>
    %c7_i32_52 = arith.constant 7 : i32
    %89 = arith.subi %c7_i32_52, %c3_i32 : i32
    %90 = arith.index_cast %89 : i32 to index
    %c0_53 = arith.constant 0 : index
    %c0_54 = arith.constant 0 : index
    %91 = vector.load %arg13[%90, %c0_53, %c0_54] : memref<8x16x128xf32, #tpu.memory_space<vmem>>, vector<1x16x128xf32>
    %92 = vector.shape_cast %91 : vector<1x16x128xf32> to vector<16x128xf32>
    %93 = arith.select %2, %88, %92 : vector<16x128xi1>, vector<16x128xf32>
    %cst_55 = arith.constant dense<0.000000e+00> : vector<16x128xf32>
    %94 = tpu.matmul %76, %21, %cst_55 {dimension_numbers = #tpu.dot_dimension_numbers<[1], [0], [0], [1], [0, 0, 1, 1], [], []>} : vector<16x128xbf16>, vector<128x128xbf16>, vector<16x128xf32> -> vector<16x128xf32>
    %95 = arith.addf %93, %94 : vector<16x128xf32>
    %96 = math.tanh %95 : vector<16x128xf32>
    %97 = arith.truncf %96 : vector<16x128xf32> to vector<16x128xbf16>
    %98 = arith.index_cast %c3_i32 : i32 to index
    %c0_56 = arith.constant 0 : index
    %c0_57 = arith.constant 0 : index
    %99 = vector.load %arg14[%98, %c0_56, %c0_57] : memref<8x16x128xbf16, #tpu.memory_space<vmem>>, vector<1x16x128xbf16>
    %100 = vector.shape_cast %99 : vector<1x16x128xbf16> to vector<16x128xbf16>
    %101 = vector.shape_cast %97 : vector<16x128xbf16> to vector<1x16x128xbf16>
    tpu.vector_store %arg14[%98, %c0_56, %c0_57], %101 {strides = array<i32>} : memref<8x16x128xbf16, #tpu.memory_space<vmem>>, vector<1x16x128xbf16>,
    %c7_i32_58 = arith.constant 7 : i32
    %102 = arith.subi %c7_i32_58, %c3_i32 : i32
    %103 = arith.index_cast %102 : i32 to index
    %c0_59 = arith.constant 0 : index
    %c0_60 = arith.constant 0 : index
    %104 = vector.load %arg15[%103, %c0_59, %c0_60] : memref<8x16x128xbf16, #tpu.memory_space<vmem>>, vector<1x16x128xbf16>
    %105 = vector.shape_cast %104 : vector<1x16x128xbf16> to vector<16x128xbf16>
    %106 = vector.shape_cast %97 : vector<16x128xbf16> to vector<1x16x128xbf16>
    tpu.vector_store %arg15[%103, %c0_59, %c0_60], %106 {strides = array<i32>} : memref<8x16x128xbf16, #tpu.memory_space<vmem>>, vector<1x16x128xbf16>,
    %c4_i32 = arith.constant 4 : i32
    %107 = arith.index_cast %c4_i32 : i32 to index
    %c0_61 = arith.constant 0 : index
    %c0_62 = arith.constant 0 : index
    %108 = vector.load %arg13[%107, %c0_61, %c0_62] : memref<8x16x128xf32, #tpu.memory_space<vmem>>, vector<1x16x128xf32>
    %109 = vector.shape_cast %108 : vector<1x16x128xf32> to vector<16x128xf32>
    %c7_i32_63 = arith.constant 7 : i32
    %110 = arith.subi %c7_i32_63, %c4_i32 : i32
    %111 = arith.index_cast %110 : i32 to index
    %c0_64 = arith.constant 0 : index
    %c0_65 = arith.constant 0 : index
    %112 = vector.load %arg13[%111, %c0_64, %c0_65] : memref<8x16x128xf32, #tpu.memory_space<vmem>>, vector<1x16x128xf32>
    %113 = vector.shape_cast %112 : vector<1x16x128xf32> to vector<16x128xf32>
    %114 = arith.select %2, %109, %113 : vector<16x128xi1>, vector<16x128xf32>
    %cst_66 = arith.constant dense<0.000000e+00> : vector<16x128xf32>
    %115 = tpu.matmul %97, %21, %cst_66 {dimension_numbers = #tpu.dot_dimension_numbers<[1], [0], [0], [1], [0, 0, 1, 1], [], []>} : vector<16x128xbf16>, vector<128x128xbf16>, vector<16x128xf32> -> vector<16x128xf32>
    %116 = arith.addf %114, %115 : vector<16x128xf32>
    %117 = math.tanh %116 : vector<16x128xf32>
    %118 = arith.truncf %117 : vector<16x128xf32> to vector<16x128xbf16>
    %119 = arith.index_cast %c4_i32 : i32 to index
    %c0_67 = arith.constant 0 : index
    %c0_68 = arith.constant 0 : index
    %120 = vector.load %arg14[%119, %c0_67, %c0_68] : memref<8x16x128xbf16, #tpu.memory_space<vmem>>, vector<1x16x128xbf16>
    %121 = vector.shape_cast %120 : vector<1x16x128xbf16> to vector<16x128xbf16>
    %122 = vector.shape_cast %118 : vector<16x128xbf16> to vector<1x16x128xbf16>
    tpu.vector_store %arg14[%119, %c0_67, %c0_68], %122 {strides = array<i32>} : memref<8x16x128xbf16, #tpu.memory_space<vmem>>, vector<1x16x128xbf16>,
    %c7_i32_69 = arith.constant 7 : i32
    %123 = arith.subi %c7_i32_69, %c4_i32 : i32
    %124 = arith.index_cast %123 : i32 to index
    %c0_70 = arith.constant 0 : index
    %c0_71 = arith.constant 0 : index
    %125 = vector.load %arg15[%124, %c0_70, %c0_71] : memref<8x16x128xbf16, #tpu.memory_space<vmem>>, vector<1x16x128xbf16>
    %126 = vector.shape_cast %125 : vector<1x16x128xbf16> to vector<16x128xbf16>
    %127 = vector.shape_cast %118 : vector<16x128xbf16> to vector<1x16x128xbf16>
    tpu.vector_store %arg15[%124, %c0_70, %c0_71], %127 {strides = array<i32>} : memref<8x16x128xbf16, #tpu.memory_space<vmem>>, vector<1x16x128xbf16>,
    %c5_i32 = arith.constant 5 : i32
    %128 = arith.index_cast %c5_i32 : i32 to index
    %c0_72 = arith.constant 0 : index
    %c0_73 = arith.constant 0 : index
    %129 = vector.load %arg13[%128, %c0_72, %c0_73] : memref<8x16x128xf32, #tpu.memory_space<vmem>>, vector<1x16x128xf32>
    %130 = vector.shape_cast %129 : vector<1x16x128xf32> to vector<16x128xf32>
    %c7_i32_74 = arith.constant 7 : i32
    %131 = arith.subi %c7_i32_74, %c5_i32 : i32
    %132 = arith.index_cast %131 : i32 to index
    %c0_75 = arith.constant 0 : index
    %c0_76 = arith.constant 0 : index
    %133 = vector.load %arg13[%132, %c0_75, %c0_76] : memref<8x16x128xf32, #tpu.memory_space<vmem>>, vector<1x16x128xf32>
    %134 = vector.shape_cast %133 : vector<1x16x128xf32> to vector<16x128xf32>
    %135 = arith.select %2, %130, %134 : vector<16x128xi1>, vector<16x128xf32>
    %cst_77 = arith.constant dense<0.000000e+00> : vector<16x128xf32>
    %136 = tpu.matmul %118, %21, %cst_77 {dimension_numbers = #tpu.dot_dimension_numbers<[1], [0], [0], [1], [0, 0, 1, 1], [], []>} : vector<16x128xbf16>, vector<128x128xbf16>, vector<16x128xf32> -> vector<16x128xf32>
    %137 = arith.addf %135, %136 : vector<16x128xf32>
    %138 = math.tanh %137 : vector<16x128xf32>
    %139 = arith.truncf %138 : vector<16x128xf32> to vector<16x128xbf16>
    %140 = arith.index_cast %c5_i32 : i32 to index
    %c0_78 = arith.constant 0 : index
    %c0_79 = arith.constant 0 : index
    %141 = vector.load %arg14[%140, %c0_78, %c0_79] : memref<8x16x128xbf16, #tpu.memory_space<vmem>>, vector<1x16x128xbf16>
    %142 = vector.shape_cast %141 : vector<1x16x128xbf16> to vector<16x128xbf16>
    %143 = vector.shape_cast %139 : vector<16x128xbf16> to vector<1x16x128xbf16>
    tpu.vector_store %arg14[%140, %c0_78, %c0_79], %143 {strides = array<i32>} : memref<8x16x128xbf16, #tpu.memory_space<vmem>>, vector<1x16x128xbf16>,
    %c7_i32_80 = arith.constant 7 : i32
    %144 = arith.subi %c7_i32_80, %c5_i32 : i32
    %145 = arith.index_cast %144 : i32 to index
    %c0_81 = arith.constant 0 : index
    %c0_82 = arith.constant 0 : index
    %146 = vector.load %arg15[%145, %c0_81, %c0_82] : memref<8x16x128xbf16, #tpu.memory_space<vmem>>, vector<1x16x128xbf16>
    %147 = vector.shape_cast %146 : vector<1x16x128xbf16> to vector<16x128xbf16>
    %148 = vector.shape_cast %139 : vector<16x128xbf16> to vector<1x16x128xbf16>
    tpu.vector_store %arg15[%145, %c0_81, %c0_82], %148 {strides = array<i32>} : memref<8x16x128xbf16, #tpu.memory_space<vmem>>, vector<1x16x128xbf16>,
    %c6_i32 = arith.constant 6 : i32
    %149 = arith.index_cast %c6_i32 : i32 to index
    %c0_83 = arith.constant 0 : index
    %c0_84 = arith.constant 0 : index
    %150 = vector.load %arg13[%149, %c0_83, %c0_84] : memref<8x16x128xf32, #tpu.memory_space<vmem>>, vector<1x16x128xf32>
    %151 = vector.shape_cast %150 : vector<1x16x128xf32> to vector<16x128xf32>
    %c7_i32_85 = arith.constant 7 : i32
    %152 = arith.subi %c7_i32_85, %c6_i32 : i32
    %153 = arith.index_cast %152 : i32 to index
    %c0_86 = arith.constant 0 : index
    %c0_87 = arith.constant 0 : index
    %154 = vector.load %arg13[%153, %c0_86, %c0_87] : memref<8x16x128xf32, #tpu.memory_space<vmem>>, vector<1x16x128xf32>
    %155 = vector.shape_cast %154 : vector<1x16x128xf32> to vector<16x128xf32>
    %156 = arith.select %2, %151, %155 : vector<16x128xi1>, vector<16x128xf32>
    %cst_88 = arith.constant dense<0.000000e+00> : vector<16x128xf32>
    %157 = tpu.matmul %139, %21, %cst_88 {dimension_numbers = #tpu.dot_dimension_numbers<[1], [0], [0], [1], [0, 0, 1, 1], [], []>} : vector<16x128xbf16>, vector<128x128xbf16>, vector<16x128xf32> -> vector<16x128xf32>
    %158 = arith.addf %156, %157 : vector<16x128xf32>
    %159 = math.tanh %158 : vector<16x128xf32>
    %160 = arith.truncf %159 : vector<16x128xf32> to vector<16x128xbf16>
    %161 = arith.index_cast %c6_i32 : i32 to index
    %c0_89 = arith.constant 0 : index
    %c0_90 = arith.constant 0 : index
    %162 = vector.load %arg14[%161, %c0_89, %c0_90] : memref<8x16x128xbf16, #tpu.memory_space<vmem>>, vector<1x16x128xbf16>
    %163 = vector.shape_cast %162 : vector<1x16x128xbf16> to vector<16x128xbf16>
    %164 = vector.shape_cast %160 : vector<16x128xbf16> to vector<1x16x128xbf16>
    tpu.vector_store %arg14[%161, %c0_89, %c0_90], %164 {strides = array<i32>} : memref<8x16x128xbf16, #tpu.memory_space<vmem>>, vector<1x16x128xbf16>,
    %c7_i32_91 = arith.constant 7 : i32
    %165 = arith.subi %c7_i32_91, %c6_i32 : i32
    %166 = arith.index_cast %165 : i32 to index
    %c0_92 = arith.constant 0 : index
    %c0_93 = arith.constant 0 : index
    %167 = vector.load %arg15[%166, %c0_92, %c0_93] : memref<8x16x128xbf16, #tpu.memory_space<vmem>>, vector<1x16x128xbf16>
    %168 = vector.shape_cast %167 : vector<1x16x128xbf16> to vector<16x128xbf16>
    %169 = vector.shape_cast %160 : vector<16x128xbf16> to vector<1x16x128xbf16>
    tpu.vector_store %arg15[%166, %c0_92, %c0_93], %169 {strides = array<i32>} : memref<8x16x128xbf16, #tpu.memory_space<vmem>>, vector<1x16x128xbf16>,
    %c7_i32_94 = arith.constant 7 : i32
    %170 = arith.index_cast %c7_i32_94 : i32 to index
    %c0_95 = arith.constant 0 : index
    %c0_96 = arith.constant 0 : index
    %171 = vector.load %arg13[%170, %c0_95, %c0_96] : memref<8x16x128xf32, #tpu.memory_space<vmem>>, vector<1x16x128xf32>
    %172 = vector.shape_cast %171 : vector<1x16x128xf32> to vector<16x128xf32>
    %c7_i32_97 = arith.constant 7 : i32
    %173 = arith.subi %c7_i32_97, %c7_i32_94 : i32
    %174 = arith.index_cast %173 : i32 to index
    %c0_98 = arith.constant 0 : index
    %c0_99 = arith.constant 0 : index
    %175 = vector.load %arg13[%174, %c0_98, %c0_99] : memref<8x16x128xf32, #tpu.memory_space<vmem>>, vector<1x16x128xf32>
    %176 = vector.shape_cast %175 : vector<1x16x128xf32> to vector<16x128xf32>
    %177 = arith.select %2, %172, %176 : vector<16x128xi1>, vector<16x128xf32>
    %cst_100 = arith.constant dense<0.000000e+00> : vector<16x128xf32>
    %178 = tpu.matmul %160, %21, %cst_100 {dimension_numbers = #tpu.dot_dimension_numbers<[1], [0], [0], [1], [0, 0, 1, 1], [], []>} : vector<16x128xbf16>, vector<128x128xbf16>, vector<16x128xf32> -> vector<16x128xf32>
    %179 = arith.addf %177, %178 : vector<16x128xf32>
    %180 = math.tanh %179 : vector<16x128xf32>
    %181 = arith.truncf %180 : vector<16x128xf32> to vector<16x128xbf16>
    %182 = arith.index_cast %c7_i32_94 : i32 to index
    %c0_101 = arith.constant 0 : index
    %c0_102 = arith.constant 0 : index
    %183 = vector.load %arg14[%182, %c0_101, %c0_102] : memref<8x16x128xbf16, #tpu.memory_space<vmem>>, vector<1x16x128xbf16>
    %184 = vector.shape_cast %183 : vector<1x16x128xbf16> to vector<16x128xbf16>
    %185 = vector.shape_cast %181 : vector<16x128xbf16> to vector<1x16x128xbf16>
    tpu.vector_store %arg14[%182, %c0_101, %c0_102], %185 {strides = array<i32>} : memref<8x16x128xbf16, #tpu.memory_space<vmem>>, vector<1x16x128xbf16>,
    %c7_i32_103 = arith.constant 7 : i32
    %186 = arith.subi %c7_i32_103, %c7_i32_94 : i32
    %187 = arith.index_cast %186 : i32 to index
    %c0_104 = arith.constant 0 : index
    %c0_105 = arith.constant 0 : index
    %188 = vector.load %arg15[%187, %c0_104, %c0_105] : memref<8x16x128xbf16, #tpu.memory_space<vmem>>, vector<1x16x128xbf16>
    %189 = vector.shape_cast %188 : vector<1x16x128xbf16> to vector<16x128xbf16>
    %190 = vector.shape_cast %181 : vector<16x128xbf16> to vector<1x16x128xbf16>
    tpu.vector_store %arg15[%187, %c0_104, %c0_105], %190 {strides = array<i32>} : memref<8x16x128xbf16, #tpu.memory_space<vmem>>, vector<1x16x128xbf16>,
    %c8_i32 = arith.constant 8 : i32
    %c0_106 = arith.constant 0 : index
    %c0_107 = arith.constant 0 : index
    %c0_108 = arith.constant 0 : index
    %191 = vector.load %arg14[%c0_106, %c0_107, %c0_108] : memref<8x16x128xbf16, #tpu.memory_space<vmem>>, vector<8x16x128xbf16>
    %c0_109 = arith.constant 0 : index
    %c0_110 = arith.constant 0 : index
    %c0_111 = arith.constant 0 : index
    %192 = vector.load %arg15[%c0_109, %c0_110, %c0_111] : memref<8x16x128xbf16, #tpu.memory_space<vmem>>, vector<8x16x128xbf16>
    %193 = arith.select %5, %191, %192 : vector<8x16x128xi1>, vector<8x16x128xbf16>
    %194 = vector.shape_cast %193 : vector<8x16x128xbf16> to vector<128x128xbf16>
    %c0_112 = arith.constant 0 : index
    %c0_113 = arith.constant 0 : index
    %195 = vector.load %arg7[%c0_112, %c0_113] : memref<128x128xbf16, #tpu.memory_space<vmem>>, vector<128x128xbf16>
    %cst_114 = arith.constant dense<0.000000e+00> : vector<128x128xf32>
    %196 = tpu.matmul %194, %195, %cst_114 {dimension_numbers = #tpu.dot_dimension_numbers<[1], [0], [0], [1], [0, 0, 1, 1], [], []>} : vector<128x128xbf16>, vector<128x128xbf16>, vector<128x128xf32> -> vector<128x128xf32>
    %c0_115 = arith.constant 0 : index
    %c0_116 = arith.constant 0 : index
    %197 = vector.load %arg9[%c0_115, %c0_116] : memref<1x128xf32, #tpu.memory_space<vmem>>, vector<1x128xf32>
    %198 = vector.broadcast %197 : vector<1x128xf32> to vector<128x128xf32>
    %199 = arith.addf %196, %198 : vector<128x128xf32>
    %200 = vector.shape_cast %199 : vector<128x128xf32> to vector<8x16x128xf32>
    %c0_117 = arith.constant 0 : index
    %c0_118 = arith.constant 0 : index
    %c0_119 = arith.constant 0 : index
    %201 = vector.load %arg13[%c0_117, %c0_118, %c0_119] : memref<8x16x128xf32, #tpu.memory_space<vmem>>, vector<8x16x128xf32>
    tpu.vector_store %arg13[%c0_117, %c0_118, %c0_119], %200 {strides = array<i32>} : memref<8x16x128xf32, #tpu.memory_space<vmem>>, vector<8x16x128xf32>,
    %c0_120 = arith.constant 0 : index
    %c0_121 = arith.constant 0 : index
    %202 = vector.load %arg8[%c0_120, %c0_121] : memref<128x128xbf16, #tpu.memory_space<vmem>>, vector<128x128xbf16>
    %cst_122 = arith.constant 0.000000e+00 : bf16
    %203 = vector.broadcast %cst_122 : bf16 to vector<16x128xbf16>
    %c0_i32_123 = arith.constant 0 : i32
    %204 = arith.index_cast %c0_i32_123 : i32 to index
    %c0_124 = arith.constant 0 : index
    %c0_125 = arith.constant 0 : index
    %205 = vector.load %arg13[%204, %c0_124, %c0_125] : memref<8x16x128xf32, #tpu.memory_space<vmem>>, vector<1x16x128xf32>
    %206 = vector.shape_cast %205 : vector<1x16x128xf32> to vector<16x128xf32>
    %c7_i32_126 = arith.constant 7 : i32
    %207 = arith.subi %c7_i32_126, %c0_i32_123 : i32
    %208 = arith.index_cast %207 : i32 to index
    %c0_127 = arith.constant 0 : index
    %c0_128 = arith.constant 0 : index
    %209 = vector.load %arg13[%208, %c0_127, %c0_128] : memref<8x16x128xf32, #tpu.memory_space<vmem>>, vector<1x16x128xf32>
    %210 = vector.shape_cast %209 : vector<1x16x128xf32> to vector<16x128xf32>
    %211 = arith.select %2, %206, %210 : vector<16x128xi1>, vector<16x128xf32>
    %cst_129 = arith.constant dense<0.000000e+00> : vector<16x128xf32>
    %212 = tpu.matmul %203, %202, %cst_129 {dimension_numbers = #tpu.dot_dimension_numbers<[1], [0], [0], [1], [0, 0, 1, 1], [], []>} : vector<16x128xbf16>, vector<128x128xbf16>, vector<16x128xf32> -> vector<16x128xf32>
    %213 = arith.addf %211, %212 : vector<16x128xf32>
    %214 = math.tanh %213 : vector<16x128xf32>
    %215 = arith.truncf %214 : vector<16x128xf32> to vector<16x128xbf16>
    %216 = arith.index_cast %c0_i32_123 : i32 to index
    %c0_130 = arith.constant 0 : index
    %c0_131 = arith.constant 0 : index
    %217 = vector.load %arg14[%216, %c0_130, %c0_131] : memref<8x16x128xbf16, #tpu.memory_space<vmem>>, vector<1x16x128xbf16>
    %218 = vector.shape_cast %217 : vector<1x16x128xbf16> to vector<16x128xbf16>
    %219 = vector.shape_cast %215 : vector<16x128xbf16> to vector<1x16x128xbf16>
    tpu.vector_store %arg14[%216, %c0_130, %c0_131], %219 {strides = array<i32>} : memref<8x16x128xbf16, #tpu.memory_space<vmem>>, vector<1x16x128xbf16>,
    %c7_i32_132 = arith.constant 7 : i32
    %220 = arith.subi %c7_i32_132, %c0_i32_123 : i32
    %221 = arith.index_cast %220 : i32 to index
    %c0_133 = arith.constant 0 : index
    %c0_134 = arith.constant 0 : index
    %222 = vector.load %arg15[%221, %c0_133, %c0_134] : memref<8x16x128xbf16, #tpu.memory_space<vmem>>, vector<1x16x128xbf16>
    %223 = vector.shape_cast %222 : vector<1x16x128xbf16> to vector<16x128xbf16>
    %224 = vector.shape_cast %215 : vector<16x128xbf16> to vector<1x16x128xbf16>
    tpu.vector_store %arg15[%221, %c0_133, %c0_134], %224 {strides = array<i32>} : memref<8x16x128xbf16, #tpu.memory_space<vmem>>, vector<1x16x128xbf16>,
    %c1_i32_135 = arith.constant 1 : i32
    %225 = arith.index_cast %c1_i32_135 : i32 to index
    %c0_136 = arith.constant 0 : index
    %c0_137 = arith.constant 0 : index
    %226 = vector.load %arg13[%225, %c0_136, %c0_137] : memref<8x16x128xf32, #tpu.memory_space<vmem>>, vector<1x16x128xf32>
    %227 = vector.shape_cast %226 : vector<1x16x128xf32> to vector<16x128xf32>
    %c7_i32_138 = arith.constant 7 : i32
    %228 = arith.subi %c7_i32_138, %c1_i32_135 : i32
    %229 = arith.index_cast %228 : i32 to index
    %c0_139 = arith.constant 0 : index
    %c0_140 = arith.constant 0 : index
    %230 = vector.load %arg13[%229, %c0_139, %c0_140] : memref<8x16x128xf32, #tpu.memory_space<vmem>>, vector<1x16x128xf32>
    %231 = vector.shape_cast %230 : vector<1x16x128xf32> to vector<16x128xf32>
    %232 = arith.select %2, %227, %231 : vector<16x128xi1>, vector<16x128xf32>
    %cst_141 = arith.constant dense<0.000000e+00> : vector<16x128xf32>
    %233 = tpu.matmul %215, %202, %cst_141 {dimension_numbers = #tpu.dot_dimension_numbers<[1], [0], [0], [1], [0, 0, 1, 1], [], []>} : vector<16x128xbf16>, vector<128x128xbf16>, vector<16x128xf32> -> vector<16x128xf32>
    %234 = arith.addf %232, %233 : vector<16x128xf32>
    %235 = math.tanh %234 : vector<16x128xf32>
    %236 = arith.truncf %235 : vector<16x128xf32> to vector<16x128xbf16>
    %237 = arith.index_cast %c1_i32_135 : i32 to index
    %c0_142 = arith.constant 0 : index
    %c0_143 = arith.constant 0 : index
    %238 = vector.load %arg14[%237, %c0_142, %c0_143] : memref<8x16x128xbf16, #tpu.memory_space<vmem>>, vector<1x16x128xbf16>
    %239 = vector.shape_cast %238 : vector<1x16x128xbf16> to vector<16x128xbf16>
    %240 = vector.shape_cast %236 : vector<16x128xbf16> to vector<1x16x128xbf16>
    tpu.vector_store %arg14[%237, %c0_142, %c0_143], %240 {strides = array<i32>} : memref<8x16x128xbf16, #tpu.memory_space<vmem>>, vector<1x16x128xbf16>,
    %c7_i32_144 = arith.constant 7 : i32
    %241 = arith.subi %c7_i32_144, %c1_i32_135 : i32
    %242 = arith.index_cast %241 : i32 to index
    %c0_145 = arith.constant 0 : index
    %c0_146 = arith.constant 0 : index
    %243 = vector.load %arg15[%242, %c0_145, %c0_146] : memref<8x16x128xbf16, #tpu.memory_space<vmem>>, vector<1x16x128xbf16>
    %244 = vector.shape_cast %243 : vector<1x16x128xbf16> to vector<16x128xbf16>
    %245 = vector.shape_cast %236 : vector<16x128xbf16> to vector<1x16x128xbf16>
    tpu.vector_store %arg15[%242, %c0_145, %c0_146], %245 {strides = array<i32>} : memref<8x16x128xbf16, #tpu.memory_space<vmem>>, vector<1x16x128xbf16>,
    %c2_i32_147 = arith.constant 2 : i32
    %246 = arith.index_cast %c2_i32_147 : i32 to index
    %c0_148 = arith.constant 0 : index
    %c0_149 = arith.constant 0 : index
    %247 = vector.load %arg13[%246, %c0_148, %c0_149] : memref<8x16x128xf32, #tpu.memory_space<vmem>>, vector<1x16x128xf32>
    %248 = vector.shape_cast %247 : vector<1x16x128xf32> to vector<16x128xf32>
    %c7_i32_150 = arith.constant 7 : i32
    %249 = arith.subi %c7_i32_150, %c2_i32_147 : i32
    %250 = arith.index_cast %249 : i32 to index
    %c0_151 = arith.constant 0 : index
    %c0_152 = arith.constant 0 : index
    %251 = vector.load %arg13[%250, %c0_151, %c0_152] : memref<8x16x128xf32, #tpu.memory_space<vmem>>, vector<1x16x128xf32>
    %252 = vector.shape_cast %251 : vector<1x16x128xf32> to vector<16x128xf32>
    %253 = arith.select %2, %248, %252 : vector<16x128xi1>, vector<16x128xf32>
    %cst_153 = arith.constant dense<0.000000e+00> : vector<16x128xf32>
    %254 = tpu.matmul %236, %202, %cst_153 {dimension_numbers = #tpu.dot_dimension_numbers<[1], [0], [0], [1], [0, 0, 1, 1], [], []>} : vector<16x128xbf16>, vector<128x128xbf16>, vector<16x128xf32> -> vector<16x128xf32>
    %255 = arith.addf %253, %254 : vector<16x128xf32>
    %256 = math.tanh %255 : vector<16x128xf32>
    %257 = arith.truncf %256 : vector<16x128xf32> to vector<16x128xbf16>
    %258 = arith.index_cast %c2_i32_147 : i32 to index
    %c0_154 = arith.constant 0 : index
    %c0_155 = arith.constant 0 : index
    %259 = vector.load %arg14[%258, %c0_154, %c0_155] : memref<8x16x128xbf16, #tpu.memory_space<vmem>>, vector<1x16x128xbf16>
    %260 = vector.shape_cast %259 : vector<1x16x128xbf16> to vector<16x128xbf16>
    %261 = vector.shape_cast %257 : vector<16x128xbf16> to vector<1x16x128xbf16>
    tpu.vector_store %arg14[%258, %c0_154, %c0_155], %261 {strides = array<i32>} : memref<8x16x128xbf16, #tpu.memory_space<vmem>>, vector<1x16x128xbf16>,
    %c7_i32_156 = arith.constant 7 : i32
    %262 = arith.subi %c7_i32_156, %c2_i32_147 : i32
    %263 = arith.index_cast %262 : i32 to index
    %c0_157 = arith.constant 0 : index
    %c0_158 = arith.constant 0 : index
    %264 = vector.load %arg15[%263, %c0_157, %c0_158] : memref<8x16x128xbf16, #tpu.memory_space<vmem>>, vector<1x16x128xbf16>
    %265 = vector.shape_cast %264 : vector<1x16x128xbf16> to vector<16x128xbf16>
    %266 = vector.shape_cast %257 : vector<16x128xbf16> to vector<1x16x128xbf16>
    tpu.vector_store %arg15[%263, %c0_157, %c0_158], %266 {strides = array<i32>} : memref<8x16x128xbf16, #tpu.memory_space<vmem>>, vector<1x16x128xbf16>,
    %c3_i32_159 = arith.constant 3 : i32
    %267 = arith.index_cast %c3_i32_159 : i32 to index
    %c0_160 = arith.constant 0 : index
    %c0_161 = arith.constant 0 : index
    %268 = vector.load %arg13[%267, %c0_160, %c0_161] : memref<8x16x128xf32, #tpu.memory_space<vmem>>, vector<1x16x128xf32>
    %269 = vector.shape_cast %268 : vector<1x16x128xf32> to vector<16x128xf32>
    %c7_i32_162 = arith.constant 7 : i32
    %270 = arith.subi %c7_i32_162, %c3_i32_159 : i32
    %271 = arith.index_cast %270 : i32 to index
    %c0_163 = arith.constant 0 : index
    %c0_164 = arith.constant 0 : index
    %272 = vector.load %arg13[%271, %c0_163, %c0_164] : memref<8x16x128xf32, #tpu.memory_space<vmem>>, vector<1x16x128xf32>
    %273 = vector.shape_cast %272 : vector<1x16x128xf32> to vector<16x128xf32>
    %274 = arith.select %2, %269, %273 : vector<16x128xi1>, vector<16x128xf32>
    %cst_165 = arith.constant dense<0.000000e+00> : vector<16x128xf32>
    %275 = tpu.matmul %257, %202, %cst_165 {dimension_numbers = #tpu.dot_dimension_numbers<[1], [0], [0], [1], [0, 0, 1, 1], [], []>} : vector<16x128xbf16>, vector<128x128xbf16>, vector<16x128xf32> -> vector<16x128xf32>
    %276 = arith.addf %274, %275 : vector<16x128xf32>
    %277 = math.tanh %276 : vector<16x128xf32>
    %278 = arith.truncf %277 : vector<16x128xf32> to vector<16x128xbf16>
    %279 = arith.index_cast %c3_i32_159 : i32 to index
    %c0_166 = arith.constant 0 : index
    %c0_167 = arith.constant 0 : index
    %280 = vector.load %arg14[%279, %c0_166, %c0_167] : memref<8x16x128xbf16, #tpu.memory_space<vmem>>, vector<1x16x128xbf16>
    %281 = vector.shape_cast %280 : vector<1x16x128xbf16> to vector<16x128xbf16>
    %282 = vector.shape_cast %278 : vector<16x128xbf16> to vector<1x16x128xbf16>
    tpu.vector_store %arg14[%279, %c0_166, %c0_167], %282 {strides = array<i32>} : memref<8x16x128xbf16, #tpu.memory_space<vmem>>, vector<1x16x128xbf16>,
    %c7_i32_168 = arith.constant 7 : i32
    %283 = arith.subi %c7_i32_168, %c3_i32_159 : i32
    %284 = arith.index_cast %283 : i32 to index
    %c0_169 = arith.constant 0 : index
    %c0_170 = arith.constant 0 : index
    %285 = vector.load %arg15[%284, %c0_169, %c0_170] : memref<8x16x128xbf16, #tpu.memory_space<vmem>>, vector<1x16x128xbf16>
    %286 = vector.shape_cast %285 : vector<1x16x128xbf16> to vector<16x128xbf16>
    %287 = vector.shape_cast %278 : vector<16x128xbf16> to vector<1x16x128xbf16>
    tpu.vector_store %arg15[%284, %c0_169, %c0_170], %287 {strides = array<i32>} : memref<8x16x128xbf16, #tpu.memory_space<vmem>>, vector<1x16x128xbf16>,
    %c4_i32_171 = arith.constant 4 : i32
    %288 = arith.index_cast %c4_i32_171 : i32 to index
    %c0_172 = arith.constant 0 : index
    %c0_173 = arith.constant 0 : index
    %289 = vector.load %arg13[%288, %c0_172, %c0_173] : memref<8x16x128xf32, #tpu.memory_space<vmem>>, vector<1x16x128xf32>
    %290 = vector.shape_cast %289 : vector<1x16x128xf32> to vector<16x128xf32>
    %c7_i32_174 = arith.constant 7 : i32
    %291 = arith.subi %c7_i32_174, %c4_i32_171 : i32
    %292 = arith.index_cast %291 : i32 to index
    %c0_175 = arith.constant 0 : index
    %c0_176 = arith.constant 0 : index
    %293 = vector.load %arg13[%292, %c0_175, %c0_176] : memref<8x16x128xf32, #tpu.memory_space<vmem>>, vector<1x16x128xf32>
    %294 = vector.shape_cast %293 : vector<1x16x128xf32> to vector<16x128xf32>
    %295 = arith.select %2, %290, %294 : vector<16x128xi1>, vector<16x128xf32>
    %cst_177 = arith.constant dense<0.000000e+00> : vector<16x128xf32>
    %296 = tpu.matmul %278, %202, %cst_177 {dimension_numbers = #tpu.dot_dimension_numbers<[1], [0], [0], [1], [0, 0, 1, 1], [], []>} : vector<16x128xbf16>, vector<128x128xbf16>, vector<16x128xf32> -> vector<16x128xf32>
    %297 = arith.addf %295, %296 : vector<16x128xf32>
    %298 = math.tanh %297 : vector<16x128xf32>
    %299 = arith.truncf %298 : vector<16x128xf32> to vector<16x128xbf16>
    %300 = arith.index_cast %c4_i32_171 : i32 to index
    %c0_178 = arith.constant 0 : index
    %c0_179 = arith.constant 0 : index
    %301 = vector.load %arg14[%300, %c0_178, %c0_179] : memref<8x16x128xbf16, #tpu.memory_space<vmem>>, vector<1x16x128xbf16>
    %302 = vector.shape_cast %301 : vector<1x16x128xbf16> to vector<16x128xbf16>
    %303 = vector.shape_cast %299 : vector<16x128xbf16> to vector<1x16x128xbf16>
    tpu.vector_store %arg14[%300, %c0_178, %c0_179], %303 {strides = array<i32>} : memref<8x16x128xbf16, #tpu.memory_space<vmem>>, vector<1x16x128xbf16>,
    %c7_i32_180 = arith.constant 7 : i32
    %304 = arith.subi %c7_i32_180, %c4_i32_171 : i32
    %305 = arith.index_cast %304 : i32 to index
    %c0_181 = arith.constant 0 : index
    %c0_182 = arith.constant 0 : index
    %306 = vector.load %arg15[%305, %c0_181, %c0_182] : memref<8x16x128xbf16, #tpu.memory_space<vmem>>, vector<1x16x128xbf16>
    %307 = vector.shape_cast %306 : vector<1x16x128xbf16> to vector<16x128xbf16>
    %308 = vector.shape_cast %299 : vector<16x128xbf16> to vector<1x16x128xbf16>
    tpu.vector_store %arg15[%305, %c0_181, %c0_182], %308 {strides = array<i32>} : memref<8x16x128xbf16, #tpu.memory_space<vmem>>, vector<1x16x128xbf16>,
    %c5_i32_183 = arith.constant 5 : i32
    %309 = arith.index_cast %c5_i32_183 : i32 to index
    %c0_184 = arith.constant 0 : index
    %c0_185 = arith.constant 0 : index
    %310 = vector.load %arg13[%309, %c0_184, %c0_185] : memref<8x16x128xf32, #tpu.memory_space<vmem>>, vector<1x16x128xf32>
    %311 = vector.shape_cast %310 : vector<1x16x128xf32> to vector<16x128xf32>
    %c7_i32_186 = arith.constant 7 : i32
    %312 = arith.subi %c7_i32_186, %c5_i32_183 : i32
    %313 = arith.index_cast %312 : i32 to index
    %c0_187 = arith.constant 0 : index
    %c0_188 = arith.constant 0 : index
    %314 = vector.load %arg13[%313, %c0_187, %c0_188] : memref<8x16x128xf32, #tpu.memory_space<vmem>>, vector<1x16x128xf32>
    %315 = vector.shape_cast %314 : vector<1x16x128xf32> to vector<16x128xf32>
    %316 = arith.select %2, %311, %315 : vector<16x128xi1>, vector<16x128xf32>
    %cst_189 = arith.constant dense<0.000000e+00> : vector<16x128xf32>
    %317 = tpu.matmul %299, %202, %cst_189 {dimension_numbers = #tpu.dot_dimension_numbers<[1], [0], [0], [1], [0, 0, 1, 1], [], []>} : vector<16x128xbf16>, vector<128x128xbf16>, vector<16x128xf32> -> vector<16x128xf32>
    %318 = arith.addf %316, %317 : vector<16x128xf32>
    %319 = math.tanh %318 : vector<16x128xf32>
    %320 = arith.truncf %319 : vector<16x128xf32> to vector<16x128xbf16>
    %321 = arith.index_cast %c5_i32_183 : i32 to index
    %c0_190 = arith.constant 0 : index
    %c0_191 = arith.constant 0 : index
    %322 = vector.load %arg14[%321, %c0_190, %c0_191] : memref<8x16x128xbf16, #tpu.memory_space<vmem>>, vector<1x16x128xbf16>
    %323 = vector.shape_cast %322 : vector<1x16x128xbf16> to vector<16x128xbf16>
    %324 = vector.shape_cast %320 : vector<16x128xbf16> to vector<1x16x128xbf16>
    tpu.vector_store %arg14[%321, %c0_190, %c0_191], %324 {strides = array<i32>} : memref<8x16x128xbf16, #tpu.memory_space<vmem>>, vector<1x16x128xbf16>,
    %c7_i32_192 = arith.constant 7 : i32
    %325 = arith.subi %c7_i32_192, %c5_i32_183 : i32
    %326 = arith.index_cast %325 : i32 to index
    %c0_193 = arith.constant 0 : index
    %c0_194 = arith.constant 0 : index
    %327 = vector.load %arg15[%326, %c0_193, %c0_194] : memref<8x16x128xbf16, #tpu.memory_space<vmem>>, vector<1x16x128xbf16>
    %328 = vector.shape_cast %327 : vector<1x16x128xbf16> to vector<16x128xbf16>
    %329 = vector.shape_cast %320 : vector<16x128xbf16> to vector<1x16x128xbf16>
    tpu.vector_store %arg15[%326, %c0_193, %c0_194], %329 {strides = array<i32>} : memref<8x16x128xbf16, #tpu.memory_space<vmem>>, vector<1x16x128xbf16>,
    %c6_i32_195 = arith.constant 6 : i32
    %330 = arith.index_cast %c6_i32_195 : i32 to index
    %c0_196 = arith.constant 0 : index
    %c0_197 = arith.constant 0 : index
    %331 = vector.load %arg13[%330, %c0_196, %c0_197] : memref<8x16x128xf32, #tpu.memory_space<vmem>>, vector<1x16x128xf32>
    %332 = vector.shape_cast %331 : vector<1x16x128xf32> to vector<16x128xf32>
    %c7_i32_198 = arith.constant 7 : i32
    %333 = arith.subi %c7_i32_198, %c6_i32_195 : i32
    %334 = arith.index_cast %333 : i32 to index
    %c0_199 = arith.constant 0 : index
    %c0_200 = arith.constant 0 : index
    %335 = vector.load %arg13[%334, %c0_199, %c0_200] : memref<8x16x128xf32, #tpu.memory_space<vmem>>, vector<1x16x128xf32>
    %336 = vector.shape_cast %335 : vector<1x16x128xf32> to vector<16x128xf32>
    %337 = arith.select %2, %332, %336 : vector<16x128xi1>, vector<16x128xf32>
    %cst_201 = arith.constant dense<0.000000e+00> : vector<16x128xf32>
    %338 = tpu.matmul %320, %202, %cst_201 {dimension_numbers = #tpu.dot_dimension_numbers<[1], [0], [0], [1], [0, 0, 1, 1], [], []>} : vector<16x128xbf16>, vector<128x128xbf16>, vector<16x128xf32> -> vector<16x128xf32>
    %339 = arith.addf %337, %338 : vector<16x128xf32>
    %340 = math.tanh %339 : vector<16x128xf32>
    %341 = arith.truncf %340 : vector<16x128xf32> to vector<16x128xbf16>
    %342 = arith.index_cast %c6_i32_195 : i32 to index
    %c0_202 = arith.constant 0 : index
    %c0_203 = arith.constant 0 : index
    %343 = vector.load %arg14[%342, %c0_202, %c0_203] : memref<8x16x128xbf16, #tpu.memory_space<vmem>>, vector<1x16x128xbf16>
    %344 = vector.shape_cast %343 : vector<1x16x128xbf16> to vector<16x128xbf16>
    %345 = vector.shape_cast %341 : vector<16x128xbf16> to vector<1x16x128xbf16>
    tpu.vector_store %arg14[%342, %c0_202, %c0_203], %345 {strides = array<i32>} : memref<8x16x128xbf16, #tpu.memory_space<vmem>>, vector<1x16x128xbf16>,
    %c7_i32_204 = arith.constant 7 : i32
    %346 = arith.subi %c7_i32_204, %c6_i32_195 : i32
    %347 = arith.index_cast %346 : i32 to index
    %c0_205 = arith.constant 0 : index
    %c0_206 = arith.constant 0 : index
    %348 = vector.load %arg15[%347, %c0_205, %c0_206] : memref<8x16x128xbf16, #tpu.memory_space<vmem>>, vector<1x16x128xbf16>
    %349 = vector.shape_cast %348 : vector<1x16x128xbf16> to vector<16x128xbf16>
    %350 = vector.shape_cast %341 : vector<16x128xbf16> to vector<1x16x128xbf16>
    tpu.vector_store %arg15[%347, %c0_205, %c0_206], %350 {strides = array<i32>} : memref<8x16x128xbf16, #tpu.memory_space<vmem>>, vector<1x16x128xbf16>,
    %c7_i32_207 = arith.constant 7 : i32
    %351 = arith.index_cast %c7_i32_207 : i32 to index
    %c0_208 = arith.constant 0 : index
    %c0_209 = arith.constant 0 : index
    %352 = vector.load %arg13[%351, %c0_208, %c0_209] : memref<8x16x128xf32, #tpu.memory_space<vmem>>, vector<1x16x128xf32>
    %353 = vector.shape_cast %352 : vector<1x16x128xf32> to vector<16x128xf32>
    %c7_i32_210 = arith.constant 7 : i32
    %354 = arith.subi %c7_i32_210, %c7_i32_207 : i32
    %355 = arith.index_cast %354 : i32 to index
    %c0_211 = arith.constant 0 : index
    %c0_212 = arith.constant 0 : index
    %356 = vector.load %arg13[%355, %c0_211, %c0_212] : memref<8x16x128xf32, #tpu.memory_space<vmem>>, vector<1x16x128xf32>
    %357 = vector.shape_cast %356 : vector<1x16x128xf32> to vector<16x128xf32>
    %358 = arith.select %2, %353, %357 : vector<16x128xi1>, vector<16x128xf32>
    %cst_213 = arith.constant dense<0.000000e+00> : vector<16x128xf32>
    %359 = tpu.matmul %341, %202, %cst_213 {dimension_numbers = #tpu.dot_dimension_numbers<[1], [0], [0], [1], [0, 0, 1, 1], [], []>} : vector<16x128xbf16>, vector<128x128xbf16>, vector<16x128xf32> -> vector<16x128xf32>
    %360 = arith.addf %358, %359 : vector<16x128xf32>
    %361 = math.tanh %360 : vector<16x128xf32>
    %362 = arith.truncf %361 : vector<16x128xf32> to vector<16x128xbf16>
    %363 = arith.index_cast %c7_i32_207 : i32 to index
    %c0_214 = arith.constant 0 : index
    %c0_215 = arith.constant 0 : index
    %364 = vector.load %arg14[%363, %c0_214, %c0_215] : memref<8x16x128xbf16, #tpu.memory_space<vmem>>, vector<1x16x128xbf16>
    %365 = vector.shape_cast %364 : vector<1x16x128xbf16> to vector<16x128xbf16>
    %366 = vector.shape_cast %362 : vector<16x128xbf16> to vector<1x16x128xbf16>
    tpu.vector_store %arg14[%363, %c0_214, %c0_215], %366 {strides = array<i32>} : memref<8x16x128xbf16, #tpu.memory_space<vmem>>, vector<1x16x128xbf16>,
    %c7_i32_216 = arith.constant 7 : i32
    %367 = arith.subi %c7_i32_216, %c7_i32_207 : i32
    %368 = arith.index_cast %367 : i32 to index
    %c0_217 = arith.constant 0 : index
    %c0_218 = arith.constant 0 : index
    %369 = vector.load %arg15[%368, %c0_217, %c0_218] : memref<8x16x128xbf16, #tpu.memory_space<vmem>>, vector<1x16x128xbf16>
    %370 = vector.shape_cast %369 : vector<1x16x128xbf16> to vector<16x128xbf16>
    %371 = vector.shape_cast %362 : vector<16x128xbf16> to vector<1x16x128xbf16>
    tpu.vector_store %arg15[%368, %c0_217, %c0_218], %371 {strides = array<i32>} : memref<8x16x128xbf16, #tpu.memory_space<vmem>>, vector<1x16x128xbf16>,
    %c8_i32_219 = arith.constant 8 : i32
    %c0_220 = arith.constant 0 : index
    %c0_221 = arith.constant 0 : index
    %c0_222 = arith.constant 0 : index
    %372 = vector.load %arg14[%c0_220, %c0_221, %c0_222] : memref<8x16x128xbf16, #tpu.memory_space<vmem>>, vector<8x16x128xbf16>
    %c0_223 = arith.constant 0 : index
    %c0_224 = arith.constant 0 : index
    %c0_225 = arith.constant 0 : index
    %373 = vector.load %arg15[%c0_223, %c0_224, %c0_225] : memref<8x16x128xbf16, #tpu.memory_space<vmem>>, vector<8x16x128xbf16>
    %374 = arith.select %5, %372, %373 : vector<8x16x128xi1>, vector<8x16x128xbf16>
    %375 = arith.extf %374 : vector<8x16x128xbf16> to vector<8x16x128xf32>
    %c0_226 = arith.constant 0 : index
    %c0_227 = arith.constant 0 : index
    %376 = vector.load %arg10[%c0_226, %c0_227] : memref<1x128xbf16, #tpu.memory_space<vmem>>, vector<1x128xbf16>
    %377 = arith.extf %376 : vector<1x128xbf16> to vector<1x128xf32>
    %378 = vector.shape_cast %377 : vector<1x128xf32> to vector<1x1x128xf32>
    %379 = vector.broadcast %378 : vector<1x1x128xf32> to vector<8x16x128xf32>
    %380 = arith.mulf %375, %379 : vector<8x16x128xf32>
    %cst_228 = arith.constant dense<0.000000e+00> : vector<8x16xf32>
    %381 = vector.multi_reduction <add>, %380, %cst_228 [2] : vector<8x16x128xf32> to vector<8x16xf32>
    %c0_229 = arith.constant 0 : index
    %c0_230 = arith.constant 0 : index
    %382 = vector.load %arg11[%c0_229, %c0_230] : memref<1x1xf32, #tpu.memory_space<vmem>>, vector<1x1xf32>
    %383 = vector.broadcast %382 : vector<1x1xf32> to vector<8x16xf32>
    %384 = arith.addf %381, %383 : vector<8x16xf32>
    %385 = arith.negf %384 : vector<8x16xf32>
    %386 = math.exp %385 : vector<8x16xf32>
    %cst_231 = arith.constant 1.000000e+00 : f32
    %387 = vector.broadcast %cst_231 : f32 to vector<8x16xf32>
    %388 = arith.addf %387, %386 : vector<8x16xf32>
    %389 = arith.divf %387, %388 : vector<8x16xf32>
    %390 = tpu.transpose %389, [1, 0] : vector<8x16xf32> -> vector<16x8xf32>
    %c0_232 = arith.constant 0 : index
    %c0_233 = arith.constant 0 : index
    %391 = vector.load %arg12[%c0_232, %c0_233] : memref<16x8xf32, #tpu.memory_space<vmem>>, vector<16x8xf32>
    tpu.vector_store %arg12[%c0_232, %c0_233], %390 {strides = array<i32>} : memref<16x8xf32, #tpu.memory_space<vmem>>, vector<16x8xf32>,
    return
  }
  func.func @transform_0(%arg0: i32) -> (i32, i32, i32) {
    %c0_i32 = arith.constant 0 : i32
    %c0_i32_0 = arith.constant 0 : i32
    %c0_i32_1 = arith.constant 0 : i32
    return %c0_i32, %arg0, %c0_i32_0 : i32, i32, i32
  }
  func.func @transform_1(%arg0: i32) -> (i32, i32) {
    %c0_i32 = arith.constant 0 : i32
    %c0_i32_0 = arith.constant 0 : i32
    %c0_i32_1 = arith.constant 0 : i32
    return %c0_i32, %c0_i32_0 : i32, i32
  }
  func.func @transform_2(%arg0: i32) -> (i32, i32) {
    %c0_i32 = arith.constant 0 : i32
    %c0_i32_0 = arith.constant 0 : i32
    %c0_i32_1 = arith.constant 0 : i32
    return %c0_i32, %c0_i32_0 : i32, i32
  }
  func.func @transform_3(%arg0: i32) -> (i32, i32) {
    %c0_i32 = arith.constant 0 : i32
    %c0_i32_0 = arith.constant 0 : i32
    %c0_i32_1 = arith.constant 0 : i32
    return %c0_i32, %c0_i32_0 : i32, i32
  }
  func.func @transform_4(%arg0: i32) -> (i32, i32) {
    %c0_i32 = arith.constant 0 : i32
    %c0_i32_0 = arith.constant 0 : i32
    %c0_i32_1 = arith.constant 0 : i32
    return %c0_i32, %c0_i32_0 : i32, i32
  }
  func.func @transform_5(%arg0: i32) -> (i32, i32) {
    %c0_i32 = arith.constant 0 : i32
    %c0_i32_0 = arith.constant 0 : i32
    %c0_i32_1 = arith.constant 0 : i32
    return %c0_i32, %c0_i32_0 : i32, i32
  }
  func.func @transform_6(%arg0: i32) -> (i32, i32) {
    %c0_i32 = arith.constant 0 : i32
    %c0_i32_0 = arith.constant 0 : i32
    %c0_i32_1 = arith.constant 0 : i32
    return %c0_i32, %c0_i32_0 : i32, i32
  }
  func.func @transform_7(%arg0: i32) -> (i32, i32) {
    %c0_i32 = arith.constant 0 : i32
    %c0_i32_0 = arith.constant 0 : i32
    %c0_i32_1 = arith.constant 0 : i32
    return %c0_i32, %c0_i32_0 : i32, i32
  }
  func.func @transform_8(%arg0: i32) -> (i32, i32) {
    %c0_i32 = arith.constant 0 : i32
    %c0_i32_0 = arith.constant 0 : i32
    %c0_i32_1 = arith.constant 0 : i32
    return %c0_i32, %c0_i32_0 : i32, i32
  }
  func.func @transform_9(%arg0: i32) -> (i32, i32) {
    %c0_i32 = arith.constant 0 : i32
    %c0_i32_0 = arith.constant 0 : i32
    %c0_i32_1 = arith.constant 0 : i32
    return %c0_i32, %c0_i32_0 : i32, i32
  }
  func.func @transform_10(%arg0: i32) -> (i32, i32) {
    %c0_i32 = arith.constant 0 : i32
    %c0_i32_0 = arith.constant 0 : i32
    %c0_i32_1 = arith.constant 0 : i32
    return %c0_i32, %c0_i32_0 : i32, i32
  }
  func.func @transform_11(%arg0: i32) -> (i32, i32) {
    %c0_i32 = arith.constant 0 : i32
    %c0_i32_0 = arith.constant 0 : i32
    return %arg0, %c0_i32 : i32, i32
  }
}

module attributes {stable_mosaic.version = 11 : i64} {
  func.func @kernel(%arg0: i32, %arg1: memref<8x16x32xbf16, #tpu.memory_space<vmem>>, %arg2: memref<32x128xbf16, #tpu.memory_space<vmem>>, %arg3: memref<1x128xf32, #tpu.memory_space<vmem>>, %arg4: memref<128x128xbf16, #tpu.memory_space<vmem>>, %arg5: memref<128x128xbf16, #tpu.memory_space<vmem>>, %arg6: memref<1x128xf32, #tpu.memory_space<vmem>>, %arg7: memref<128x128xbf16, #tpu.memory_space<vmem>>, %arg8: memref<128x128xbf16, #tpu.memory_space<vmem>>, %arg9: memref<1x128xf32, #tpu.memory_space<vmem>>, %arg10: memref<1x128xbf16, #tpu.memory_space<vmem>>, %arg11: memref<1x1xf32, #tpu.memory_space<vmem>>, %arg12: memref<16x8xf32, #tpu.memory_space<vmem>>, %arg13: memref<8x16x128xf32, #tpu.memory_space<vmem>>, %arg14: memref<8x16x128xbf16, #tpu.memory_space<vmem>>, %arg15: memref<8x16x128xbf16, #tpu.memory_space<vmem>>) attributes {dimension_semantics = [#tpu.dimension_semantics<parallel>], iteration_bounds = array<i64: 2>, scalar_prefetch = 0 : i64, scratch_operands = 3 : i64, tpu.core_type = #tpu.core_type<tc>, window_params = [{transform_indices = @transform_0, window_bounds = array<i64: 8, 16, 32>}, {pipeline_mode = #tpu.pipeline_mode<synchronous>, transform_indices = @transform_1, window_bounds = array<i64: 32, 128>}, {pipeline_mode = #tpu.pipeline_mode<synchronous>, transform_indices = @transform_2, window_bounds = array<i64: 1, 128>}, {pipeline_mode = #tpu.pipeline_mode<synchronous>, transform_indices = @transform_3, window_bounds = array<i64: 128, 128>}, {pipeline_mode = #tpu.pipeline_mode<synchronous>, transform_indices = @transform_4, window_bounds = array<i64: 128, 128>}, {pipeline_mode = #tpu.pipeline_mode<synchronous>, transform_indices = @transform_5, window_bounds = array<i64: 1, 128>}, {pipeline_mode = #tpu.pipeline_mode<synchronous>, transform_indices = @transform_6, window_bounds = array<i64: 128, 128>}, {pipeline_mode = #tpu.pipeline_mode<synchronous>, transform_indices = @transform_7, window_bounds = array<i64: 128, 128>}, {pipeline_mode = #tpu.pipeline_mode<synchronous>, transform_indices = @transform_8, window_bounds = array<i64: 1, 128>}, {pipeline_mode = #tpu.pipeline_mode<synchronous>, transform_indices = @transform_9, window_bounds = array<i64: 1, 128>}, {pipeline_mode = #tpu.pipeline_mode<synchronous>, transform_indices = @transform_10, window_bounds = array<i64: 1, 1>}, {transform_indices = @transform_11, window_bounds = array<i64: 16, 8>}]} {
    %0 = tpu.iota {dimensions = array<i32: 1>} : vector<16x128xi32>
    %c32_i32 = arith.constant 32 : i32
    %1 = vector.broadcast %c32_i32 : i32 to vector<16x128xi32>
    %2 = arith.cmpi slt, %0, %1 : vector<16x128xi32>
    %3 = tpu.iota {dimensions = array<i32: 2>} : vector<8x16x128xi32>
    %c32_i32_0 = arith.constant 32 : i32
    %4 = vector.broadcast %c32_i32_0 : i32 to vector<8x16x128xi32>
    %5 = arith.cmpi slt, %3, %4 : vector<8x16x128xi32>
    %c0 = arith.constant 0 : index
    %c0_1 = arith.constant 0 : index
    %c0_2 = arith.constant 0 : index
    %6 = vector.load %arg1[%c0, %c0_1, %c0_2] : memref<8x16x32xbf16, #tpu.memory_space<vmem>>, vector<8x16x32xbf16>
    %7 = vector.shape_cast %6 : vector<8x16x32xbf16> to vector<128x32xbf16>
    %c0_3 = arith.constant 0 : index
    %c0_4 = arith.constant 0 : index
    %8 = vector.load %arg2[%c0_3, %c0_4] : memref<32x128xbf16, #tpu.memory_space<vmem>>, vector<32x128xbf16>
    %cst = arith.constant dense<0.000000e+00> : vector<128x128xf32>
    %9 = tpu.matmul %7, %8, %cst {dimension_numbers = #tpu.dot_dimension_numbers<[1], [0], [0], [1], [0, 0, 1, 1], [], []>} : vector<128x32xbf16>, vector<32x128xbf16>, vector<128x128xf32> -> vector<128x128xf32>
    %c0_5 = arith.constant 0 : index
    %c0_6 = arith.constant 0 : index
    %10 = vector.load %arg3[%c0_5, %c0_6] : memref<1x128xf32, #tpu.memory_space<vmem>>, vector<1x128xf32>
    %11 = vector.broadcast %10 : vector<1x128xf32> to vector<128x128xf32>
    %12 = arith.addf %9, %11 : vector<128x128xf32>
    %13 = arith.truncf %12 : vector<128x128xf32> to vector<128x128xbf16>
    %c0_7 = arith.constant 0 : index
    %c0_8 = arith.constant 0 : index
    %14 = vector.load %arg4[%c0_7, %c0_8] : memref<128x128xbf16, #tpu.memory_space<vmem>>, vector<128x128xbf16>
    %cst_9 = arith.constant dense<0.000000e+00> : vector<128x128xf32>
    %15 = tpu.matmul %13, %14, %cst_9 {dimension_numbers = #tpu.dot_dimension_numbers<[1], [0], [0], [1], [0, 0, 1, 1], [], []>} : vector<128x128xbf16>, vector<128x128xbf16>, vector<128x128xf32> -> vector<128x128xf32>
    %c0_10 = arith.constant 0 : index
    %c0_11 = arith.constant 0 : index
    %16 = vector.load %arg6[%c0_10, %c0_11] : memref<1x128xf32, #tpu.memory_space<vmem>>, vector<1x128xf32>
    %17 = vector.broadcast %16 : vector<1x128xf32> to vector<128x128xf32>
    %18 = arith.addf %15, %17 : vector<128x128xf32>
    %19 = vector.shape_cast %18 : vector<128x128xf32> to vector<8x16x128xf32>
    %c0_12 = arith.constant 0 : index
    %c0_13 = arith.constant 0 : index
    %c0_14 = arith.constant 0 : index
    %20 = vector.load %arg13[%c0_12, %c0_13, %c0_14] : memref<8x16x128xf32, #tpu.memory_space<vmem>>, vector<8x16x128xf32>
    tpu.vector_store %arg13[%c0_12, %c0_13, %c0_14], %19 {strides = array<i32>} : memref<8x16x128xf32, #tpu.memory_space<vmem>>, vector<8x16x128xf32>,
    %c0_15 = arith.constant 0 : index
    %c0_16 = arith.constant 0 : index
    %21 = vector.load %arg5[%c0_15, %c0_16] : memref<128x128xbf16, #tpu.memory_space<vmem>>, vector<128x128xbf16>
    %cst_17 = arith.constant 0.000000e+00 : bf16
    %22 = vector.broadcast %cst_17 : bf16 to vector<16x128xbf16>
    %c0_i32 = arith.constant 0 : i32
    %23 = arith.index_cast %c0_i32 : i32 to index
    %c0_18 = arith.constant 0 : index
    %c0_19 = arith.constant 0 : index
    %24 = vector.load %arg13[%23, %c0_18, %c0_19] : memref<8x16x128xf32, #tpu.memory_space<vmem>>, vector<1x16x128xf32>
    %25 = vector.shape_cast %24 : vector<1x16x128xf32> to vector<16x128xf32>
    %c7_i32 = arith.constant 7 : i32
    %26 = arith.subi %c7_i32, %c0_i32 : i32
    %27 = arith.index_cast %26 : i32 to index
    %c0_20 = arith.constant 0 : index
    %c0_21 = arith.constant 0 : index
    %28 = vector.load %arg13[%27, %c0_20, %c0_21] : memref<8x16x128xf32, #tpu.memory_space<vmem>>, vector<1x16x128xf32>
    %29 = vector.shape_cast %28 : vector<1x16x128xf32> to vector<16x128xf32>
    %30 = arith.select %2, %25, %29 : vector<16x128xi1>, vector<16x128xf32>
    %cst_22 = arith.constant dense<0.000000e+00> : vector<16x128xf32>
    %31 = tpu.matmul %22, %21, %cst_22 {dimension_numbers = #tpu.dot_dimension_numbers<[1], [0], [0], [1], [0, 0, 1, 1], [], []>} : vector<16x128xbf16>, vector<128x128xbf16>, vector<16x128xf32> -> vector<16x128xf32>
    %32 = arith.addf %30, %31 : vector<16x128xf32>
    %33 = math.tanh %32 : vector<16x128xf32>
    %34 = arith.truncf %33 : vector<16x128xf32> to vector<16x128xbf16>
    %35 = arith.index_cast %c0_i32 : i32 to index
    %c0_23 = arith.constant 0 : index
    %c0_24 = arith.constant 0 : index
    %36 = vector.load %arg14[%35, %c0_23, %c0_24] : memref<8x16x128xbf16, #tpu.memory_space<vmem>>, vector<1x16x128xbf16>
    %37 = vector.shape_cast %36 : vector<1x16x128xbf16> to vector<16x128xbf16>
    %38 = vector.shape_cast %34 : vector<16x128xbf16> to vector<1x16x128xbf16>
    tpu.vector_store %arg14[%35, %c0_23, %c0_24], %38 {strides = array<i32>} : memref<8x16x128xbf16, #tpu.memory_space<vmem>>, vector<1x16x128xbf16>,
    %c7_i32_25 = arith.constant 7 : i32
    %39 = arith.subi %c7_i32_25, %c0_i32 : i32
    %40 = arith.index_cast %39 : i32 to index
    %c0_26 = arith.constant 0 : index
    %c0_27 = arith.constant 0 : index
    %41 = vector.load %arg15[%40, %c0_26, %c0_27] : memref<8x16x128xbf16, #tpu.memory_space<vmem>>, vector<1x16x128xbf16>
    %42 = vector.shape_cast %41 : vector<1x16x128xbf16> to vector<16x128xbf16>
    %43 = vector.shape_cast %34 : vector<16x128xbf16> to vector<1x16x128xbf16>
    tpu.vector_store %arg15[%40, %c0_26, %c0_27], %43 {strides = array<i32>} : memref<8x16x128xbf16, #tpu.memory_space<vmem>>, vector<1x16x128xbf16>,
    %c1_i32 = arith.constant 1 : i32
    %44 = arith.index_cast %c1_i32 : i32 to index
    %c0_28 = arith.constant 0 : index
    %c0_29 = arith.constant 0 : index
    %45 = vector.load %arg13[%44, %c0_28, %c0_29] : memref<8x16x128xf32, #tpu.memory_space<vmem>>, vector<1x16x128xf32>
    %46 = vector.shape_cast %45 : vector<1x16x128xf32> to vector<16x128xf32>
    %c7_i32_30 = arith.constant 7 : i32
    %47 = arith.subi %c7_i32_30, %c1_i32 : i32
    %48 = arith.index_cast %47 : i32 to index
    %c0_31 = arith.constant 0 : index
    %c0_32 = arith.constant 0 : index
    %49 = vector.load %arg13[%48, %c0_31, %c0_32] : memref<8x16x128xf32, #tpu.memory_space<vmem>>, vector<1x16x128xf32>
    %50 = vector.shape_cast %49 : vector<1x16x128xf32> to vector<16x128xf32>
    %51 = arith.select %2, %46, %50 : vector<16x128xi1>, vector<16x128xf32>
    %cst_33 = arith.constant dense<0.000000e+00> : vector<16x128xf32>
    %52 = tpu.matmul %34, %21, %cst_33 {dimension_numbers = #tpu.dot_dimension_numbers<[1], [0], [0], [1], [0, 0, 1, 1], [], []>} : vector<16x128xbf16>, vector<128x128xbf16>, vector<16x128xf32> -> vector<16x128xf32>
    %53 = arith.addf %51, %52 : vector<16x128xf32>
    %54 = math.tanh %53 : vector<16x128xf32>
    %55 = arith.truncf %54 : vector<16x128xf32> to vector<16x128xbf16>
    %56 = arith.index_cast %c1_i32 : i32 to index
    %c0_34 = arith.constant 0 : index
    %c0_35 = arith.constant 0 : index
    %57 = vector.load %arg14[%56, %c0_34, %c0_35] : memref<8x16x128xbf16, #tpu.memory_space<vmem>>, vector<1x16x128xbf16>
    %58 = vector.shape_cast %57 : vector<1x16x128xbf16> to vector<16x128xbf16>
    %59 = vector.shape_cast %55 : vector<16x128xbf16> to vector<1x16x128xbf16>
    tpu.vector_store %arg14[%56, %c0_34, %c0_35], %59 {strides = array<i32>} : memref<8x16x128xbf16, #tpu.memory_space<vmem>>, vector<1x16x128xbf16>,
    %c7_i32_36 = arith.constant 7 : i32
    %60 = arith.subi %c7_i32_36, %c1_i32 : i32
    %61 = arith.index_cast %60 : i32 to index
    %c0_37 = arith.constant 0 : index
    %c0_38 = arith.constant 0 : index
    %62 = vector.load %arg15[%61, %c0_37, %c0_38] : memref<8x16x128xbf16, #tpu.memory_space<vmem>>, vector<1x16x128xbf16>
    %63 = vector.shape_cast %62 : vector<1x16x128xbf16> to vector<16x128xbf16>
    %64 = vector.shape_cast %55 : vector<16x128xbf16> to vector<1x16x128xbf16>
    tpu.vector_store %arg15[%61, %c0_37, %c0_38], %64 {strides = array<i32>} : memref<8x16x128xbf16, #tpu.memory_space<vmem>>, vector<1x16x128xbf16>,
    %c2_i32 = arith.constant 2 : i32
    %65 = arith.index_cast %c2_i32 : i32 to index
    %c0_39 = arith.constant 0 : index
    %c0_40 = arith.constant 0 : index
    %66 = vector.load %arg13[%65, %c0_39, %c0_40] : memref<8x16x128xf32, #tpu.memory_space<vmem>>, vector<1x16x128xf32>
    %67 = vector.shape_cast %66 : vector<1x16x128xf32> to vector<16x128xf32>
    %c7_i32_41 = arith.constant 7 : i32
    %68 = arith.subi %c7_i32_41, %c2_i32 : i32
    %69 = arith.index_cast %68 : i32 to index
    %c0_42 = arith.constant 0 : index
    %c0_43 = arith.constant 0 : index
    %70 = vector.load %arg13[%69, %c0_42, %c0_43] : memref<8x16x128xf32, #tpu.memory_space<vmem>>, vector<1x16x128xf32>
    %71 = vector.shape_cast %70 : vector<1x16x128xf32> to vector<16x128xf32>
    %72 = arith.select %2, %67, %71 : vector<16x128xi1>, vector<16x128xf32>
    %cst_44 = arith.constant dense<0.000000e+00> : vector<16x128xf32>
    %73 = tpu.matmul %55, %21, %cst_44 {dimension_numbers = #tpu.dot_dimension_numbers<[1], [0], [0], [1], [0, 0, 1, 1], [], []>} : vector<16x128xbf16>, vector<128x128xbf16>, vector<16x128xf32> -> vector<16x128xf32>
    %74 = arith.addf %72, %73 : vector<16x128xf32>
    %75 = math.tanh %74 : vector<16x128xf32>
    %76 = arith.truncf %75 : vector<16x128xf32> to vector<16x128xbf16>
    %77 = arith.index_cast %c2_i32 : i32 to index
    %c0_45 = arith.constant 0 : index
    %c0_46 = arith.constant 0 : index
    %78 = vector.load %arg14[%77, %c0_45, %c0_46] : memref<8x16x128xbf16, #tpu.memory_space<vmem>>, vector<1x16x128xbf16>
    %79 = vector.shape_cast %78 : vector<1x16x128xbf16> to vector<16x128xbf16>
    %80 = vector.shape_cast %76 : vector<16x128xbf16> to vector<1x16x128xbf16>
    tpu.vector_store %arg14[%77, %c0_45, %c0_46], %80 {strides = array<i32>} : memref<8x16x128xbf16, #tpu.memory_space<vmem>>, vector<1x16x128xbf16>,
    %c7_i32_47 = arith.constant 7 : i32
    %81 = arith.subi %c7_i32_47, %c2_i32 : i32
    %82 = arith.index_cast %81 : i32 to index
    %c0_48 = arith.constant 0 : index
    %c0_49 = arith.constant 0 : index
    %83 = vector.load %arg15[%82, %c0_48, %c0_49] : memref<8x16x128xbf16, #tpu.memory_space<vmem>>, vector<1x16x128xbf16>
    %84 = vector.shape_cast %83 : vector<1x16x128xbf16> to vector<16x128xbf16>
    %85 = vector.shape_cast %76 : vector<16x128xbf16> to vector<1x16x128xbf16>
    tpu.vector_store %arg15[%82, %c0_48, %c0_49], %85 {strides = array<i32>} : memref<8x16x128xbf16, #tpu.memory_space<vmem>>, vector<1x16x128xbf16>,
    %c3_i32 = arith.constant 3 : i32
    %86 = arith.index_cast %c3_i32 : i32 to index
    %c0_50 = arith.constant 0 : index
    %c0_51 = arith.constant 0 : index
    %87 = vector.load %arg13[%86, %c0_50, %c0_51] : memref<8x16x128xf32, #tpu.memory_space<vmem>>, vector<1x16x128xf32>
    %88 = vector.shape_cast %87 : vector<1x16x128xf32> to vector<16x128xf32>
    %c7_i32_52 = arith.constant 7 : i32
    %89 = arith.subi %c7_i32_52, %c3_i32 : i32
    %90 = arith.index_cast %89 : i32 to index
    %c0_53 = arith.constant 0 : index
    %c0_54 = arith.constant 0 : index
    %91 = vector.load %arg13[%90, %c0_53, %c0_54] : memref<8x16x128xf32, #tpu.memory_space<vmem>>, vector<1x16x128xf32>
    %92 = vector.shape_cast %91 : vector<1x16x128xf32> to vector<16x128xf32>
    %93 = arith.select %2, %88, %92 : vector<16x128xi1>, vector<16x128xf32>
    %cst_55 = arith.constant dense<0.000000e+00> : vector<16x128xf32>
    %94 = tpu.matmul %76, %21, %cst_55 {dimension_numbers = #tpu.dot_dimension_numbers<[1], [0], [0], [1], [0, 0, 1, 1], [], []>} : vector<16x128xbf16>, vector<128x128xbf16>, vector<16x128xf32> -> vector<16x128xf32>
    %95 = arith.addf %93, %94 : vector<16x128xf32>
    %96 = math.tanh %95 : vector<16x128xf32>
    %97 = arith.truncf %96 : vector<16x128xf32> to vector<16x128xbf16>
    %98 = arith.index_cast %c3_i32 : i32 to index
    %c0_56 = arith.constant 0 : index
    %c0_57 = arith.constant 0 : index
    %99 = vector.load %arg14[%98, %c0_56, %c0_57] : memref<8x16x128xbf16, #tpu.memory_space<vmem>>, vector<1x16x128xbf16>
    %100 = vector.shape_cast %99 : vector<1x16x128xbf16> to vector<16x128xbf16>
    %101 = vector.shape_cast %97 : vector<16x128xbf16> to vector<1x16x128xbf16>
    tpu.vector_store %arg14[%98, %c0_56, %c0_57], %101 {strides = array<i32>} : memref<8x16x128xbf16, #tpu.memory_space<vmem>>, vector<1x16x128xbf16>,
    %c7_i32_58 = arith.constant 7 : i32
    %102 = arith.subi %c7_i32_58, %c3_i32 : i32
    %103 = arith.index_cast %102 : i32 to index
    %c0_59 = arith.constant 0 : index
    %c0_60 = arith.constant 0 : index
    %104 = vector.load %arg15[%103, %c0_59, %c0_60] : memref<8x16x128xbf16, #tpu.memory_space<vmem>>, vector<1x16x128xbf16>
    %105 = vector.shape_cast %104 : vector<1x16x128xbf16> to vector<16x128xbf16>
    %106 = vector.shape_cast %97 : vector<16x128xbf16> to vector<1x16x128xbf16>
    tpu.vector_store %arg15[%103, %c0_59, %c0_60], %106 {strides = array<i32>} : memref<8x16x128xbf16, #tpu.memory_space<vmem>>, vector<1x16x128xbf16>,
    %c4_i32 = arith.constant 4 : i32
    %107 = arith.index_cast %c4_i32 : i32 to index
    %c0_61 = arith.constant 0 : index
    %c0_62 = arith.constant 0 : index
    %108 = vector.load %arg13[%107, %c0_61, %c0_62] : memref<8x16x128xf32, #tpu.memory_space<vmem>>, vector<1x16x128xf32>
    %109 = vector.shape_cast %108 : vector<1x16x128xf32> to vector<16x128xf32>
    %c7_i32_63 = arith.constant 7 : i32
    %110 = arith.subi %c7_i32_63, %c4_i32 : i32
    %111 = arith.index_cast %110 : i32 to index
    %c0_64 = arith.constant 0 : index
    %c0_65 = arith.constant 0 : index
    %112 = vector.load %arg13[%111, %c0_64, %c0_65] : memref<8x16x128xf32, #tpu.memory_space<vmem>>, vector<1x16x128xf32>
    %113 = vector.shape_cast %112 : vector<1x16x128xf32> to vector<16x128xf32>
    %114 = arith.select %2, %109, %113 : vector<16x128xi1>, vector<16x128xf32>
    %cst_66 = arith.constant dense<0.000000e+00> : vector<16x128xf32>
    %115 = tpu.matmul %97, %21, %cst_66 {dimension_numbers = #tpu.dot_dimension_numbers<[1], [0], [0], [1], [0, 0, 1, 1], [], []>} : vector<16x128xbf16>, vector<128x128xbf16>, vector<16x128xf32> -> vector<16x128xf32>
    %116 = arith.addf %114, %115 : vector<16x128xf32>
    %117 = math.tanh %116 : vector<16x128xf32>
    %118 = arith.truncf %117 : vector<16x128xf32> to vector<16x128xbf16>
    %119 = arith.index_cast %c4_i32 : i32 to index
    %c0_67 = arith.constant 0 : index
    %c0_68 = arith.constant 0 : index
    %120 = vector.load %arg14[%119, %c0_67, %c0_68] : memref<8x16x128xbf16, #tpu.memory_space<vmem>>, vector<1x16x128xbf16>
    %121 = vector.shape_cast %120 : vector<1x16x128xbf16> to vector<16x128xbf16>
    %122 = vector.shape_cast %118 : vector<16x128xbf16> to vector<1x16x128xbf16>
    tpu.vector_store %arg14[%119, %c0_67, %c0_68], %122 {strides = array<i32>} : memref<8x16x128xbf16, #tpu.memory_space<vmem>>, vector<1x16x128xbf16>,
    %c7_i32_69 = arith.constant 7 : i32
    %123 = arith.subi %c7_i32_69, %c4_i32 : i32
    %124 = arith.index_cast %123 : i32 to index
    %c0_70 = arith.constant 0 : index
    %c0_71 = arith.constant 0 : index
    %125 = vector.load %arg15[%124, %c0_70, %c0_71] : memref<8x16x128xbf16, #tpu.memory_space<vmem>>, vector<1x16x128xbf16>
    %126 = vector.shape_cast %125 : vector<1x16x128xbf16> to vector<16x128xbf16>
    %127 = vector.shape_cast %118 : vector<16x128xbf16> to vector<1x16x128xbf16>
    tpu.vector_store %arg15[%124, %c0_70, %c0_71], %127 {strides = array<i32>} : memref<8x16x128xbf16, #tpu.memory_space<vmem>>, vector<1x16x128xbf16>,
    %c5_i32 = arith.constant 5 : i32
    %128 = arith.index_cast %c5_i32 : i32 to index
    %c0_72 = arith.constant 0 : index
    %c0_73 = arith.constant 0 : index
    %129 = vector.load %arg13[%128, %c0_72, %c0_73] : memref<8x16x128xf32, #tpu.memory_space<vmem>>, vector<1x16x128xf32>
    %130 = vector.shape_cast %129 : vector<1x16x128xf32> to vector<16x128xf32>
    %c7_i32_74 = arith.constant 7 : i32
    %131 = arith.subi %c7_i32_74, %c5_i32 : i32
    %132 = arith.index_cast %131 : i32 to index
    %c0_75 = arith.constant 0 : index
    %c0_76 = arith.constant 0 : index
    %133 = vector.load %arg13[%132, %c0_75, %c0_76] : memref<8x16x128xf32, #tpu.memory_space<vmem>>, vector<1x16x128xf32>
    %134 = vector.shape_cast %133 : vector<1x16x128xf32> to vector<16x128xf32>
    %135 = arith.select %2, %130, %134 : vector<16x128xi1>, vector<16x128xf32>
    %cst_77 = arith.constant dense<0.000000e+00> : vector<16x128xf32>
    %136 = tpu.matmul %118, %21, %cst_77 {dimension_numbers = #tpu.dot_dimension_numbers<[1], [0], [0], [1], [0, 0, 1, 1], [], []>} : vector<16x128xbf16>, vector<128x128xbf16>, vector<16x128xf32> -> vector<16x128xf32>
    %137 = arith.addf %135, %136 : vector<16x128xf32>
    %138 = math.tanh %137 : vector<16x128xf32>
    %139 = arith.truncf %138 : vector<16x128xf32> to vector<16x128xbf16>
    %140 = arith.index_cast %c5_i32 : i32 to index
    %c0_78 = arith.constant 0 : index
    %c0_79 = arith.constant 0 : index
    %141 = vector.load %arg14[%140, %c0_78, %c0_79] : memref<8x16x128xbf16, #tpu.memory_space<vmem>>, vector<1x16x128xbf16>
    %142 = vector.shape_cast %141 : vector<1x16x128xbf16> to vector<16x128xbf16>
    %143 = vector.shape_cast %139 : vector<16x128xbf16> to vector<1x16x128xbf16>
    tpu.vector_store %arg14[%140, %c0_78, %c0_79], %143 {strides = array<i32>} : memref<8x16x128xbf16, #tpu.memory_space<vmem>>, vector<1x16x128xbf16>,
    %c7_i32_80 = arith.constant 7 : i32
    %144 = arith.subi %c7_i32_80, %c5_i32 : i32
    %145 = arith.index_cast %144 : i32 to index
    %c0_81 = arith.constant 0 : index
    %c0_82 = arith.constant 0 : index
    %146 = vector.load %arg15[%145, %c0_81, %c0_82] : memref<8x16x128xbf16, #tpu.memory_space<vmem>>, vector<1x16x128xbf16>
    %147 = vector.shape_cast %146 : vector<1x16x128xbf16> to vector<16x128xbf16>
    %148 = vector.shape_cast %139 : vector<16x128xbf16> to vector<1x16x128xbf16>
    tpu.vector_store %arg15[%145, %c0_81, %c0_82], %148 {strides = array<i32>} : memref<8x16x128xbf16, #tpu.memory_space<vmem>>, vector<1x16x128xbf16>,
    %c6_i32 = arith.constant 6 : i32
    %149 = arith.index_cast %c6_i32 : i32 to index
    %c0_83 = arith.constant 0 : index
    %c0_84 = arith.constant 0 : index
    %150 = vector.load %arg13[%149, %c0_83, %c0_84] : memref<8x16x128xf32, #tpu.memory_space<vmem>>, vector<1x16x128xf32>
    %151 = vector.shape_cast %150 : vector<1x16x128xf32> to vector<16x128xf32>
    %c7_i32_85 = arith.constant 7 : i32
    %152 = arith.subi %c7_i32_85, %c6_i32 : i32
    %153 = arith.index_cast %152 : i32 to index
    %c0_86 = arith.constant 0 : index
    %c0_87 = arith.constant 0 : index
    %154 = vector.load %arg13[%153, %c0_86, %c0_87] : memref<8x16x128xf32, #tpu.memory_space<vmem>>, vector<1x16x128xf32>
    %155 = vector.shape_cast %154 : vector<1x16x128xf32> to vector<16x128xf32>
    %156 = arith.select %2, %151, %155 : vector<16x128xi1>, vector<16x128xf32>
    %cst_88 = arith.constant dense<0.000000e+00> : vector<16x128xf32>
    %157 = tpu.matmul %139, %21, %cst_88 {dimension_numbers = #tpu.dot_dimension_numbers<[1], [0], [0], [1], [0, 0, 1, 1], [], []>} : vector<16x128xbf16>, vector<128x128xbf16>, vector<16x128xf32> -> vector<16x128xf32>
    %158 = arith.addf %156, %157 : vector<16x128xf32>
    %159 = math.tanh %158 : vector<16x128xf32>
    %160 = arith.truncf %159 : vector<16x128xf32> to vector<16x128xbf16>
    %161 = arith.index_cast %c6_i32 : i32 to index
    %c0_89 = arith.constant 0 : index
    %c0_90 = arith.constant 0 : index
    %162 = vector.load %arg14[%161, %c0_89, %c0_90] : memref<8x16x128xbf16, #tpu.memory_space<vmem>>, vector<1x16x128xbf16>
    %163 = vector.shape_cast %162 : vector<1x16x128xbf16> to vector<16x128xbf16>
    %164 = vector.shape_cast %160 : vector<16x128xbf16> to vector<1x16x128xbf16>
    tpu.vector_store %arg14[%161, %c0_89, %c0_90], %164 {strides = array<i32>} : memref<8x16x128xbf16, #tpu.memory_space<vmem>>, vector<1x16x128xbf16>,
    %c7_i32_91 = arith.constant 7 : i32
    %165 = arith.subi %c7_i32_91, %c6_i32 : i32
    %166 = arith.index_cast %165 : i32 to index
    %c0_92 = arith.constant 0 : index
    %c0_93 = arith.constant 0 : index
    %167 = vector.load %arg15[%166, %c0_92, %c0_93] : memref<8x16x128xbf16, #tpu.memory_space<vmem>>, vector<1x16x128xbf16>
    %168 = vector.shape_cast %167 : vector<1x16x128xbf16> to vector<16x128xbf16>
    %169 = vector.shape_cast %160 : vector<16x128xbf16> to vector<1x16x128xbf16>
    tpu.vector_store %arg15[%166, %c0_92, %c0_93], %169 {strides = array<i32>} : memref<8x16x128xbf16, #tpu.memory_space<vmem>>, vector<1x16x128xbf16>,
    %c7_i32_94 = arith.constant 7 : i32
    %170 = arith.index_cast %c7_i32_94 : i32 to index
    %c0_95 = arith.constant 0 : index
    %c0_96 = arith.constant 0 : index
    %171 = vector.load %arg13[%170, %c0_95, %c0_96] : memref<8x16x128xf32, #tpu.memory_space<vmem>>, vector<1x16x128xf32>
    %172 = vector.shape_cast %171 : vector<1x16x128xf32> to vector<16x128xf32>
    %c7_i32_97 = arith.constant 7 : i32
    %173 = arith.subi %c7_i32_97, %c7_i32_94 : i32
    %174 = arith.index_cast %173 : i32 to index
    %c0_98 = arith.constant 0 : index
    %c0_99 = arith.constant 0 : index
    %175 = vector.load %arg13[%174, %c0_98, %c0_99] : memref<8x16x128xf32, #tpu.memory_space<vmem>>, vector<1x16x128xf32>
    %176 = vector.shape_cast %175 : vector<1x16x128xf32> to vector<16x128xf32>
    %177 = arith.select %2, %172, %176 : vector<16x128xi1>, vector<16x128xf32>
    %cst_100 = arith.constant dense<0.000000e+00> : vector<16x128xf32>
    %178 = tpu.matmul %160, %21, %cst_100 {dimension_numbers = #tpu.dot_dimension_numbers<[1], [0], [0], [1], [0, 0, 1, 1], [], []>} : vector<16x128xbf16>, vector<128x128xbf16>, vector<16x128xf32> -> vector<16x128xf32>
    %179 = arith.addf %177, %178 : vector<16x128xf32>
    %180 = math.tanh %179 : vector<16x128xf32>
    %181 = arith.truncf %180 : vector<16x128xf32> to vector<16x128xbf16>
    %182 = arith.index_cast %c7_i32_94 : i32 to index
    %c0_101 = arith.constant 0 : index
    %c0_102 = arith.constant 0 : index
    %183 = vector.load %arg14[%182, %c0_101, %c0_102] : memref<8x16x128xbf16, #tpu.memory_space<vmem>>, vector<1x16x128xbf16>
    %184 = vector.shape_cast %183 : vector<1x16x128xbf16> to vector<16x128xbf16>
    %185 = vector.shape_cast %181 : vector<16x128xbf16> to vector<1x16x128xbf16>
    tpu.vector_store %arg14[%182, %c0_101, %c0_102], %185 {strides = array<i32>} : memref<8x16x128xbf16, #tpu.memory_space<vmem>>, vector<1x16x128xbf16>,
    %c7_i32_103 = arith.constant 7 : i32
    %186 = arith.subi %c7_i32_103, %c7_i32_94 : i32
    %187 = arith.index_cast %186 : i32 to index
    %c0_104 = arith.constant 0 : index
    %c0_105 = arith.constant 0 : index
    %188 = vector.load %arg15[%187, %c0_104, %c0_105] : memref<8x16x128xbf16, #tpu.memory_space<vmem>>, vector<1x16x128xbf16>
    %189 = vector.shape_cast %188 : vector<1x16x128xbf16> to vector<16x128xbf16>
    %190 = vector.shape_cast %181 : vector<16x128xbf16> to vector<1x16x128xbf16>
    tpu.vector_store %arg15[%187, %c0_104, %c0_105], %190 {strides = array<i32>} : memref<8x16x128xbf16, #tpu.memory_space<vmem>>, vector<1x16x128xbf16>,
    %c8_i32 = arith.constant 8 : i32
    %c0_106 = arith.constant 0 : index
    %c0_107 = arith.constant 0 : index
    %c0_108 = arith.constant 0 : index
    %191 = vector.load %arg14[%c0_106, %c0_107, %c0_108] : memref<8x16x128xbf16, #tpu.memory_space<vmem>>, vector<8x16x128xbf16>
    %c0_109 = arith.constant 0 : index
    %c0_110 = arith.constant 0 : index
    %c0_111 = arith.constant 0 : index
    %192 = vector.load %arg15[%c0_109, %c0_110, %c0_111] : memref<8x16x128xbf16, #tpu.memory_space<vmem>>, vector<8x16x128xbf16>
    %193 = arith.select %5, %191, %192 : vector<8x16x128xi1>, vector<8x16x128xbf16>
    %194 = vector.shape_cast %193 : vector<8x16x128xbf16> to vector<128x128xbf16>
    %c0_112 = arith.constant 0 : index
    %c0_113 = arith.constant 0 : index
    %195 = vector.load %arg7[%c0_112, %c0_113] : memref<128x128xbf16, #tpu.memory_space<vmem>>, vector<128x128xbf16>
    %cst_114 = arith.constant dense<0.000000e+00> : vector<128x128xf32>
    %196 = tpu.matmul %194, %195, %cst_114 {dimension_numbers = #tpu.dot_dimension_numbers<[1], [0], [0], [1], [0, 0, 1, 1], [], []>} : vector<128x128xbf16>, vector<128x128xbf16>, vector<128x128xf32> -> vector<128x128xf32>
    %c0_115 = arith.constant 0 : index
    %c0_116 = arith.constant 0 : index
    %197 = vector.load %arg9[%c0_115, %c0_116] : memref<1x128xf32, #tpu.memory_space<vmem>>, vector<1x128xf32>
    %198 = vector.broadcast %197 : vector<1x128xf32> to vector<128x128xf32>
    %199 = arith.addf %196, %198 : vector<128x128xf32>
    %200 = vector.shape_cast %199 : vector<128x128xf32> to vector<8x16x128xf32>
    %c0_117 = arith.constant 0 : index
    %c0_118 = arith.constant 0 : index
    %c0_119 = arith.constant 0 : index
    %201 = vector.load %arg13[%c0_117, %c0_118, %c0_119] : memref<8x16x128xf32, #tpu.memory_space<vmem>>, vector<8x16x128xf32>
    tpu.vector_store %arg13[%c0_117, %c0_118, %c0_119], %200 {strides = array<i32>} : memref<8x16x128xf32, #tpu.memory_space<vmem>>, vector<8x16x128xf32>,
    %c0_120 = arith.constant 0 : index
    %c0_121 = arith.constant 0 : index
    %202 = vector.load %arg8[%c0_120, %c0_121] : memref<128x128xbf16, #tpu.memory_space<vmem>>, vector<128x128xbf16>
    %cst_122 = arith.constant 0.000000e+00 : bf16
    %203 = vector.broadcast %cst_122 : bf16 to vector<16x128xbf16>
    %c0_i32_123 = arith.constant 0 : i32
    %204 = arith.index_cast %c0_i32_123 : i32 to index
    %c0_124 = arith.constant 0 : index
    %c0_125 = arith.constant 0 : index
    %205 = vector.load %arg13[%204, %c0_124, %c0_125] : memref<8x16x128xf32, #tpu.memory_space<vmem>>, vector<1x16x128xf32>
    %206 = vector.shape_cast %205 : vector<1x16x128xf32> to vector<16x128xf32>
    %c7_i32_126 = arith.constant 7 : i32
    %207 = arith.subi %c7_i32_126, %c0_i32_123 : i32
    %208 = arith.index_cast %207 : i32 to index
    %c0_127 = arith.constant 0 : index
    %c0_128 = arith.constant 0 : index
    %209 = vector.load %arg13[%208, %c0_127, %c0_128] : memref<8x16x128xf32, #tpu.memory_space<vmem>>, vector<1x16x128xf32>
    %210 = vector.shape_cast %209 : vector<1x16x128xf32> to vector<16x128xf32>
    %211 = arith.select %2, %206, %210 : vector<16x128xi1>, vector<16x128xf32>
    %cst_129 = arith.constant dense<0.000000e+00> : vector<16x128xf32>
    %212 = tpu.matmul %203, %202, %cst_129 {dimension_numbers = #tpu.dot_dimension_numbers<[1], [0], [0], [1], [0, 0, 1, 1], [], []>} : vector<16x128xbf16>, vector<128x128xbf16>, vector<16x128xf32> -> vector<16x128xf32>
    %213 = arith.addf %211, %212 : vector<16x128xf32>
    %214 = math.tanh %213 : vector<16x128xf32>
    %215 = arith.truncf %214 : vector<16x128xf32> to vector<16x128xbf16>
    %216 = arith.index_cast %c0_i32_123 : i32 to index
    %c0_130 = arith.constant 0 : index
    %c0_131 = arith.constant 0 : index
    %217 = vector.load %arg14[%216, %c0_130, %c0_131] : memref<8x16x128xbf16, #tpu.memory_space<vmem>>, vector<1x16x128xbf16>
    %218 = vector.shape_cast %217 : vector<1x16x128xbf16> to vector<16x128xbf16>
    %219 = vector.shape_cast %215 : vector<16x128xbf16> to vector<1x16x128xbf16>
    tpu.vector_store %arg14[%216, %c0_130, %c0_131], %219 {strides = array<i32>} : memref<8x16x128xbf16, #tpu.memory_space<vmem>>, vector<1x16x128xbf16>,
    %c7_i32_132 = arith.constant 7 : i32
    %220 = arith.subi %c7_i32_132, %c0_i32_123 : i32
    %221 = arith.index_cast %220 : i32 to index
    %c0_133 = arith.constant 0 : index
    %c0_134 = arith.constant 0 : index
    %222 = vector.load %arg15[%221, %c0_133, %c0_134] : memref<8x16x128xbf16, #tpu.memory_space<vmem>>, vector<1x16x128xbf16>
    %223 = vector.shape_cast %222 : vector<1x16x128xbf16> to vector<16x128xbf16>
    %224 = vector.shape_cast %215 : vector<16x128xbf16> to vector<1x16x128xbf16>
    tpu.vector_store %arg15[%221, %c0_133, %c0_134], %224 {strides = array<i32>} : memref<8x16x128xbf16, #tpu.memory_space<vmem>>, vector<1x16x128xbf16>,
    %c1_i32_135 = arith.constant 1 : i32
    %225 = arith.index_cast %c1_i32_135 : i32 to index
    %c0_136 = arith.constant 0 : index
    %c0_137 = arith.constant 0 : index
    %226 = vector.load %arg13[%225, %c0_136, %c0_137] : memref<8x16x128xf32, #tpu.memory_space<vmem>>, vector<1x16x128xf32>
    %227 = vector.shape_cast %226 : vector<1x16x128xf32> to vector<16x128xf32>
    %c7_i32_138 = arith.constant 7 : i32
    %228 = arith.subi %c7_i32_138, %c1_i32_135 : i32
    %229 = arith.index_cast %228 : i32 to index
    %c0_139 = arith.constant 0 : index
    %c0_140 = arith.constant 0 : index
    %230 = vector.load %arg13[%229, %c0_139, %c0_140] : memref<8x16x128xf32, #tpu.memory_space<vmem>>, vector<1x16x128xf32>
    %231 = vector.shape_cast %230 : vector<1x16x128xf32> to vector<16x128xf32>
    %232 = arith.select %2, %227, %231 : vector<16x128xi1>, vector<16x128xf32>
    %cst_141 = arith.constant dense<0.000000e+00> : vector<16x128xf32>
    %233 = tpu.matmul %215, %202, %cst_141 {dimension_numbers = #tpu.dot_dimension_numbers<[1], [0], [0], [1], [0, 0, 1, 1], [], []>} : vector<16x128xbf16>, vector<128x128xbf16>, vector<16x128xf32> -> vector<16x128xf32>
    %234 = arith.addf %232, %233 : vector<16x128xf32>
    %235 = math.tanh %234 : vector<16x128xf32>
    %236 = arith.truncf %235 : vector<16x128xf32> to vector<16x128xbf16>
    %237 = arith.index_cast %c1_i32_135 : i32 to index
    %c0_142 = arith.constant 0 : index
    %c0_143 = arith.constant 0 : index
    %238 = vector.load %arg14[%237, %c0_142, %c0_143] : memref<8x16x128xbf16, #tpu.memory_space<vmem>>, vector<1x16x128xbf16>
    %239 = vector.shape_cast %238 : vector<1x16x128xbf16> to vector<16x128xbf16>
    %240 = vector.shape_cast %236 : vector<16x128xbf16> to vector<1x16x128xbf16>
    tpu.vector_store %arg14[%237, %c0_142, %c0_143], %240 {strides = array<i32>} : memref<8x16x128xbf16, #tpu.memory_space<vmem>>, vector<1x16x128xbf16>,
    %c7_i32_144 = arith.constant 7 : i32
    %241 = arith.subi %c7_i32_144, %c1_i32_135 : i32
    %242 = arith.index_cast %241 : i32 to index
    %c0_145 = arith.constant 0 : index
    %c0_146 = arith.constant 0 : index
    %243 = vector.load %arg15[%242, %c0_145, %c0_146] : memref<8x16x128xbf16, #tpu.memory_space<vmem>>, vector<1x16x128xbf16>
    %244 = vector.shape_cast %243 : vector<1x16x128xbf16> to vector<16x128xbf16>
    %245 = vector.shape_cast %236 : vector<16x128xbf16> to vector<1x16x128xbf16>
    tpu.vector_store %arg15[%242, %c0_145, %c0_146], %245 {strides = array<i32>} : memref<8x16x128xbf16, #tpu.memory_space<vmem>>, vector<1x16x128xbf16>,
    %c2_i32_147 = arith.constant 2 : i32
    %246 = arith.index_cast %c2_i32_147 : i32 to index
    %c0_148 = arith.constant 0 : index
    %c0_149 = arith.constant 0 : index
    %247 = vector.load %arg13[%246, %c0_148, %c0_149] : memref<8x16x128xf32, #tpu.memory_space<vmem>>, vector<1x16x128xf32>
    %248 = vector.shape_cast %247 : vector<1x16x128xf32> to vector<16x128xf32>
    %c7_i32_150 = arith.constant 7 : i32
    %249 = arith.subi %c7_i32_150, %c2_i32_147 : i32
    %250 = arith.index_cast %249 : i32 to index
    %c0_151 = arith.constant 0 : index
    %c0_152 = arith.constant 0 : index
    %251 = vector.load %arg13[%250, %c0_151, %c0_152] : memref<8x16x128xf32, #tpu.memory_space<vmem>>, vector<1x16x128xf32>
    %252 = vector.shape_cast %251 : vector<1x16x128xf32> to vector<16x128xf32>
    %253 = arith.select %2, %248, %252 : vector<16x128xi1>, vector<16x128xf32>
    %cst_153 = arith.constant dense<0.000000e+00> : vector<16x128xf32>
    %254 = tpu.matmul %236, %202, %cst_153 {dimension_numbers = #tpu.dot_dimension_numbers<[1], [0], [0], [1], [0, 0, 1, 1], [], []>} : vector<16x128xbf16>, vector<128x128xbf16>, vector<16x128xf32> -> vector<16x128xf32>
    %255 = arith.addf %253, %254 : vector<16x128xf32>
    %256 = math.tanh %255 : vector<16x128xf32>
    %257 = arith.truncf %256 : vector<16x128xf32> to vector<16x128xbf16>
    %258 = arith.index_cast %c2_i32_147 : i32 to index
    %c0_154 = arith.constant 0 : index
    %c0_155 = arith.constant 0 : index
    %259 = vector.load %arg14[%258, %c0_154, %c0_155] : memref<8x16x128xbf16, #tpu.memory_space<vmem>>, vector<1x16x128xbf16>
    %260 = vector.shape_cast %259 : vector<1x16x128xbf16> to vector<16x128xbf16>
    %261 = vector.shape_cast %257 : vector<16x128xbf16> to vector<1x16x128xbf16>
    tpu.vector_store %arg14[%258, %c0_154, %c0_155], %261 {strides = array<i32>} : memref<8x16x128xbf16, #tpu.memory_space<vmem>>, vector<1x16x128xbf16>,
    %c7_i32_156 = arith.constant 7 : i32
    %262 = arith.subi %c7_i32_156, %c2_i32_147 : i32
    %263 = arith.index_cast %262 : i32 to index
    %c0_157 = arith.constant 0 : index
    %c0_158 = arith.constant 0 : index
    %264 = vector.load %arg15[%263, %c0_157, %c0_158] : memref<8x16x128xbf16, #tpu.memory_space<vmem>>, vector<1x16x128xbf16>
    %265 = vector.shape_cast %264 : vector<1x16x128xbf16> to vector<16x128xbf16>
    %266 = vector.shape_cast %257 : vector<16x128xbf16> to vector<1x16x128xbf16>
    tpu.vector_store %arg15[%263, %c0_157, %c0_158], %266 {strides = array<i32>} : memref<8x16x128xbf16, #tpu.memory_space<vmem>>, vector<1x16x128xbf16>,
    %c3_i32_159 = arith.constant 3 : i32
    %267 = arith.index_cast %c3_i32_159 : i32 to index
    %c0_160 = arith.constant 0 : index
    %c0_161 = arith.constant 0 : index
    %268 = vector.load %arg13[%267, %c0_160, %c0_161] : memref<8x16x128xf32, #tpu.memory_space<vmem>>, vector<1x16x128xf32>
    %269 = vector.shape_cast %268 : vector<1x16x128xf32> to vector<16x128xf32>
    %c7_i32_162 = arith.constant 7 : i32
    %270 = arith.subi %c7_i32_162, %c3_i32_159 : i32
    %271 = arith.index_cast %270 : i32 to index
    %c0_163 = arith.constant 0 : index
    %c0_164 = arith.constant 0 : index
    %272 = vector.load %arg13[%271, %c0_163, %c0_164] : memref<8x16x128xf32, #tpu.memory_space<vmem>>, vector<1x16x128xf32>
    %273 = vector.shape_cast %272 : vector<1x16x128xf32> to vector<16x128xf32>
    %274 = arith.select %2, %269, %273 : vector<16x128xi1>, vector<16x128xf32>
    %cst_165 = arith.constant dense<0.000000e+00> : vector<16x128xf32>
    %275 = tpu.matmul %257, %202, %cst_165 {dimension_numbers = #tpu.dot_dimension_numbers<[1], [0], [0], [1], [0, 0, 1, 1], [], []>} : vector<16x128xbf16>, vector<128x128xbf16>, vector<16x128xf32> -> vector<16x128xf32>
    %276 = arith.addf %274, %275 : vector<16x128xf32>
    %277 = math.tanh %276 : vector<16x128xf32>
    %278 = arith.truncf %277 : vector<16x128xf32> to vector<16x128xbf16>
    %279 = arith.index_cast %c3_i32_159 : i32 to index
    %c0_166 = arith.constant 0 : index
    %c0_167 = arith.constant 0 : index
    %280 = vector.load %arg14[%279, %c0_166, %c0_167] : memref<8x16x128xbf16, #tpu.memory_space<vmem>>, vector<1x16x128xbf16>
    %281 = vector.shape_cast %280 : vector<1x16x128xbf16> to vector<16x128xbf16>
    %282 = vector.shape_cast %278 : vector<16x128xbf16> to vector<1x16x128xbf16>
    tpu.vector_store %arg14[%279, %c0_166, %c0_167], %282 {strides = array<i32>} : memref<8x16x128xbf16, #tpu.memory_space<vmem>>, vector<1x16x128xbf16>,
    %c7_i32_168 = arith.constant 7 : i32
    %283 = arith.subi %c7_i32_168, %c3_i32_159 : i32
    %284 = arith.index_cast %283 : i32 to index
    %c0_169 = arith.constant 0 : index
    %c0_170 = arith.constant 0 : index
    %285 = vector.load %arg15[%284, %c0_169, %c0_170] : memref<8x16x128xbf16, #tpu.memory_space<vmem>>, vector<1x16x128xbf16>
    %286 = vector.shape_cast %285 : vector<1x16x128xbf16> to vector<16x128xbf16>
    %287 = vector.shape_cast %278 : vector<16x128xbf16> to vector<1x16x128xbf16>
    tpu.vector_store %arg15[%284, %c0_169, %c0_170], %287 {strides = array<i32>} : memref<8x16x128xbf16, #tpu.memory_space<vmem>>, vector<1x16x128xbf16>,
    %c4_i32_171 = arith.constant 4 : i32
    %288 = arith.index_cast %c4_i32_171 : i32 to index
    %c0_172 = arith.constant 0 : index
    %c0_173 = arith.constant 0 : index
    %289 = vector.load %arg13[%288, %c0_172, %c0_173] : memref<8x16x128xf32, #tpu.memory_space<vmem>>, vector<1x16x128xf32>
    %290 = vector.shape_cast %289 : vector<1x16x128xf32> to vector<16x128xf32>
    %c7_i32_174 = arith.constant 7 : i32
    %291 = arith.subi %c7_i32_174, %c4_i32_171 : i32
    %292 = arith.index_cast %291 : i32 to index
    %c0_175 = arith.constant 0 : index
    %c0_176 = arith.constant 0 : index
    %293 = vector.load %arg13[%292, %c0_175, %c0_176] : memref<8x16x128xf32, #tpu.memory_space<vmem>>, vector<1x16x128xf32>
    %294 = vector.shape_cast %293 : vector<1x16x128xf32> to vector<16x128xf32>
    %295 = arith.select %2, %290, %294 : vector<16x128xi1>, vector<16x128xf32>
    %cst_177 = arith.constant dense<0.000000e+00> : vector<16x128xf32>
    %296 = tpu.matmul %278, %202, %cst_177 {dimension_numbers = #tpu.dot_dimension_numbers<[1], [0], [0], [1], [0, 0, 1, 1], [], []>} : vector<16x128xbf16>, vector<128x128xbf16>, vector<16x128xf32> -> vector<16x128xf32>
    %297 = arith.addf %295, %296 : vector<16x128xf32>
    %298 = math.tanh %297 : vector<16x128xf32>
    %299 = arith.truncf %298 : vector<16x128xf32> to vector<16x128xbf16>
    %300 = arith.index_cast %c4_i32_171 : i32 to index
    %c0_178 = arith.constant 0 : index
    %c0_179 = arith.constant 0 : index
    %301 = vector.load %arg14[%300, %c0_178, %c0_179] : memref<8x16x128xbf16, #tpu.memory_space<vmem>>, vector<1x16x128xbf16>
    %302 = vector.shape_cast %301 : vector<1x16x128xbf16> to vector<16x128xbf16>
    %303 = vector.shape_cast %299 : vector<16x128xbf16> to vector<1x16x128xbf16>
    tpu.vector_store %arg14[%300, %c0_178, %c0_179], %303 {strides = array<i32>} : memref<8x16x128xbf16, #tpu.memory_space<vmem>>, vector<1x16x128xbf16>,
    %c7_i32_180 = arith.constant 7 : i32
    %304 = arith.subi %c7_i32_180, %c4_i32_171 : i32
    %305 = arith.index_cast %304 : i32 to index
    %c0_181 = arith.constant 0 : index
    %c0_182 = arith.constant 0 : index
    %306 = vector.load %arg15[%305, %c0_181, %c0_182] : memref<8x16x128xbf16, #tpu.memory_space<vmem>>, vector<1x16x128xbf16>
    %307 = vector.shape_cast %306 : vector<1x16x128xbf16> to vector<16x128xbf16>
    %308 = vector.shape_cast %299 : vector<16x128xbf16> to vector<1x16x128xbf16>
    tpu.vector_store %arg15[%305, %c0_181, %c0_182], %308 {strides = array<i32>} : memref<8x16x128xbf16, #tpu.memory_space<vmem>>, vector<1x16x128xbf16>,
    %c5_i32_183 = arith.constant 5 : i32
    %309 = arith.index_cast %c5_i32_183 : i32 to index
    %c0_184 = arith.constant 0 : index
    %c0_185 = arith.constant 0 : index
    %310 = vector.load %arg13[%309, %c0_184, %c0_185] : memref<8x16x128xf32, #tpu.memory_space<vmem>>, vector<1x16x128xf32>
    %311 = vector.shape_cast %310 : vector<1x16x128xf32> to vector<16x128xf32>
    %c7_i32_186 = arith.constant 7 : i32
    %312 = arith.subi %c7_i32_186, %c5_i32_183 : i32
    %313 = arith.index_cast %312 : i32 to index
    %c0_187 = arith.constant 0 : index
    %c0_188 = arith.constant 0 : index
    %314 = vector.load %arg13[%313, %c0_187, %c0_188] : memref<8x16x128xf32, #tpu.memory_space<vmem>>, vector<1x16x128xf32>
    %315 = vector.shape_cast %314 : vector<1x16x128xf32> to vector<16x128xf32>
    %316 = arith.select %2, %311, %315 : vector<16x128xi1>, vector<16x128xf32>
    %cst_189 = arith.constant dense<0.000000e+00> : vector<16x128xf32>
    %317 = tpu.matmul %299, %202, %cst_189 {dimension_numbers = #tpu.dot_dimension_numbers<[1], [0], [0], [1], [0, 0, 1, 1], [], []>} : vector<16x128xbf16>, vector<128x128xbf16>, vector<16x128xf32> -> vector<16x128xf32>
    %318 = arith.addf %316, %317 : vector<16x128xf32>
    %319 = math.tanh %318 : vector<16x128xf32>
    %320 = arith.truncf %319 : vector<16x128xf32> to vector<16x128xbf16>
    %321 = arith.index_cast %c5_i32_183 : i32 to index
    %c0_190 = arith.constant 0 : index
    %c0_191 = arith.constant 0 : index
    %322 = vector.load %arg14[%321, %c0_190, %c0_191] : memref<8x16x128xbf16, #tpu.memory_space<vmem>>, vector<1x16x128xbf16>
    %323 = vector.shape_cast %322 : vector<1x16x128xbf16> to vector<16x128xbf16>
    %324 = vector.shape_cast %320 : vector<16x128xbf16> to vector<1x16x128xbf16>
    tpu.vector_store %arg14[%321, %c0_190, %c0_191], %324 {strides = array<i32>} : memref<8x16x128xbf16, #tpu.memory_space<vmem>>, vector<1x16x128xbf16>,
    %c7_i32_192 = arith.constant 7 : i32
    %325 = arith.subi %c7_i32_192, %c5_i32_183 : i32
    %326 = arith.index_cast %325 : i32 to index
    %c0_193 = arith.constant 0 : index
    %c0_194 = arith.constant 0 : index
    %327 = vector.load %arg15[%326, %c0_193, %c0_194] : memref<8x16x128xbf16, #tpu.memory_space<vmem>>, vector<1x16x128xbf16>
    %328 = vector.shape_cast %327 : vector<1x16x128xbf16> to vector<16x128xbf16>
    %329 = vector.shape_cast %320 : vector<16x128xbf16> to vector<1x16x128xbf16>
    tpu.vector_store %arg15[%326, %c0_193, %c0_194], %329 {strides = array<i32>} : memref<8x16x128xbf16, #tpu.memory_space<vmem>>, vector<1x16x128xbf16>,
    %c6_i32_195 = arith.constant 6 : i32
    %330 = arith.index_cast %c6_i32_195 : i32 to index
    %c0_196 = arith.constant 0 : index
    %c0_197 = arith.constant 0 : index
    %331 = vector.load %arg13[%330, %c0_196, %c0_197] : memref<8x16x128xf32, #tpu.memory_space<vmem>>, vector<1x16x128xf32>
    %332 = vector.shape_cast %331 : vector<1x16x128xf32> to vector<16x128xf32>
    %c7_i32_198 = arith.constant 7 : i32
    %333 = arith.subi %c7_i32_198, %c6_i32_195 : i32
    %334 = arith.index_cast %333 : i32 to index
    %c0_199 = arith.constant 0 : index
    %c0_200 = arith.constant 0 : index
    %335 = vector.load %arg13[%334, %c0_199, %c0_200] : memref<8x16x128xf32, #tpu.memory_space<vmem>>, vector<1x16x128xf32>
    %336 = vector.shape_cast %335 : vector<1x16x128xf32> to vector<16x128xf32>
    %337 = arith.select %2, %332, %336 : vector<16x128xi1>, vector<16x128xf32>
    %cst_201 = arith.constant dense<0.000000e+00> : vector<16x128xf32>
    %338 = tpu.matmul %320, %202, %cst_201 {dimension_numbers = #tpu.dot_dimension_numbers<[1], [0], [0], [1], [0, 0, 1, 1], [], []>} : vector<16x128xbf16>, vector<128x128xbf16>, vector<16x128xf32> -> vector<16x128xf32>
    %339 = arith.addf %337, %338 : vector<16x128xf32>
    %340 = math.tanh %339 : vector<16x128xf32>
    %341 = arith.truncf %340 : vector<16x128xf32> to vector<16x128xbf16>
    %342 = arith.index_cast %c6_i32_195 : i32 to index
    %c0_202 = arith.constant 0 : index
    %c0_203 = arith.constant 0 : index
    %343 = vector.load %arg14[%342, %c0_202, %c0_203] : memref<8x16x128xbf16, #tpu.memory_space<vmem>>, vector<1x16x128xbf16>
    %344 = vector.shape_cast %343 : vector<1x16x128xbf16> to vector<16x128xbf16>
    %345 = vector.shape_cast %341 : vector<16x128xbf16> to vector<1x16x128xbf16>
    tpu.vector_store %arg14[%342, %c0_202, %c0_203], %345 {strides = array<i32>} : memref<8x16x128xbf16, #tpu.memory_space<vmem>>, vector<1x16x128xbf16>,
    %c7_i32_204 = arith.constant 7 : i32
    %346 = arith.subi %c7_i32_204, %c6_i32_195 : i32
    %347 = arith.index_cast %346 : i32 to index
    %c0_205 = arith.constant 0 : index
    %c0_206 = arith.constant 0 : index
    %348 = vector.load %arg15[%347, %c0_205, %c0_206] : memref<8x16x128xbf16, #tpu.memory_space<vmem>>, vector<1x16x128xbf16>
    %349 = vector.shape_cast %348 : vector<1x16x128xbf16> to vector<16x128xbf16>
    %350 = vector.shape_cast %341 : vector<16x128xbf16> to vector<1x16x128xbf16>
    tpu.vector_store %arg15[%347, %c0_205, %c0_206], %350 {strides = array<i32>} : memref<8x16x128xbf16, #tpu.memory_space<vmem>>, vector<1x16x128xbf16>,
    %c7_i32_207 = arith.constant 7 : i32
    %351 = arith.index_cast %c7_i32_207 : i32 to index
    %c0_208 = arith.constant 0 : index
    %c0_209 = arith.constant 0 : index
    %352 = vector.load %arg13[%351, %c0_208, %c0_209] : memref<8x16x128xf32, #tpu.memory_space<vmem>>, vector<1x16x128xf32>
    %353 = vector.shape_cast %352 : vector<1x16x128xf32> to vector<16x128xf32>
    %c7_i32_210 = arith.constant 7 : i32
    %354 = arith.subi %c7_i32_210, %c7_i32_207 : i32
    %355 = arith.index_cast %354 : i32 to index
    %c0_211 = arith.constant 0 : index
    %c0_212 = arith.constant 0 : index
    %356 = vector.load %arg13[%355, %c0_211, %c0_212] : memref<8x16x128xf32, #tpu.memory_space<vmem>>, vector<1x16x128xf32>
    %357 = vector.shape_cast %356 : vector<1x16x128xf32> to vector<16x128xf32>
    %358 = arith.select %2, %353, %357 : vector<16x128xi1>, vector<16x128xf32>
    %cst_213 = arith.constant dense<0.000000e+00> : vector<16x128xf32>
    %359 = tpu.matmul %341, %202, %cst_213 {dimension_numbers = #tpu.dot_dimension_numbers<[1], [0], [0], [1], [0, 0, 1, 1], [], []>} : vector<16x128xbf16>, vector<128x128xbf16>, vector<16x128xf32> -> vector<16x128xf32>
    %360 = arith.addf %358, %359 : vector<16x128xf32>
    %361 = math.tanh %360 : vector<16x128xf32>
    %362 = arith.truncf %361 : vector<16x128xf32> to vector<16x128xbf16>
    %363 = arith.index_cast %c7_i32_207 : i32 to index
    %c0_214 = arith.constant 0 : index
    %c0_215 = arith.constant 0 : index
    %364 = vector.load %arg14[%363, %c0_214, %c0_215] : memref<8x16x128xbf16, #tpu.memory_space<vmem>>, vector<1x16x128xbf16>
    %365 = vector.shape_cast %364 : vector<1x16x128xbf16> to vector<16x128xbf16>
    %366 = vector.shape_cast %362 : vector<16x128xbf16> to vector<1x16x128xbf16>
    tpu.vector_store %arg14[%363, %c0_214, %c0_215], %366 {strides = array<i32>} : memref<8x16x128xbf16, #tpu.memory_space<vmem>>, vector<1x16x128xbf16>,
    %c7_i32_216 = arith.constant 7 : i32
    %367 = arith.subi %c7_i32_216, %c7_i32_207 : i32
    %368 = arith.index_cast %367 : i32 to index
    %c0_217 = arith.constant 0 : index
    %c0_218 = arith.constant 0 : index
    %369 = vector.load %arg15[%368, %c0_217, %c0_218] : memref<8x16x128xbf16, #tpu.memory_space<vmem>>, vector<1x16x128xbf16>
    %370 = vector.shape_cast %369 : vector<1x16x128xbf16> to vector<16x128xbf16>
    %371 = vector.shape_cast %362 : vector<16x128xbf16> to vector<1x16x128xbf16>
    tpu.vector_store %arg15[%368, %c0_217, %c0_218], %371 {strides = array<i32>} : memref<8x16x128xbf16, #tpu.memory_space<vmem>>, vector<1x16x128xbf16>,
    %c8_i32_219 = arith.constant 8 : i32
    %c0_220 = arith.constant 0 : index
    %c0_221 = arith.constant 0 : index
    %c0_222 = arith.constant 0 : index
    %372 = vector.load %arg14[%c0_220, %c0_221, %c0_222] : memref<8x16x128xbf16, #tpu.memory_space<vmem>>, vector<8x16x128xbf16>
    %c0_223 = arith.constant 0 : index
    %c0_224 = arith.constant 0 : index
    %c0_225 = arith.constant 0 : index
    %373 = vector.load %arg15[%c0_223, %c0_224, %c0_225] : memref<8x16x128xbf16, #tpu.memory_space<vmem>>, vector<8x16x128xbf16>
    %374 = arith.select %5, %372, %373 : vector<8x16x128xi1>, vector<8x16x128xbf16>
    %375 = arith.extf %374 : vector<8x16x128xbf16> to vector<8x16x128xf32>
    %c0_226 = arith.constant 0 : index
    %c0_227 = arith.constant 0 : index
    %376 = vector.load %arg10[%c0_226, %c0_227] : memref<1x128xbf16, #tpu.memory_space<vmem>>, vector<1x128xbf16>
    %377 = arith.extf %376 : vector<1x128xbf16> to vector<1x128xf32>
    %378 = vector.shape_cast %377 : vector<1x128xf32> to vector<1x1x128xf32>
    %379 = vector.broadcast %378 : vector<1x1x128xf32> to vector<8x16x128xf32>
    %380 = arith.mulf %375, %379 : vector<8x16x128xf32>
    %cst_228 = arith.constant dense<0.000000e+00> : vector<8x16xf32>
    %381 = vector.multi_reduction <add>, %380, %cst_228 [2] : vector<8x16x128xf32> to vector<8x16xf32>
    %c0_229 = arith.constant 0 : index
    %c0_230 = arith.constant 0 : index
    %382 = vector.load %arg11[%c0_229, %c0_230] : memref<1x1xf32, #tpu.memory_space<vmem>>, vector<1x1xf32>
    %383 = vector.broadcast %382 : vector<1x1xf32> to vector<8x16xf32>
    %384 = arith.addf %381, %383 : vector<8x16xf32>
    %385 = arith.negf %384 : vector<8x16xf32>
    %386 = math.exp %385 : vector<8x16xf32>
    %cst_231 = arith.constant 1.000000e+00 : f32
    %387 = vector.broadcast %cst_231 : f32 to vector<8x16xf32>
    %388 = arith.addf %387, %386 : vector<8x16xf32>
    %389 = arith.divf %387, %388 : vector<8x16xf32>
    %390 = tpu.transpose %389, [1, 0] : vector<8x16xf32> -> vector<16x8xf32>
    %c0_232 = arith.constant 0 : index
    %c0_233 = arith.constant 0 : index
    %391 = vector.load %arg12[%c0_232, %c0_233] : memref<16x8xf32, #tpu.memory_space<vmem>>, vector<16x8xf32>
    tpu.vector_store %arg12[%c0_232, %c0_233], %390 {strides = array<i32>} : memref<16x8xf32, #tpu.memory_space<vmem>>, vector<16x8xf32>,
    return
  }
  func.func @transform_0(%arg0: i32) -> (i32, i32, i32) {
    %c0_i32 = arith.constant 0 : i32
    %c0_i32_0 = arith.constant 0 : i32
    %c0_i32_1 = arith.constant 0 : i32
    return %c0_i32, %arg0, %c0_i32_0 : i32, i32, i32
  }
  func.func @transform_1(%arg0: i32) -> (i32, i32) {
    %c0_i32 = arith.constant 0 : i32
    %c0_i32_0 = arith.constant 0 : i32
    %c0_i32_1 = arith.constant 0 : i32
    return %c0_i32, %c0_i32_0 : i32, i32
  }
  func.func @transform_2(%arg0: i32) -> (i32, i32) {
    %c0_i32 = arith.constant 0 : i32
    %c0_i32_0 = arith.constant 0 : i32
    %c0_i32_1 = arith.constant 0 : i32
    return %c0_i32, %c0_i32_0 : i32, i32
  }
  func.func @transform_3(%arg0: i32) -> (i32, i32) {
    %c0_i32 = arith.constant 0 : i32
    %c0_i32_0 = arith.constant 0 : i32
    %c0_i32_1 = arith.constant 0 : i32
    return %c0_i32, %c0_i32_0 : i32, i32
  }
  func.func @transform_4(%arg0: i32) -> (i32, i32) {
    %c0_i32 = arith.constant 0 : i32
    %c0_i32_0 = arith.constant 0 : i32
    %c0_i32_1 = arith.constant 0 : i32
    return %c0_i32, %c0_i32_0 : i32, i32
  }
  func.func @transform_5(%arg0: i32) -> (i32, i32) {
    %c0_i32 = arith.constant 0 : i32
    %c0_i32_0 = arith.constant 0 : i32
    %c0_i32_1 = arith.constant 0 : i32
    return %c0_i32, %c0_i32_0 : i32, i32
  }
  func.func @transform_6(%arg0: i32) -> (i32, i32) {
    %c0_i32 = arith.constant 0 : i32
    %c0_i32_0 = arith.constant 0 : i32
    %c0_i32_1 = arith.constant 0 : i32
    return %c0_i32, %c0_i32_0 : i32, i32
  }
  func.func @transform_7(%arg0: i32) -> (i32, i32) {
    %c0_i32 = arith.constant 0 : i32
    %c0_i32_0 = arith.constant 0 : i32
    %c0_i32_1 = arith.constant 0 : i32
    return %c0_i32, %c0_i32_0 : i32, i32
  }
  func.func @transform_8(%arg0: i32) -> (i32, i32) {
    %c0_i32 = arith.constant 0 : i32
    %c0_i32_0 = arith.constant 0 : i32
    %c0_i32_1 = arith.constant 0 : i32
    return %c0_i32, %c0_i32_0 : i32, i32
  }
  func.func @transform_9(%arg0: i32) -> (i32, i32) {
    %c0_i32 = arith.constant 0 : i32
    %c0_i32_0 = arith.constant 0 : i32
    %c0_i32_1 = arith.constant 0 : i32
    return %c0_i32, %c0_i32_0 : i32, i32
  }
  func.func @transform_10(%arg0: i32) -> (i32, i32) {
    %c0_i32 = arith.constant 0 : i32
    %c0_i32_0 = arith.constant 0 : i32
    %c0_i32_1 = arith.constant 0 : i32
    return %c0_i32, %c0_i32_0 : i32, i32
  }
  func.func @transform_11(%arg0: i32) -> (i32, i32) {
    %c0_i32 = arith.constant 0 : i32
    %c0_i32_0 = arith.constant 0 : i32
    return %arg0, %c0_i32 : i32, i32
  }
}

</mosaic_0001>

<llo_original>
// kernel: tpu_custom_call.1
$region0: #{tpu_custom_call.1}
  #allocation0 [shape = 'u32[]', space=smem, size = 0x4, offset = 0x4, fixed_abs, tag = 'smem constant byte address 0x4 - core index']
  #allocation1 [shape = 'u32[144,128]{1,0:T(1,128)}', space=vmem, size = 0x12000, scoped, tag = 'internal scratch']
  #allocation2 [shape = 'f32[8,16,128]{2,1,0:T(8,128)}', space=vmem, size = 0x10000, scoped, tag = 'scratch operand']
  #allocation3 [shape = 'bf16[8,16,128]{2,1,0:T(8,128)(2,1)}', space=vmem, size = 0x8000, scoped, tag = 'scratch operand']
  #allocation4 [shape = 'bf16[8,16,128]{2,1,0:T(8,128)(2,1)}', space=vmem, size = 0x8000, scoped, tag = 'scratch operand']
  #allocation5 [shape = 'f32[1,1]{1,0:T(1,128)S(1)}', space=vmem, size = 0x200, scoped, tag = 'scoped memory for tpu_custom_call.1']
  #allocation16 [shape = 's32[]', space=sflag, size = 0x4, offset = 0, fixed_abs, tag = 'sflag constant byte address 0x0 - dummy sync flag']
  %s0 = inlined_call_operand.hbm [shape: bf16[8,32,32], index: 0, kind: input, shape index: {}]
  %s1 = inlined_call_operand.hbm [shape: bf16[32,128], index: 1, kind: input, shape index: {}]
  %s2 = inlined_call_operand.vmem [shape: f32[1,128], index: 2, kind: input, shape index: {}]
  %s3 = inlined_call_operand.hbm [shape: bf16[128,128], index: 3, kind: input, shape index: {}]
  %s4 = inlined_call_operand.hbm [shape: bf16[128,128], index: 4, kind: input, shape index: {}]
  %s5 = inlined_call_operand.vmem [shape: f32[1,128], index: 5, kind: input, shape index: {}]
  %s6 = inlined_call_operand.hbm [shape: bf16[128,128], index: 6, kind: input, shape index: {}]
  %s7 = inlined_call_operand.hbm [shape: bf16[128,128], index: 7, kind: input, shape index: {}]
  %s8 = inlined_call_operand.vmem [shape: f32[1,128], index: 8, kind: input, shape index: {}]
  %s9 = inlined_call_operand.vmem [shape: bf16[1,128], index: 9, kind: input, shape index: {}]
  %s10 = inlined_call_operand.<no memory space> [shape: f32[1,1], index: 10, kind: input, shape index: {}]
  %s11 = inlined_call_operand.vmem [shape: f32[32,8], index: 11, kind: output, shape index: {}]
  %s12 = sld [smem:[#allocation0]]
  $region101: #{tpu_custom_call.1} parent=0
    _
  %s14 = ssub.s32 1, %s12
  %s15 = scalar_select 0, %s14, %s12
  %v16 = vstv %s10
  %17 = vst [vmem:[#allocation5] sm:$0x1] %v16
  $region1: #{tpu_custom_call.1} parent=0
    #allocation6 [shape = 'u8[65536]{0}', space=vmem, size = 0x10000, scoped, tag = 'input window, operand 0']
    #allocation7 [shape = 's32[2]{0}', space=sflag, size = 0x8, scoped, tag = 'scoped memory for tpu_custom_call.1']
    #allocation8 [shape = 'u8[8192]{0}', space=vmem, size = 0x2000, scoped, tag = 'input window, operand 1, single buffered']
    #allocation9 [shape = 's32[1]{0}', space=sflag, size = 0x4, scoped, tag = 'scoped memory for tpu_custom_call.1']
    #allocation10 [shape = 'u8[32768]{0}', space=vmem, size = 0x8000, scoped, tag = 'input window, operand 3, single buffered']
    #allocation11 [shape = 'u8[32768]{0}', space=vmem, size = 0x8000, scoped, tag = 'input window, operand 4, single buffered']
    #allocation12 [shape = 's32[1]{0}', space=sflag, size = 0x4, scoped, tag = 'scoped memory for tpu_custom_call.1']
    #allocation13 [shape = 'u8[32768]{0}', space=vmem, size = 0x8000, scoped, tag = 'input window, operand 6, single buffered']
    #allocation14 [shape = 'u8[32768]{0}', space=vmem, size = 0x8000, scoped, tag = 'input window, operand 7, single buffered']
    #allocation15 [shape = 's32[1]{0}', space=sflag, size = 0x4, scoped, tag = 'scoped memory for tpu_custom_call.1']
    %18 = vsyncpa [#allocation7], 0
    %s19 = scalar_lea.sflag [#allocation7], 1
    %20 = vsyncpa %s19, 0
    %21 = vsyncpa [#allocation9], 0
    %22 = vsyncpa [#allocation12], 0
    %23 = vsyncpa [#allocation15], 0
    loop: start=0, step=1, limit=4
    $region2: #{tpu_custom_call.1} parent=1 // loop_pre_header
      _
    $region3: #{tpu_custom_call.1} parent=1 // loop_header
      %s25 = sphi 0, %s29
      %p26 = scmp.ge.s32.totalorder %s25, 4
      %s35 = sphi 0, %s37
      %s38 = sphi 0, %s35
      %s39 = sphi 0, %s38
      %s55 = sphi 0, %s39
      %s59 = sphi 0, %s59
      %s61 = sphi 0, %s59
      %s62 = sphi 0, %s61
      %s76 = sphi 0, %s62
      %s80 = sphi 0, %s80
      %s82 = sphi 0, %s80
      %s83 = sphi 0, %s82
      %s97 = sphi 0, %s83
      %s101 = sphi 0, %s101
      %s103 = sphi 0, %s101
      %s104 = sphi 0, %s103
      %s118 = sphi 0, %s104
      %s122 = sphi 0, %s122
      %s124 = sphi 0, %s122
      %s125 = sphi 0, %s124
      %s139 = sphi 0, %s125
      %s143 = sphi 0, %s143
      %s145 = sphi 0, %s143
      %s146 = sphi 0, %s145
      %s160 = sphi 0, %s146
      %s164 = sphi 0, %s164
      %s166 = sphi 0, %s164
      %s167 = sphi 0, %s166
      %s181 = sphi 0, %s167
      %s185 = sphi 0, %s185
      %s187 = sphi 0, %s185
      %s188 = sphi 0, %s187
      %s202 = sphi 0, %s188
      %s206 = sphi 0, %s206
      %s208 = sphi 0, %s206
      %s209 = sphi 0, %s208
      %s223 = sphi 0, %s209
      %s227 = sphi 0, %s227
      %s229 = sphi 0, %s227
      %s230 = sphi 0, %s229
      %s244 = sphi 0, %s230
      %s248 = sphi 0, %s248
      %s250 = sphi 0, %s248
      %s251 = sphi 0, %s250
      %s265 = sphi 0, %s251
      %s271 = sphi 0, %s273
      %s274 = sphi 0, %s271
      %s275 = sphi 0, %s274
      %s291 = sphi 0, %s275
    $region4: #{tpu_custom_call.1} parent=1 // loop_header_branch
      %28 = sbr.rel (%p26) target = $region8
    $region5: #{tpu_custom_call.1} parent=1 // loop_body
      %s30 = ssub.s32 %s25, 1
      %s31 = ssub.s32 %s25, 2
      %s32 = sadd.s32 %s25, 1
      %s33 = ssub.s32 %s25, %s32
      %p34 = scmp.eq.s32.totalorder %s33, 0
      %s36 = sadd.s32 %s35, 1
      %s37 = scalar_select %p34, %s35, %s36
      %p40 = pneg %p34
      %p41 = scmp.eq.s32.totalorder %s25, 1
      %p42 = por %p40, %p41
      %p43 = scmp.ne.s32.totalorder %s35, %s38
      %p44 = scmp.eq.s32.totalorder %s25, 0
      %p45 = por %p43, %p44
      %p46 = scmp.ne.s32.totalorder %s35, %s38
      %p47 = scmp.eq.s32.totalorder %s30, 1
      %p48 = por %p46, %p47
      %p49 = scmp.ne.s32.totalorder %s38, %s39
      %p50 = scmp.eq.s32.totalorder %s30, 0
      %p51 = por %p49, %p50
      %p52 = scmp.ne.s32.totalorder %s38, %s39
      %p53 = scmp.eq.s32.totalorder %s31, 1
      %p54 = por %p52, %p53
      %p56 = scmp.ne.s32.totalorder %s39, %s55
      %p57 = scmp.eq.s32.totalorder %s31, 0
      %p58 = por %p56, %p57
      %s60 = sadd.s32 %s59, 1
      %p63 = scmp.eq.s32.totalorder %s25, 1
      %p64 = scmp.ne.s32.totalorder %s59, %s61
      %p65 = scmp.eq.s32.totalorder %s25, 0
      %p66 = por %p64, %p65
      %p67 = scmp.ne.s32.totalorder %s59, %s61
      %p68 = scmp.eq.s32.totalorder %s30, 1
      %p69 = por %p67, %p68
      %p70 = scmp.ne.s32.totalorder %s61, %s62
      %p71 = scmp.eq.s32.totalorder %s30, 0
      %p72 = por %p70, %p71
      %p73 = scmp.ne.s32.totalorder %s61, %s62
      %p74 = scmp.eq.s32.totalorder %s31, 1
      %p75 = por %p73, %p74
      %p77 = scmp.ne.s32.totalorder %s62, %s76
      %p78 = scmp.eq.s32.totalorder %s31, 0
      %p79 = por %p77, %p78
      %s81 = sadd.s32 %s80, 1
      %p84 = scmp.eq.s32.totalorder %s25, 1
      %p85 = scmp.ne.s32.totalorder %s80, %s82
      %p86 = scmp.eq.s32.totalorder %s25, 0
      %p87 = por %p85, %p86
      %p88 = scmp.ne.s32.totalorder %s80, %s82
      %p89 = scmp.eq.s32.totalorder %s30, 1
      %p90 = por %p88, %p89
      %p91 = scmp.ne.s32.totalorder %s82, %s83
      %p92 = scmp.eq.s32.totalorder %s30, 0
      %p93 = por %p91, %p92
      %p94 = scmp.ne.s32.totalorder %s82, %s83
      %p95 = scmp.eq.s32.totalorder %s31, 1
      %p96 = por %p94, %p95
      %p98 = scmp.ne.s32.totalorder %s83, %s97
      %p99 = scmp.eq.s32.totalorder %s31, 0
      %p100 = por %p98, %p99
      %s102 = sadd.s32 %s101, 1
      %p105 = scmp.eq.s32.totalorder %s25, 1
      %p106 = scmp.ne.s32.totalorder %s101, %s103
      %p107 = scmp.eq.s32.totalorder %s25, 0
      %p108 = por %p106, %p107
      %p109 = scmp.ne.s32.totalorder %s101, %s103
      %p110 = scmp.eq.s32.totalorder %s30, 1
      %p111 = por %p109, %p110
      %p112 = scmp.ne.s32.totalorder %s103, %s104
      %p113 = scmp.eq.s32.totalorder %s30, 0
      %p114 = por %p112, %p113
      %p115 = scmp.ne.s32.totalorder %s103, %s104
      %p116 = scmp.eq.s32.totalorder %s31, 1
      %p117 = por %p115, %p116
      %p119 = scmp.ne.s32.totalorder %s104, %s118
      %p120 = scmp.eq.s32.totalorder %s31, 0
      %p121 = por %p119, %p120
      %s123 = sadd.s32 %s122, 1
      %p126 = scmp.eq.s32.totalorder %s25, 1
      %p127 = scmp.ne.s32.totalorder %s122, %s124
      %p128 = scmp.eq.s32.totalorder %s25, 0
      %p129 = por %p127, %p128
      %p130 = scmp.ne.s32.totalorder %s122, %s124
      %p131 = scmp.eq.s32.totalorder %s30, 1
      %p132 = por %p130, %p131
      %p133 = scmp.ne.s32.totalorder %s124, %s125
      %p134 = scmp.eq.s32.totalorder %s30, 0
      %p135 = por %p133, %p134
      %p136 = scmp.ne.s32.totalorder %s124, %s125
      %p137 = scmp.eq.s32.totalorder %s31, 1
      %p138 = por %p136, %p137
      %p140 = scmp.ne.s32.totalorder %s125, %s139
      %p141 = scmp.eq.s32.totalorder %s31, 0
      %p142 = por %p140, %p141
      %s144 = sadd.s32 %s143, 1
      %p147 = scmp.eq.s32.totalorder %s25, 1
      %p148 = scmp.ne.s32.totalorder %s143, %s145
      %p149 = scmp.eq.s32.totalorder %s25, 0
      %p150 = por %p148, %p149
      %p151 = scmp.ne.s32.totalorder %s143, %s145
      %p152 = scmp.eq.s32.totalorder %s30, 1
      %p153 = por %p151, %p152
      %p154 = scmp.ne.s32.totalorder %s145, %s146
      %p155 = scmp.eq.s32.totalorder %s30, 0
      %p156 = por %p154, %p155
      %p157 = scmp.ne.s32.totalorder %s145, %s146
      %p158 = scmp.eq.s32.totalorder %s31, 1
      %p159 = por %p157, %p158
      %p161 = scmp.ne.s32.totalorder %s146, %s160
      %p162 = scmp.eq.s32.totalorder %s31, 0
      %p163 = por %p161, %p162
      %s165 = sadd.s32 %s164, 1
      %p168 = scmp.eq.s32.totalorder %s25, 1
      %p169 = scmp.ne.s32.totalorder %s164, %s166
      %p170 = scmp.eq.s32.totalorder %s25, 0
      %p171 = por %p169, %p170
      %p172 = scmp.ne.s32.totalorder %s164, %s166
      %p173 = scmp.eq.s32.totalorder %s30, 1
      %p174 = por %p172, %p173
      %p175 = scmp.ne.s32.totalorder %s166, %s167
      %p176 = scmp.eq.s32.totalorder %s30, 0
      %p177 = por %p175, %p176
      %p178 = scmp.ne.s32.totalorder %s166, %s167
      %p179 = scmp.eq.s32.totalorder %s31, 1
      %p180 = por %p178, %p179
      %p182 = scmp.ne.s32.totalorder %s167, %s181
      %p183 = scmp.eq.s32.totalorder %s31, 0
      %p184 = por %p182, %p183
      %s186 = sadd.s32 %s185, 1
      %p189 = scmp.eq.s32.totalorder %s25, 1
      %p190 = scmp.ne.s32.totalorder %s185, %s187
      %p191 = scmp.eq.s32.totalorder %s25, 0
      %p192 = por %p190, %p191
      %p193 = scmp.ne.s32.totalorder %s185, %s187
      %p194 = scmp.eq.s32.totalorder %s30, 1
      %p195 = por %p193, %p194
      %p196 = scmp.ne.s32.totalorder %s187, %s188
      %p197 = scmp.eq.s32.totalorder %s30, 0
      %p198 = por %p196, %p197
      %p199 = scmp.ne.s32.totalorder %s187, %s188
      %p200 = scmp.eq.s32.totalorder %s31, 1
      %p201 = por %p199, %p200
      %p203 = scmp.ne.s32.totalorder %s188, %s202
      %p204 = scmp.eq.s32.totalorder %s31, 0
      %p205 = por %p203, %p204
      %s207 = sadd.s32 %s206, 1
      %p210 = scmp.eq.s32.totalorder %s25, 1
      %p211 = scmp.ne.s32.totalorder %s206, %s208
      %p212 = scmp.eq.s32.totalorder %s25, 0
      %p213 = por %p211, %p212
      %p214 = scmp.ne.s32.totalorder %s206, %s208
      %p215 = scmp.eq.s32.totalorder %s30, 1
      %p216 = por %p214, %p215
      %p217 = scmp.ne.s32.totalorder %s208, %s209
      %p218 = scmp.eq.s32.totalorder %s30, 0
      %p219 = por %p217, %p218
      %p220 = scmp.ne.s32.totalorder %s208, %s209
      %p221 = scmp.eq.s32.totalorder %s31, 1
      %p222 = por %p220, %p221
      %p224 = scmp.ne.s32.totalorder %s209, %s223
      %p225 = scmp.eq.s32.totalorder %s31, 0
      %p226 = por %p224, %p225
      %s228 = sadd.s32 %s227, 1
      %p231 = scmp.eq.s32.totalorder %s25, 1
      %p232 = scmp.ne.s32.totalorder %s227, %s229
      %p233 = scmp.eq.s32.totalorder %s25, 0
      %p234 = por %p232, %p233
      %p235 = scmp.ne.s32.totalorder %s227, %s229
      %p236 = scmp.eq.s32.totalorder %s30, 1
      %p237 = por %p235, %p236
      %p238 = scmp.ne.s32.totalorder %s229, %s230
      %p239 = scmp.eq.s32.totalorder %s30, 0
      %p240 = por %p238, %p239
      %p241 = scmp.ne.s32.totalorder %s229, %s230
      %p242 = scmp.eq.s32.totalorder %s31, 1
      %p243 = por %p241, %p242
      %p245 = scmp.ne.s32.totalorder %s230, %s244
      %p246 = scmp.eq.s32.totalorder %s31, 0
      %p247 = por %p245, %p246
      %s249 = sadd.s32 %s248, 1
      %p252 = scmp.eq.s32.totalorder %s25, 1
      %p253 = scmp.ne.s32.totalorder %s248, %s250
      %p254 = scmp.eq.s32.totalorder %s25, 0
      %p255 = por %p253, %p254
      %p256 = scmp.ne.s32.totalorder %s248, %s250
      %p257 = scmp.eq.s32.totalorder %s30, 1
      %p258 = por %p256, %p257
      %p259 = scmp.ne.s32.totalorder %s250, %s251
      %p260 = scmp.eq.s32.totalorder %s30, 0
      %p261 = por %p259, %p260
      %p262 = scmp.ne.s32.totalorder %s250, %s251
      %p263 = scmp.eq.s32.totalorder %s31, 1
      %p264 = por %p262, %p263
      %p266 = scmp.ne.s32.totalorder %s251, %s265
      %p267 = scmp.eq.s32.totalorder %s31, 0
      %p268 = por %p266, %p267
      %s269 = ssub.s32 %s25, %s32
      %p270 = scmp.eq.s32.totalorder %s269, 0
      %s272 = sadd.s32 %s271, 1
      %s273 = scalar_select %p270, %s271, %s272
      %p276 = pneg %p270
      %p277 = scmp.eq.s32.totalorder %s25, 1
      %p278 = por %p276, %p277
      %p279 = scmp.ne.s32.totalorder %s271, %s274
      %p280 = scmp.eq.s32.totalorder %s25, 0
      %p281 = por %p279, %p280
      %p282 = scmp.ne.s32.totalorder %s271, %s274
      %p283 = scmp.eq.s32.totalorder %s30, 1
      %p284 = por %p282, %p283
      %p285 = scmp.ne.s32.totalorder %s274, %s275
      %p286 = scmp.eq.s32.totalorder %s30, 0
      %p287 = por %p285, %p286
      %p288 = scmp.ne.s32.totalorder %s274, %s275
      %p289 = scmp.eq.s32.totalorder %s31, 1
      %p290 = por %p288, %p289
      %p292 = scmp.ne.s32.totalorder %s275, %s291
      %p293 = scmp.eq.s32.totalorder %s31, 0
      %p294 = por %p292, %p293
      %p295 = scmp.le.s32.totalorder 1, %s25
      %p296 = scmp.lt.s32.totalorder %s25, 3
      %p297 = pnand %p295, %p296
      %p298 = pneg %p297
      // Predicated region
      $region9: #{tpu_custom_call.1} parent=5 // pred_check
        _
      $region10: #{tpu_custom_call.1} parent=5 // pred_check_branch
        %300 = sbr.rel (%p297) target = $region12
      $region11: #{tpu_custom_call.1} parent=5 // pred_region
        %s301 = ssub.s32 %s25, 1
        // Predicated region
        $region13: #{tpu_custom_call.1} parent=11 // pred_check
          %p302 = pneg %p72
        $region14: #{tpu_custom_call.1} parent=11 // pred_check_branch
          %304 = sbr.rel (%p302) target = $region16
        $region15: #{tpu_custom_call.1} parent=11 // pred_region
          %s306 = ssub.s32 256, 256
          %307 = vsyncadd [#allocation9], %s306
          %s308 = sshll.u32 [#allocation8], 4
          %s309 = int_to_ptr.vmem [resolvable:$true] %s308
          %314 = dma.hbm_to_vmem [thread:$0]  %s1, 256, %s309, [#allocation9], 64, 64, 4
        $region16: #{tpu_custom_call.1} parent=11 // pred_fallthru
          _
        // Predicated region
        $region17: #{tpu_custom_call.1} parent=11 // pred_check
          %p315 = pneg %p93
        $region18: #{tpu_custom_call.1} parent=11 // pred_check_branch
          %317 = sbr.rel (%p315) target = $region20
        $region19: #{tpu_custom_call.1} parent=11 // pred_region
          _
        $region20: #{tpu_custom_call.1} parent=11 // pred_fallthru
          _
        // Predicated region
        $region21: #{tpu_custom_call.1} parent=11 // pred_check
          %p318 = pneg %p114
        $region22: #{tpu_custom_call.1} parent=11 // pred_check_branch
          %320 = sbr.rel (%p318) target = $region24
        $region23: #{tpu_custom_call.1} parent=11 // pred_region
          %s322 = ssub.s32 1024, 1024
          %323 = vsyncadd [#allocation9], %s322
          %s324 = sshll.u32 [#allocation10], 4
          %s325 = int_to_ptr.vmem [resolvable:$true] %s324
          %330 = dma.hbm_to_vmem [thread:$0]  %s3, 1024, %s325, [#allocation9], 64, 64, 4
        $region24: #{tpu_custom_call.1} parent=11 // pred_fallthru
          _
        // Predicated region
        $region25: #{tpu_custom_call.1} parent=11 // pred_check
          %p331 = pneg %p135
        $region26: #{tpu_custom_call.1} parent=11 // pred_check_branch
          %333 = sbr.rel (%p331) target = $region28
        $region27: #{tpu_custom_call.1} parent=11 // pred_region
          %s335 = ssub.s32 1024, 1024
          %336 = vsyncadd [#allocation12], %s335
          %s337 = sshll.u32 [#allocation11], 4
          %s338 = int_to_ptr.vmem [resolvable:$true] %s337
          %343 = dma.hbm_to_vmem [thread:$0]  %s4, 1024, %s338, [#allocation12], 64, 64, 4
        $region28: #{tpu_custom_call.1} parent=11 // pred_fallthru
          _
        // Predicated region
        $region29: #{tpu_custom_call.1} parent=11 // pred_check
          %p344 = pneg %p156
        $region30: #{tpu_custom_call.1} parent=11 // pred_check_branch
          %346 = sbr.rel (%p344) target = $region32
        $region31: #{tpu_custom_call.1} parent=11 // pred_region
          _
        $region32: #{tpu_custom_call.1} parent=11 // pred_fallthru
          _
        // Predicated region
        $region33: #{tpu_custom_call.1} parent=11 // pred_check
          %p347 = pneg %p177
        $region34: #{tpu_custom_call.1} parent=11 // pred_check_branch
          %349 = sbr.rel (%p347) target = $region36
        $region35: #{tpu_custom_call.1} parent=11 // pred_region
          %s351 = ssub.s32 1024, 1024
          %352 = vsyncadd [#allocation12], %s351
          %s353 = sshll.u32 [#allocation13], 4
          %s354 = int_to_ptr.vmem [resolvable:$true] %s353
          %359 = dma.hbm_to_vmem [thread:$0]  %s6, 1024, %s354, [#allocation12], 64, 64, 4
        $region36: #{tpu_custom_call.1} parent=11 // pred_fallthru
          _
        // Predicated region
        $region37: #{tpu_custom_call.1} parent=11 // pred_check
          %p360 = pneg %p198
        $region38: #{tpu_custom_call.1} parent=11 // pred_check_branch
          %362 = sbr.rel (%p360) target = $region40
        $region39: #{tpu_custom_call.1} parent=11 // pred_region
          %s364 = ssub.s32 1024, 1024
          %365 = vsyncadd [#allocation15], %s364
          %s366 = sshll.u32 [#allocation14], 4
          %s367 = int_to_ptr.vmem [resolvable:$true] %s366
          %372 = dma.hbm_to_vmem [thread:$0]  %s7, 1024, %s367, [#allocation15], 64, 64, 4
        $region40: #{tpu_custom_call.1} parent=11 // pred_fallthru
          _
        // Predicated region
        $region41: #{tpu_custom_call.1} parent=11 // pred_check
          %p373 = pneg %p219
        $region42: #{tpu_custom_call.1} parent=11 // pred_check_branch
          %375 = sbr.rel (%p373) target = $region44
        $region43: #{tpu_custom_call.1} parent=11 // pred_region
          _
        $region44: #{tpu_custom_call.1} parent=11 // pred_fallthru
          _
        // Predicated region
        $region45: #{tpu_custom_call.1} parent=11 // pred_check
          %p376 = pneg %p240
        $region46: #{tpu_custom_call.1} parent=11 // pred_check_branch
          %378 = sbr.rel (%p376) target = $region48
        $region47: #{tpu_custom_call.1} parent=11 // pred_region
          _
        $region48: #{tpu_custom_call.1} parent=11 // pred_fallthru
          _
        // Predicated region
        $region49: #{tpu_custom_call.1} parent=11 // pred_check
          %p379 = pneg %p261
        $region50: #{tpu_custom_call.1} parent=11 // pred_check_branch
          %381 = sbr.rel (%p379) target = $region52
        $region51: #{tpu_custom_call.1} parent=11 // pred_region
          _
        $region52: #{tpu_custom_call.1} parent=11 // pred_fallthru
          _
      $region12: #{tpu_custom_call.1} parent=5 // pred_fallthru
        _
      %p382 = scmp.lt.s32.totalorder %s25, 2
      // Predicated region
      $region53: #{tpu_custom_call.1} parent=5 // pred_check
        %p383 = pneg %p382
      $region54: #{tpu_custom_call.1} parent=5 // pred_check_branch
        %385 = sbr.rel (%p383) target = $region56
      $region55: #{tpu_custom_call.1} parent=5 // pred_region
        // Predicated region
        $region57: #{tpu_custom_call.1} parent=55 // pred_check
          %p386 = pneg %p45
        $region58: #{tpu_custom_call.1} parent=55 // pred_check_branch
          %388 = sbr.rel (%p386) target = $region60
        $region59: #{tpu_custom_call.1} parent=55 // pred_region
          #allocation17 [shape = 'u32[6]{0}', space=smem, size = 0x18, scoped, tag = 'DMA stride descriptor']
          %s389 = sand.u32 %s35, 1
          %s390 = scalar_lea.sflag [#allocation7], %s389
          %s391 = sand.u32 %s35, 1
          %s392 = smul.addr %s391, 64
          %s393 = scalar_lea.vmem [#allocation6], %s392
          %s394 = smul.u32 2, %s25
          %s396 = ssub.s32 1024, 1024
          %397 = vsyncadd %s390, %s396
          %s398 = smul.addr %s394, 64
          %s399 = scalar_lea.hbm %s0, %s398
          %s401 = sshll.u32 1, 14
          %s402 = sxor.u32 4294967295, %s401
          %s404 = sld [smem:[#allocation0]]
          %s405 = sadd.s32 2, %s404
          %s407 = sshll.u32 7, 26
          %s408 = sxor.u32 4294967295, %s407
          %s409 = sand.u32 0, %s408
          %s410 = sshll.u32 %s405, 26
          %s411 = sor.u32 %s409, %s410
          %s412 = sshll.u32 %s393, 4
          %s413 = int_to_ptr.vmem [resolvable:$true] %s412
          %419 = sst [smem:[#allocation17]] 256
          %s420 = scalar_lea.smem [#allocation17], 1
          %421 = sst [smem:[%s420]] 128
          %s422 = scalar_lea.smem [#allocation17], 2
          %423 = sst [smem:[%s422]] 2
          %s424 = scalar_lea.smem [#allocation17], 3
          %425 = sst [smem:[%s424]] 64
          %s426 = scalar_lea.smem [#allocation17], 4
          %427 = sst [smem:[%s426]] 64
          %s428 = scalar_lea.smem [#allocation17], 5
          %429 = sst [smem:[%s428]] 4
          %431 = dma.general %s399, 1024, %s413, %s390, 131072, [#allocation17], %s411, 0
        $region60: #{tpu_custom_call.1} parent=55 // pred_fallthru
          _
      $region56: #{tpu_custom_call.1} parent=5 // pred_fallthru
        _
      %p432 = scmp.le.s32.totalorder 1, %s25
      %p433 = scmp.lt.s32.totalorder %s25, 3
      %p434 = pnand %p432, %p433
      %p435 = pneg %p434
      // Predicated region
      $region61: #{tpu_custom_call.1} parent=5 // pred_check
        _
      $region62: #{tpu_custom_call.1} parent=5 // pred_check_branch
        %437 = sbr.rel (%p434) target = $region64
      $region63: #{tpu_custom_call.1} parent=5 // pred_region
        %s438 = ssub.s32 %s25, 1
        %s439 = sand.u32 %s38, 1
        %s440 = scalar_lea.sflag [#allocation7], %s439
        %s441 = sand.u32 %s38, 1
        %s442 = smul.addr %s441, 64
        %s443 = scalar_lea.vmem [#allocation6], %s442
        // Predicated region
        $region65: #{tpu_custom_call.1} parent=63 // pred_check
          %p444 = pneg %p51
        $region66: #{tpu_custom_call.1} parent=63 // pred_check_branch
          %446 = sbr.rel (%p444) target = $region68
        $region67: #{tpu_custom_call.1} parent=63 // pred_region
          %447 = dma.done %s440, 1024
        $region68: #{tpu_custom_call.1} parent=63 // pred_fallthru
          _
        // Predicated region
        $region69: #{tpu_custom_call.1} parent=63 // pred_check
          %p448 = pneg %p72
        $region70: #{tpu_custom_call.1} parent=63 // pred_check_branch
          %450 = sbr.rel (%p448) target = $region72
        $region71: #{tpu_custom_call.1} parent=63 // pred_region
          %451 = dma.done [#allocation9], 256
        $region72: #{tpu_custom_call.1} parent=63 // pred_fallthru
          _
        // Predicated region
        $region73: #{tpu_custom_call.1} parent=63 // pred_check
          %p452 = pneg %p114
        $region74: #{tpu_custom_call.1} parent=63 // pred_check_branch
          %454 = sbr.rel (%p452) target = $region76
        $region75: #{tpu_custom_call.1} parent=63 // pred_region
          %455 = dma.done [#allocation9], 1024
        $region76: #{tpu_custom_call.1} parent=63 // pred_fallthru
          _
        // Predicated region
        $region77: #{tpu_custom_call.1} parent=63 // pred_check
          %p456 = pneg %p135
        $region78: #{tpu_custom_call.1} parent=63 // pred_check_branch
          %458 = sbr.rel (%p456) target = $region80
        $region79: #{tpu_custom_call.1} parent=63 // pred_region
          %459 = dma.done [#allocation12], 1024
        $region80: #{tpu_custom_call.1} parent=63 // pred_fallthru
          _
        // Predicated region
        $region81: #{tpu_custom_call.1} parent=63 // pred_check
          %p460 = pneg %p177
        $region82: #{tpu_custom_call.1} parent=63 // pred_check_branch
          %462 = sbr.rel (%p460) target = $region84
        $region83: #{tpu_custom_call.1} parent=63 // pred_region
          %463 = dma.done [#allocation12], 1024
        $region84: #{tpu_custom_call.1} parent=63 // pred_fallthru
          _
        // Predicated region
        $region85: #{tpu_custom_call.1} parent=63 // pred_check
          %p464 = pneg %p198
        $region86: #{tpu_custom_call.1} parent=63 // pred_check_branch
          %466 = sbr.rel (%p464) target = $region88
        $region87: #{tpu_custom_call.1} parent=63 // pred_region
          %467 = dma.done [#allocation15], 1024
        $region88: #{tpu_custom_call.1} parent=63 // pred_fallthru
          _
        %s468 = sand.u32 %s38, 1
        %s469 = scalar_lea.sflag [#allocation7], %s468
        %s470 = sand.u32 %s38, 1
        %s471 = smul.addr %s470, 64
        %s472 = scalar_lea.vmem [#allocation6], %s471
        %p473 = pneg %p51
        %p474 = pneg %p48
        %p475 = pneg %p72
        %p476 = pneg %p69
        %p477 = pneg %p93
        %p478 = pneg %p90
        %p479 = pneg %p114
        %p480 = pneg %p111
        %p481 = pneg %p135
        %p482 = pneg %p132
        %p483 = pneg %p156
        %p484 = pneg %p153
        %p485 = pneg %p177
        %p486 = pneg %p174
        %p487 = pneg %p198
        %p488 = pneg %p195
        %p489 = pneg %p219
        %p490 = pneg %p216
        %p491 = pneg %p240
        %p492 = pneg %p237
        %p493 = pneg %p261
        %p494 = pneg %p258
        %p495 = pneg %p287
        %p496 = pneg %p284
        %s497 = smul.u32 2, %s30
        %p498 = scmp.lt.s32.totalorder %s497, 3
        %s499 = scalar_select %p498, %s497, 3
        %s500 = smul.addr %s499, 8
        %s501 = scalar_lea.vmem %s11, %s500
        %s502 = smul.u32 2, %s30
        %s503 = smul.u32 2, %s30
        %p504 = scmp.lt.s32.totalorder %s503, 3
        %s505 = scalar_select %p504, %s503, 3
        %s506 = smul.addr %s505, 8
        %s507 = scalar_lea.vmem %s11, %s506
        %s508 = smul.u32 2, %s30
        %v510 = vlaneseq
        %v511 = vand.u32 %v510, 127
        %vm512 = vcmp.lt.s32.totalorder %v511, 32
        %v513 = vld [vmem:[%s443] sm:$0xf]
        %v514 = vld [vmem:[%s443 + $0x4] sm:$0xf]
        %v515 = vld [vmem:[%s443 + $0x8] sm:$0xf]
        %v516 = vld [vmem:[%s443 + $0xc] sm:$0xf]
        %v517 = vld [vmem:[%s443 + $0x10] sm:$0xf]
        %v518 = vld [vmem:[%s443 + $0x14] sm:$0xf]
        %v519 = vld [vmem:[%s443 + $0x18] sm:$0xf]
        %v520 = vld [vmem:[%s443 + $0x1c] sm:$0xf]
        %v521 = vld [vmem:[%s443 + $0x20] sm:$0xf]
        %v522 = vld [vmem:[%s443 + $0x24] sm:$0xf]
        %v523 = vld [vmem:[%s443 + $0x28] sm:$0xf]
        %v524 = vld [vmem:[%s443 + $0x2c] sm:$0xf]
        %v525 = vld [vmem:[%s443 + $0x30] sm:$0xf]
        %v526 = vld [vmem:[%s443 + $0x34] sm:$0xf]
        %v527 = vld [vmem:[%s443 + $0x38] sm:$0xf]
        %v528 = vld [vmem:[%s443 + $0x3c] sm:$0xf]
        %v529 = vld [vmem:[#allocation8] sm:$0xf]
        %v530 = vld [vmem:[#allocation8 + $0x4] sm:$0xf]
        %v531 = vld [vmem:[#allocation8 + $0x8] sm:$0xf]
        %v532 = vld [vmem:[#allocation8 + $0xc] sm:$0xf]
        %v533 = vld [vmem:[%s2] sm:$0x1]
        %v535 = vlaneseq
        %v536 = vshrl.u32 %v535, 7
        %v537 = vsub.s32 0, %v536
        %v538 = vrot.slane %v533, %v537
        %v556 = vunpack.c.l.b16 %v513
        %v557 = vunpack.c.l.b16 %v514
        %v558 = vunpack.c.l.b16 %v515
        %v559 = vunpack.c.l.b16 %v516
        %v560 = vunpack.c.l.b16 %v517
        %v561 = vunpack.c.l.b16 %v518
        %v562 = vunpack.c.l.b16 %v519
        %v563 = vunpack.c.l.b16 %v520
        %v564 = vunpack.c.l.b16 %v521
        %v565 = vunpack.c.l.b16 %v522
        %v566 = vunpack.c.l.b16 %v523
        %v567 = vunpack.c.l.b16 %v524
        %v568 = vunpack.c.l.b16 %v525
        %v569 = vunpack.c.l.b16 %v526
        %v570 = vunpack.c.l.b16 %v527
        %v571 = vunpack.c.l.b16 %v528
        %v572 = vpack.c.b16 %v557, %v556
        %v573 = vpack.c.b16 %v559, %v558
        %v574 = vpack.c.b16 %v561, %v560
        %v575 = vpack.c.b16 %v563, %v562
        %v576 = vpack.c.b16 %v565, %v564
        %v577 = vpack.c.b16 %v567, %v566
        %v578 = vpack.c.b16 %v569, %v568
        %v579 = vpack.c.b16 %v571, %v570
        %v584 = vunpack.c.l.b16 %v529
        %v585 = vunpack.c.l.b16 %v530
        %v586 = vunpack.c.l.b16 %v531
        %v587 = vunpack.c.l.b16 %v532
        %v588 = vpack.c.b16 %v585, %v584
        %v589 = vpack.c.b16 %v587, %v586
        %vm592 = vcmask 261120
        %v594 = vsel %vm592, %v572, 0
        %v597 = vsel %vm592, %v573, 0
        %v600 = vsel %vm592, %v574, 0
        %v603 = vsel %vm592, %v575, 0
        %v606 = vsel %vm592, %v576, 0
        %v609 = vsel %vm592, %v577, 0
        %v612 = vsel %vm592, %v578, 0
        %v615 = vsel %vm592, %v579, 0
        %617 = vmatprep.subr.bf16.mxu0 0
        %618 = vmatpush1.bf16.msra.mxu0 0
        %619 = vmatprep.subr.bf16.mxu0 0
        %620 = vmatpush1.bf16.msra.mxu0 0
        %621 = vmatprep.subr.bf16.mxu0 0
        %622 = vmatpush1.bf16.msra.mxu0 0
        %623 = vmatprep.subr.bf16.mxu0 0
        %624 = vmatpush1.bf16.msra.mxu0 0
        %625 = vmatprep.subr.bf16.mxu0 0
        %626 = vmatpush1.bf16.msra.mxu0 0
        %627 = vmatprep.subr.bf16.mxu0 0
        %628 = vmatpush1.bf16.msra.mxu0 0
        %629 = vmatprep.subr.bf16.mxu0 0
        %630 = vmatpush1.bf16.msra.mxu0 %v589
        %631 = vmatprep.subr.bf16.mxu0 0
        %632 = vmatpush1.bf16.msra.mxu0 %v588
        %633 = vmatprep.subr.bf16.mxu0 0
        %634 = vmatpush2.bf16.msra.mxu0 0
        %635 = vmatprep.subr.bf16.mxu0 0
        %636 = vmatpush2.bf16.msra.mxu0 0
        %637 = vmatprep.subr.bf16.mxu0 0
        %638 = vmatpush2.bf16.msra.mxu0 0
        %639 = vmatprep.subr.bf16.mxu0 0
        %640 = vmatpush2.bf16.msra.mxu0 0
        %641 = vmatprep.subr.bf16.mxu0 0
        %642 = vmatpush2.bf16.msra.mxu0 0
        %643 = vmatprep.subr.bf16.mxu0 0
        %644 = vmatpush2.bf16.msra.mxu0 0
        %645 = vmatprep.subr.bf16.mxu0 0
        %646 = vmatpush2.bf16.msra.mxu0 0
        %647 = vmatprep.subr.bf16.mxu0 0
        %648 = vmatpush2.bf16.msra.mxu0 0
        %649 = vmatprep.mubr.bf16.mxu0 0
        %650 = vmatmul.mubr.bf16.gmra.mxu0 %v594
        %v651 = vpop.f32.mrf.mxu0
        %v652 = vadd.f32 %v538, %v651
        %v653 = vpop.f32.mrf.mxu0
        %v654 = vpop.f32.mrf.mxu0
        %v655 = vadd.f32 %v538, %v654
        %v656 = vpop.f32.mrf.mxu0
        %657 = vmatprep.mubr.bf16.mxu0 0
        %658 = vmatmul.mubr.bf16.gmra.mxu0 %v597
        %v659 = vpop.f32.mrf.mxu0
        %v660 = vadd.f32 %v538, %v659
        %v661 = vpop.f32.mrf.mxu0
        %v662 = vpop.f32.mrf.mxu0
        %v663 = vadd.f32 %v538, %v662
        %v664 = vpop.f32.mrf.mxu0
        %665 = vmatprep.mubr.bf16.mxu0 0
        %666 = vmatmul.mubr.bf16.gmra.mxu0 %v600
        %v667 = vpop.f32.mrf.mxu0
        %v668 = vadd.f32 %v538, %v667
        %v669 = vpop.f32.mrf.mxu0
        %v670 = vpop.f32.mrf.mxu0
        %v671 = vadd.f32 %v538, %v670
        %v672 = vpop.f32.mrf.mxu0
        %673 = vmatprep.mubr.bf16.mxu0 0
        %674 = vmatmul.mubr.bf16.gmra.mxu0 %v603
        %v675 = vpop.f32.mrf.mxu0
        %v676 = vadd.f32 %v538, %v675
        %v677 = vpop.f32.mrf.mxu0
        %v678 = vpop.f32.mrf.mxu0
        %v679 = vadd.f32 %v538, %v678
        %v680 = vpop.f32.mrf.mxu0
        %681 = vmatprep.mubr.bf16.mxu0 0
        %682 = vmatmul.mubr.bf16.gmra.mxu0 %v606
        %v683 = vpop.f32.mrf.mxu0
        %v684 = vadd.f32 %v538, %v683
        %v685 = vpop.f32.mrf.mxu0
        %v686 = vpop.f32.mrf.mxu0
        %v687 = vadd.f32 %v538, %v686
        %v688 = vpop.f32.mrf.mxu0
        %689 = vmatprep.mubr.bf16.mxu0 0
        %690 = vmatmul.mubr.bf16.gmra.mxu0 %v609
        %v691 = vpop.f32.mrf.mxu0
        %v692 = vadd.f32 %v538, %v691
        %v693 = vpop.f32.mrf.mxu0
        %v694 = vpop.f32.mrf.mxu0
        %v695 = vadd.f32 %v538, %v694
        %v696 = vpop.f32.mrf.mxu0
        %697 = vmatprep.mubr.bf16.mxu0 0
        %698 = vmatmul.mubr.bf16.gmra.mxu0 %v612
        %v699 = vpop.f32.mrf.mxu0
        %v700 = vadd.f32 %v538, %v699
        %v701 = vpop.f32.mrf.mxu0
        %v702 = vpop.f32.mrf.mxu0
        %v703 = vadd.f32 %v538, %v702
        %v704 = vpop.f32.mrf.mxu0
        %705 = vmatprep.mubr.bf16.mxu0 0
        %706 = vmatmul.mubr.bf16.gmra.mxu0 %v615
        %v707 = vpop.f32.mrf.mxu0
        %v708 = vadd.f32 %v538, %v707
        %v709 = vpop.f32.mrf.mxu0
        %v710 = vpop.f32.mrf.mxu0
        %v711 = vadd.f32 %v538, %v710
        %v712 = vpop.f32.mrf.mxu0
        %713 = vdwg.mxu0
        %v714 = vpack.c.bf16 %v655, %v652
        %v715 = vpack.c.bf16 %v663, %v660
        %v716 = vpack.c.bf16 %v671, %v668
        %v717 = vpack.c.bf16 %v679, %v676
        %v718 = vpack.c.bf16 %v687, %v684
        %v719 = vpack.c.bf16 %v695, %v692
        %v720 = vpack.c.bf16 %v703, %v700
        %v721 = vpack.c.bf16 %v711, %v708
        %v722 = vld [vmem:[#allocation10] sm:$0xf]
        %v723 = vld [vmem:[#allocation10 + $0x4] sm:$0xf]
        %v724 = vld [vmem:[#allocation10 + $0x8] sm:$0xf]
        %v725 = vld [vmem:[#allocation10 + $0xc] sm:$0xf]
        %v726 = vld [vmem:[#allocation10 + $0x10] sm:$0xf]
        %v727 = vld [vmem:[#allocation10 + $0x14] sm:$0xf]
        %v728 = vld [vmem:[#allocation10 + $0x18] sm:$0xf]
        %v729 = vld [vmem:[#allocation10 + $0x1c] sm:$0xf]
        %v730 = vld [vmem:[#allocation10 + $0x20] sm:$0xf]
        %v731 = vld [vmem:[#allocation10 + $0x24] sm:$0xf]
        %v732 = vld [vmem:[#allocation10 + $0x28] sm:$0xf]
        %v733 = vld [vmem:[#allocation10 + $0x2c] sm:$0xf]
        %v734 = vld [vmem:[#allocation10 + $0x30] sm:$0xf]
        %v735 = vld [vmem:[#allocation10 + $0x34] sm:$0xf]
        %v736 = vld [vmem:[#allocation10 + $0x38] sm:$0xf]
        %v737 = vld [vmem:[#allocation10 + $0x3c] sm:$0xf]
        %v738 = vld [vmem:[%s5] sm:$0x1]
        %v740 = vlaneseq
        %v741 = vshrl.u32 %v740, 7
        %v742 = vsub.s32 0, %v741
        %v743 = vrot.slane %v738, %v742
        %v761 = vunpack.c.l.b16 %v722
        %v762 = vunpack.c.l.b16 %v723
        %v763 = vunpack.c.l.b16 %v724
        %v764 = vunpack.c.l.b16 %v725
        %v765 = vunpack.c.l.b16 %v726
        %v766 = vunpack.c.l.b16 %v727
        %v767 = vunpack.c.l.b16 %v728
        %v768 = vunpack.c.l.b16 %v729
        %v769 = vunpack.c.l.b16 %v730
        %v770 = vunpack.c.l.b16 %v731
        %v771 = vunpack.c.l.b16 %v732
        %v772 = vunpack.c.l.b16 %v733
        %v773 = vunpack.c.l.b16 %v734
        %v774 = vunpack.c.l.b16 %v735
        %v775 = vunpack.c.l.b16 %v736
        %v776 = vunpack.c.l.b16 %v737
        %v777 = vpack.c.b16 %v762, %v761
        %v778 = vpack.c.b16 %v764, %v763
        %v779 = vpack.c.b16 %v766, %v765
        %v780 = vpack.c.b16 %v768, %v767
        %v781 = vpack.c.b16 %v770, %v769
        %v782 = vpack.c.b16 %v772, %v771
        %v783 = vpack.c.b16 %v774, %v773
        %v784 = vpack.c.b16 %v776, %v775
        %793 = vmatprep.subr.bf16.mxu0 0
        %794 = vmatpush1.bf16.msra.mxu0 %v784
        %795 = vmatprep.subr.bf16.mxu0 0
        %796 = vmatpush1.bf16.msra.mxu0 %v783
        %797 = vmatprep.subr.bf16.mxu0 0
        %798 = vmatpush1.bf16.msra.mxu0 %v782
        %799 = vmatprep.subr.bf16.mxu0 0
        %800 = vmatpush1.bf16.msra.mxu0 %v781
        %801 = vmatprep.subr.bf16.mxu0 0
        %802 = vmatpush1.bf16.msra.mxu0 %v780
        %803 = vmatprep.subr.bf16.mxu0 0
        %804 = vmatpush1.bf16.msra.mxu0 %v779
        %805 = vmatprep.subr.bf16.mxu0 0
        %806 = vmatpush1.bf16.msra.mxu0 %v778
        %807 = vmatprep.subr.bf16.mxu0 0
        %808 = vmatpush1.bf16.msra.mxu0 %v777
        %809 = vmatprep.subr.bf16.mxu0 0
        %810 = vmatpush2.bf16.msra.mxu0 0
        %811 = vmatprep.subr.bf16.mxu0 0
        %812 = vmatpush2.bf16.msra.mxu0 0
        %813 = vmatprep.subr.bf16.mxu0 0
        %814 = vmatpush2.bf16.msra.mxu0 0
        %815 = vmatprep.subr.bf16.mxu0 0
        %816 = vmatpush2.bf16.msra.mxu0 0
        %817 = vmatprep.subr.bf16.mxu0 0
        %818 = vmatpush2.bf16.msra.mxu0 0
        %819 = vmatprep.subr.bf16.mxu0 0
        %820 = vmatpush2.bf16.msra.mxu0 0
        %821 = vmatprep.subr.bf16.mxu0 0
        %822 = vmatpush2.bf16.msra.mxu0 0
        %823 = vmatprep.subr.bf16.mxu0 0
        %824 = vmatpush2.bf16.msra.mxu0 0
        %825 = vmatprep.mubr.bf16.mxu0 0
        %826 = vmatmul.mubr.bf16.gmra.mxu0 %v714
        %v827 = vpop.f32.mrf.mxu0
        %v828 = vadd.f32 %v743, %v827
        %v829 = vpop.f32.mrf.mxu0
        %v830 = vpop.f32.mrf.mxu0
        %v831 = vadd.f32 %v743, %v830
        %v832 = vpop.f32.mrf.mxu0
        %833 = vmatprep.mubr.bf16.mxu0 0
        %834 = vmatmul.mubr.bf16.gmra.mxu0 %v715
        %v835 = vpop.f32.mrf.mxu0
        %v836 = vadd.f32 %v743, %v835
        %v837 = vpop.f32.mrf.mxu0
        %v838 = vpop.f32.mrf.mxu0
        %v839 = vadd.f32 %v743, %v838
        %v840 = vpop.f32.mrf.mxu0
        %841 = vmatprep.mubr.bf16.mxu0 0
        %842 = vmatmul.mubr.bf16.gmra.mxu0 %v716
        %v843 = vpop.f32.mrf.mxu0
        %v844 = vadd.f32 %v743, %v843
        %v845 = vpop.f32.mrf.mxu0
        %v846 = vpop.f32.mrf.mxu0
        %v847 = vadd.f32 %v743, %v846
        %v848 = vpop.f32.mrf.mxu0
        %849 = vmatprep.mubr.bf16.mxu0 0
        %850 = vmatmul.mubr.bf16.gmra.mxu0 %v717
        %v851 = vpop.f32.mrf.mxu0
        %v852 = vadd.f32 %v743, %v851
        %v853 = vpop.f32.mrf.mxu0
        %v854 = vpop.f32.mrf.mxu0
        %v855 = vadd.f32 %v743, %v854
        %v856 = vpop.f32.mrf.mxu0
        %857 = vmatprep.mubr.bf16.mxu0 0
        %858 = vmatmul.mubr.bf16.gmra.mxu0 %v718
        %v859 = vpop.f32.mrf.mxu0
        %v860 = vadd.f32 %v743, %v859
        %v861 = vpop.f32.mrf.mxu0
        %v862 = vpop.f32.mrf.mxu0
        %v863 = vadd.f32 %v743, %v862
        %v864 = vpop.f32.mrf.mxu0
        %865 = vmatprep.mubr.bf16.mxu0 0
        %866 = vmatmul.mubr.bf16.gmra.mxu0 %v719
        %v867 = vpop.f32.mrf.mxu0
        %v868 = vadd.f32 %v743, %v867
        %v869 = vpop.f32.mrf.mxu0
        %v870 = vpop.f32.mrf.mxu0
        %v871 = vadd.f32 %v743, %v870
        %v872 = vpop.f32.mrf.mxu0
        %873 = vmatprep.mubr.bf16.mxu0 0
        %874 = vmatmul.mubr.bf16.gmra.mxu0 %v720
        %v875 = vpop.f32.mrf.mxu0
        %v876 = vadd.f32 %v743, %v875
        %v877 = vpop.f32.mrf.mxu0
        %v878 = vpop.f32.mrf.mxu0
        %v879 = vadd.f32 %v743, %v878
        %v880 = vpop.f32.mrf.mxu0
        %881 = vmatprep.mubr.bf16.mxu0 0
        %882 = vmatmul.mubr.bf16.gmra.mxu0 %v721
        %v883 = vpop.f32.mrf.mxu0
        %v884 = vadd.f32 %v743, %v883
        %v885 = vpop.f32.mrf.mxu0
        %v886 = vpop.f32.mrf.mxu0
        %v887 = vadd.f32 %v743, %v886
        %v888 = vpop.f32.mrf.mxu0
        %889 = vdwg.mxu0
        %890 = vst [vmem:[#allocation2] sm:$0xff] %v828
        %891 = vst [vmem:[#allocation2 + $0x8] sm:$0xff] %v831
        %892 = vst [vmem:[#allocation2 + $0x10] sm:$0xff] %v836
        %893 = vst [vmem:[#allocation2 + $0x18] sm:$0xff] %v839
        %894 = vst [vmem:[#allocation2 + $0x20] sm:$0xff] %v844
        %895 = vst [vmem:[#allocation2 + $0x28] sm:$0xff] %v847
        %896 = vst [vmem:[#allocation2 + $0x30] sm:$0xff] %v852
        %897 = vst [vmem:[#allocation2 + $0x38] sm:$0xff] %v855
        %898 = vst [vmem:[#allocation2 + $0x40] sm:$0xff] %v860
        %899 = vst [vmem:[#allocation2 + $0x48] sm:$0xff] %v863
        %900 = vst [vmem:[#allocation2 + $0x50] sm:$0xff] %v868
        %901 = vst [vmem:[#allocation2 + $0x58] sm:$0xff] %v871
        %902 = vst [vmem:[#allocation2 + $0x60] sm:$0xff] %v876
        %903 = vst [vmem:[#allocation2 + $0x68] sm:$0xff] %v879
        %904 = vst [vmem:[#allocation2 + $0x70] sm:$0xff] %v884
        %905 = vst [vmem:[#allocation2 + $0x78] sm:$0xff] %v887
        %v906 = vld [vmem:[#allocation11] sm:$0xf]
        %v907 = vld [vmem:[#allocation11 + $0x4] sm:$0xf]
        %v908 = vld [vmem:[#allocation11 + $0x8] sm:$0xf]
        %v909 = vld [vmem:[#allocation11 + $0xc] sm:$0xf]
        %v910 = vld [vmem:[#allocation11 + $0x10] sm:$0xf]
        %v911 = vld [vmem:[#allocation11 + $0x14] sm:$0xf]
        %v912 = vld [vmem:[#allocation11 + $0x18] sm:$0xf]
        %v913 = vld [vmem:[#allocation11 + $0x1c] sm:$0xf]
        %v914 = vld [vmem:[#allocation11 + $0x20] sm:$0xf]
        %v915 = vld [vmem:[#allocation11 + $0x24] sm:$0xf]
        %v916 = vld [vmem:[#allocation11 + $0x28] sm:$0xf]
        %v917 = vld [vmem:[#allocation11 + $0x2c] sm:$0xf]
        %v918 = vld [vmem:[#allocation11 + $0x30] sm:$0xf]
        %v919 = vld [vmem:[#allocation11 + $0x34] sm:$0xf]
        %v920 = vld [vmem:[#allocation11 + $0x38] sm:$0xf]
        %v921 = vld [vmem:[#allocation11 + $0x3c] sm:$0xf]
        %v922 = vld [vmem:[#allocation2] sm:$0xff]
        %v923 = vld [vmem:[#allocation2 + $0x8] sm:$0xff]
        %s924 = scalar_lea.vmem [#allocation2], 112
        %v925 = vld [vmem:[%s924] sm:$0xff]
        %v926 = vld [vmem:[%s924 + $0x8] sm:$0xff]
        %v927 = vsel %vm512, %v922, %v925
        %v928 = vsel %vm512, %v923, %v926
        %v945 = vunpack.c.l.b16 %v906
        %v946 = vunpack.c.l.b16 %v907
        %v947 = vunpack.c.l.b16 %v908
        %v948 = vunpack.c.l.b16 %v909
        %v949 = vunpack.c.l.b16 %v910
        %v950 = vunpack.c.l.b16 %v911
        %v951 = vunpack.c.l.b16 %v912
        %v952 = vunpack.c.l.b16 %v913
        %v953 = vunpack.c.l.b16 %v914
        %v954 = vunpack.c.l.b16 %v915
        %v955 = vunpack.c.l.b16 %v916
        %v956 = vunpack.c.l.b16 %v917
        %v957 = vunpack.c.l.b16 %v918
        %v958 = vunpack.c.l.b16 %v919
        %v959 = vunpack.c.l.b16 %v920
        %v960 = vunpack.c.l.b16 %v921
        %v961 = vpack.c.b16 %v946, %v945
        %v962 = vpack.c.b16 %v948, %v947
        %v963 = vpack.c.b16 %v950, %v949
        %v964 = vpack.c.b16 %v952, %v951
        %v965 = vpack.c.b16 %v954, %v953
        %v966 = vpack.c.b16 %v956, %v955
        %v967 = vpack.c.b16 %v958, %v957
        %v968 = vpack.c.b16 %v960, %v959
        %977 = vmatprep.subr.bf16.mxu0 0
        %978 = vmatpush1.bf16.msra.mxu0 %v968
        %979 = vmatprep.subr.bf16.mxu0 0
        %980 = vmatpush1.bf16.msra.mxu0 %v967
        %981 = vmatprep.subr.bf16.mxu0 0
        %982 = vmatpush1.bf16.msra.mxu0 %v966
        %983 = vmatprep.subr.bf16.mxu0 0
        %984 = vmatpush1.bf16.msra.mxu0 %v965
        %985 = vmatprep.subr.bf16.mxu0 0
        %986 = vmatpush1.bf16.msra.mxu0 %v964
        %987 = vmatprep.subr.bf16.mxu0 0
        %988 = vmatpush1.bf16.msra.mxu0 %v963
        %989 = vmatprep.subr.bf16.mxu0 0
        %990 = vmatpush1.bf16.msra.mxu0 %v962
        %991 = vmatprep.subr.bf16.mxu0 0
        %992 = vmatpush1.bf16.msra.mxu0 %v961
        %993 = vmatprep.subr.bf16.mxu0 0
        %994 = vmatpush2.bf16.msra.mxu0 0
        %995 = vmatprep.subr.bf16.mxu0 0
        %996 = vmatpush2.bf16.msra.mxu0 0
        %997 = vmatprep.subr.bf16.mxu0 0
        %998 = vmatpush2.bf16.msra.mxu0 0
        %999 = vmatprep.subr.bf16.mxu0 0
        %1000 = vmatpush2.bf16.msra.mxu0 0
        %1001 = vmatprep.subr.bf16.mxu0 0
        %1002 = vmatpush2.bf16.msra.mxu0 0
        %1003 = vmatprep.subr.bf16.mxu0 0
        %1004 = vmatpush2.bf16.msra.mxu0 0
        %1005 = vmatprep.subr.bf16.mxu0 0
        %1006 = vmatpush2.bf16.msra.mxu0 0
        %1007 = vmatprep.subr.bf16.mxu0 0
        %1008 = vmatpush2.bf16.msra.mxu0 0
        %1009 = vmatprep.mubr.bf16.mxu0 0
        %1010 = vmatmul.mubr.bf16.gmra.mxu0 0
        %v1011 = vpop.f32.mrf.mxu0
        %v1012 = vadd.f32 0.0, %v1011
        %v1013 = vpop.f32.mrf.mxu0
        %v1014 = vpop.f32.mrf.mxu0
        %v1015 = vadd.f32 0.0, %v1014
        %v1016 = vpop.f32.mrf.mxu0
        %1017 = vdwg.mxu0
        %v1018 = vadd.f32 %v927, %v1012
        %v1019 = vadd.f32 %v928, %v1015
        %v1020 = vtanh.pop %v1018
        %v1021 = vtanh.pop %v1019
        %v1022 = vpack.c.bf16 %v1021, %v1020
        %v1024 = vunpack.c.l.b16 %v1022
        %v1025 = vunpack.c.h.b16 %v1022
        %v1026 = vpack.c.b16 %v1024, %v1024
        %v1027 = vpack.c.b16 %v1025, %v1025
        %1030 = vst [vmem:[#allocation3] sm:$0xf] %v1026
        %1031 = vst [vmem:[#allocation3 + $0x4] sm:$0xf] %v1027
        %s1032 = scalar_lea.vmem [#allocation4], 56
        %1033 = vst [vmem:[%s1032] sm:$0xf] %v1026
        %1034 = vst [vmem:[%s1032 + $0x4] sm:$0xf] %v1027
        %s1035 = scalar_lea.vmem [#allocation2], 16
        %v1036 = vld [vmem:[%s1035] sm:$0xff]
        %v1037 = vld [vmem:[%s1035 + $0x8] sm:$0xff]
        %s1038 = scalar_lea.vmem [#allocation2], 96
        %v1039 = vld [vmem:[%s1038] sm:$0xff]
        %v1040 = vld [vmem:[%s1038 + $0x8] sm:$0xff]
        %v1041 = vsel %vm512, %v1036, %v1039
        %v1042 = vsel %vm512, %v1037, %v1040
        %1043 = vmatprep.subr.bf16.mxu0 0
        %1044 = vmatpush1.bf16.msra.mxu0 %v968
        %1045 = vmatprep.subr.bf16.mxu0 0
        %1046 = vmatpush1.bf16.msra.mxu0 %v967
        %1047 = vmatprep.subr.bf16.mxu0 0
        %1048 = vmatpush1.bf16.msra.mxu0 %v966
        %1049 = vmatprep.subr.bf16.mxu0 0
        %1050 = vmatpush1.bf16.msra.mxu0 %v965
        %1051 = vmatprep.subr.bf16.mxu0 0
        %1052 = vmatpush1.bf16.msra.mxu0 %v964
        %1053 = vmatprep.subr.bf16.mxu0 0
        %1054 = vmatpush1.bf16.msra.mxu0 %v963
        %1055 = vmatprep.subr.bf16.mxu0 0
        %1056 = vmatpush1.bf16.msra.mxu0 %v962
        %1057 = vmatprep.subr.bf16.mxu0 0
        %1058 = vmatpush1.bf16.msra.mxu0 %v961
        %1059 = vmatprep.subr.bf16.mxu0 0
        %1060 = vmatpush2.bf16.msra.mxu0 0
        %1061 = vmatprep.subr.bf16.mxu0 0
        %1062 = vmatpush2.bf16.msra.mxu0 0
        %1063 = vmatprep.subr.bf16.mxu0 0
        %1064 = vmatpush2.bf16.msra.mxu0 0
        %1065 = vmatprep.subr.bf16.mxu0 0
        %1066 = vmatpush2.bf16.msra.mxu0 0
        %1067 = vmatprep.subr.bf16.mxu0 0
        %1068 = vmatpush2.bf16.msra.mxu0 0
        %1069 = vmatprep.subr.bf16.mxu0 0
        %1070 = vmatpush2.bf16.msra.mxu0 0
        %1071 = vmatprep.subr.bf16.mxu0 0
        %1072 = vmatpush2.bf16.msra.mxu0 0
        %1073 = vmatprep.subr.bf16.mxu0 0
        %1074 = vmatpush2.bf16.msra.mxu0 0
        %1075 = vmatprep.mubr.bf16.mxu0 0
        %1076 = vmatmul.mubr.bf16.gmra.mxu0 %v1022
        %v1077 = vpop.f32.mrf.mxu0
        %v1078 = vadd.f32 0.0, %v1077
        %v1079 = vpop.f32.mrf.mxu0
        %v1080 = vpop.f32.mrf.mxu0
        %v1081 = vadd.f32 0.0, %v1080
        %v1082 = vpop.f32.mrf.mxu0
        %1083 = vdwg.mxu0
        %v1084 = vadd.f32 %v1041, %v1078
        %v1085 = vadd.f32 %v1042, %v1081
        %v1086 = vtanh.pop %v1084
        %v1087 = vtanh.pop %v1085
        %v1088 = vpack.c.bf16 %v1087, %v1086
        %v1090 = vunpack.c.l.b16 %v1088
        %v1091 = vunpack.c.h.b16 %v1088
        %v1092 = vpack.c.b16 %v1090, %v1090
        %v1093 = vpack.c.b16 %v1091, %v1091
        %s1096 = scalar_lea.vmem [#allocation3], 8
        %1097 = vst [vmem:[%s1096] sm:$0xf] %v1092
        %1098 = vst [vmem:[%s1096 + $0x4] sm:$0xf] %v1093
        %s1099 = scalar_lea.vmem [#allocation4], 48
        %1100 = vst [vmem:[%s1099] sm:$0xf] %v1092
        %1101 = vst [vmem:[%s1099 + $0x4] sm:$0xf] %v1093
        %s1102 = scalar_lea.vmem [#allocation2], 32
        %v1103 = vld [vmem:[%s1102] sm:$0xff]
        %v1104 = vld [vmem:[%s1102 + $0x8] sm:$0xff]
        %s1105 = scalar_lea.vmem [#allocation2], 80
        %v1106 = vld [vmem:[%s1105] sm:$0xff]
        %v1107 = vld [vmem:[%s1105 + $0x8] sm:$0xff]
        %v1108 = vsel %vm512, %v1103, %v1106
        %v1109 = vsel %vm512, %v1104, %v1107
        %1110 = vmatprep.subr.bf16.mxu0 0
        %1111 = vmatpush1.bf16.msra.mxu0 %v968
        %1112 = vmatprep.subr.bf16.mxu0 0
        %1113 = vmatpush1.bf16.msra.mxu0 %v967
        %1114 = vmatprep.subr.bf16.mxu0 0
        %1115 = vmatpush1.bf16.msra.mxu0 %v966
        %1116 = vmatprep.subr.bf16.mxu0 0
        %1117 = vmatpush1.bf16.msra.mxu0 %v965
        %1118 = vmatprep.subr.bf16.mxu0 0
        %1119 = vmatpush1.bf16.msra.mxu0 %v964
        %1120 = vmatprep.subr.bf16.mxu0 0
        %1121 = vmatpush1.bf16.msra.mxu0 %v963
        %1122 = vmatprep.subr.bf16.mxu0 0
        %1123 = vmatpush1.bf16.msra.mxu0 %v962
        %1124 = vmatprep.subr.bf16.mxu0 0
        %1125 = vmatpush1.bf16.msra.mxu0 %v961
        %1126 = vmatprep.subr.bf16.mxu0 0
        %1127 = vmatpush2.bf16.msra.mxu0 0
        %1128 = vmatprep.subr.bf16.mxu0 0
        %1129 = vmatpush2.bf16.msra.mxu0 0
        %1130 = vmatprep.subr.bf16.mxu0 0
        %1131 = vmatpush2.bf16.msra.mxu0 0
        %1132 = vmatprep.subr.bf16.mxu0 0
        %1133 = vmatpush2.bf16.msra.mxu0 0
        %1134 = vmatprep.subr.bf16.mxu0 0
        %1135 = vmatpush2.bf16.msra.mxu0 0
        %1136 = vmatprep.subr.bf16.mxu0 0
        %1137 = vmatpush2.bf16.msra.mxu0 0
        %1138 = vmatprep.subr.bf16.mxu0 0
        %1139 = vmatpush2.bf16.msra.mxu0 0
        %1140 = vmatprep.subr.bf16.mxu0 0
        %1141 = vmatpush2.bf16.msra.mxu0 0
        %1142 = vmatprep.mubr.bf16.mxu0 0
        %1143 = vmatmul.mubr.bf16.gmra.mxu0 %v1088
        %v1144 = vpop.f32.mrf.mxu0
        %v1145 = vadd.f32 0.0, %v1144
        %v1146 = vpop.f32.mrf.mxu0
        %v1147 = vpop.f32.mrf.mxu0
        %v1148 = vadd.f32 0.0, %v1147
        %v1149 = vpop.f32.mrf.mxu0
        %1150 = vdwg.mxu0
        %v1151 = vadd.f32 %v1108, %v1145
        %v1152 = vadd.f32 %v1109, %v1148
        %v1153 = vtanh.pop %v1151
        %v1154 = vtanh.pop %v1152
        %v1155 = vpack.c.bf16 %v1154, %v1153
        %v1157 = vunpack.c.l.b16 %v1155
        %v1158 = vunpack.c.h.b16 %v1155
        %v1159 = vpack.c.b16 %v1157, %v1157
        %v1160 = vpack.c.b16 %v1158, %v1158
        %s1163 = scalar_lea.vmem [#allocation3], 16
        %1164 = vst [vmem:[%s1163] sm:$0xf] %v1159
        %1165 = vst [vmem:[%s1163 + $0x4] sm:$0xf] %v1160
        %s1166 = scalar_lea.vmem [#allocation4], 40
        %1167 = vst [vmem:[%s1166] sm:$0xf] %v1159
        %1168 = vst [vmem:[%s1166 + $0x4] sm:$0xf] %v1160
        %s1169 = scalar_lea.vmem [#allocation2], 48
        %v1170 = vld [vmem:[%s1169] sm:$0xff]
        %v1171 = vld [vmem:[%s1169 + $0x8] sm:$0xff]
        %s1172 = scalar_lea.vmem [#allocation2], 64
        %v1173 = vld [vmem:[%s1172] sm:$0xff]
        %v1174 = vld [vmem:[%s1172 + $0x8] sm:$0xff]
        %v1175 = vsel %vm512, %v1170, %v1173
        %v1176 = vsel %vm512, %v1171, %v1174
        %1177 = vmatprep.subr.bf16.mxu0 0
        %1178 = vmatpush1.bf16.msra.mxu0 %v968
        %1179 = vmatprep.subr.bf16.mxu0 0
        %1180 = vmatpush1.bf16.msra.mxu0 %v967
        %1181 = vmatprep.subr.bf16.mxu0 0
        %1182 = vmatpush1.bf16.msra.mxu0 %v966
        %1183 = vmatprep.subr.bf16.mxu0 0
        %1184 = vmatpush1.bf16.msra.mxu0 %v965
        %1185 = vmatprep.subr.bf16.mxu0 0
        %1186 = vmatpush1.bf16.msra.mxu0 %v964
        %1187 = vmatprep.subr.bf16.mxu0 0
        %1188 = vmatpush1.bf16.msra.mxu0 %v963
        %1189 = vmatprep.subr.bf16.mxu0 0
        %1190 = vmatpush1.bf16.msra.mxu0 %v962
        %1191 = vmatprep.subr.bf16.mxu0 0
        %1192 = vmatpush1.bf16.msra.mxu0 %v961
        %1193 = vmatprep.subr.bf16.mxu0 0
        %1194 = vmatpush2.bf16.msra.mxu0 0
        %1195 = vmatprep.subr.bf16.mxu0 0
        %1196 = vmatpush2.bf16.msra.mxu0 0
        %1197 = vmatprep.subr.bf16.mxu0 0
        %1198 = vmatpush2.bf16.msra.mxu0 0
        %1199 = vmatprep.subr.bf16.mxu0 0
        %1200 = vmatpush2.bf16.msra.mxu0 0
        %1201 = vmatprep.subr.bf16.mxu0 0
        %1202 = vmatpush2.bf16.msra.mxu0 0
        %1203 = vmatprep.subr.bf16.mxu0 0
        %1204 = vmatpush2.bf16.msra.mxu0 0
        %1205 = vmatprep.subr.bf16.mxu0 0
        %1206 = vmatpush2.bf16.msra.mxu0 0
        %1207 = vmatprep.subr.bf16.mxu0 0
        %1208 = vmatpush2.bf16.msra.mxu0 0
        %1209 = vmatprep.mubr.bf16.mxu0 0
        %1210 = vmatmul.mubr.bf16.gmra.mxu0 %v1155
        %v1211 = vpop.f32.mrf.mxu0
        %v1212 = vadd.f32 0.0, %v1211
        %v1213 = vpop.f32.mrf.mxu0
        %v1214 = vpop.f32.mrf.mxu0
        %v1215 = vadd.f32 0.0, %v1214
        %v1216 = vpop.f32.mrf.mxu0
        %1217 = vdwg.mxu0
        %v1218 = vadd.f32 %v1175, %v1212
        %v1219 = vadd.f32 %v1176, %v1215
        %v1220 = vtanh.pop %v1218
        %v1221 = vtanh.pop %v1219
        %v1222 = vpack.c.bf16 %v1221, %v1220
        %v1224 = vunpack.c.l.b16 %v1222
        %v1225 = vunpack.c.h.b16 %v1222
        %v1226 = vpack.c.b16 %v1224, %v1224
        %v1227 = vpack.c.b16 %v1225, %v1225
        %s1230 = scalar_lea.vmem [#allocation3], 24
        %1231 = vst [vmem:[%s1230] sm:$0xf] %v1226
        %1232 = vst [vmem:[%s1230 + $0x4] sm:$0xf] %v1227
        %s1233 = scalar_lea.vmem [#allocation4], 32
        %1234 = vst [vmem:[%s1233] sm:$0xf] %v1226
        %1235 = vst [vmem:[%s1233 + $0x4] sm:$0xf] %v1227
        %v1236 = vld [vmem:[%s1172] sm:$0xff]
        %v1237 = vld [vmem:[%s1172 + $0x8] sm:$0xff]
        %v1238 = vld [vmem:[%s1169] sm:$0xff]
        %v1239 = vld [vmem:[%s1169 + $0x8] sm:$0xff]
        %v1240 = vsel %vm512, %v1236, %v1238
        %v1241 = vsel %vm512, %v1237, %v1239
        %1242 = vmatprep.subr.bf16.mxu0 0
        %1243 = vmatpush1.bf16.msra.mxu0 %v968
        %1244 = vmatprep.subr.bf16.mxu0 0
        %1245 = vmatpush1.bf16.msra.mxu0 %v967
        %1246 = vmatprep.subr.bf16.mxu0 0
        %1247 = vmatpush1.bf16.msra.mxu0 %v966
        %1248 = vmatprep.subr.bf16.mxu0 0
        %1249 = vmatpush1.bf16.msra.mxu0 %v965
        %1250 = vmatprep.subr.bf16.mxu0 0
        %1251 = vmatpush1.bf16.msra.mxu0 %v964
        %1252 = vmatprep.subr.bf16.mxu0 0
        %1253 = vmatpush1.bf16.msra.mxu0 %v963
        %1254 = vmatprep.subr.bf16.mxu0 0
        %1255 = vmatpush1.bf16.msra.mxu0 %v962
        %1256 = vmatprep.subr.bf16.mxu0 0
        %1257 = vmatpush1.bf16.msra.mxu0 %v961
        %1258 = vmatprep.subr.bf16.mxu0 0
        %1259 = vmatpush2.bf16.msra.mxu0 0
        %1260 = vmatprep.subr.bf16.mxu0 0
        %1261 = vmatpush2.bf16.msra.mxu0 0
        %1262 = vmatprep.subr.bf16.mxu0 0
        %1263 = vmatpush2.bf16.msra.mxu0 0
        %1264 = vmatprep.subr.bf16.mxu0 0
        %1265 = vmatpush2.bf16.msra.mxu0 0
        %1266 = vmatprep.subr.bf16.mxu0 0
        %1267 = vmatpush2.bf16.msra.mxu0 0
        %1268 = vmatprep.subr.bf16.mxu0 0
        %1269 = vmatpush2.bf16.msra.mxu0 0
        %1270 = vmatprep.subr.bf16.mxu0 0
        %1271 = vmatpush2.bf16.msra.mxu0 0
        %1272 = vmatprep.subr.bf16.mxu0 0
        %1273 = vmatpush2.bf16.msra.mxu0 0
        %1274 = vmatprep.mubr.bf16.mxu0 0
        %1275 = vmatmul.mubr.bf16.gmra.mxu0 %v1222
        %v1276 = vpop.f32.mrf.mxu0
        %v1277 = vadd.f32 0.0, %v1276
        %v1278 = vpop.f32.mrf.mxu0
        %v1279 = vpop.f32.mrf.mxu0
        %v1280 = vadd.f32 0.0, %v1279
        %v1281 = vpop.f32.mrf.mxu0
        %1282 = vdwg.mxu0
        %v1283 = vadd.f32 %v1240, %v1277
        %v1284 = vadd.f32 %v1241, %v1280
        %v1285 = vtanh.pop %v1283
        %v1286 = vtanh.pop %v1284
        %v1287 = vpack.c.bf16 %v1286, %v1285
        %v1289 = vunpack.c.l.b16 %v1287
        %v1290 = vunpack.c.h.b16 %v1287
        %v1291 = vpack.c.b16 %v1289, %v1289
        %v1292 = vpack.c.b16 %v1290, %v1290
        %s1295 = scalar_lea.vmem [#allocation3], 32
        %1296 = vst [vmem:[%s1295] sm:$0xf] %v1291
        %1297 = vst [vmem:[%s1295 + $0x4] sm:$0xf] %v1292
        %s1298 = scalar_lea.vmem [#allocation4], 24
        %1299 = vst [vmem:[%s1298] sm:$0xf] %v1291
        %1300 = vst [vmem:[%s1298 + $0x4] sm:$0xf] %v1292
        %v1301 = vld [vmem:[%s1105] sm:$0xff]
        %v1302 = vld [vmem:[%s1105 + $0x8] sm:$0xff]
        %v1303 = vld [vmem:[%s1102] sm:$0xff]
        %v1304 = vld [vmem:[%s1102 + $0x8] sm:$0xff]
        %v1305 = vsel %vm512, %v1301, %v1303
        %v1306 = vsel %vm512, %v1302, %v1304
        %1307 = vmatprep.subr.bf16.mxu0 0
        %1308 = vmatpush1.bf16.msra.mxu0 %v968
        %1309 = vmatprep.subr.bf16.mxu0 0
        %1310 = vmatpush1.bf16.msra.mxu0 %v967
        %1311 = vmatprep.subr.bf16.mxu0 0
        %1312 = vmatpush1.bf16.msra.mxu0 %v966
        %1313 = vmatprep.subr.bf16.mxu0 0
        %1314 = vmatpush1.bf16.msra.mxu0 %v965
        %1315 = vmatprep.subr.bf16.mxu0 0
        %1316 = vmatpush1.bf16.msra.mxu0 %v964
        %1317 = vmatprep.subr.bf16.mxu0 0
        %1318 = vmatpush1.bf16.msra.mxu0 %v963
        %1319 = vmatprep.subr.bf16.mxu0 0
        %1320 = vmatpush1.bf16.msra.mxu0 %v962
        %1321 = vmatprep.subr.bf16.mxu0 0
        %1322 = vmatpush1.bf16.msra.mxu0 %v961
        %1323 = vmatprep.subr.bf16.mxu0 0
        %1324 = vmatpush2.bf16.msra.mxu0 0
        %1325 = vmatprep.subr.bf16.mxu0 0
        %1326 = vmatpush2.bf16.msra.mxu0 0
        %1327 = vmatprep.subr.bf16.mxu0 0
        %1328 = vmatpush2.bf16.msra.mxu0 0
        %1329 = vmatprep.subr.bf16.mxu0 0
        %1330 = vmatpush2.bf16.msra.mxu0 0
        %1331 = vmatprep.subr.bf16.mxu0 0
        %1332 = vmatpush2.bf16.msra.mxu0 0
        %1333 = vmatprep.subr.bf16.mxu0 0
        %1334 = vmatpush2.bf16.msra.mxu0 0
        %1335 = vmatprep.subr.bf16.mxu0 0
        %1336 = vmatpush2.bf16.msra.mxu0 0
        %1337 = vmatprep.subr.bf16.mxu0 0
        %1338 = vmatpush2.bf16.msra.mxu0 0
        %1339 = vmatprep.mubr.bf16.mxu0 0
        %1340 = vmatmul.mubr.bf16.gmra.mxu0 %v1287
        %v1341 = vpop.f32.mrf.mxu0
        %v1342 = vadd.f32 0.0, %v1341
        %v1343 = vpop.f32.mrf.mxu0
        %v1344 = vpop.f32.mrf.mxu0
        %v1345 = vadd.f32 0.0, %v1344
        %v1346 = vpop.f32.mrf.mxu0
        %1347 = vdwg.mxu0
        %v1348 = vadd.f32 %v1305, %v1342
        %v1349 = vadd.f32 %v1306, %v1345
        %v1350 = vtanh.pop %v1348
        %v1351 = vtanh.pop %v1349
        %v1352 = vpack.c.bf16 %v1351, %v1350
        %v1354 = vunpack.c.l.b16 %v1352
        %v1355 = vunpack.c.h.b16 %v1352
        %v1356 = vpack.c.b16 %v1354, %v1354
        %v1357 = vpack.c.b16 %v1355, %v1355
        %s1360 = scalar_lea.vmem [#allocation3], 40
        %1361 = vst [vmem:[%s1360] sm:$0xf] %v1356
        %1362 = vst [vmem:[%s1360 + $0x4] sm:$0xf] %v1357
        %s1363 = scalar_lea.vmem [#allocation4], 16
        %1364 = vst [vmem:[%s1363] sm:$0xf] %v1356
        %1365 = vst [vmem:[%s1363 + $0x4] sm:$0xf] %v1357
        %v1366 = vld [vmem:[%s1038] sm:$0xff]
        %v1367 = vld [vmem:[%s1038 + $0x8] sm:$0xff]
        %v1368 = vld [vmem:[%s1035] sm:$0xff]
        %v1369 = vld [vmem:[%s1035 + $0x8] sm:$0xff]
        %v1370 = vsel %vm512, %v1366, %v1368
        %v1371 = vsel %vm512, %v1367, %v1369
        %1372 = vmatprep.subr.bf16.mxu0 0
        %1373 = vmatpush1.bf16.msra.mxu0 %v968
        %1374 = vmatprep.subr.bf16.mxu0 0
        %1375 = vmatpush1.bf16.msra.mxu0 %v967
        %1376 = vmatprep.subr.bf16.mxu0 0
        %1377 = vmatpush1.bf16.msra.mxu0 %v966
        %1378 = vmatprep.subr.bf16.mxu0 0
        %1379 = vmatpush1.bf16.msra.mxu0 %v965
        %1380 = vmatprep.subr.bf16.mxu0 0
        %1381 = vmatpush1.bf16.msra.mxu0 %v964
        %1382 = vmatprep.subr.bf16.mxu0 0
        %1383 = vmatpush1.bf16.msra.mxu0 %v963
        %1384 = vmatprep.subr.bf16.mxu0 0
        %1385 = vmatpush1.bf16.msra.mxu0 %v962
        %1386 = vmatprep.subr.bf16.mxu0 0
        %1387 = vmatpush1.bf16.msra.mxu0 %v961
        %1388 = vmatprep.subr.bf16.mxu0 0
        %1389 = vmatpush2.bf16.msra.mxu0 0
        %1390 = vmatprep.subr.bf16.mxu0 0
        %1391 = vmatpush2.bf16.msra.mxu0 0
        %1392 = vmatprep.subr.bf16.mxu0 0
        %1393 = vmatpush2.bf16.msra.mxu0 0
        %1394 = vmatprep.subr.bf16.mxu0 0
        %1395 = vmatpush2.bf16.msra.mxu0 0
        %1396 = vmatprep.subr.bf16.mxu0 0
        %1397 = vmatpush2.bf16.msra.mxu0 0
        %1398 = vmatprep.subr.bf16.mxu0 0
        %1399 = vmatpush2.bf16.msra.mxu0 0
        %1400 = vmatprep.subr.bf16.mxu0 0
        %1401 = vmatpush2.bf16.msra.mxu0 0
        %1402 = vmatprep.subr.bf16.mxu0 0
        %1403 = vmatpush2.bf16.msra.mxu0 0
        %1404 = vmatprep.mubr.bf16.mxu0 0
        %1405 = vmatmul.mubr.bf16.gmra.mxu0 %v1352
        %v1406 = vpop.f32.mrf.mxu0
        %v1407 = vadd.f32 0.0, %v1406
        %v1408 = vpop.f32.mrf.mxu0
        %v1409 = vpop.f32.mrf.mxu0
        %v1410 = vadd.f32 0.0, %v1409
        %v1411 = vpop.f32.mrf.mxu0
        %1412 = vdwg.mxu0
        %v1413 = vadd.f32 %v1370, %v1407
        %v1414 = vadd.f32 %v1371, %v1410
        %v1415 = vtanh.pop %v1413
        %v1416 = vtanh.pop %v1414
        %v1417 = vpack.c.bf16 %v1416, %v1415
        %v1419 = vunpack.c.l.b16 %v1417
        %v1420 = vunpack.c.h.b16 %v1417
        %v1421 = vpack.c.b16 %v1419, %v1419
        %v1422 = vpack.c.b16 %v1420, %v1420
        %s1425 = scalar_lea.vmem [#allocation3], 48
        %1426 = vst [vmem:[%s1425] sm:$0xf] %v1421
        %1427 = vst [vmem:[%s1425 + $0x4] sm:$0xf] %v1422
        %s1428 = scalar_lea.vmem [#allocation4], 8
        %1429 = vst [vmem:[%s1428] sm:$0xf] %v1421
        %1430 = vst [vmem:[%s1428 + $0x4] sm:$0xf] %v1422
        %v1431 = vld [vmem:[%s924] sm:$0xff]
        %v1432 = vld [vmem:[%s924 + $0x8] sm:$0xff]
        %v1433 = vld [vmem:[#allocation2] sm:$0xff]
        %v1434 = vld [vmem:[#allocation2 + $0x8] sm:$0xff]
        %v1435 = vsel %vm512, %v1431, %v1433
        %v1436 = vsel %vm512, %v1432, %v1434
        %1437 = vmatprep.subr.bf16.mxu0 0
        %1438 = vmatpush1.bf16.msra.mxu0 %v968
        %1439 = vmatprep.subr.bf16.mxu0 0
        %1440 = vmatpush1.bf16.msra.mxu0 %v967
        %1441 = vmatprep.subr.bf16.mxu0 0
        %1442 = vmatpush1.bf16.msra.mxu0 %v966
        %1443 = vmatprep.subr.bf16.mxu0 0
        %1444 = vmatpush1.bf16.msra.mxu0 %v965
        %1445 = vmatprep.subr.bf16.mxu0 0
        %1446 = vmatpush1.bf16.msra.mxu0 %v964
        %1447 = vmatprep.subr.bf16.mxu0 0
        %1448 = vmatpush1.bf16.msra.mxu0 %v963
        %1449 = vmatprep.subr.bf16.mxu0 0
        %1450 = vmatpush1.bf16.msra.mxu0 %v962
        %1451 = vmatprep.subr.bf16.mxu0 0
        %1452 = vmatpush1.bf16.msra.mxu0 %v961
        %1453 = vmatprep.subr.bf16.mxu0 0
        %1454 = vmatpush2.bf16.msra.mxu0 0
        %1455 = vmatprep.subr.bf16.mxu0 0
        %1456 = vmatpush2.bf16.msra.mxu0 0
        %1457 = vmatprep.subr.bf16.mxu0 0
        %1458 = vmatpush2.bf16.msra.mxu0 0
        %1459 = vmatprep.subr.bf16.mxu0 0
        %1460 = vmatpush2.bf16.msra.mxu0 0
        %1461 = vmatprep.subr.bf16.mxu0 0
        %1462 = vmatpush2.bf16.msra.mxu0 0
        %1463 = vmatprep.subr.bf16.mxu0 0
        %1464 = vmatpush2.bf16.msra.mxu0 0
        %1465 = vmatprep.subr.bf16.mxu0 0
        %1466 = vmatpush2.bf16.msra.mxu0 0
        %1467 = vmatprep.subr.bf16.mxu0 0
        %1468 = vmatpush2.bf16.msra.mxu0 0
        %1469 = vmatprep.mubr.bf16.mxu0 0
        %1470 = vmatmul.mubr.bf16.gmra.mxu0 %v1417
        %v1471 = vpop.f32.mrf.mxu0
        %v1472 = vadd.f32 0.0, %v1471
        %v1473 = vpop.f32.mrf.mxu0
        %v1474 = vpop.f32.mrf.mxu0
        %v1475 = vadd.f32 0.0, %v1474
        %v1476 = vpop.f32.mrf.mxu0
        %1477 = vdwg.mxu0
        %v1478 = vadd.f32 %v1435, %v1472
        %v1479 = vadd.f32 %v1436, %v1475
        %v1480 = vtanh.pop %v1478
        %v1481 = vtanh.pop %v1479
        %v1482 = vpack.c.bf16 %v1481, %v1480
        %v1484 = vunpack.c.l.b16 %v1482
        %v1485 = vunpack.c.h.b16 %v1482
        %v1486 = vpack.c.b16 %v1484, %v1484
        %v1487 = vpack.c.b16 %v1485, %v1485
        %s1490 = scalar_lea.vmem [#allocation3], 56
        %1491 = vst [vmem:[%s1490] sm:$0xf] %v1486
        %1492 = vst [vmem:[%s1490 + $0x4] sm:$0xf] %v1487
        %1493 = vst [vmem:[#allocation4] sm:$0xf] %v1486
        %1494 = vst [vmem:[#allocation4 + $0x4] sm:$0xf] %v1487
        %v1495 = vld [vmem:[#allocation3] sm:$0xf]
        %v1496 = vld [vmem:[#allocation3 + $0x4] sm:$0xf]
        %v1497 = vld [vmem:[#allocation3 + $0x8] sm:$0xf]
        %v1498 = vld [vmem:[#allocation3 + $0xc] sm:$0xf]
        %v1499 = vld [vmem:[#allocation3 + $0x10] sm:$0xf]
        %v1500 = vld [vmem:[#allocation3 + $0x14] sm:$0xf]
        %v1501 = vld [vmem:[#allocation3 + $0x18] sm:$0xf]
        %v1502 = vld [vmem:[#allocation3 + $0x1c] sm:$0xf]
        %v1503 = vld [vmem:[#allocation3 + $0x20] sm:$0xf]
        %v1504 = vld [vmem:[#allocation3 + $0x24] sm:$0xf]
        %v1505 = vld [vmem:[#allocation3 + $0x28] sm:$0xf]
        %v1506 = vld [vmem:[#allocation3 + $0x2c] sm:$0xf]
        %v1507 = vld [vmem:[#allocation3 + $0x30] sm:$0xf]
        %v1508 = vld [vmem:[#allocation3 + $0x34] sm:$0xf]
        %v1509 = vld [vmem:[#allocation3 + $0x38] sm:$0xf]
        %v1510 = vld [vmem:[#allocation3 + $0x3c] sm:$0xf]
        %v1511 = vld [vmem:[#allocation4] sm:$0xf]
        %v1512 = vld [vmem:[#allocation4 + $0x4] sm:$0xf]
        %v1513 = vld [vmem:[#allocation4 + $0x8] sm:$0xf]
        %v1514 = vld [vmem:[#allocation4 + $0xc] sm:$0xf]
        %v1515 = vld [vmem:[#allocation4 + $0x10] sm:$0xf]
        %v1516 = vld [vmem:[#allocation4 + $0x14] sm:$0xf]
        %v1517 = vld [vmem:[#allocation4 + $0x18] sm:$0xf]
        %v1518 = vld [vmem:[#allocation4 + $0x1c] sm:$0xf]
        %v1519 = vld [vmem:[#allocation4 + $0x20] sm:$0xf]
        %v1520 = vld [vmem:[#allocation4 + $0x24] sm:$0xf]
        %v1521 = vld [vmem:[#allocation4 + $0x28] sm:$0xf]
        %v1522 = vld [vmem:[#allocation4 + $0x2c] sm:$0xf]
        %v1523 = vld [vmem:[#allocation4 + $0x30] sm:$0xf]
        %v1524 = vld [vmem:[#allocation4 + $0x34] sm:$0xf]
        %v1525 = vld [vmem:[#allocation4 + $0x38] sm:$0xf]
        %v1526 = vld [vmem:[#allocation4 + $0x3c] sm:$0xf]
        %vm1527 = vmpackc.low %vm512, %vm512
        %v1528 = vsel %vm1527, %v1495, %v1511
        %v1529 = vsel %vm1527, %v1496, %v1512
        %v1530 = vsel %vm1527, %v1497, %v1513
        %v1531 = vsel %vm1527, %v1498, %v1514
        %v1532 = vsel %vm1527, %v1499, %v1515
        %v1533 = vsel %vm1527, %v1500, %v1516
        %v1534 = vsel %vm1527, %v1501, %v1517
        %v1535 = vsel %vm1527, %v1502, %v1518
        %v1536 = vsel %vm1527, %v1503, %v1519
        %v1537 = vsel %vm1527, %v1504, %v1520
        %v1538 = vsel %vm1527, %v1505, %v1521
        %v1539 = vsel %vm1527, %v1506, %v1522
        %v1540 = vsel %vm1527, %v1507, %v1523
        %v1541 = vsel %vm1527, %v1508, %v1524
        %v1542 = vsel %vm1527, %v1509, %v1525
        %v1543 = vsel %vm1527, %v1510, %v1526
        %v1544 = vld [vmem:[#allocation13] sm:$0xf]
        %v1545 = vld [vmem:[#allocation13 + $0x4] sm:$0xf]
        %v1546 = vld [vmem:[#allocation13 + $0x8] sm:$0xf]
        %v1547 = vld [vmem:[#allocation13 + $0xc] sm:$0xf]
        %v1548 = vld [vmem:[#allocation13 + $0x10] sm:$0xf]
        %v1549 = vld [vmem:[#allocation13 + $0x14] sm:$0xf]
        %v1550 = vld [vmem:[#allocation13 + $0x18] sm:$0xf]
        %v1551 = vld [vmem:[#allocation13 + $0x1c] sm:$0xf]
        %v1552 = vld [vmem:[#allocation13 + $0x20] sm:$0xf]
        %v1553 = vld [vmem:[#allocation13 + $0x24] sm:$0xf]
        %v1554 = vld [vmem:[#allocation13 + $0x28] sm:$0xf]
        %v1555 = vld [vmem:[#allocation13 + $0x2c] sm:$0xf]
        %v1556 = vld [vmem:[#allocation13 + $0x30] sm:$0xf]
        %v1557 = vld [vmem:[#allocation13 + $0x34] sm:$0xf]
        %v1558 = vld [vmem:[#allocation13 + $0x38] sm:$0xf]
        %v1559 = vld [vmem:[#allocation13 + $0x3c] sm:$0xf]
        %v1560 = vld [vmem:[%s8] sm:$0x1]
        %v1562 = vlaneseq
        %v1563 = vshrl.u32 %v1562, 7
        %v1564 = vsub.s32 0, %v1563
        %v1565 = vrot.slane %v1560, %v1564
        %v1583 = vunpack.c.l.b16 %v1528
        %v1584 = vunpack.c.l.b16 %v1529
        %v1585 = vunpack.c.l.b16 %v1530
        %v1586 = vunpack.c.l.b16 %v1531
        %v1587 = vunpack.c.l.b16 %v1532
        %v1588 = vunpack.c.l.b16 %v1533
        %v1589 = vunpack.c.l.b16 %v1534
        %v1590 = vunpack.c.l.b16 %v1535
        %v1591 = vunpack.c.l.b16 %v1536
        %v1592 = vunpack.c.l.b16 %v1537
        %v1593 = vunpack.c.l.b16 %v1538
        %v1594 = vunpack.c.l.b16 %v1539
        %v1595 = vunpack.c.l.b16 %v1540
        %v1596 = vunpack.c.l.b16 %v1541
        %v1597 = vunpack.c.l.b16 %v1542
        %v1598 = vunpack.c.l.b16 %v1543
        %v1599 = vpack.c.b16 %v1584, %v1583
        %v1600 = vpack.c.b16 %v1586, %v1585
        %v1601 = vpack.c.b16 %v1588, %v1587
        %v1602 = vpack.c.b16 %v1590, %v1589
        %v1603 = vpack.c.b16 %v1592, %v1591
        %v1604 = vpack.c.b16 %v1594, %v1593
        %v1605 = vpack.c.b16 %v1596, %v1595
        %v1606 = vpack.c.b16 %v1598, %v1597
        %v1631 = vunpack.c.l.b16 %v1544
        %v1632 = vunpack.c.l.b16 %v1545
        %v1633 = vunpack.c.l.b16 %v1546
        %v1634 = vunpack.c.l.b16 %v1547
        %v1635 = vunpack.c.l.b16 %v1548
        %v1636 = vunpack.c.l.b16 %v1549
        %v1637 = vunpack.c.l.b16 %v1550
        %v1638 = vunpack.c.l.b16 %v1551
        %v1639 = vunpack.c.l.b16 %v1552
        %v1640 = vunpack.c.l.b16 %v1553
        %v1641 = vunpack.c.l.b16 %v1554
        %v1642 = vunpack.c.l.b16 %v1555
        %v1643 = vunpack.c.l.b16 %v1556
        %v1644 = vunpack.c.l.b16 %v1557
        %v1645 = vunpack.c.l.b16 %v1558
        %v1646 = vunpack.c.l.b16 %v1559
        %v1647 = vpack.c.b16 %v1632, %v1631
        %v1648 = vpack.c.b16 %v1634, %v1633
        %v1649 = vpack.c.b16 %v1636, %v1635
        %v1650 = vpack.c.b16 %v1638, %v1637
        %v1651 = vpack.c.b16 %v1640, %v1639
        %v1652 = vpack.c.b16 %v1642, %v1641
        %v1653 = vpack.c.b16 %v1644, %v1643
        %v1654 = vpack.c.b16 %v1646, %v1645
        %1663 = vmatprep.subr.bf16.mxu0 0
        %1664 = vmatpush1.bf16.msra.mxu0 %v1654
        %1665 = vmatprep.subr.bf16.mxu0 0
        %1666 = vmatpush1.bf16.msra.mxu0 %v1653
        %1667 = vmatprep.subr.bf16.mxu0 0
        %1668 = vmatpush1.bf16.msra.mxu0 %v1652
        %1669 = vmatprep.subr.bf16.mxu0 0
        %1670 = vmatpush1.bf16.msra.mxu0 %v1651
        %1671 = vmatprep.subr.bf16.mxu0 0
        %1672 = vmatpush1.bf16.msra.mxu0 %v1650
        %1673 = vmatprep.subr.bf16.mxu0 0
        %1674 = vmatpush1.bf16.msra.mxu0 %v1649
        %1675 = vmatprep.subr.bf16.mxu0 0
        %1676 = vmatpush1.bf16.msra.mxu0 %v1648
        %1677 = vmatprep.subr.bf16.mxu0 0
        %1678 = vmatpush1.bf16.msra.mxu0 %v1647
        %1679 = vmatprep.subr.bf16.mxu0 0
        %1680 = vmatpush2.bf16.msra.mxu0 0
        %1681 = vmatprep.subr.bf16.mxu0 0
        %1682 = vmatpush2.bf16.msra.mxu0 0
        %1683 = vmatprep.subr.bf16.mxu0 0
        %1684 = vmatpush2.bf16.msra.mxu0 0
        %1685 = vmatprep.subr.bf16.mxu0 0
        %1686 = vmatpush2.bf16.msra.mxu0 0
        %1687 = vmatprep.subr.bf16.mxu0 0
        %1688 = vmatpush2.bf16.msra.mxu0 0
        %1689 = vmatprep.subr.bf16.mxu0 0
        %1690 = vmatpush2.bf16.msra.mxu0 0
        %1691 = vmatprep.subr.bf16.mxu0 0
        %1692 = vmatpush2.bf16.msra.mxu0 0
        %1693 = vmatprep.subr.bf16.mxu0 0
        %1694 = vmatpush2.bf16.msra.mxu0 0
        %1695 = vmatprep.mubr.bf16.mxu0 0
        %1696 = vmatmul.mubr.bf16.gmra.mxu0 %v1599
        %v1697 = vpop.f32.mrf.mxu0
        %v1698 = vadd.f32 %v1565, %v1697
        %v1699 = vpop.f32.mrf.mxu0
        %v1700 = vpop.f32.mrf.mxu0
        %v1701 = vadd.f32 %v1565, %v1700
        %v1702 = vpop.f32.mrf.mxu0
        %1703 = vmatprep.mubr.bf16.mxu0 0
        %1704 = vmatmul.mubr.bf16.gmra.mxu0 %v1600
        %v1705 = vpop.f32.mrf.mxu0
        %v1706 = vadd.f32 %v1565, %v1705
        %v1707 = vpop.f32.mrf.mxu0
        %v1708 = vpop.f32.mrf.mxu0
        %v1709 = vadd.f32 %v1565, %v1708
        %v1710 = vpop.f32.mrf.mxu0
        %1711 = vmatprep.mubr.bf16.mxu0 0
        %1712 = vmatmul.mubr.bf16.gmra.mxu0 %v1601
        %v1713 = vpop.f32.mrf.mxu0
        %v1714 = vadd.f32 %v1565, %v1713
        %v1715 = vpop.f32.mrf.mxu0
        %v1716 = vpop.f32.mrf.mxu0
        %v1717 = vadd.f32 %v1565, %v1716
        %v1718 = vpop.f32.mrf.mxu0
        %1719 = vmatprep.mubr.bf16.mxu0 0
        %1720 = vmatmul.mubr.bf16.gmra.mxu0 %v1602
        %v1721 = vpop.f32.mrf.mxu0
        %v1722 = vadd.f32 %v1565, %v1721
        %v1723 = vpop.f32.mrf.mxu0
        %v1724 = vpop.f32.mrf.mxu0
        %v1725 = vadd.f32 %v1565, %v1724
        %v1726 = vpop.f32.mrf.mxu0
        %1727 = vmatprep.mubr.bf16.mxu0 0
        %1728 = vmatmul.mubr.bf16.gmra.mxu0 %v1603
        %v1729 = vpop.f32.mrf.mxu0
        %v1730 = vadd.f32 %v1565, %v1729
        %v1731 = vpop.f32.mrf.mxu0
        %v1732 = vpop.f32.mrf.mxu0
        %v1733 = vadd.f32 %v1565, %v1732
        %v1734 = vpop.f32.mrf.mxu0
        %1735 = vmatprep.mubr.bf16.mxu0 0
        %1736 = vmatmul.mubr.bf16.gmra.mxu0 %v1604
        %v1737 = vpop.f32.mrf.mxu0
        %v1738 = vadd.f32 %v1565, %v1737
        %v1739 = vpop.f32.mrf.mxu0
        %v1740 = vpop.f32.mrf.mxu0
        %v1741 = vadd.f32 %v1565, %v1740
        %v1742 = vpop.f32.mrf.mxu0
        %1743 = vmatprep.mubr.bf16.mxu0 0
        %1744 = vmatmul.mubr.bf16.gmra.mxu0 %v1605
        %v1745 = vpop.f32.mrf.mxu0
        %v1746 = vadd.f32 %v1565, %v1745
        %v1747 = vpop.f32.mrf.mxu0
        %v1748 = vpop.f32.mrf.mxu0
        %v1749 = vadd.f32 %v1565, %v1748
        %v1750 = vpop.f32.mrf.mxu0
        %1751 = vmatprep.mubr.bf16.mxu0 0
        %1752 = vmatmul.mubr.bf16.gmra.mxu0 %v1606
        %v1753 = vpop.f32.mrf.mxu0
        %v1754 = vadd.f32 %v1565, %v1753
        %v1755 = vpop.f32.mrf.mxu0
        %v1756 = vpop.f32.mrf.mxu0
        %v1757 = vadd.f32 %v1565, %v1756
        %v1758 = vpop.f32.mrf.mxu0
        %1759 = vdwg.mxu0
        %1760 = vst [vmem:[#allocation2] sm:$0xff] %v1698
        %1761 = vst [vmem:[#allocation2 + $0x8] sm:$0xff] %v1701
        %1762 = vst [vmem:[#allocation2 + $0x10] sm:$0xff] %v1706
        %1763 = vst [vmem:[#allocation2 + $0x18] sm:$0xff] %v1709
        %1764 = vst [vmem:[#allocation2 + $0x20] sm:$0xff] %v1714
        %1765 = vst [vmem:[#allocation2 + $0x28] sm:$0xff] %v1717
        %1766 = vst [vmem:[#allocation2 + $0x30] sm:$0xff] %v1722
        %1767 = vst [vmem:[#allocation2 + $0x38] sm:$0xff] %v1725
        %1768 = vst [vmem:[#allocation2 + $0x40] sm:$0xff] %v1730
        %1769 = vst [vmem:[#allocation2 + $0x48] sm:$0xff] %v1733
        %1770 = vst [vmem:[#allocation2 + $0x50] sm:$0xff] %v1738
        %1771 = vst [vmem:[#allocation2 + $0x58] sm:$0xff] %v1741
        %1772 = vst [vmem:[#allocation2 + $0x60] sm:$0xff] %v1746
        %1773 = vst [vmem:[#allocation2 + $0x68] sm:$0xff] %v1749
        %1774 = vst [vmem:[#allocation2 + $0x70] sm:$0xff] %v1754
        %1775 = vst [vmem:[#allocation2 + $0x78] sm:$0xff] %v1757
        %v1776 = vld [vmem:[#allocation14] sm:$0xf]
        %v1777 = vld [vmem:[#allocation14 + $0x4] sm:$0xf]
        %v1778 = vld [vmem:[#allocation14 + $0x8] sm:$0xf]
        %v1779 = vld [vmem:[#allocation14 + $0xc] sm:$0xf]
        %v1780 = vld [vmem:[#allocation14 + $0x10] sm:$0xf]
        %v1781 = vld [vmem:[#allocation14 + $0x14] sm:$0xf]
        %v1782 = vld [vmem:[#allocation14 + $0x18] sm:$0xf]
        %v1783 = vld [vmem:[#allocation14 + $0x1c] sm:$0xf]
        %v1784 = vld [vmem:[#allocation14 + $0x20] sm:$0xf]
        %v1785 = vld [vmem:[#allocation14 + $0x24] sm:$0xf]
        %v1786 = vld [vmem:[#allocation14 + $0x28] sm:$0xf]
        %v1787 = vld [vmem:[#allocation14 + $0x2c] sm:$0xf]
        %v1788 = vld [vmem:[#allocation14 + $0x30] sm:$0xf]
        %v1789 = vld [vmem:[#allocation14 + $0x34] sm:$0xf]
        %v1790 = vld [vmem:[#allocation14 + $0x38] sm:$0xf]
        %v1791 = vld [vmem:[#allocation14 + $0x3c] sm:$0xf]
        %v1792 = vld [vmem:[#allocation2] sm:$0xff]
        %v1793 = vld [vmem:[#allocation2 + $0x8] sm:$0xff]
        %v1794 = vld [vmem:[%s924] sm:$0xff]
        %v1795 = vld [vmem:[%s924 + $0x8] sm:$0xff]
        %v1796 = vsel %vm512, %v1792, %v1794
        %v1797 = vsel %vm512, %v1793, %v1795
        %v1814 = vunpack.c.l.b16 %v1776
        %v1815 = vunpack.c.l.b16 %v1777
        %v1816 = vunpack.c.l.b16 %v1778
        %v1817 = vunpack.c.l.b16 %v1779
        %v1818 = vunpack.c.l.b16 %v1780
        %v1819 = vunpack.c.l.b16 %v1781
        %v1820 = vunpack.c.l.b16 %v1782
        %v1821 = vunpack.c.l.b16 %v1783
        %v1822 = vunpack.c.l.b16 %v1784
        %v1823 = vunpack.c.l.b16 %v1785
        %v1824 = vunpack.c.l.b16 %v1786
        %v1825 = vunpack.c.l.b16 %v1787
        %v1826 = vunpack.c.l.b16 %v1788
        %v1827 = vunpack.c.l.b16 %v1789
        %v1828 = vunpack.c.l.b16 %v1790
        %v1829 = vunpack.c.l.b16 %v1791
        %v1830 = vpack.c.b16 %v1815, %v1814
        %v1831 = vpack.c.b16 %v1817, %v1816
        %v1832 = vpack.c.b16 %v1819, %v1818
        %v1833 = vpack.c.b16 %v1821, %v1820
        %v1834 = vpack.c.b16 %v1823, %v1822
        %v1835 = vpack.c.b16 %v1825, %v1824
        %v1836 = vpack.c.b16 %v1827, %v1826
        %v1837 = vpack.c.b16 %v1829, %v1828
        %1846 = vmatprep.subr.bf16.mxu0 0
        %1847 = vmatpush1.bf16.msra.mxu0 %v1837
        %1848 = vmatprep.subr.bf16.mxu0 0
        %1849 = vmatpush1.bf16.msra.mxu0 %v1836
        %1850 = vmatprep.subr.bf16.mxu0 0
        %1851 = vmatpush1.bf16.msra.mxu0 %v1835
        %1852 = vmatprep.subr.bf16.mxu0 0
        %1853 = vmatpush1.bf16.msra.mxu0 %v1834
        %1854 = vmatprep.subr.bf16.mxu0 0
        %1855 = vmatpush1.bf16.msra.mxu0 %v1833
        %1856 = vmatprep.subr.bf16.mxu0 0
        %1857 = vmatpush1.bf16.msra.mxu0 %v1832
        %1858 = vmatprep.subr.bf16.mxu0 0
        %1859 = vmatpush1.bf16.msra.mxu0 %v1831
        %1860 = vmatprep.subr.bf16.mxu0 0
        %1861 = vmatpush1.bf16.msra.mxu0 %v1830
        %1862 = vmatprep.subr.bf16.mxu0 0
        %1863 = vmatpush2.bf16.msra.mxu0 0
        %1864 = vmatprep.subr.bf16.mxu0 0
        %1865 = vmatpush2.bf16.msra.mxu0 0
        %1866 = vmatprep.subr.bf16.mxu0 0
        %1867 = vmatpush2.bf16.msra.mxu0 0
        %1868 = vmatprep.subr.bf16.mxu0 0
        %1869 = vmatpush2.bf16.msra.mxu0 0
        %1870 = vmatprep.subr.bf16.mxu0 0
        %1871 = vmatpush2.bf16.msra.mxu0 0
        %1872 = vmatprep.subr.bf16.mxu0 0
        %1873 = vmatpush2.bf16.msra.mxu0 0
        %1874 = vmatprep.subr.bf16.mxu0 0
        %1875 = vmatpush2.bf16.msra.mxu0 0
        %1876 = vmatprep.subr.bf16.mxu0 0
        %1877 = vmatpush2.bf16.msra.mxu0 0
        %1878 = vmatprep.mubr.bf16.mxu0 0
        %1879 = vmatmul.mubr.bf16.gmra.mxu0 0
        %v1880 = vpop.f32.mrf.mxu0
        %v1881 = vadd.f32 0.0, %v1880
        %v1882 = vpop.f32.mrf.mxu0
        %v1883 = vpop.f32.mrf.mxu0
        %v1884 = vadd.f32 0.0, %v1883
        %v1885 = vpop.f32.mrf.mxu0
        %1886 = vdwg.mxu0
        %v1887 = vadd.f32 %v1796, %v1881
        %v1888 = vadd.f32 %v1797, %v1884
        %v1889 = vtanh.pop %v1887
        %v1890 = vtanh.pop %v1888
        %v1891 = vpack.c.bf16 %v1890, %v1889
        %v1893 = vunpack.c.l.b16 %v1891
        %v1894 = vunpack.c.h.b16 %v1891
        %v1895 = vpack.c.b16 %v1893, %v1893
        %v1896 = vpack.c.b16 %v1894, %v1894
        %1899 = vst [vmem:[#allocation3] sm:$0xf] %v1895
        %1900 = vst [vmem:[#allocation3 + $0x4] sm:$0xf] %v1896
        %1901 = vst [vmem:[%s1032] sm:$0xf] %v1895
        %1902 = vst [vmem:[%s1032 + $0x4] sm:$0xf] %v1896
        %v1903 = vld [vmem:[%s1035] sm:$0xff]
        %v1904 = vld [vmem:[%s1035 + $0x8] sm:$0xff]
        %v1905 = vld [vmem:[%s1038] sm:$0xff]
        %v1906 = vld [vmem:[%s1038 + $0x8] sm:$0xff]
        %v1907 = vsel %vm512, %v1903, %v1905
        %v1908 = vsel %vm512, %v1904, %v1906
        %1909 = vmatprep.subr.bf16.mxu0 0
        %1910 = vmatpush1.bf16.msra.mxu0 %v1837
        %1911 = vmatprep.subr.bf16.mxu0 0
        %1912 = vmatpush1.bf16.msra.mxu0 %v1836
        %1913 = vmatprep.subr.bf16.mxu0 0
        %1914 = vmatpush1.bf16.msra.mxu0 %v1835
        %1915 = vmatprep.subr.bf16.mxu0 0
        %1916 = vmatpush1.bf16.msra.mxu0 %v1834
        %1917 = vmatprep.subr.bf16.mxu0 0
        %1918 = vmatpush1.bf16.msra.mxu0 %v1833
        %1919 = vmatprep.subr.bf16.mxu0 0
        %1920 = vmatpush1.bf16.msra.mxu0 %v1832
        %1921 = vmatprep.subr.bf16.mxu0 0
        %1922 = vmatpush1.bf16.msra.mxu0 %v1831
        %1923 = vmatprep.subr.bf16.mxu0 0
        %1924 = vmatpush1.bf16.msra.mxu0 %v1830
        %1925 = vmatprep.subr.bf16.mxu0 0
        %1926 = vmatpush2.bf16.msra.mxu0 0
        %1927 = vmatprep.subr.bf16.mxu0 0
        %1928 = vmatpush2.bf16.msra.mxu0 0
        %1929 = vmatprep.subr.bf16.mxu0 0
        %1930 = vmatpush2.bf16.msra.mxu0 0
        %1931 = vmatprep.subr.bf16.mxu0 0
        %1932 = vmatpush2.bf16.msra.mxu0 0
        %1933 = vmatprep.subr.bf16.mxu0 0
        %1934 = vmatpush2.bf16.msra.mxu0 0
        %1935 = vmatprep.subr.bf16.mxu0 0
        %1936 = vmatpush2.bf16.msra.mxu0 0
        %1937 = vmatprep.subr.bf16.mxu0 0
        %1938 = vmatpush2.bf16.msra.mxu0 0
        %1939 = vmatprep.subr.bf16.mxu0 0
        %1940 = vmatpush2.bf16.msra.mxu0 0
        %1941 = vmatprep.mubr.bf16.mxu0 0
        %1942 = vmatmul.mubr.bf16.gmra.mxu0 %v1891
        %v1943 = vpop.f32.mrf.mxu0
        %v1944 = vadd.f32 0.0, %v1943
        %v1945 = vpop.f32.mrf.mxu0
        %v1946 = vpop.f32.mrf.mxu0
        %v1947 = vadd.f32 0.0, %v1946
        %v1948 = vpop.f32.mrf.mxu0
        %1949 = vdwg.mxu0
        %v1950 = vadd.f32 %v1907, %v1944
        %v1951 = vadd.f32 %v1908, %v1947
        %v1952 = vtanh.pop %v1950
        %v1953 = vtanh.pop %v1951
        %v1954 = vpack.c.bf16 %v1953, %v1952
        %v1956 = vunpack.c.l.b16 %v1954
        %v1957 = vunpack.c.h.b16 %v1954
        %v1958 = vpack.c.b16 %v1956, %v1956
        %v1959 = vpack.c.b16 %v1957, %v1957
        %1962 = vst [vmem:[%s1096] sm:$0xf] %v1958
        %1963 = vst [vmem:[%s1096 + $0x4] sm:$0xf] %v1959
        %1964 = vst [vmem:[%s1099] sm:$0xf] %v1958
        %1965 = vst [vmem:[%s1099 + $0x4] sm:$0xf] %v1959
        %v1966 = vld [vmem:[%s1102] sm:$0xff]
        %v1967 = vld [vmem:[%s1102 + $0x8] sm:$0xff]
        %v1968 = vld [vmem:[%s1105] sm:$0xff]
        %v1969 = vld [vmem:[%s1105 + $0x8] sm:$0xff]
        %v1970 = vsel %vm512, %v1966, %v1968
        %v1971 = vsel %vm512, %v1967, %v1969
        %1972 = vmatprep.subr.bf16.mxu0 0
        %1973 = vmatpush1.bf16.msra.mxu0 %v1837
        %1974 = vmatprep.subr.bf16.mxu0 0
        %1975 = vmatpush1.bf16.msra.mxu0 %v1836
        %1976 = vmatprep.subr.bf16.mxu0 0
        %1977 = vmatpush1.bf16.msra.mxu0 %v1835
        %1978 = vmatprep.subr.bf16.mxu0 0
        %1979 = vmatpush1.bf16.msra.mxu0 %v1834
        %1980 = vmatprep.subr.bf16.mxu0 0
        %1981 = vmatpush1.bf16.msra.mxu0 %v1833
        %1982 = vmatprep.subr.bf16.mxu0 0
        %1983 = vmatpush1.bf16.msra.mxu0 %v1832
        %1984 = vmatprep.subr.bf16.mxu0 0
        %1985 = vmatpush1.bf16.msra.mxu0 %v1831
        %1986 = vmatprep.subr.bf16.mxu0 0
        %1987 = vmatpush1.bf16.msra.mxu0 %v1830
        %1988 = vmatprep.subr.bf16.mxu0 0
        %1989 = vmatpush2.bf16.msra.mxu0 0
        %1990 = vmatprep.subr.bf16.mxu0 0
        %1991 = vmatpush2.bf16.msra.mxu0 0
        %1992 = vmatprep.subr.bf16.mxu0 0
        %1993 = vmatpush2.bf16.msra.mxu0 0
        %1994 = vmatprep.subr.bf16.mxu0 0
        %1995 = vmatpush2.bf16.msra.mxu0 0
        %1996 = vmatprep.subr.bf16.mxu0 0
        %1997 = vmatpush2.bf16.msra.mxu0 0
        %1998 = vmatprep.subr.bf16.mxu0 0
        %1999 = vmatpush2.bf16.msra.mxu0 0
        %2000 = vmatprep.subr.bf16.mxu0 0
        %2001 = vmatpush2.bf16.msra.mxu0 0
        %2002 = vmatprep.subr.bf16.mxu0 0
        %2003 = vmatpush2.bf16.msra.mxu0 0
        %2004 = vmatprep.mubr.bf16.mxu0 0
        %2005 = vmatmul.mubr.bf16.gmra.mxu0 %v1954
        %v2006 = vpop.f32.mrf.mxu0
        %v2007 = vadd.f32 0.0, %v2006
        %v2008 = vpop.f32.mrf.mxu0
        %v2009 = vpop.f32.mrf.mxu0
        %v2010 = vadd.f32 0.0, %v2009
        %v2011 = vpop.f32.mrf.mxu0
        %2012 = vdwg.mxu0
        %v2013 = vadd.f32 %v1970, %v2007
        %v2014 = vadd.f32 %v1971, %v2010
        %v2015 = vtanh.pop %v2013
        %v2016 = vtanh.pop %v2014
        %v2017 = vpack.c.bf16 %v2016, %v2015
        %v2019 = vunpack.c.l.b16 %v2017
        %v2020 = vunpack.c.h.b16 %v2017
        %v2021 = vpack.c.b16 %v2019, %v2019
        %v2022 = vpack.c.b16 %v2020, %v2020
        %2025 = vst [vmem:[%s1163] sm:$0xf] %v2021
        %2026 = vst [vmem:[%s1163 + $0x4] sm:$0xf] %v2022
        %2027 = vst [vmem:[%s1166] sm:$0xf] %v2021
        %2028 = vst [vmem:[%s1166 + $0x4] sm:$0xf] %v2022
        %v2029 = vld [vmem:[%s1169] sm:$0xff]
        %v2030 = vld [vmem:[%s1169 + $0x8] sm:$0xff]
        %v2031 = vld [vmem:[%s1172] sm:$0xff]
        %v2032 = vld [vmem:[%s1172 + $0x8] sm:$0xff]
        %v2033 = vsel %vm512, %v2029, %v2031
        %v2034 = vsel %vm512, %v2030, %v2032
        %2035 = vmatprep.subr.bf16.mxu0 0
        %2036 = vmatpush1.bf16.msra.mxu0 %v1837
        %2037 = vmatprep.subr.bf16.mxu0 0
        %2038 = vmatpush1.bf16.msra.mxu0 %v1836
        %2039 = vmatprep.subr.bf16.mxu0 0
        %2040 = vmatpush1.bf16.msra.mxu0 %v1835
        %2041 = vmatprep.subr.bf16.mxu0 0
        %2042 = vmatpush1.bf16.msra.mxu0 %v1834
        %2043 = vmatprep.subr.bf16.mxu0 0
        %2044 = vmatpush1.bf16.msra.mxu0 %v1833
        %2045 = vmatprep.subr.bf16.mxu0 0
        %2046 = vmatpush1.bf16.msra.mxu0 %v1832
        %2047 = vmatprep.subr.bf16.mxu0 0
        %2048 = vmatpush1.bf16.msra.mxu0 %v1831
        %2049 = vmatprep.subr.bf16.mxu0 0
        %2050 = vmatpush1.bf16.msra.mxu0 %v1830
        %2051 = vmatprep.subr.bf16.mxu0 0
        %2052 = vmatpush2.bf16.msra.mxu0 0
        %2053 = vmatprep.subr.bf16.mxu0 0
        %2054 = vmatpush2.bf16.msra.mxu0 0
        %2055 = vmatprep.subr.bf16.mxu0 0
        %2056 = vmatpush2.bf16.msra.mxu0 0
        %2057 = vmatprep.subr.bf16.mxu0 0
        %2058 = vmatpush2.bf16.msra.mxu0 0
        %2059 = vmatprep.subr.bf16.mxu0 0
        %2060 = vmatpush2.bf16.msra.mxu0 0
        %2061 = vmatprep.subr.bf16.mxu0 0
        %2062 = vmatpush2.bf16.msra.mxu0 0
        %2063 = vmatprep.subr.bf16.mxu0 0
        %2064 = vmatpush2.bf16.msra.mxu0 0
        %2065 = vmatprep.subr.bf16.mxu0 0
        %2066 = vmatpush2.bf16.msra.mxu0 0
        %2067 = vmatprep.mubr.bf16.mxu0 0
        %2068 = vmatmul.mubr.bf16.gmra.mxu0 %v2017
        %v2069 = vpop.f32.mrf.mxu0
        %v2070 = vadd.f32 0.0, %v2069
        %v2071 = vpop.f32.mrf.mxu0
        %v2072 = vpop.f32.mrf.mxu0
        %v2073 = vadd.f32 0.0, %v2072
        %v2074 = vpop.f32.mrf.mxu0
        %2075 = vdwg.mxu0
        %v2076 = vadd.f32 %v2033, %v2070
        %v2077 = vadd.f32 %v2034, %v2073
        %v2078 = vtanh.pop %v2076
        %v2079 = vtanh.pop %v2077
        %v2080 = vpack.c.bf16 %v2079, %v2078
        %v2082 = vunpack.c.l.b16 %v2080
        %v2083 = vunpack.c.h.b16 %v2080
        %v2084 = vpack.c.b16 %v2082, %v2082
        %v2085 = vpack.c.b16 %v2083, %v2083
        %2088 = vst [vmem:[%s1230] sm:$0xf] %v2084
        %2089 = vst [vmem:[%s1230 + $0x4] sm:$0xf] %v2085
        %2090 = vst [vmem:[%s1233] sm:$0xf] %v2084
        %2091 = vst [vmem:[%s1233 + $0x4] sm:$0xf] %v2085
        %v2092 = vld [vmem:[%s1172] sm:$0xff]
        %v2093 = vld [vmem:[%s1172 + $0x8] sm:$0xff]
        %v2094 = vld [vmem:[%s1169] sm:$0xff]
        %v2095 = vld [vmem:[%s1169 + $0x8] sm:$0xff]
        %v2096 = vsel %vm512, %v2092, %v2094
        %v2097 = vsel %vm512, %v2093, %v2095
        %2098 = vmatprep.subr.bf16.mxu0 0
        %2099 = vmatpush1.bf16.msra.mxu0 %v1837
        %2100 = vmatprep.subr.bf16.mxu0 0
        %2101 = vmatpush1.bf16.msra.mxu0 %v1836
        %2102 = vmatprep.subr.bf16.mxu0 0
        %2103 = vmatpush1.bf16.msra.mxu0 %v1835
        %2104 = vmatprep.subr.bf16.mxu0 0
        %2105 = vmatpush1.bf16.msra.mxu0 %v1834
        %2106 = vmatprep.subr.bf16.mxu0 0
        %2107 = vmatpush1.bf16.msra.mxu0 %v1833
        %2108 = vmatprep.subr.bf16.mxu0 0
        %2109 = vmatpush1.bf16.msra.mxu0 %v1832
        %2110 = vmatprep.subr.bf16.mxu0 0
        %2111 = vmatpush1.bf16.msra.mxu0 %v1831
        %2112 = vmatprep.subr.bf16.mxu0 0
        %2113 = vmatpush1.bf16.msra.mxu0 %v1830
        %2114 = vmatprep.subr.bf16.mxu0 0
        %2115 = vmatpush2.bf16.msra.mxu0 0
        %2116 = vmatprep.subr.bf16.mxu0 0
        %2117 = vmatpush2.bf16.msra.mxu0 0
        %2118 = vmatprep.subr.bf16.mxu0 0
        %2119 = vmatpush2.bf16.msra.mxu0 0
        %2120 = vmatprep.subr.bf16.mxu0 0
        %2121 = vmatpush2.bf16.msra.mxu0 0
        %2122 = vmatprep.subr.bf16.mxu0 0
        %2123 = vmatpush2.bf16.msra.mxu0 0
        %2124 = vmatprep.subr.bf16.mxu0 0
        %2125 = vmatpush2.bf16.msra.mxu0 0
        %2126 = vmatprep.subr.bf16.mxu0 0
        %2127 = vmatpush2.bf16.msra.mxu0 0
        %2128 = vmatprep.subr.bf16.mxu0 0
        %2129 = vmatpush2.bf16.msra.mxu0 0
        %2130 = vmatprep.mubr.bf16.mxu0 0
        %2131 = vmatmul.mubr.bf16.gmra.mxu0 %v2080
        %v2132 = vpop.f32.mrf.mxu0
        %v2133 = vadd.f32 0.0, %v2132
        %v2134 = vpop.f32.mrf.mxu0
        %v2135 = vpop.f32.mrf.mxu0
        %v2136 = vadd.f32 0.0, %v2135
        %v2137 = vpop.f32.mrf.mxu0
        %2138 = vdwg.mxu0
        %v2139 = vadd.f32 %v2096, %v2133
        %v2140 = vadd.f32 %v2097, %v2136
        %v2141 = vtanh.pop %v2139
        %v2142 = vtanh.pop %v2140
        %v2143 = vpack.c.bf16 %v2142, %v2141
        %v2145 = vunpack.c.l.b16 %v2143
        %v2146 = vunpack.c.h.b16 %v2143
        %v2147 = vpack.c.b16 %v2145, %v2145
        %v2148 = vpack.c.b16 %v2146, %v2146
        %2151 = vst [vmem:[%s1295] sm:$0xf] %v2147
        %2152 = vst [vmem:[%s1295 + $0x4] sm:$0xf] %v2148
        %2153 = vst [vmem:[%s1298] sm:$0xf] %v2147
        %2154 = vst [vmem:[%s1298 + $0x4] sm:$0xf] %v2148
        %v2155 = vld [vmem:[%s1105] sm:$0xff]
        %v2156 = vld [vmem:[%s1105 + $0x8] sm:$0xff]
        %v2157 = vld [vmem:[%s1102] sm:$0xff]
        %v2158 = vld [vmem:[%s1102 + $0x8] sm:$0xff]
        %v2159 = vsel %vm512, %v2155, %v2157
        %v2160 = vsel %vm512, %v2156, %v2158
        %2161 = vmatprep.subr.bf16.mxu0 0
        %2162 = vmatpush1.bf16.msra.mxu0 %v1837
        %2163 = vmatprep.subr.bf16.mxu0 0
        %2164 = vmatpush1.bf16.msra.mxu0 %v1836
        %2165 = vmatprep.subr.bf16.mxu0 0
        %2166 = vmatpush1.bf16.msra.mxu0 %v1835
        %2167 = vmatprep.subr.bf16.mxu0 0
        %2168 = vmatpush1.bf16.msra.mxu0 %v1834
        %2169 = vmatprep.subr.bf16.mxu0 0
        %2170 = vmatpush1.bf16.msra.mxu0 %v1833
        %2171 = vmatprep.subr.bf16.mxu0 0
        %2172 = vmatpush1.bf16.msra.mxu0 %v1832
        %2173 = vmatprep.subr.bf16.mxu0 0
        %2174 = vmatpush1.bf16.msra.mxu0 %v1831
        %2175 = vmatprep.subr.bf16.mxu0 0
        %2176 = vmatpush1.bf16.msra.mxu0 %v1830
        %2177 = vmatprep.subr.bf16.mxu0 0
        %2178 = vmatpush2.bf16.msra.mxu0 0
        %2179 = vmatprep.subr.bf16.mxu0 0
        %2180 = vmatpush2.bf16.msra.mxu0 0
        %2181 = vmatprep.subr.bf16.mxu0 0
        %2182 = vmatpush2.bf16.msra.mxu0 0
        %2183 = vmatprep.subr.bf16.mxu0 0
        %2184 = vmatpush2.bf16.msra.mxu0 0
        %2185 = vmatprep.subr.bf16.mxu0 0
        %2186 = vmatpush2.bf16.msra.mxu0 0
        %2187 = vmatprep.subr.bf16.mxu0 0
        %2188 = vmatpush2.bf16.msra.mxu0 0
        %2189 = vmatprep.subr.bf16.mxu0 0
        %2190 = vmatpush2.bf16.msra.mxu0 0
        %2191 = vmatprep.subr.bf16.mxu0 0
        %2192 = vmatpush2.bf16.msra.mxu0 0
        %2193 = vmatprep.mubr.bf16.mxu0 0
        %2194 = vmatmul.mubr.bf16.gmra.mxu0 %v2143
        %v2195 = vpop.f32.mrf.mxu0
        %v2196 = vadd.f32 0.0, %v2195
        %v2197 = vpop.f32.mrf.mxu0
        %v2198 = vpop.f32.mrf.mxu0
        %v2199 = vadd.f32 0.0, %v2198
        %v2200 = vpop.f32.mrf.mxu0
        %2201 = vdwg.mxu0
        %v2202 = vadd.f32 %v2159, %v2196
        %v2203 = vadd.f32 %v2160, %v2199
        %v2204 = vtanh.pop %v2202
        %v2205 = vtanh.pop %v2203
        %v2206 = vpack.c.bf16 %v2205, %v2204
        %v2208 = vunpack.c.l.b16 %v2206
        %v2209 = vunpack.c.h.b16 %v2206
        %v2210 = vpack.c.b16 %v2208, %v2208
        %v2211 = vpack.c.b16 %v2209, %v2209
        %2214 = vst [vmem:[%s1360] sm:$0xf] %v2210
        %2215 = vst [vmem:[%s1360 + $0x4] sm:$0xf] %v2211
        %2216 = vst [vmem:[%s1363] sm:$0xf] %v2210
        %2217 = vst [vmem:[%s1363 + $0x4] sm:$0xf] %v2211
        %v2218 = vld [vmem:[%s1038] sm:$0xff]
        %v2219 = vld [vmem:[%s1038 + $0x8] sm:$0xff]
        %v2220 = vld [vmem:[%s1035] sm:$0xff]
        %v2221 = vld [vmem:[%s1035 + $0x8] sm:$0xff]
        %v2222 = vsel %vm512, %v2218, %v2220
        %v2223 = vsel %vm512, %v2219, %v2221
        %2224 = vmatprep.subr.bf16.mxu0 0
        %2225 = vmatpush1.bf16.msra.mxu0 %v1837
        %2226 = vmatprep.subr.bf16.mxu0 0
        %2227 = vmatpush1.bf16.msra.mxu0 %v1836
        %2228 = vmatprep.subr.bf16.mxu0 0
        %2229 = vmatpush1.bf16.msra.mxu0 %v1835
        %2230 = vmatprep.subr.bf16.mxu0 0
        %2231 = vmatpush1.bf16.msra.mxu0 %v1834
        %2232 = vmatprep.subr.bf16.mxu0 0
        %2233 = vmatpush1.bf16.msra.mxu0 %v1833
        %2234 = vmatprep.subr.bf16.mxu0 0
        %2235 = vmatpush1.bf16.msra.mxu0 %v1832
        %2236 = vmatprep.subr.bf16.mxu0 0
        %2237 = vmatpush1.bf16.msra.mxu0 %v1831
        %2238 = vmatprep.subr.bf16.mxu0 0
        %2239 = vmatpush1.bf16.msra.mxu0 %v1830
        %2240 = vmatprep.subr.bf16.mxu0 0
        %2241 = vmatpush2.bf16.msra.mxu0 0
        %2242 = vmatprep.subr.bf16.mxu0 0
        %2243 = vmatpush2.bf16.msra.mxu0 0
        %2244 = vmatprep.subr.bf16.mxu0 0
        %2245 = vmatpush2.bf16.msra.mxu0 0
        %2246 = vmatprep.subr.bf16.mxu0 0
        %2247 = vmatpush2.bf16.msra.mxu0 0
        %2248 = vmatprep.subr.bf16.mxu0 0
        %2249 = vmatpush2.bf16.msra.mxu0 0
        %2250 = vmatprep.subr.bf16.mxu0 0
        %2251 = vmatpush2.bf16.msra.mxu0 0
        %2252 = vmatprep.subr.bf16.mxu0 0
        %2253 = vmatpush2.bf16.msra.mxu0 0
        %2254 = vmatprep.subr.bf16.mxu0 0
        %2255 = vmatpush2.bf16.msra.mxu0 0
        %2256 = vmatprep.mubr.bf16.mxu0 0
        %2257 = vmatmul.mubr.bf16.gmra.mxu0 %v2206
        %v2258 = vpop.f32.mrf.mxu0
        %v2259 = vadd.f32 0.0, %v2258
        %v2260 = vpop.f32.mrf.mxu0
        %v2261 = vpop.f32.mrf.mxu0
        %v2262 = vadd.f32 0.0, %v2261
        %v2263 = vpop.f32.mrf.mxu0
        %2264 = vdwg.mxu0
        %v2265 = vadd.f32 %v2222, %v2259
        %v2266 = vadd.f32 %v2223, %v2262
        %v2267 = vtanh.pop %v2265
        %v2268 = vtanh.pop %v2266
        %v2269 = vpack.c.bf16 %v2268, %v2267
        %v2271 = vunpack.c.l.b16 %v2269
        %v2272 = vunpack.c.h.b16 %v2269
        %v2273 = vpack.c.b16 %v2271, %v2271
        %v2274 = vpack.c.b16 %v2272, %v2272
        %2277 = vst [vmem:[%s1425] sm:$0xf] %v2273
        %2278 = vst [vmem:[%s1425 + $0x4] sm:$0xf] %v2274
        %2279 = vst [vmem:[%s1428] sm:$0xf] %v2273
        %2280 = vst [vmem:[%s1428 + $0x4] sm:$0xf] %v2274
        %v2281 = vld [vmem:[%s924] sm:$0xff]
        %v2282 = vld [vmem:[%s924 + $0x8] sm:$0xff]
        %v2283 = vld [vmem:[#allocation2] sm:$0xff]
        %v2284 = vld [vmem:[#allocation2 + $0x8] sm:$0xff]
        %v2285 = vsel %vm512, %v2281, %v2283
        %v2286 = vsel %vm512, %v2282, %v2284
        %2287 = vmatprep.subr.bf16.mxu0 0
        %2288 = vmatpush1.bf16.msra.mxu0 %v1837
        %2289 = vmatprep.subr.bf16.mxu0 0
        %2290 = vmatpush1.bf16.msra.mxu0 %v1836
        %2291 = vmatprep.subr.bf16.mxu0 0
        %2292 = vmatpush1.bf16.msra.mxu0 %v1835
        %2293 = vmatprep.subr.bf16.mxu0 0
        %2294 = vmatpush1.bf16.msra.mxu0 %v1834
        %2295 = vmatprep.subr.bf16.mxu0 0
        %2296 = vmatpush1.bf16.msra.mxu0 %v1833
        %2297 = vmatprep.subr.bf16.mxu0 0
        %2298 = vmatpush1.bf16.msra.mxu0 %v1832
        %2299 = vmatprep.subr.bf16.mxu0 0
        %2300 = vmatpush1.bf16.msra.mxu0 %v1831
        %2301 = vmatprep.subr.bf16.mxu0 0
        %2302 = vmatpush1.bf16.msra.mxu0 %v1830
        %2303 = vmatprep.subr.bf16.mxu0 0
        %2304 = vmatpush2.bf16.msra.mxu0 0
        %2305 = vmatprep.subr.bf16.mxu0 0
        %2306 = vmatpush2.bf16.msra.mxu0 0
        %2307 = vmatprep.subr.bf16.mxu0 0
        %2308 = vmatpush2.bf16.msra.mxu0 0
        %2309 = vmatprep.subr.bf16.mxu0 0
        %2310 = vmatpush2.bf16.msra.mxu0 0
        %2311 = vmatprep.subr.bf16.mxu0 0
        %2312 = vmatpush2.bf16.msra.mxu0 0
        %2313 = vmatprep.subr.bf16.mxu0 0
        %2314 = vmatpush2.bf16.msra.mxu0 0
        %2315 = vmatprep.subr.bf16.mxu0 0
        %2316 = vmatpush2.bf16.msra.mxu0 0
        %2317 = vmatprep.subr.bf16.mxu0 0
        %2318 = vmatpush2.bf16.msra.mxu0 0
        %2319 = vmatprep.mubr.bf16.mxu0 0
        %2320 = vmatmul.mubr.bf16.gmra.mxu0 %v2269
        %v2321 = vpop.f32.mrf.mxu0
        %v2322 = vadd.f32 0.0, %v2321
        %v2323 = vpop.f32.mrf.mxu0
        %v2324 = vpop.f32.mrf.mxu0
        %v2325 = vadd.f32 0.0, %v2324
        %v2326 = vpop.f32.mrf.mxu0
        %2327 = vdwg.mxu0
        %v2328 = vadd.f32 %v2285, %v2322
        %v2329 = vadd.f32 %v2286, %v2325
        %v2330 = vtanh.pop %v2328
        %v2331 = vtanh.pop %v2329
        %v2332 = vpack.c.bf16 %v2331, %v2330
        %v2334 = vunpack.c.l.b16 %v2332
        %v2335 = vunpack.c.h.b16 %v2332
        %v2336 = vpack.c.b16 %v2334, %v2334
        %v2337 = vpack.c.b16 %v2335, %v2335
        %2340 = vst [vmem:[%s1490] sm:$0xf] %v2336
        %2341 = vst [vmem:[%s1490 + $0x4] sm:$0xf] %v2337
        %2342 = vst [vmem:[#allocation4] sm:$0xf] %v2336
        %2343 = vst [vmem:[#allocation4 + $0x4] sm:$0xf] %v2337
        %v2344 = vld [vmem:[#allocation3] sm:$0xf]
        %v2345 = vld [vmem:[#allocation3 + $0x4] sm:$0xf]
        %v2346 = vld [vmem:[#allocation3 + $0x8] sm:$0xf]
        %v2347 = vld [vmem:[#allocation3 + $0xc] sm:$0xf]
        %v2348 = vld [vmem:[#allocation3 + $0x10] sm:$0xf]
        %v2349 = vld [vmem:[#allocation3 + $0x14] sm:$0xf]
        %v2350 = vld [vmem:[#allocation3 + $0x18] sm:$0xf]
        %v2351 = vld [vmem:[#allocation3 + $0x1c] sm:$0xf]
        %v2352 = vld [vmem:[#allocation3 + $0x20] sm:$0xf]
        %v2353 = vld [vmem:[#allocation3 + $0x24] sm:$0xf]
        %v2354 = vld [vmem:[#allocation3 + $0x28] sm:$0xf]
        %v2355 = vld [vmem:[#allocation3 + $0x2c] sm:$0xf]
        %v2356 = vld [vmem:[#allocation3 + $0x30] sm:$0xf]
        %v2357 = vld [vmem:[#allocation3 + $0x34] sm:$0xf]
        %v2358 = vld [vmem:[#allocation3 + $0x38] sm:$0xf]
        %v2359 = vld [vmem:[#allocation3 + $0x3c] sm:$0xf]
        %v2360 = vld [vmem:[#allocation4] sm:$0xf]
        %v2361 = vld [vmem:[#allocation4 + $0x4] sm:$0xf]
        %v2362 = vld [vmem:[#allocation4 + $0x8] sm:$0xf]
        %v2363 = vld [vmem:[#allocation4 + $0xc] sm:$0xf]
        %v2364 = vld [vmem:[#allocation4 + $0x10] sm:$0xf]
        %v2365 = vld [vmem:[#allocation4 + $0x14] sm:$0xf]
        %v2366 = vld [vmem:[#allocation4 + $0x18] sm:$0xf]
        %v2367 = vld [vmem:[#allocation4 + $0x1c] sm:$0xf]
        %v2368 = vld [vmem:[#allocation4 + $0x20] sm:$0xf]
        %v2369 = vld [vmem:[#allocation4 + $0x24] sm:$0xf]
        %v2370 = vld [vmem:[#allocation4 + $0x28] sm:$0xf]
        %v2371 = vld [vmem:[#allocation4 + $0x2c] sm:$0xf]
        %v2372 = vld [vmem:[#allocation4 + $0x30] sm:$0xf]
        %v2373 = vld [vmem:[#allocation4 + $0x34] sm:$0xf]
        %v2374 = vld [vmem:[#allocation4 + $0x38] sm:$0xf]
        %v2375 = vld [vmem:[#allocation4 + $0x3c] sm:$0xf]
        %v2376 = vsel %vm1527, %v2344, %v2360
        %v2377 = vsel %vm1527, %v2345, %v2361
        %v2378 = vsel %vm1527, %v2346, %v2362
        %v2379 = vsel %vm1527, %v2347, %v2363
        %v2380 = vsel %vm1527, %v2348, %v2364
        %v2381 = vsel %vm1527, %v2349, %v2365
        %v2382 = vsel %vm1527, %v2350, %v2366
        %v2383 = vsel %vm1527, %v2351, %v2367
        %v2384 = vsel %vm1527, %v2352, %v2368
        %v2385 = vsel %vm1527, %v2353, %v2369
        %v2386 = vsel %vm1527, %v2354, %v2370
        %v2387 = vsel %vm1527, %v2355, %v2371
        %v2388 = vsel %vm1527, %v2356, %v2372
        %v2389 = vsel %vm1527, %v2357, %v2373
        %v2390 = vsel %vm1527, %v2358, %v2374
        %v2391 = vsel %vm1527, %v2359, %v2375
        %v2392 = vunpack.c.l.bf16 %v2376
        %v2393 = vunpack.c.l.bf16 %v2377
        %v2394 = vunpack.c.l.bf16 %v2378
        %v2395 = vunpack.c.l.bf16 %v2379
        %v2396 = vunpack.c.l.bf16 %v2380
        %v2397 = vunpack.c.l.bf16 %v2381
        %v2398 = vunpack.c.l.bf16 %v2382
        %v2399 = vunpack.c.l.bf16 %v2383
        %v2400 = vunpack.c.l.bf16 %v2384
        %v2401 = vunpack.c.l.bf16 %v2385
        %v2402 = vunpack.c.l.bf16 %v2386
        %v2403 = vunpack.c.l.bf16 %v2387
        %v2404 = vunpack.c.l.bf16 %v2388
        %v2405 = vunpack.c.l.bf16 %v2389
        %v2406 = vunpack.c.l.bf16 %v2390
        %v2407 = vunpack.c.l.bf16 %v2391
        %v2408 = vld [vmem:[%s9] sm:$0x1]
        %v2409 = vunpack.c.l.bf16 %v2408
        %v2410 = vlaneseq
        %v2411 = vshrl.u32 %v2410, 7
        %v2412 = vsub.s32 0, %v2411
        %v2413 = vrot.slane %v2409, %v2412
        %v2414 = vmul.f32 %v2392, %v2413
        %v2415 = vmul.f32 %v2393, %v2413
        %v2416 = vmul.f32 %v2394, %v2413
        %v2417 = vmul.f32 %v2395, %v2413
        %v2418 = vmul.f32 %v2396, %v2413
        %v2419 = vmul.f32 %v2397, %v2413
        %v2420 = vmul.f32 %v2398, %v2413
        %v2421 = vmul.f32 %v2399, %v2413
        %v2422 = vmul.f32 %v2400, %v2413
        %v2423 = vmul.f32 %v2401, %v2413
        %v2424 = vmul.f32 %v2402, %v2413
        %v2425 = vmul.f32 %v2403, %v2413
        %v2426 = vmul.f32 %v2404, %v2413
        %v2427 = vmul.f32 %v2405, %v2413
        %v2428 = vmul.f32 %v2406, %v2413
        %v2429 = vmul.f32 %v2407, %v2413
        %2430 = vadd.xlane.f32.xlu0 %v2414
        %v2431 = vpop.xlane.xlu0 %2430
        %2432 = vadd.xlane.f32.xlu0 %v2415
        %v2433 = vpop.xlane.xlu0 %2432
        %2434 = vadd.xlane.f32.xlu0 %v2416
        %v2435 = vpop.xlane.xlu0 %2434
        %2436 = vadd.xlane.f32.xlu0 %v2417
        %v2437 = vpop.xlane.xlu0 %2436
        %2438 = vadd.xlane.f32.xlu0 %v2418
        %v2439 = vpop.xlane.xlu0 %2438
        %2440 = vadd.xlane.f32.xlu0 %v2419
        %v2441 = vpop.xlane.xlu0 %2440
        %2442 = vadd.xlane.f32.xlu0 %v2420
        %v2443 = vpop.xlane.xlu0 %2442
        %2444 = vadd.xlane.f32.xlu0 %v2421
        %v2445 = vpop.xlane.xlu0 %2444
        %2446 = vadd.xlane.f32.xlu0 %v2422
        %v2447 = vpop.xlane.xlu0 %2446
        %2448 = vadd.xlane.f32.xlu0 %v2423
        %v2449 = vpop.xlane.xlu0 %2448
        %2450 = vadd.xlane.f32.xlu0 %v2424
        %v2451 = vpop.xlane.xlu0 %2450
        %2452 = vadd.xlane.f32.xlu0 %v2425
        %v2453 = vpop.xlane.xlu0 %2452
        %2454 = vadd.xlane.f32.xlu0 %v2426
        %v2455 = vpop.xlane.xlu0 %2454
        %2456 = vadd.xlane.f32.xlu0 %v2427
        %v2457 = vpop.xlane.xlu0 %2456
        %2458 = vadd.xlane.f32.xlu0 %v2428
        %v2459 = vpop.xlane.xlu0 %2458
        %2460 = vadd.xlane.f32.xlu0 %v2429
        %v2461 = vpop.xlane.xlu0 %2460
        %v2462 = vld [vmem:[#allocation5] sm:$0x1]
        %v2464 = vlaneseq
        %v2465 = vshrl.u32 %v2464, 7
        %v2466 = vsub.s32 0, %v2465
        %v2467 = vrot.slane %v2462, %v2466
        %2468 = vset.pattern.permute.xlu0 0
        %2469 = vperm.xlu0 %2468, %v2467
        %v2470 = vpop.permute.xlu0 %2469
        %v2472 = vadd.f32 %v2431, %v2470
        %v2473 = vadd.f32 %v2433, %v2470
        %v2474 = vadd.f32 %v2435, %v2470
        %v2475 = vadd.f32 %v2437, %v2470
        %v2476 = vadd.f32 %v2439, %v2470
        %v2477 = vadd.f32 %v2441, %v2470
        %v2478 = vadd.f32 %v2443, %v2470
        %v2479 = vadd.f32 %v2445, %v2470
        %v2480 = vadd.f32 %v2447, %v2470
        %v2481 = vadd.f32 %v2449, %v2470
        %v2482 = vadd.f32 %v2451, %v2470
        %v2483 = vadd.f32 %v2453, %v2470
        %v2484 = vadd.f32 %v2455, %v2470
        %v2485 = vadd.f32 %v2457, %v2470
        %v2486 = vadd.f32 %v2459, %v2470
        %v2487 = vadd.f32 %v2461, %v2470
        %v2488 = vxor.u32 %v2472, 2147483648
        %v2489 = vxor.u32 %v2473, 2147483648
        %v2490 = vxor.u32 %v2474, 2147483648
        %v2491 = vxor.u32 %v2475, 2147483648
        %v2492 = vxor.u32 %v2476, 2147483648
        %v2493 = vxor.u32 %v2477, 2147483648
        %v2494 = vxor.u32 %v2478, 2147483648
        %v2495 = vxor.u32 %v2479, 2147483648
        %v2496 = vxor.u32 %v2480, 2147483648
        %v2497 = vxor.u32 %v2481, 2147483648
        %v2498 = vxor.u32 %v2482, 2147483648
        %v2499 = vxor.u32 %v2483, 2147483648
        %v2500 = vxor.u32 %v2484, 2147483648
        %v2501 = vxor.u32 %v2485, 2147483648
        %v2502 = vxor.u32 %v2486, 2147483648
        %v2503 = vxor.u32 %v2487, 2147483648
        %v2504 = vmul.f32 %v2488, 1.442695
        %v2505 = vpow.pop %v2504
        %v2506 = vmul.f32 %v2489, 1.442695
        %v2507 = vpow.pop %v2506
        %v2508 = vmul.f32 %v2490, 1.442695
        %v2509 = vpow.pop %v2508
        %v2510 = vmul.f32 %v2491, 1.442695
        %v2511 = vpow.pop %v2510
        %v2512 = vmul.f32 %v2492, 1.442695
        %v2513 = vpow.pop %v2512
        %v2514 = vmul.f32 %v2493, 1.442695
        %v2515 = vpow.pop %v2514
        %v2516 = vmul.f32 %v2494, 1.442695
        %v2517 = vpow.pop %v2516
        %v2518 = vmul.f32 %v2495, 1.442695
        %v2519 = vpow.pop %v2518
        %v2520 = vmul.f32 %v2496, 1.442695
        %v2521 = vpow.pop %v2520
        %v2522 = vmul.f32 %v2497, 1.442695
        %v2523 = vpow.pop %v2522
        %v2524 = vmul.f32 %v2498, 1.442695
        %v2525 = vpow.pop %v2524
        %v2526 = vmul.f32 %v2499, 1.442695
        %v2527 = vpow.pop %v2526
        %v2528 = vmul.f32 %v2500, 1.442695
        %v2529 = vpow.pop %v2528
        %v2530 = vmul.f32 %v2501, 1.442695
        %v2531 = vpow.pop %v2530
        %v2532 = vmul.f32 %v2502, 1.442695
        %v2533 = vpow.pop %v2532
        %v2534 = vmul.f32 %v2503, 1.442695
        %v2535 = vpow.pop %v2534
        %v2536 = vadd.f32 %v2505, 1.0
        %v2537 = vadd.f32 %v2507, 1.0
        %v2538 = vadd.f32 %v2509, 1.0
        %v2539 = vadd.f32 %v2511, 1.0
        %v2540 = vadd.f32 %v2513, 1.0
        %v2541 = vadd.f32 %v2515, 1.0
        %v2542 = vadd.f32 %v2517, 1.0
        %v2543 = vadd.f32 %v2519, 1.0
        %v2544 = vadd.f32 %v2521, 1.0
        %v2545 = vadd.f32 %v2523, 1.0
        %v2546 = vadd.f32 %v2525, 1.0
        %v2547 = vadd.f32 %v2527, 1.0
        %v2548 = vadd.f32 %v2529, 1.0
        %v2549 = vadd.f32 %v2531, 1.0
        %v2550 = vadd.f32 %v2533, 1.0
        %v2551 = vadd.f32 %v2535, 1.0
        %v2552 = vrcp.pop %v2536
        %v2553 = vmul.f32 1.0, %v2552
        %v2554 = vrcp.pop %v2537
        %v2555 = vmul.f32 1.0, %v2554
        %v2556 = vrcp.pop %v2538
        %v2557 = vmul.f32 1.0, %v2556
        %v2558 = vrcp.pop %v2539
        %v2559 = vmul.f32 1.0, %v2558
        %v2560 = vrcp.pop %v2540
        %v2561 = vmul.f32 1.0, %v2560
        %v2562 = vrcp.pop %v2541
        %v2563 = vmul.f32 1.0, %v2562
        %v2564 = vrcp.pop %v2542
        %v2565 = vmul.f32 1.0, %v2564
        %v2566 = vrcp.pop %v2543
        %v2567 = vmul.f32 1.0, %v2566
        %v2568 = vrcp.pop %v2544
        %v2569 = vmul.f32 1.0, %v2568
        %v2570 = vrcp.pop %v2545
        %v2571 = vmul.f32 1.0, %v2570
        %v2572 = vrcp.pop %v2546
        %v2573 = vmul.f32 1.0, %v2572
        %v2574 = vrcp.pop %v2547
        %v2575 = vmul.f32 1.0, %v2574
        %v2576 = vrcp.pop %v2548
        %v2577 = vmul.f32 1.0, %v2576
        %v2578 = vrcp.pop %v2549
        %v2579 = vmul.f32 1.0, %v2578
        %v2580 = vrcp.pop %v2550
        %v2581 = vmul.f32 1.0, %v2580
        %v2582 = vrcp.pop %v2551
        %v2583 = vmul.f32 1.0, %v2582
        %v2600 = vlaneseq
        %v2601 = vshrl.u32 %v2600, 7
        %v2602 = vsub.s32 %v511, %v2601
        %v2603 = vrot.slane %v2553, %v2602
        %v2604 = vadd.s32 %v511, 4294967288
        %v2605 = vlaneseq
        %v2606 = vshrl.u32 %v2605, 7
        %v2607 = vsub.s32 %v2604, %v2606
        %v2608 = vrot.slane %v2555, %v2607
        %vm2609 = vcmask 130112
        %v2610 = vsel %vm2609, %v2608, %v2603
        %v2611 = vlaneseq
        %v2612 = vshrl.u32 %v2611, 7
        %v2613 = vsub.s32 %v511, %v2612
        %v2614 = vrot.slane %v2557, %v2613
        %v2615 = vlaneseq
        %v2616 = vshrl.u32 %v2615, 7
        %v2617 = vsub.s32 %v2604, %v2616
        %v2618 = vrot.slane %v2559, %v2617
        %v2619 = vsel %vm2609, %v2618, %v2614
        %v2620 = vlaneseq
        %v2621 = vshrl.u32 %v2620, 7
        %v2622 = vsub.s32 %v511, %v2621
        %v2623 = vrot.slane %v2561, %v2622
        %v2624 = vlaneseq
        %v2625 = vshrl.u32 %v2624, 7
        %v2626 = vsub.s32 %v2604, %v2625
        %v2627 = vrot.slane %v2563, %v2626
        %v2628 = vsel %vm2609, %v2627, %v2623
        %v2629 = vlaneseq
        %v2630 = vshrl.u32 %v2629, 7
        %v2631 = vsub.s32 %v511, %v2630
        %v2632 = vrot.slane %v2565, %v2631
        %v2633 = vlaneseq
        %v2634 = vshrl.u32 %v2633, 7
        %v2635 = vsub.s32 %v2604, %v2634
        %v2636 = vrot.slane %v2567, %v2635
        %v2637 = vsel %vm2609, %v2636, %v2632
        %v2638 = vlaneseq
        %v2639 = vshrl.u32 %v2638, 7
        %v2640 = vsub.s32 %v511, %v2639
        %v2641 = vrot.slane %v2569, %v2640
        %v2642 = vlaneseq
        %v2643 = vshrl.u32 %v2642, 7
        %v2644 = vsub.s32 %v2604, %v2643
        %v2645 = vrot.slane %v2571, %v2644
        %v2646 = vsel %vm2609, %v2645, %v2641
        %v2647 = vlaneseq
        %v2648 = vshrl.u32 %v2647, 7
        %v2649 = vsub.s32 %v511, %v2648
        %v2650 = vrot.slane %v2573, %v2649
        %v2651 = vlaneseq
        %v2652 = vshrl.u32 %v2651, 7
        %v2653 = vsub.s32 %v2604, %v2652
        %v2654 = vrot.slane %v2575, %v2653
        %v2655 = vsel %vm2609, %v2654, %v2650
        %v2656 = vlaneseq
        %v2657 = vshrl.u32 %v2656, 7
        %v2658 = vsub.s32 %v511, %v2657
        %v2659 = vrot.slane %v2577, %v2658
        %v2660 = vlaneseq
        %v2661 = vshrl.u32 %v2660, 7
        %v2662 = vsub.s32 %v2604, %v2661
        %v2663 = vrot.slane %v2579, %v2662
        %v2664 = vsel %vm2609, %v2663, %v2659
        %v2665 = vlaneseq
        %v2666 = vshrl.u32 %v2665, 7
        %v2667 = vsub.s32 %v511, %v2666
        %v2668 = vrot.slane %v2581, %v2667
        %v2669 = vlaneseq
        %v2670 = vshrl.u32 %v2669, 7
        %v2671 = vsub.s32 %v2604, %v2670
        %v2672 = vrot.slane %v2583, %v2671
        %v2673 = vsel %vm2609, %v2672, %v2668
        %vm2674 = vcmask 1041409
        %v2675 = vsel %vm2674, %v2619, %v2610
        %vm2676 = vcmask 1042434
        %v2677 = vsel %vm2676, %v2628, %v2675
        %vm2678 = vcmask 1043459
        %v2679 = vsel %vm2678, %v2637, %v2677
        %vm2680 = vcmask 1044484
        %v2681 = vsel %vm2680, %v2646, %v2679
        %vm2682 = vcmask 1045509
        %v2683 = vsel %vm2682, %v2655, %v2681
        %vm2684 = vcmask 1046534
        %v2685 = vsel %vm2684, %v2664, %v2683
        %vm2686 = vcmask 1047559
        %v2687 = vsel %vm2686, %v2673, %v2685
        %2689 = vxpose.xlu0.b32.start [1/16] %v2687, 128
        %2690 = vxpose.xlu0.b32.cont [2/16] 0.0, 128
        %2691 = vxpose.xlu0.b32.cont [3/16] 0.0, 128
        %2692 = vxpose.xlu0.b32.cont [4/16] 0.0, 128
        %2693 = vxpose.xlu0.b32.cont [5/16] 0.0, 128
        %2694 = vxpose.xlu0.b32.cont [6/16] 0.0, 128
        %2695 = vxpose.xlu0.b32.cont [7/16] 0.0, 128
        %2696 = vxpose.xlu0.b32.cont [8/16] 0.0, 128
        %2697 = vxpose.xlu0.b32.cont [9/16] 0.0, 128
        %2698 = vxpose.xlu0.b32.cont [10/16] 0.0, 128
        %2699 = vxpose.xlu0.b32.cont [11/16] 0.0, 128
        %2700 = vxpose.xlu0.b32.cont [12/16] 0.0, 128
        %2701 = vxpose.xlu0.b32.cont [13/16] 0.0, 128
        %2702 = vxpose.xlu0.b32.cont [14/16] 0.0, 128
        %2703 = vxpose.xlu0.b32.cont [15/16] 0.0, 128
        %2704 = vxpose.xlu0.b32.end [16/16] 0.0, 128
        %v2705 = vpop.trf.xlu0
        %v2706 = vpop.trf.xlu0
        %v2707 = vpop.trf.xlu0
        %v2708 = vpop.trf.xlu0
        %v2709 = vpop.trf.xlu0
        %v2710 = vpop.trf.xlu0
        %v2711 = vpop.trf.xlu0
        %v2712 = vpop.trf.xlu0
        %v2713 = vpop.trf.xlu0
        %v2714 = vpop.trf.xlu0
        %v2715 = vpop.trf.xlu0
        %v2716 = vpop.trf.xlu0
        %v2717 = vpop.trf.xlu0
        %v2718 = vpop.trf.xlu0
        %v2719 = vpop.trf.xlu0
        %v2720 = vpop.trf.xlu0
        %vm2721 = vcmask 64512
        %2722 = vst.msk [vmem:[%s507] sm:$0xff] %vm2721, %v2705
        %2723 = vst.msk [vmem:[%s507 + $0x8] sm:$0xff] %vm2721, %v2706
        %s2724 = smul.u32 2, %s30
        %p2725 = scmp.lt.s32.totalorder %s2724, 3
        %s2726 = scalar_select %p2725, %s2724, 3
        %s2727 = smul.addr %s2726, 8
        %s2728 = scalar_lea.vmem %s11, %s2727
        // Predicated region
        $region89: #{tpu_custom_call.1} parent=63 // pred_check
          %p2729 = pneg %p284
        $region90: #{tpu_custom_call.1} parent=63 // pred_check_branch
          %2731 = sbr.rel (%p2729) target = $region92
        $region91: #{tpu_custom_call.1} parent=63 // pred_region
          %s2732 = smul.u32 2, %s30
        $region92: #{tpu_custom_call.1} parent=63 // pred_fallthru
          _
      $region64: #{tpu_custom_call.1} parent=5 // pred_fallthru
        _
      %p2733 = scmp.le.s32.totalorder 2, %s25
      // Predicated region
      $region93: #{tpu_custom_call.1} parent=5 // pred_check
        %p2734 = pneg %p2733
      $region94: #{tpu_custom_call.1} parent=5 // pred_check_branch
        %2736 = sbr.rel (%p2734) target = $region96
      $region95: #{tpu_custom_call.1} parent=5 // pred_region
        %s2737 = ssub.s32 %s25, 2
        // Predicated region
        $region97: #{tpu_custom_call.1} parent=95 // pred_check
          %p2738 = pneg %p290
        $region98: #{tpu_custom_call.1} parent=95 // pred_check_branch
          %2740 = sbr.rel (%p2738) target = $region100
        $region99: #{tpu_custom_call.1} parent=95 // pred_region
          %s2741 = smul.u32 2, %s31
          %p2742 = scmp.lt.s32.totalorder %s2741, 3
          %s2743 = scalar_select %p2742, %s2741, 3
          %s2744 = smul.addr %s2743, 8
          %s2745 = scalar_lea.vmem %s11, %s2744
        $region100: #{tpu_custom_call.1} parent=95 // pred_fallthru
          _
      $region96: #{tpu_custom_call.1} parent=5 // pred_fallthru
        _
    $region6: #{tpu_custom_call.1} parent=1 // loop_footer
      %s29 = sadd.s32 1, %s25
    $region7: #{tpu_custom_call.1} parent=1 // loop_footer_branch
      %24 = sbr.rel target = $region3
    $region8: #{tpu_custom_call.1} parent=1 // loop_exit
      _
    %2746 = vsyncpa [#allocation7], 1
    %s2747 = scalar_lea.sflag [#allocation7], 1
    %2748 = vsyncpa %s2747, 1
    %2749 = vsyncpa [#allocation9], 1
    %2750 = vsyncpa [#allocation12], 1
    %2751 = vsyncpa [#allocation15], 1

// kernel: tpu_custom_call.1
$region0: #{tpu_custom_call.1}
  #allocation0 [shape = 'u32[]', space=smem, size = 0x4, offset = 0x4, fixed_abs, tag = 'smem constant byte address 0x4 - core index']
  #allocation1 [shape = 'u32[144,128]{1,0:T(1,128)}', space=vmem, size = 0x12000, scoped, tag = 'internal scratch']
  #allocation2 [shape = 'f32[8,16,128]{2,1,0:T(8,128)}', space=vmem, size = 0x10000, scoped, tag = 'scratch operand']
  #allocation3 [shape = 'bf16[8,16,128]{2,1,0:T(8,128)(2,1)}', space=vmem, size = 0x8000, scoped, tag = 'scratch operand']
  #allocation4 [shape = 'bf16[8,16,128]{2,1,0:T(8,128)(2,1)}', space=vmem, size = 0x8000, scoped, tag = 'scratch operand']
  #allocation5 [shape = 'f32[1,1]{1,0:T(1,128)S(1)}', space=vmem, size = 0x200, scoped, tag = 'scoped memory for tpu_custom_call.1']
  #allocation16 [shape = 's32[]', space=sflag, size = 0x4, offset = 0, fixed_abs, tag = 'sflag constant byte address 0x0 - dummy sync flag']
  %s0 = inlined_call_operand.hbm [shape: bf16[8,32,32], index: 0, kind: input, shape index: {}]
  %s1 = inlined_call_operand.hbm [shape: bf16[32,128], index: 1, kind: input, shape index: {}]
  %s2 = inlined_call_operand.vmem [shape: f32[1,128], index: 2, kind: input, shape index: {}]
  %s3 = inlined_call_operand.hbm [shape: bf16[128,128], index: 3, kind: input, shape index: {}]
  %s4 = inlined_call_operand.hbm [shape: bf16[128,128], index: 4, kind: input, shape index: {}]
  %s5 = inlined_call_operand.vmem [shape: f32[1,128], index: 5, kind: input, shape index: {}]
  %s6 = inlined_call_operand.hbm [shape: bf16[128,128], index: 6, kind: input, shape index: {}]
  %s7 = inlined_call_operand.hbm [shape: bf16[128,128], index: 7, kind: input, shape index: {}]
  %s8 = inlined_call_operand.vmem [shape: f32[1,128], index: 8, kind: input, shape index: {}]
  %s9 = inlined_call_operand.vmem [shape: bf16[1,128], index: 9, kind: input, shape index: {}]
  %s10 = inlined_call_operand.<no memory space> [shape: f32[1,1], index: 10, kind: input, shape index: {}]
  %s11 = inlined_call_operand.vmem [shape: f32[32,8], index: 11, kind: output, shape index: {}]
  %s12 = sld [smem:[#allocation0]]
  $region101: #{tpu_custom_call.1} parent=0
    _
  %s14 = ssub.s32 1, %s12
  %s15 = scalar_select 0, %s14, %s12
  %v16 = vstv %s10
  %17 = vst [vmem:[#allocation5] sm:$0x1] %v16
  $region1: #{tpu_custom_call.1} parent=0
    #allocation6 [shape = 'u8[65536]{0}', space=vmem, size = 0x10000, scoped, tag = 'input window, operand 0']
    #allocation7 [shape = 's32[2]{0}', space=sflag, size = 0x8, scoped, tag = 'scoped memory for tpu_custom_call.1']
    #allocation8 [shape = 'u8[8192]{0}', space=vmem, size = 0x2000, scoped, tag = 'input window, operand 1, single buffered']
    #allocation9 [shape = 's32[1]{0}', space=sflag, size = 0x4, scoped, tag = 'scoped memory for tpu_custom_call.1']
    #allocation10 [shape = 'u8[32768]{0}', space=vmem, size = 0x8000, scoped, tag = 'input window, operand 3, single buffered']
    #allocation11 [shape = 'u8[32768]{0}', space=vmem, size = 0x8000, scoped, tag = 'input window, operand 4, single buffered']
    #allocation12 [shape = 's32[1]{0}', space=sflag, size = 0x4, scoped, tag = 'scoped memory for tpu_custom_call.1']
    #allocation13 [shape = 'u8[32768]{0}', space=vmem, size = 0x8000, scoped, tag = 'input window, operand 6, single buffered']
    #allocation14 [shape = 'u8[32768]{0}', space=vmem, size = 0x8000, scoped, tag = 'input window, operand 7, single buffered']
    #allocation15 [shape = 's32[1]{0}', space=sflag, size = 0x4, scoped, tag = 'scoped memory for tpu_custom_call.1']
    %18 = vsyncpa [#allocation7], 0
    %s19 = scalar_lea.sflag [#allocation7], 1
    %20 = vsyncpa %s19, 0
    %21 = vsyncpa [#allocation9], 0
    %22 = vsyncpa [#allocation12], 0
    %23 = vsyncpa [#allocation15], 0
    loop: start=0, step=1, limit=4
    $region2: #{tpu_custom_call.1} parent=1 // loop_pre_header
      _
    $region3: #{tpu_custom_call.1} parent=1 // loop_header
      %s25 = sphi 0, %s29
      %p26 = scmp.ge.s32.totalorder %s25, 4
      %s35 = sphi 0, %s37
      %s38 = sphi 0, %s35
      %s39 = sphi 0, %s38
      %s55 = sphi 0, %s39
      %s59 = sphi 0, %s59
      %s61 = sphi 0, %s59
      %s62 = sphi 0, %s61
      %s76 = sphi 0, %s62
      %s80 = sphi 0, %s80
      %s82 = sphi 0, %s80
      %s83 = sphi 0, %s82
      %s97 = sphi 0, %s83
      %s101 = sphi 0, %s101
      %s103 = sphi 0, %s101
      %s104 = sphi 0, %s103
      %s118 = sphi 0, %s104
      %s122 = sphi 0, %s122
      %s124 = sphi 0, %s122
      %s125 = sphi 0, %s124
      %s139 = sphi 0, %s125
      %s143 = sphi 0, %s143
      %s145 = sphi 0, %s143
      %s146 = sphi 0, %s145
      %s160 = sphi 0, %s146
      %s164 = sphi 0, %s164
      %s166 = sphi 0, %s164
      %s167 = sphi 0, %s166
      %s181 = sphi 0, %s167
      %s185 = sphi 0, %s185
      %s187 = sphi 0, %s185
      %s188 = sphi 0, %s187
      %s202 = sphi 0, %s188
      %s206 = sphi 0, %s206
      %s208 = sphi 0, %s206
      %s209 = sphi 0, %s208
      %s223 = sphi 0, %s209
      %s227 = sphi 0, %s227
      %s229 = sphi 0, %s227
      %s230 = sphi 0, %s229
      %s244 = sphi 0, %s230
      %s248 = sphi 0, %s248
      %s250 = sphi 0, %s248
      %s251 = sphi 0, %s250
      %s265 = sphi 0, %s251
      %s271 = sphi 0, %s273
      %s274 = sphi 0, %s271
      %s275 = sphi 0, %s274
      %s291 = sphi 0, %s275
    $region4: #{tpu_custom_call.1} parent=1 // loop_header_branch
      %28 = sbr.rel (%p26) target = $region8
    $region5: #{tpu_custom_call.1} parent=1 // loop_body
      %s30 = ssub.s32 %s25, 1
      %s31 = ssub.s32 %s25, 2
      %s32 = sadd.s32 %s25, 1
      %s33 = ssub.s32 %s25, %s32
      %p34 = scmp.eq.s32.totalorder %s33, 0
      %s36 = sadd.s32 %s35, 1
      %s37 = scalar_select %p34, %s35, %s36
      %p40 = pneg %p34
      %p41 = scmp.eq.s32.totalorder %s25, 1
      %p42 = por %p40, %p41
      %p43 = scmp.ne.s32.totalorder %s35, %s38
      %p44 = scmp.eq.s32.totalorder %s25, 0
      %p45 = por %p43, %p44
      %p46 = scmp.ne.s32.totalorder %s35, %s38
      %p47 = scmp.eq.s32.totalorder %s30, 1
      %p48 = por %p46, %p47
      %p49 = scmp.ne.s32.totalorder %s38, %s39
      %p50 = scmp.eq.s32.totalorder %s30, 0
      %p51 = por %p49, %p50
      %p52 = scmp.ne.s32.totalorder %s38, %s39
      %p53 = scmp.eq.s32.totalorder %s31, 1
      %p54 = por %p52, %p53
      %p56 = scmp.ne.s32.totalorder %s39, %s55
      %p57 = scmp.eq.s32.totalorder %s31, 0
      %p58 = por %p56, %p57
      %s60 = sadd.s32 %s59, 1
      %p63 = scmp.eq.s32.totalorder %s25, 1
      %p64 = scmp.ne.s32.totalorder %s59, %s61
      %p65 = scmp.eq.s32.totalorder %s25, 0
      %p66 = por %p64, %p65
      %p67 = scmp.ne.s32.totalorder %s59, %s61
      %p68 = scmp.eq.s32.totalorder %s30, 1
      %p69 = por %p67, %p68
      %p70 = scmp.ne.s32.totalorder %s61, %s62
      %p71 = scmp.eq.s32.totalorder %s30, 0
      %p72 = por %p70, %p71
      %p73 = scmp.ne.s32.totalorder %s61, %s62
      %p74 = scmp.eq.s32.totalorder %s31, 1
      %p75 = por %p73, %p74
      %p77 = scmp.ne.s32.totalorder %s62, %s76
      %p78 = scmp.eq.s32.totalorder %s31, 0
      %p79 = por %p77, %p78
      %s81 = sadd.s32 %s80, 1
      %p84 = scmp.eq.s32.totalorder %s25, 1
      %p85 = scmp.ne.s32.totalorder %s80, %s82
      %p86 = scmp.eq.s32.totalorder %s25, 0
      %p87 = por %p85, %p86
      %p88 = scmp.ne.s32.totalorder %s80, %s82
      %p89 = scmp.eq.s32.totalorder %s30, 1
      %p90 = por %p88, %p89
      %p91 = scmp.ne.s32.totalorder %s82, %s83
      %p92 = scmp.eq.s32.totalorder %s30, 0
      %p93 = por %p91, %p92
      %p94 = scmp.ne.s32.totalorder %s82, %s83
      %p95 = scmp.eq.s32.totalorder %s31, 1
      %p96 = por %p94, %p95
      %p98 = scmp.ne.s32.totalorder %s83, %s97
      %p99 = scmp.eq.s32.totalorder %s31, 0
      %p100 = por %p98, %p99
      %s102 = sadd.s32 %s101, 1
      %p105 = scmp.eq.s32.totalorder %s25, 1
      %p106 = scmp.ne.s32.totalorder %s101, %s103
      %p107 = scmp.eq.s32.totalorder %s25, 0
      %p108 = por %p106, %p107
      %p109 = scmp.ne.s32.totalorder %s101, %s103
      %p110 = scmp.eq.s32.totalorder %s30, 1
      %p111 = por %p109, %p110
      %p112 = scmp.ne.s32.totalorder %s103, %s104
      %p113 = scmp.eq.s32.totalorder %s30, 0
      %p114 = por %p112, %p113
      %p115 = scmp.ne.s32.totalorder %s103, %s104
      %p116 = scmp.eq.s32.totalorder %s31, 1
      %p117 = por %p115, %p116
      %p119 = scmp.ne.s32.totalorder %s104, %s118
      %p120 = scmp.eq.s32.totalorder %s31, 0
      %p121 = por %p119, %p120
      %s123 = sadd.s32 %s122, 1
      %p126 = scmp.eq.s32.totalorder %s25, 1
      %p127 = scmp.ne.s32.totalorder %s122, %s124
      %p128 = scmp.eq.s32.totalorder %s25, 0
      %p129 = por %p127, %p128
      %p130 = scmp.ne.s32.totalorder %s122, %s124
      %p131 = scmp.eq.s32.totalorder %s30, 1
      %p132 = por %p130, %p131
      %p133 = scmp.ne.s32.totalorder %s124, %s125
      %p134 = scmp.eq.s32.totalorder %s30, 0
      %p135 = por %p133, %p134
      %p136 = scmp.ne.s32.totalorder %s124, %s125
      %p137 = scmp.eq.s32.totalorder %s31, 1
      %p138 = por %p136, %p137
      %p140 = scmp.ne.s32.totalorder %s125, %s139
      %p141 = scmp.eq.s32.totalorder %s31, 0
      %p142 = por %p140, %p141
      %s144 = sadd.s32 %s143, 1
      %p147 = scmp.eq.s32.totalorder %s25, 1
      %p148 = scmp.ne.s32.totalorder %s143, %s145
      %p149 = scmp.eq.s32.totalorder %s25, 0
      %p150 = por %p148, %p149
      %p151 = scmp.ne.s32.totalorder %s143, %s145
      %p152 = scmp.eq.s32.totalorder %s30, 1
      %p153 = por %p151, %p152
      %p154 = scmp.ne.s32.totalorder %s145, %s146
      %p155 = scmp.eq.s32.totalorder %s30, 0
      %p156 = por %p154, %p155
      %p157 = scmp.ne.s32.totalorder %s145, %s146
      %p158 = scmp.eq.s32.totalorder %s31, 1
      %p159 = por %p157, %p158
      %p161 = scmp.ne.s32.totalorder %s146, %s160
      %p162 = scmp.eq.s32.totalorder %s31, 0
      %p163 = por %p161, %p162
      %s165 = sadd.s32 %s164, 1
      %p168 = scmp.eq.s32.totalorder %s25, 1
      %p169 = scmp.ne.s32.totalorder %s164, %s166
      %p170 = scmp.eq.s32.totalorder %s25, 0
      %p171 = por %p169, %p170
      %p172 = scmp.ne.s32.totalorder %s164, %s166
      %p173 = scmp.eq.s32.totalorder %s30, 1
      %p174 = por %p172, %p173
      %p175 = scmp.ne.s32.totalorder %s166, %s167
      %p176 = scmp.eq.s32.totalorder %s30, 0
      %p177 = por %p175, %p176
      %p178 = scmp.ne.s32.totalorder %s166, %s167
      %p179 = scmp.eq.s32.totalorder %s31, 1
      %p180 = por %p178, %p179
      %p182 = scmp.ne.s32.totalorder %s167, %s181
      %p183 = scmp.eq.s32.totalorder %s31, 0
      %p184 = por %p182, %p183
      %s186 = sadd.s32 %s185, 1
      %p189 = scmp.eq.s32.totalorder %s25, 1
      %p190 = scmp.ne.s32.totalorder %s185, %s187
      %p191 = scmp.eq.s32.totalorder %s25, 0
      %p192 = por %p190, %p191
      %p193 = scmp.ne.s32.totalorder %s185, %s187
      %p194 = scmp.eq.s32.totalorder %s30, 1
      %p195 = por %p193, %p194
      %p196 = scmp.ne.s32.totalorder %s187, %s188
      %p197 = scmp.eq.s32.totalorder %s30, 0
      %p198 = por %p196, %p197
      %p199 = scmp.ne.s32.totalorder %s187, %s188
      %p200 = scmp.eq.s32.totalorder %s31, 1
      %p201 = por %p199, %p200
      %p203 = scmp.ne.s32.totalorder %s188, %s202
      %p204 = scmp.eq.s32.totalorder %s31, 0
      %p205 = por %p203, %p204
      %s207 = sadd.s32 %s206, 1
      %p210 = scmp.eq.s32.totalorder %s25, 1
      %p211 = scmp.ne.s32.totalorder %s206, %s208
      %p212 = scmp.eq.s32.totalorder %s25, 0
      %p213 = por %p211, %p212
      %p214 = scmp.ne.s32.totalorder %s206, %s208
      %p215 = scmp.eq.s32.totalorder %s30, 1
      %p216 = por %p214, %p215
      %p217 = scmp.ne.s32.totalorder %s208, %s209
      %p218 = scmp.eq.s32.totalorder %s30, 0
      %p219 = por %p217, %p218
      %p220 = scmp.ne.s32.totalorder %s208, %s209
      %p221 = scmp.eq.s32.totalorder %s31, 1
      %p222 = por %p220, %p221
      %p224 = scmp.ne.s32.totalorder %s209, %s223
      %p225 = scmp.eq.s32.totalorder %s31, 0
      %p226 = por %p224, %p225
      %s228 = sadd.s32 %s227, 1
      %p231 = scmp.eq.s32.totalorder %s25, 1
      %p232 = scmp.ne.s32.totalorder %s227, %s229
      %p233 = scmp.eq.s32.totalorder %s25, 0
      %p234 = por %p232, %p233
      %p235 = scmp.ne.s32.totalorder %s227, %s229
      %p236 = scmp.eq.s32.totalorder %s30, 1
      %p237 = por %p235, %p236
      %p238 = scmp.ne.s32.totalorder %s229, %s230
      %p239 = scmp.eq.s32.totalorder %s30, 0
      %p240 = por %p238, %p239
      %p241 = scmp.ne.s32.totalorder %s229, %s230
      %p242 = scmp.eq.s32.totalorder %s31, 1
      %p243 = por %p241, %p242
      %p245 = scmp.ne.s32.totalorder %s230, %s244
      %p246 = scmp.eq.s32.totalorder %s31, 0
      %p247 = por %p245, %p246
      %s249 = sadd.s32 %s248, 1
      %p252 = scmp.eq.s32.totalorder %s25, 1
      %p253 = scmp.ne.s32.totalorder %s248, %s250
      %p254 = scmp.eq.s32.totalorder %s25, 0
      %p255 = por %p253, %p254
      %p256 = scmp.ne.s32.totalorder %s248, %s250
      %p257 = scmp.eq.s32.totalorder %s30, 1
      %p258 = por %p256, %p257
      %p259 = scmp.ne.s32.totalorder %s250, %s251
      %p260 = scmp.eq.s32.totalorder %s30, 0
      %p261 = por %p259, %p260
      %p262 = scmp.ne.s32.totalorder %s250, %s251
      %p263 = scmp.eq.s32.totalorder %s31, 1
      %p264 = por %p262, %p263
      %p266 = scmp.ne.s32.totalorder %s251, %s265
      %p267 = scmp.eq.s32.totalorder %s31, 0
      %p268 = por %p266, %p267
      %s269 = ssub.s32 %s25, %s32
      %p270 = scmp.eq.s32.totalorder %s269, 0
      %s272 = sadd.s32 %s271, 1
      %s273 = scalar_select %p270, %s271, %s272
      %p276 = pneg %p270
      %p277 = scmp.eq.s32.totalorder %s25, 1
      %p278 = por %p276, %p277
      %p279 = scmp.ne.s32.totalorder %s271, %s274
      %p280 = scmp.eq.s32.totalorder %s25, 0
      %p281 = por %p279, %p280
      %p282 = scmp.ne.s32.totalorder %s271, %s274
      %p283 = scmp.eq.s32.totalorder %s30, 1
      %p284 = por %p282, %p283
      %p285 = scmp.ne.s32.totalorder %s274, %s275
      %p286 = scmp.eq.s32.totalorder %s30, 0
      %p287 = por %p285, %p286
      %p288 = scmp.ne.s32.totalorder %s274, %s275
      %p289 = scmp.eq.s32.totalorder %s31, 1
      %p290 = por %p288, %p289
      %p292 = scmp.ne.s32.totalorder %s275, %s291
      %p293 = scmp.eq.s32.totalorder %s31, 0
      %p294 = por %p292, %p293
      %p295 = scmp.le.s32.totalorder 1, %s25
      %p296 = scmp.lt.s32.totalorder %s25, 3
      %p297 = pnand %p295, %p296
      %p298 = pneg %p297
      // Predicated region
      $region9: #{tpu_custom_call.1} parent=5 // pred_check
        _
      $region10: #{tpu_custom_call.1} parent=5 // pred_check_branch
        %300 = sbr.rel (%p297) target = $region12
      $region11: #{tpu_custom_call.1} parent=5 // pred_region
        %s301 = ssub.s32 %s25, 1
        // Predicated region
        $region13: #{tpu_custom_call.1} parent=11 // pred_check
          %p302 = pneg %p72
        $region14: #{tpu_custom_call.1} parent=11 // pred_check_branch
          %304 = sbr.rel (%p302) target = $region16
        $region15: #{tpu_custom_call.1} parent=11 // pred_region
          %s306 = ssub.s32 256, 256
          %307 = vsyncadd [#allocation9], %s306
          %s308 = sshll.u32 [#allocation8], 4
          %s309 = int_to_ptr.vmem [resolvable:$true] %s308
          %314 = dma.hbm_to_vmem [thread:$0]  %s1, 256, %s309, [#allocation9], 64, 64, 4
        $region16: #{tpu_custom_call.1} parent=11 // pred_fallthru
          _
        // Predicated region
        $region17: #{tpu_custom_call.1} parent=11 // pred_check
          %p315 = pneg %p93
        $region18: #{tpu_custom_call.1} parent=11 // pred_check_branch
          %317 = sbr.rel (%p315) target = $region20
        $region19: #{tpu_custom_call.1} parent=11 // pred_region
          _
        $region20: #{tpu_custom_call.1} parent=11 // pred_fallthru
          _
        // Predicated region
        $region21: #{tpu_custom_call.1} parent=11 // pred_check
          %p318 = pneg %p114
        $region22: #{tpu_custom_call.1} parent=11 // pred_check_branch
          %320 = sbr.rel (%p318) target = $region24
        $region23: #{tpu_custom_call.1} parent=11 // pred_region
          %s322 = ssub.s32 1024, 1024
          %323 = vsyncadd [#allocation9], %s322
          %s324 = sshll.u32 [#allocation10], 4
          %s325 = int_to_ptr.vmem [resolvable:$true] %s324
          %330 = dma.hbm_to_vmem [thread:$0]  %s3, 1024, %s325, [#allocation9], 64, 64, 4
        $region24: #{tpu_custom_call.1} parent=11 // pred_fallthru
          _
        // Predicated region
        $region25: #{tpu_custom_call.1} parent=11 // pred_check
          %p331 = pneg %p135
        $region26: #{tpu_custom_call.1} parent=11 // pred_check_branch
          %333 = sbr.rel (%p331) target = $region28
        $region27: #{tpu_custom_call.1} parent=11 // pred_region
          %s335 = ssub.s32 1024, 1024
          %336 = vsyncadd [#allocation12], %s335
          %s337 = sshll.u32 [#allocation11], 4
          %s338 = int_to_ptr.vmem [resolvable:$true] %s337
          %343 = dma.hbm_to_vmem [thread:$0]  %s4, 1024, %s338, [#allocation12], 64, 64, 4
        $region28: #{tpu_custom_call.1} parent=11 // pred_fallthru
          _
        // Predicated region
        $region29: #{tpu_custom_call.1} parent=11 // pred_check
          %p344 = pneg %p156
        $region30: #{tpu_custom_call.1} parent=11 // pred_check_branch
          %346 = sbr.rel (%p344) target = $region32
        $region31: #{tpu_custom_call.1} parent=11 // pred_region
          _
        $region32: #{tpu_custom_call.1} parent=11 // pred_fallthru
          _
        // Predicated region
        $region33: #{tpu_custom_call.1} parent=11 // pred_check
          %p347 = pneg %p177
        $region34: #{tpu_custom_call.1} parent=11 // pred_check_branch
          %349 = sbr.rel (%p347) target = $region36
        $region35: #{tpu_custom_call.1} parent=11 // pred_region
          %s351 = ssub.s32 1024, 1024
          %352 = vsyncadd [#allocation12], %s351
          %s353 = sshll.u32 [#allocation13], 4
          %s354 = int_to_ptr.vmem [resolvable:$true] %s353
          %359 = dma.hbm_to_vmem [thread:$0]  %s6, 1024, %s354, [#allocation12], 64, 64, 4
        $region36: #{tpu_custom_call.1} parent=11 // pred_fallthru
          _
        // Predicated region
        $region37: #{tpu_custom_call.1} parent=11 // pred_check
          %p360 = pneg %p198
        $region38: #{tpu_custom_call.1} parent=11 // pred_check_branch
          %362 = sbr.rel (%p360) target = $region40
        $region39: #{tpu_custom_call.1} parent=11 // pred_region
          %s364 = ssub.s32 1024, 1024
          %365 = vsyncadd [#allocation15], %s364
          %s366 = sshll.u32 [#allocation14], 4
          %s367 = int_to_ptr.vmem [resolvable:$true] %s366
          %372 = dma.hbm_to_vmem [thread:$0]  %s7, 1024, %s367, [#allocation15], 64, 64, 4
        $region40: #{tpu_custom_call.1} parent=11 // pred_fallthru
          _
        // Predicated region
        $region41: #{tpu_custom_call.1} parent=11 // pred_check
          %p373 = pneg %p219
        $region42: #{tpu_custom_call.1} parent=11 // pred_check_branch
          %375 = sbr.rel (%p373) target = $region44
        $region43: #{tpu_custom_call.1} parent=11 // pred_region
          _
        $region44: #{tpu_custom_call.1} parent=11 // pred_fallthru
          _
        // Predicated region
        $region45: #{tpu_custom_call.1} parent=11 // pred_check
          %p376 = pneg %p240
        $region46: #{tpu_custom_call.1} parent=11 // pred_check_branch
          %378 = sbr.rel (%p376) target = $region48
        $region47: #{tpu_custom_call.1} parent=11 // pred_region
          _
        $region48: #{tpu_custom_call.1} parent=11 // pred_fallthru
          _
        // Predicated region
        $region49: #{tpu_custom_call.1} parent=11 // pred_check
          %p379 = pneg %p261
        $region50: #{tpu_custom_call.1} parent=11 // pred_check_branch
          %381 = sbr.rel (%p379) target = $region52
        $region51: #{tpu_custom_call.1} parent=11 // pred_region
          _
        $region52: #{tpu_custom_call.1} parent=11 // pred_fallthru
          _
      $region12: #{tpu_custom_call.1} parent=5 // pred_fallthru
        _
      %p382 = scmp.lt.s32.totalorder %s25, 2
      // Predicated region
      $region53: #{tpu_custom_call.1} parent=5 // pred_check
        %p383 = pneg %p382
      $region54: #{tpu_custom_call.1} parent=5 // pred_check_branch
        %385 = sbr.rel (%p383) target = $region56
      $region55: #{tpu_custom_call.1} parent=5 // pred_region
        // Predicated region
        $region57: #{tpu_custom_call.1} parent=55 // pred_check
          %p386 = pneg %p45
        $region58: #{tpu_custom_call.1} parent=55 // pred_check_branch
          %388 = sbr.rel (%p386) target = $region60
        $region59: #{tpu_custom_call.1} parent=55 // pred_region
          #allocation17 [shape = 'u32[6]{0}', space=smem, size = 0x18, scoped, tag = 'DMA stride descriptor']
          %s389 = sand.u32 %s35, 1
          %s390 = scalar_lea.sflag [#allocation7], %s389
          %s391 = sand.u32 %s35, 1
          %s392 = smul.addr %s391, 64
          %s393 = scalar_lea.vmem [#allocation6], %s392
          %s394 = smul.u32 2, %s25
          %s396 = ssub.s32 1024, 1024
          %397 = vsyncadd %s390, %s396
          %s398 = smul.addr %s394, 64
          %s399 = scalar_lea.hbm %s0, %s398
          %s401 = sshll.u32 1, 14
          %s402 = sxor.u32 4294967295, %s401
          %s404 = sld [smem:[#allocation0]]
          %s405 = sadd.s32 2, %s404
          %s407 = sshll.u32 7, 26
          %s408 = sxor.u32 4294967295, %s407
          %s409 = sand.u32 0, %s408
          %s410 = sshll.u32 %s405, 26
          %s411 = sor.u32 %s409, %s410
          %s412 = sshll.u32 %s393, 4
          %s413 = int_to_ptr.vmem [resolvable:$true] %s412
          %419 = sst [smem:[#allocation17]] 256
          %s420 = scalar_lea.smem [#allocation17], 1
          %421 = sst [smem:[%s420]] 128
          %s422 = scalar_lea.smem [#allocation17], 2
          %423 = sst [smem:[%s422]] 2
          %s424 = scalar_lea.smem [#allocation17], 3
          %425 = sst [smem:[%s424]] 64
          %s426 = scalar_lea.smem [#allocation17], 4
          %427 = sst [smem:[%s426]] 64
          %s428 = scalar_lea.smem [#allocation17], 5
          %429 = sst [smem:[%s428]] 4
          %431 = dma.general %s399, 1024, %s413, %s390, 131072, [#allocation17], %s411, 0
        $region60: #{tpu_custom_call.1} parent=55 // pred_fallthru
          _
      $region56: #{tpu_custom_call.1} parent=5 // pred_fallthru
        _
      %p432 = scmp.le.s32.totalorder 1, %s25
      %p433 = scmp.lt.s32.totalorder %s25, 3
      %p434 = pnand %p432, %p433
      %p435 = pneg %p434
      // Predicated region
      $region61: #{tpu_custom_call.1} parent=5 // pred_check
        _
      $region62: #{tpu_custom_call.1} parent=5 // pred_check_branch
        %437 = sbr.rel (%p434) target = $region64
      $region63: #{tpu_custom_call.1} parent=5 // pred_region
        %s438 = ssub.s32 %s25, 1
        %s439 = sand.u32 %s38, 1
        %s440 = scalar_lea.sflag [#allocation7], %s439
        %s441 = sand.u32 %s38, 1
        %s442 = smul.addr %s441, 64
        %s443 = scalar_lea.vmem [#allocation6], %s442
        // Predicated region
        $region65: #{tpu_custom_call.1} parent=63 // pred_check
          %p444 = pneg %p51
        $region66: #{tpu_custom_call.1} parent=63 // pred_check_branch
          %446 = sbr.rel (%p444) target = $region68
        $region67: #{tpu_custom_call.1} parent=63 // pred_region
          %447 = dma.done %s440, 1024
        $region68: #{tpu_custom_call.1} parent=63 // pred_fallthru
          _
        // Predicated region
        $region69: #{tpu_custom_call.1} parent=63 // pred_check
          %p448 = pneg %p72
        $region70: #{tpu_custom_call.1} parent=63 // pred_check_branch
          %450 = sbr.rel (%p448) target = $region72
        $region71: #{tpu_custom_call.1} parent=63 // pred_region
          %451 = dma.done [#allocation9], 256
        $region72: #{tpu_custom_call.1} parent=63 // pred_fallthru
          _
        // Predicated region
        $region73: #{tpu_custom_call.1} parent=63 // pred_check
          %p452 = pneg %p114
        $region74: #{tpu_custom_call.1} parent=63 // pred_check_branch
          %454 = sbr.rel (%p452) target = $region76
        $region75: #{tpu_custom_call.1} parent=63 // pred_region
          %455 = dma.done [#allocation9], 1024
        $region76: #{tpu_custom_call.1} parent=63 // pred_fallthru
          _
        // Predicated region
        $region77: #{tpu_custom_call.1} parent=63 // pred_check
          %p456 = pneg %p135
        $region78: #{tpu_custom_call.1} parent=63 // pred_check_branch
          %458 = sbr.rel (%p456) target = $region80
        $region79: #{tpu_custom_call.1} parent=63 // pred_region
          %459 = dma.done [#allocation12], 1024
        $region80: #{tpu_custom_call.1} parent=63 // pred_fallthru
          _
        // Predicated region
        $region81: #{tpu_custom_call.1} parent=63 // pred_check
          %p460 = pneg %p177
        $region82: #{tpu_custom_call.1} parent=63 // pred_check_branch
          %462 = sbr.rel (%p460) target = $region84
        $region83: #{tpu_custom_call.1} parent=63 // pred_region
          %463 = dma.done [#allocation12], 1024
        $region84: #{tpu_custom_call.1} parent=63 // pred_fallthru
          _
        // Predicated region
        $region85: #{tpu_custom_call.1} parent=63 // pred_check
          %p464 = pneg %p198
        $region86: #{tpu_custom_call.1} parent=63 // pred_check_branch
          %466 = sbr.rel (%p464) target = $region88
        $region87: #{tpu_custom_call.1} parent=63 // pred_region
          %467 = dma.done [#allocation15], 1024
        $region88: #{tpu_custom_call.1} parent=63 // pred_fallthru
          _
        %s468 = sand.u32 %s38, 1
        %s469 = scalar_lea.sflag [#allocation7], %s468
        %s470 = sand.u32 %s38, 1
        %s471 = smul.addr %s470, 64
        %s472 = scalar_lea.vmem [#allocation6], %s471
        %p473 = pneg %p51
        %p474 = pneg %p48
        %p475 = pneg %p72
        %p476 = pneg %p69
        %p477 = pneg %p93
        %p478 = pneg %p90
        %p479 = pneg %p114
        %p480 = pneg %p111
        %p481 = pneg %p135
        %p482 = pneg %p132
        %p483 = pneg %p156
        %p484 = pneg %p153
        %p485 = pneg %p177
        %p486 = pneg %p174
        %p487 = pneg %p198
        %p488 = pneg %p195
        %p489 = pneg %p219
        %p490 = pneg %p216
        %p491 = pneg %p240
        %p492 = pneg %p237
        %p493 = pneg %p261
        %p494 = pneg %p258
        %p495 = pneg %p287
        %p496 = pneg %p284
        %s497 = smul.u32 2, %s30
        %p498 = scmp.lt.s32.totalorder %s497, 3
        %s499 = scalar_select %p498, %s497, 3
        %s500 = smul.addr %s499, 8
        %s501 = scalar_lea.vmem %s11, %s500
        %s502 = smul.u32 2, %s30
        %s503 = smul.u32 2, %s30
        %p504 = scmp.lt.s32.totalorder %s503, 3
        %s505 = scalar_select %p504, %s503, 3
        %s506 = smul.addr %s505, 8
        %s507 = scalar_lea.vmem %s11, %s506
        %s508 = smul.u32 2, %s30
        %v510 = vlaneseq
        %v511 = vand.u32 %v510, 127
        %vm512 = vcmp.lt.s32.totalorder %v511, 32
        %v513 = vld [vmem:[%s443] sm:$0xf]
        %v514 = vld [vmem:[%s443 + $0x4] sm:$0xf]
        %v515 = vld [vmem:[%s443 + $0x8] sm:$0xf]
        %v516 = vld [vmem:[%s443 + $0xc] sm:$0xf]
        %v517 = vld [vmem:[%s443 + $0x10] sm:$0xf]
        %v518 = vld [vmem:[%s443 + $0x14] sm:$0xf]
        %v519 = vld [vmem:[%s443 + $0x18] sm:$0xf]
        %v520 = vld [vmem:[%s443 + $0x1c] sm:$0xf]
        %v521 = vld [vmem:[%s443 + $0x20] sm:$0xf]
        %v522 = vld [vmem:[%s443 + $0x24] sm:$0xf]
        %v523 = vld [vmem:[%s443 + $0x28] sm:$0xf]
        %v524 = vld [vmem:[%s443 + $0x2c] sm:$0xf]
        %v525 = vld [vmem:[%s443 + $0x30] sm:$0xf]
        %v526 = vld [vmem:[%s443 + $0x34] sm:$0xf]
        %v527 = vld [vmem:[%s443 + $0x38] sm:$0xf]
        %v528 = vld [vmem:[%s443 + $0x3c] sm:$0xf]
        %v529 = vld [vmem:[#allocation8] sm:$0xf]
        %v530 = vld [vmem:[#allocation8 + $0x4] sm:$0xf]
        %v531 = vld [vmem:[#allocation8 + $0x8] sm:$0xf]
        %v532 = vld [vmem:[#allocation8 + $0xc] sm:$0xf]
        %v533 = vld [vmem:[%s2] sm:$0x1]
        %v535 = vlaneseq
        %v536 = vshrl.u32 %v535, 7
        %v537 = vsub.s32 0, %v536
        %v538 = vrot.slane %v533, %v537
        %v556 = vunpack.c.l.b16 %v513
        %v557 = vunpack.c.l.b16 %v514
        %v558 = vunpack.c.l.b16 %v515
        %v559 = vunpack.c.l.b16 %v516
        %v560 = vunpack.c.l.b16 %v517
        %v561 = vunpack.c.l.b16 %v518
        %v562 = vunpack.c.l.b16 %v519
        %v563 = vunpack.c.l.b16 %v520
        %v564 = vunpack.c.l.b16 %v521
        %v565 = vunpack.c.l.b16 %v522
        %v566 = vunpack.c.l.b16 %v523
        %v567 = vunpack.c.l.b16 %v524
        %v568 = vunpack.c.l.b16 %v525
        %v569 = vunpack.c.l.b16 %v526
        %v570 = vunpack.c.l.b16 %v527
        %v571 = vunpack.c.l.b16 %v528
        %v572 = vpack.c.b16 %v557, %v556
        %v573 = vpack.c.b16 %v559, %v558
        %v574 = vpack.c.b16 %v561, %v560
        %v575 = vpack.c.b16 %v563, %v562
        %v576 = vpack.c.b16 %v565, %v564
        %v577 = vpack.c.b16 %v567, %v566
        %v578 = vpack.c.b16 %v569, %v568
        %v579 = vpack.c.b16 %v571, %v570
        %v584 = vunpack.c.l.b16 %v529
        %v585 = vunpack.c.l.b16 %v530
        %v586 = vunpack.c.l.b16 %v531
        %v587 = vunpack.c.l.b16 %v532
        %v588 = vpack.c.b16 %v585, %v584
        %v589 = vpack.c.b16 %v587, %v586
        %vm592 = vcmask 261120
        %v594 = vsel %vm592, %v572, 0
        %v597 = vsel %vm592, %v573, 0
        %v600 = vsel %vm592, %v574, 0
        %v603 = vsel %vm592, %v575, 0
        %v606 = vsel %vm592, %v576, 0
        %v609 = vsel %vm592, %v577, 0
        %v612 = vsel %vm592, %v578, 0
        %v615 = vsel %vm592, %v579, 0
        %617 = vmatprep.subr.bf16.mxu0 0
        %618 = vmatpush1.bf16.msra.mxu0 0
        %619 = vmatprep.subr.bf16.mxu0 0
        %620 = vmatpush1.bf16.msra.mxu0 0
        %621 = vmatprep.subr.bf16.mxu0 0
        %622 = vmatpush1.bf16.msra.mxu0 0
        %623 = vmatprep.subr.bf16.mxu0 0
        %624 = vmatpush1.bf16.msra.mxu0 0
        %625 = vmatprep.subr.bf16.mxu0 0
        %626 = vmatpush1.bf16.msra.mxu0 0
        %627 = vmatprep.subr.bf16.mxu0 0
        %628 = vmatpush1.bf16.msra.mxu0 0
        %629 = vmatprep.subr.bf16.mxu0 0
        %630 = vmatpush1.bf16.msra.mxu0 %v589
        %631 = vmatprep.subr.bf16.mxu0 0
        %632 = vmatpush1.bf16.msra.mxu0 %v588
        %633 = vmatprep.subr.bf16.mxu0 0
        %634 = vmatpush2.bf16.msra.mxu0 0
        %635 = vmatprep.subr.bf16.mxu0 0
        %636 = vmatpush2.bf16.msra.mxu0 0
        %637 = vmatprep.subr.bf16.mxu0 0
        %638 = vmatpush2.bf16.msra.mxu0 0
        %639 = vmatprep.subr.bf16.mxu0 0
        %640 = vmatpush2.bf16.msra.mxu0 0
        %641 = vmatprep.subr.bf16.mxu0 0
        %642 = vmatpush2.bf16.msra.mxu0 0
        %643 = vmatprep.subr.bf16.mxu0 0
        %644 = vmatpush2.bf16.msra.mxu0 0
        %645 = vmatprep.subr.bf16.mxu0 0
        %646 = vmatpush2.bf16.msra.mxu0 0
        %647 = vmatprep.subr.bf16.mxu0 0
        %648 = vmatpush2.bf16.msra.mxu0 0
        %649 = vmatprep.mubr.bf16.mxu0 0
        %650 = vmatmul.mubr.bf16.gmra.mxu0 %v594
        %v651 = vpop.f32.mrf.mxu0
        %v652 = vadd.f32 %v538, %v651
        %v653 = vpop.f32.mrf.mxu0
        %v654 = vpop.f32.mrf.mxu0
        %v655 = vadd.f32 %v538, %v654
        %v656 = vpop.f32.mrf.mxu0
        %657 = vmatprep.mubr.bf16.mxu0 0
        %658 = vmatmul.mubr.bf16.gmra.mxu0 %v597
        %v659 = vpop.f32.mrf.mxu0
        %v660 = vadd.f32 %v538, %v659
        %v661 = vpop.f32.mrf.mxu0
        %v662 = vpop.f32.mrf.mxu0
        %v663 = vadd.f32 %v538, %v662
        %v664 = vpop.f32.mrf.mxu0
        %665 = vmatprep.mubr.bf16.mxu0 0
        %666 = vmatmul.mubr.bf16.gmra.mxu0 %v600
        %v667 = vpop.f32.mrf.mxu0
        %v668 = vadd.f32 %v538, %v667
        %v669 = vpop.f32.mrf.mxu0
        %v670 = vpop.f32.mrf.mxu0
        %v671 = vadd.f32 %v538, %v670
        %v672 = vpop.f32.mrf.mxu0
        %673 = vmatprep.mubr.bf16.mxu0 0
        %674 = vmatmul.mubr.bf16.gmra.mxu0 %v603
        %v675 = vpop.f32.mrf.mxu0
        %v676 = vadd.f32 %v538, %v675
        %v677 = vpop.f32.mrf.mxu0
        %v678 = vpop.f32.mrf.mxu0
        %v679 = vadd.f32 %v538, %v678
        %v680 = vpop.f32.mrf.mxu0
        %681 = vmatprep.mubr.bf16.mxu0 0
        %682 = vmatmul.mubr.bf16.gmra.mxu0 %v606
        %v683 = vpop.f32.mrf.mxu0
        %v684 = vadd.f32 %v538, %v683
        %v685 = vpop.f32.mrf.mxu0
        %v686 = vpop.f32.mrf.mxu0
        %v687 = vadd.f32 %v538, %v686
        %v688 = vpop.f32.mrf.mxu0
        %689 = vmatprep.mubr.bf16.mxu0 0
        %690 = vmatmul.mubr.bf16.gmra.mxu0 %v609
        %v691 = vpop.f32.mrf.mxu0
        %v692 = vadd.f32 %v538, %v691
        %v693 = vpop.f32.mrf.mxu0
        %v694 = vpop.f32.mrf.mxu0
        %v695 = vadd.f32 %v538, %v694
        %v696 = vpop.f32.mrf.mxu0
        %697 = vmatprep.mubr.bf16.mxu0 0
        %698 = vmatmul.mubr.bf16.gmra.mxu0 %v612
        %v699 = vpop.f32.mrf.mxu0
        %v700 = vadd.f32 %v538, %v699
        %v701 = vpop.f32.mrf.mxu0
        %v702 = vpop.f32.mrf.mxu0
        %v703 = vadd.f32 %v538, %v702
        %v704 = vpop.f32.mrf.mxu0
        %705 = vmatprep.mubr.bf16.mxu0 0
        %706 = vmatmul.mubr.bf16.gmra.mxu0 %v615
        %v707 = vpop.f32.mrf.mxu0
        %v708 = vadd.f32 %v538, %v707
        %v709 = vpop.f32.mrf.mxu0
        %v710 = vpop.f32.mrf.mxu0
        %v711 = vadd.f32 %v538, %v710
        %v712 = vpop.f32.mrf.mxu0
        %713 = vdwg.mxu0
        %v714 = vpack.c.bf16 %v655, %v652
        %v715 = vpack.c.bf16 %v663, %v660
        %v716 = vpack.c.bf16 %v671, %v668
        %v717 = vpack.c.bf16 %v679, %v676
        %v718 = vpack.c.bf16 %v687, %v684
        %v719 = vpack.c.bf16 %v695, %v692
        %v720 = vpack.c.bf16 %v703, %v700
        %v721 = vpack.c.bf16 %v711, %v708
        %v722 = vld [vmem:[#allocation10] sm:$0xf]
        %v723 = vld [vmem:[#allocation10 + $0x4] sm:$0xf]
        %v724 = vld [vmem:[#allocation10 + $0x8] sm:$0xf]
        %v725 = vld [vmem:[#allocation10 + $0xc] sm:$0xf]
        %v726 = vld [vmem:[#allocation10 + $0x10] sm:$0xf]
        %v727 = vld [vmem:[#allocation10 + $0x14] sm:$0xf]
        %v728 = vld [vmem:[#allocation10 + $0x18] sm:$0xf]
        %v729 = vld [vmem:[#allocation10 + $0x1c] sm:$0xf]
        %v730 = vld [vmem:[#allocation10 + $0x20] sm:$0xf]
        %v731 = vld [vmem:[#allocation10 + $0x24] sm:$0xf]
        %v732 = vld [vmem:[#allocation10 + $0x28] sm:$0xf]
        %v733 = vld [vmem:[#allocation10 + $0x2c] sm:$0xf]
        %v734 = vld [vmem:[#allocation10 + $0x30] sm:$0xf]
        %v735 = vld [vmem:[#allocation10 + $0x34] sm:$0xf]
        %v736 = vld [vmem:[#allocation10 + $0x38] sm:$0xf]
        %v737 = vld [vmem:[#allocation10 + $0x3c] sm:$0xf]
        %v738 = vld [vmem:[%s5] sm:$0x1]
        %v740 = vlaneseq
        %v741 = vshrl.u32 %v740, 7
        %v742 = vsub.s32 0, %v741
        %v743 = vrot.slane %v738, %v742
        %v761 = vunpack.c.l.b16 %v722
        %v762 = vunpack.c.l.b16 %v723
        %v763 = vunpack.c.l.b16 %v724
        %v764 = vunpack.c.l.b16 %v725
        %v765 = vunpack.c.l.b16 %v726
        %v766 = vunpack.c.l.b16 %v727
        %v767 = vunpack.c.l.b16 %v728
        %v768 = vunpack.c.l.b16 %v729
        %v769 = vunpack.c.l.b16 %v730
        %v770 = vunpack.c.l.b16 %v731
        %v771 = vunpack.c.l.b16 %v732
        %v772 = vunpack.c.l.b16 %v733
        %v773 = vunpack.c.l.b16 %v734
        %v774 = vunpack.c.l.b16 %v735
        %v775 = vunpack.c.l.b16 %v736
        %v776 = vunpack.c.l.b16 %v737
        %v777 = vpack.c.b16 %v762, %v761
        %v778 = vpack.c.b16 %v764, %v763
        %v779 = vpack.c.b16 %v766, %v765
        %v780 = vpack.c.b16 %v768, %v767
        %v781 = vpack.c.b16 %v770, %v769
        %v782 = vpack.c.b16 %v772, %v771
        %v783 = vpack.c.b16 %v774, %v773
        %v784 = vpack.c.b16 %v776, %v775
        %793 = vmatprep.subr.bf16.mxu0 0
        %794 = vmatpush1.bf16.msra.mxu0 %v784
        %795 = vmatprep.subr.bf16.mxu0 0
        %796 = vmatpush1.bf16.msra.mxu0 %v783
        %797 = vmatprep.subr.bf16.mxu0 0
        %798 = vmatpush1.bf16.msra.mxu0 %v782
        %799 = vmatprep.subr.bf16.mxu0 0
        %800 = vmatpush1.bf16.msra.mxu0 %v781
        %801 = vmatprep.subr.bf16.mxu0 0
        %802 = vmatpush1.bf16.msra.mxu0 %v780
        %803 = vmatprep.subr.bf16.mxu0 0
        %804 = vmatpush1.bf16.msra.mxu0 %v779
        %805 = vmatprep.subr.bf16.mxu0 0
        %806 = vmatpush1.bf16.msra.mxu0 %v778
        %807 = vmatprep.subr.bf16.mxu0 0
        %808 = vmatpush1.bf16.msra.mxu0 %v777
        %809 = vmatprep.subr.bf16.mxu0 0
        %810 = vmatpush2.bf16.msra.mxu0 0
        %811 = vmatprep.subr.bf16.mxu0 0
        %812 = vmatpush2.bf16.msra.mxu0 0
        %813 = vmatprep.subr.bf16.mxu0 0
        %814 = vmatpush2.bf16.msra.mxu0 0
        %815 = vmatprep.subr.bf16.mxu0 0
        %816 = vmatpush2.bf16.msra.mxu0 0
        %817 = vmatprep.subr.bf16.mxu0 0
        %818 = vmatpush2.bf16.msra.mxu0 0
        %819 = vmatprep.subr.bf16.mxu0 0
        %820 = vmatpush2.bf16.msra.mxu0 0
        %821 = vmatprep.subr.bf16.mxu0 0
        %822 = vmatpush2.bf16.msra.mxu0 0
        %823 = vmatprep.subr.bf16.mxu0 0
        %824 = vmatpush2.bf16.msra.mxu0 0
        %825 = vmatprep.mubr.bf16.mxu0 0
        %826 = vmatmul.mubr.bf16.gmra.mxu0 %v714
        %v827 = vpop.f32.mrf.mxu0
        %v828 = vadd.f32 %v743, %v827
        %v829 = vpop.f32.mrf.mxu0
        %v830 = vpop.f32.mrf.mxu0
        %v831 = vadd.f32 %v743, %v830
        %v832 = vpop.f32.mrf.mxu0
        %833 = vmatprep.mubr.bf16.mxu0 0
        %834 = vmatmul.mubr.bf16.gmra.mxu0 %v715
        %v835 = vpop.f32.mrf.mxu0
        %v836 = vadd.f32 %v743, %v835
        %v837 = vpop.f32.mrf.mxu0
        %v838 = vpop.f32.mrf.mxu0
        %v839 = vadd.f32 %v743, %v838
        %v840 = vpop.f32.mrf.mxu0
        %841 = vmatprep.mubr.bf16.mxu0 0
        %842 = vmatmul.mubr.bf16.gmra.mxu0 %v716
        %v843 = vpop.f32.mrf.mxu0
        %v844 = vadd.f32 %v743, %v843
        %v845 = vpop.f32.mrf.mxu0
        %v846 = vpop.f32.mrf.mxu0
        %v847 = vadd.f32 %v743, %v846
        %v848 = vpop.f32.mrf.mxu0
        %849 = vmatprep.mubr.bf16.mxu0 0
        %850 = vmatmul.mubr.bf16.gmra.mxu0 %v717
        %v851 = vpop.f32.mrf.mxu0
        %v852 = vadd.f32 %v743, %v851
        %v853 = vpop.f32.mrf.mxu0
        %v854 = vpop.f32.mrf.mxu0
        %v855 = vadd.f32 %v743, %v854
        %v856 = vpop.f32.mrf.mxu0
        %857 = vmatprep.mubr.bf16.mxu0 0
        %858 = vmatmul.mubr.bf16.gmra.mxu0 %v718
        %v859 = vpop.f32.mrf.mxu0
        %v860 = vadd.f32 %v743, %v859
        %v861 = vpop.f32.mrf.mxu0
        %v862 = vpop.f32.mrf.mxu0
        %v863 = vadd.f32 %v743, %v862
        %v864 = vpop.f32.mrf.mxu0
        %865 = vmatprep.mubr.bf16.mxu0 0
        %866 = vmatmul.mubr.bf16.gmra.mxu0 %v719
        %v867 = vpop.f32.mrf.mxu0
        %v868 = vadd.f32 %v743, %v867
        %v869 = vpop.f32.mrf.mxu0
        %v870 = vpop.f32.mrf.mxu0
        %v871 = vadd.f32 %v743, %v870
        %v872 = vpop.f32.mrf.mxu0
        %873 = vmatprep.mubr.bf16.mxu0 0
        %874 = vmatmul.mubr.bf16.gmra.mxu0 %v720
        %v875 = vpop.f32.mrf.mxu0
        %v876 = vadd.f32 %v743, %v875
        %v877 = vpop.f32.mrf.mxu0
        %v878 = vpop.f32.mrf.mxu0
        %v879 = vadd.f32 %v743, %v878
        %v880 = vpop.f32.mrf.mxu0
        %881 = vmatprep.mubr.bf16.mxu0 0
        %882 = vmatmul.mubr.bf16.gmra.mxu0 %v721
        %v883 = vpop.f32.mrf.mxu0
        %v884 = vadd.f32 %v743, %v883
        %v885 = vpop.f32.mrf.mxu0
        %v886 = vpop.f32.mrf.mxu0
        %v887 = vadd.f32 %v743, %v886
        %v888 = vpop.f32.mrf.mxu0
        %889 = vdwg.mxu0
        %890 = vst [vmem:[#allocation2] sm:$0xff] %v828
        %891 = vst [vmem:[#allocation2 + $0x8] sm:$0xff] %v831
        %892 = vst [vmem:[#allocation2 + $0x10] sm:$0xff] %v836
        %893 = vst [vmem:[#allocation2 + $0x18] sm:$0xff] %v839
        %894 = vst [vmem:[#allocation2 + $0x20] sm:$0xff] %v844
        %895 = vst [vmem:[#allocation2 + $0x28] sm:$0xff] %v847
        %896 = vst [vmem:[#allocation2 + $0x30] sm:$0xff] %v852
        %897 = vst [vmem:[#allocation2 + $0x38] sm:$0xff] %v855
        %898 = vst [vmem:[#allocation2 + $0x40] sm:$0xff] %v860
        %899 = vst [vmem:[#allocation2 + $0x48] sm:$0xff] %v863
        %900 = vst [vmem:[#allocation2 + $0x50] sm:$0xff] %v868
        %901 = vst [vmem:[#allocation2 + $0x58] sm:$0xff] %v871
        %902 = vst [vmem:[#allocation2 + $0x60] sm:$0xff] %v876
        %903 = vst [vmem:[#allocation2 + $0x68] sm:$0xff] %v879
        %904 = vst [vmem:[#allocation2 + $0x70] sm:$0xff] %v884
        %905 = vst [vmem:[#allocation2 + $0x78] sm:$0xff] %v887
        %v906 = vld [vmem:[#allocation11] sm:$0xf]
        %v907 = vld [vmem:[#allocation11 + $0x4] sm:$0xf]
        %v908 = vld [vmem:[#allocation11 + $0x8] sm:$0xf]
        %v909 = vld [vmem:[#allocation11 + $0xc] sm:$0xf]
        %v910 = vld [vmem:[#allocation11 + $0x10] sm:$0xf]
        %v911 = vld [vmem:[#allocation11 + $0x14] sm:$0xf]
        %v912 = vld [vmem:[#allocation11 + $0x18] sm:$0xf]
        %v913 = vld [vmem:[#allocation11 + $0x1c] sm:$0xf]
        %v914 = vld [vmem:[#allocation11 + $0x20] sm:$0xf]
        %v915 = vld [vmem:[#allocation11 + $0x24] sm:$0xf]
        %v916 = vld [vmem:[#allocation11 + $0x28] sm:$0xf]
        %v917 = vld [vmem:[#allocation11 + $0x2c] sm:$0xf]
        %v918 = vld [vmem:[#allocation11 + $0x30] sm:$0xf]
        %v919 = vld [vmem:[#allocation11 + $0x34] sm:$0xf]
        %v920 = vld [vmem:[#allocation11 + $0x38] sm:$0xf]
        %v921 = vld [vmem:[#allocation11 + $0x3c] sm:$0xf]
        %v922 = vld [vmem:[#allocation2] sm:$0xff]
        %v923 = vld [vmem:[#allocation2 + $0x8] sm:$0xff]
        %s924 = scalar_lea.vmem [#allocation2], 112
        %v925 = vld [vmem:[%s924] sm:$0xff]
        %v926 = vld [vmem:[%s924 + $0x8] sm:$0xff]
        %v927 = vsel %vm512, %v922, %v925
        %v928 = vsel %vm512, %v923, %v926
        %v945 = vunpack.c.l.b16 %v906
        %v946 = vunpack.c.l.b16 %v907
        %v947 = vunpack.c.l.b16 %v908
        %v948 = vunpack.c.l.b16 %v909
        %v949 = vunpack.c.l.b16 %v910
        %v950 = vunpack.c.l.b16 %v911
        %v951 = vunpack.c.l.b16 %v912
        %v952 = vunpack.c.l.b16 %v913
        %v953 = vunpack.c.l.b16 %v914
        %v954 = vunpack.c.l.b16 %v915
        %v955 = vunpack.c.l.b16 %v916
        %v956 = vunpack.c.l.b16 %v917
        %v957 = vunpack.c.l.b16 %v918
        %v958 = vunpack.c.l.b16 %v919
        %v959 = vunpack.c.l.b16 %v920
        %v960 = vunpack.c.l.b16 %v921
        %v961 = vpack.c.b16 %v946, %v945
        %v962 = vpack.c.b16 %v948, %v947
        %v963 = vpack.c.b16 %v950, %v949
        %v964 = vpack.c.b16 %v952, %v951
        %v965 = vpack.c.b16 %v954, %v953
        %v966 = vpack.c.b16 %v956, %v955
        %v967 = vpack.c.b16 %v958, %v957
        %v968 = vpack.c.b16 %v960, %v959
        %977 = vmatprep.subr.bf16.mxu0 0
        %978 = vmatpush1.bf16.msra.mxu0 %v968
        %979 = vmatprep.subr.bf16.mxu0 0
        %980 = vmatpush1.bf16.msra.mxu0 %v967
        %981 = vmatprep.subr.bf16.mxu0 0
        %982 = vmatpush1.bf16.msra.mxu0 %v966
        %983 = vmatprep.subr.bf16.mxu0 0
        %984 = vmatpush1.bf16.msra.mxu0 %v965
        %985 = vmatprep.subr.bf16.mxu0 0
        %986 = vmatpush1.bf16.msra.mxu0 %v964
        %987 = vmatprep.subr.bf16.mxu0 0
        %988 = vmatpush1.bf16.msra.mxu0 %v963
        %989 = vmatprep.subr.bf16.mxu0 0
        %990 = vmatpush1.bf16.msra.mxu0 %v962
        %991 = vmatprep.subr.bf16.mxu0 0
        %992 = vmatpush1.bf16.msra.mxu0 %v961
        %993 = vmatprep.subr.bf16.mxu0 0
        %994 = vmatpush2.bf16.msra.mxu0 0
        %995 = vmatprep.subr.bf16.mxu0 0
        %996 = vmatpush2.bf16.msra.mxu0 0
        %997 = vmatprep.subr.bf16.mxu0 0
        %998 = vmatpush2.bf16.msra.mxu0 0
        %999 = vmatprep.subr.bf16.mxu0 0
        %1000 = vmatpush2.bf16.msra.mxu0 0
        %1001 = vmatprep.subr.bf16.mxu0 0
        %1002 = vmatpush2.bf16.msra.mxu0 0
        %1003 = vmatprep.subr.bf16.mxu0 0
        %1004 = vmatpush2.bf16.msra.mxu0 0
        %1005 = vmatprep.subr.bf16.mxu0 0
        %1006 = vmatpush2.bf16.msra.mxu0 0
        %1007 = vmatprep.subr.bf16.mxu0 0
        %1008 = vmatpush2.bf16.msra.mxu0 0
        %1009 = vmatprep.mubr.bf16.mxu0 0
        %1010 = vmatmul.mubr.bf16.gmra.mxu0 0
        %v1011 = vpop.f32.mrf.mxu0
        %v1012 = vadd.f32 0.0, %v1011
        %v1013 = vpop.f32.mrf.mxu0
        %v1014 = vpop.f32.mrf.mxu0
        %v1015 = vadd.f32 0.0, %v1014
        %v1016 = vpop.f32.mrf.mxu0
        %1017 = vdwg.mxu0
        %v1018 = vadd.f32 %v927, %v1012
        %v1019 = vadd.f32 %v928, %v1015
        %v1020 = vtanh.pop %v1018
        %v1021 = vtanh.pop %v1019
        %v1022 = vpack.c.bf16 %v1021, %v1020
        %v1024 = vunpack.c.l.b16 %v1022
        %v1025 = vunpack.c.h.b16 %v1022
        %v1026 = vpack.c.b16 %v1024, %v1024
        %v1027 = vpack.c.b16 %v1025, %v1025
        %1030 = vst [vmem:[#allocation3] sm:$0xf] %v1026
        %1031 = vst [vmem:[#allocation3 + $0x4] sm:$0xf] %v1027
        %s1032 = scalar_lea.vmem [#allocation4], 56
        %1033 = vst [vmem:[%s1032] sm:$0xf] %v1026
        %1034 = vst [vmem:[%s1032 + $0x4] sm:$0xf] %v1027
        %s1035 = scalar_lea.vmem [#allocation2], 16
        %v1036 = vld [vmem:[%s1035] sm:$0xff]
        %v1037 = vld [vmem:[%s1035 + $0x8] sm:$0xff]
        %s1038 = scalar_lea.vmem [#allocation2], 96
        %v1039 = vld [vmem:[%s1038] sm:$0xff]
        %v1040 = vld [vmem:[%s1038 + $0x8] sm:$0xff]
        %v1041 = vsel %vm512, %v1036, %v1039
        %v1042 = vsel %vm512, %v1037, %v1040
        %1043 = vmatprep.subr.bf16.mxu0 0
        %1044 = vmatpush1.bf16.msra.mxu0 %v968
        %1045 = vmatprep.subr.bf16.mxu0 0
        %1046 = vmatpush1.bf16.msra.mxu0 %v967
        %1047 = vmatprep.subr.bf16.mxu0 0
        %1048 = vmatpush1.bf16.msra.mxu0 %v966
        %1049 = vmatprep.subr.bf16.mxu0 0
        %1050 = vmatpush1.bf16.msra.mxu0 %v965
        %1051 = vmatprep.subr.bf16.mxu0 0
        %1052 = vmatpush1.bf16.msra.mxu0 %v964
        %1053 = vmatprep.subr.bf16.mxu0 0
        %1054 = vmatpush1.bf16.msra.mxu0 %v963
        %1055 = vmatprep.subr.bf16.mxu0 0
        %1056 = vmatpush1.bf16.msra.mxu0 %v962
        %1057 = vmatprep.subr.bf16.mxu0 0
        %1058 = vmatpush1.bf16.msra.mxu0 %v961
        %1059 = vmatprep.subr.bf16.mxu0 0
        %1060 = vmatpush2.bf16.msra.mxu0 0
        %1061 = vmatprep.subr.bf16.mxu0 0
        %1062 = vmatpush2.bf16.msra.mxu0 0
        %1063 = vmatprep.subr.bf16.mxu0 0
        %1064 = vmatpush2.bf16.msra.mxu0 0
        %1065 = vmatprep.subr.bf16.mxu0 0
        %1066 = vmatpush2.bf16.msra.mxu0 0
        %1067 = vmatprep.subr.bf16.mxu0 0
        %1068 = vmatpush2.bf16.msra.mxu0 0
        %1069 = vmatprep.subr.bf16.mxu0 0
        %1070 = vmatpush2.bf16.msra.mxu0 0
        %1071 = vmatprep.subr.bf16.mxu0 0
        %1072 = vmatpush2.bf16.msra.mxu0 0
        %1073 = vmatprep.subr.bf16.mxu0 0
        %1074 = vmatpush2.bf16.msra.mxu0 0
        %1075 = vmatprep.mubr.bf16.mxu0 0
        %1076 = vmatmul.mubr.bf16.gmra.mxu0 %v1022
        %v1077 = vpop.f32.mrf.mxu0
        %v1078 = vadd.f32 0.0, %v1077
        %v1079 = vpop.f32.mrf.mxu0
        %v1080 = vpop.f32.mrf.mxu0
        %v1081 = vadd.f32 0.0, %v1080
        %v1082 = vpop.f32.mrf.mxu0
        %1083 = vdwg.mxu0
        %v1084 = vadd.f32 %v1041, %v1078
        %v1085 = vadd.f32 %v1042, %v1081
        %v1086 = vtanh.pop %v1084
        %v1087 = vtanh.pop %v1085
        %v1088 = vpack.c.bf16 %v1087, %v1086
        %v1090 = vunpack.c.l.b16 %v1088
        %v1091 = vunpack.c.h.b16 %v1088
        %v1092 = vpack.c.b16 %v1090, %v1090
        %v1093 = vpack.c.b16 %v1091, %v1091
        %s1096 = scalar_lea.vmem [#allocation3], 8
        %1097 = vst [vmem:[%s1096] sm:$0xf] %v1092
        %1098 = vst [vmem:[%s1096 + $0x4] sm:$0xf] %v1093
        %s1099 = scalar_lea.vmem [#allocation4], 48
        %1100 = vst [vmem:[%s1099] sm:$0xf] %v1092
        %1101 = vst [vmem:[%s1099 + $0x4] sm:$0xf] %v1093
        %s1102 = scalar_lea.vmem [#allocation2], 32
        %v1103 = vld [vmem:[%s1102] sm:$0xff]
        %v1104 = vld [vmem:[%s1102 + $0x8] sm:$0xff]
        %s1105 = scalar_lea.vmem [#allocation2], 80
        %v1106 = vld [vmem:[%s1105] sm:$0xff]
        %v1107 = vld [vmem:[%s1105 + $0x8] sm:$0xff]
        %v1108 = vsel %vm512, %v1103, %v1106
        %v1109 = vsel %vm512, %v1104, %v1107
        %1110 = vmatprep.subr.bf16.mxu0 0
        %1111 = vmatpush1.bf16.msra.mxu0 %v968
        %1112 = vmatprep.subr.bf16.mxu0 0
        %1113 = vmatpush1.bf16.msra.mxu0 %v967
        %1114 = vmatprep.subr.bf16.mxu0 0
        %1115 = vmatpush1.bf16.msra.mxu0 %v966
        %1116 = vmatprep.subr.bf16.mxu0 0
        %1117 = vmatpush1.bf16.msra.mxu0 %v965
        %1118 = vmatprep.subr.bf16.mxu0 0
        %1119 = vmatpush1.bf16.msra.mxu0 %v964
        %1120 = vmatprep.subr.bf16.mxu0 0
        %1121 = vmatpush1.bf16.msra.mxu0 %v963
        %1122 = vmatprep.subr.bf16.mxu0 0
        %1123 = vmatpush1.bf16.msra.mxu0 %v962
        %1124 = vmatprep.subr.bf16.mxu0 0
        %1125 = vmatpush1.bf16.msra.mxu0 %v961
        %1126 = vmatprep.subr.bf16.mxu0 0
        %1127 = vmatpush2.bf16.msra.mxu0 0
        %1128 = vmatprep.subr.bf16.mxu0 0
        %1129 = vmatpush2.bf16.msra.mxu0 0
        %1130 = vmatprep.subr.bf16.mxu0 0
        %1131 = vmatpush2.bf16.msra.mxu0 0
        %1132 = vmatprep.subr.bf16.mxu0 0
        %1133 = vmatpush2.bf16.msra.mxu0 0
        %1134 = vmatprep.subr.bf16.mxu0 0
        %1135 = vmatpush2.bf16.msra.mxu0 0
        %1136 = vmatprep.subr.bf16.mxu0 0
        %1137 = vmatpush2.bf16.msra.mxu0 0
        %1138 = vmatprep.subr.bf16.mxu0 0
        %1139 = vmatpush2.bf16.msra.mxu0 0
        %1140 = vmatprep.subr.bf16.mxu0 0
        %1141 = vmatpush2.bf16.msra.mxu0 0
        %1142 = vmatprep.mubr.bf16.mxu0 0
        %1143 = vmatmul.mubr.bf16.gmra.mxu0 %v1088
        %v1144 = vpop.f32.mrf.mxu0
        %v1145 = vadd.f32 0.0, %v1144
        %v1146 = vpop.f32.mrf.mxu0
        %v1147 = vpop.f32.mrf.mxu0
        %v1148 = vadd.f32 0.0, %v1147
        %v1149 = vpop.f32.mrf.mxu0
        %1150 = vdwg.mxu0
        %v1151 = vadd.f32 %v1108, %v1145
        %v1152 = vadd.f32 %v1109, %v1148
        %v1153 = vtanh.pop %v1151
        %v1154 = vtanh.pop %v1152
        %v1155 = vpack.c.bf16 %v1154, %v1153
        %v1157 = vunpack.c.l.b16 %v1155
        %v1158 = vunpack.c.h.b16 %v1155
        %v1159 = vpack.c.b16 %v1157, %v1157
        %v1160 = vpack.c.b16 %v1158, %v1158
        %s1163 = scalar_lea.vmem [#allocation3], 16
        %1164 = vst [vmem:[%s1163] sm:$0xf] %v1159
        %1165 = vst [vmem:[%s1163 + $0x4] sm:$0xf] %v1160
        %s1166 = scalar_lea.vmem [#allocation4], 40
        %1167 = vst [vmem:[%s1166] sm:$0xf] %v1159
        %1168 = vst [vmem:[%s1166 + $0x4] sm:$0xf] %v1160
        %s1169 = scalar_lea.vmem [#allocation2], 48
        %v1170 = vld [vmem:[%s1169] sm:$0xff]
        %v1171 = vld [vmem:[%s1169 + $0x8] sm:$0xff]
        %s1172 = scalar_lea.vmem [#allocation2], 64
        %v1173 = vld [vmem:[%s1172] sm:$0xff]
        %v1174 = vld [vmem:[%s1172 + $0x8] sm:$0xff]
        %v1175 = vsel %vm512, %v1170, %v1173
        %v1176 = vsel %vm512, %v1171, %v1174
        %1177 = vmatprep.subr.bf16.mxu0 0
        %1178 = vmatpush1.bf16.msra.mxu0 %v968
        %1179 = vmatprep.subr.bf16.mxu0 0
        %1180 = vmatpush1.bf16.msra.mxu0 %v967
        %1181 = vmatprep.subr.bf16.mxu0 0
        %1182 = vmatpush1.bf16.msra.mxu0 %v966
        %1183 = vmatprep.subr.bf16.mxu0 0
        %1184 = vmatpush1.bf16.msra.mxu0 %v965
        %1185 = vmatprep.subr.bf16.mxu0 0
        %1186 = vmatpush1.bf16.msra.mxu0 %v964
        %1187 = vmatprep.subr.bf16.mxu0 0
        %1188 = vmatpush1.bf16.msra.mxu0 %v963
        %1189 = vmatprep.subr.bf16.mxu0 0
        %1190 = vmatpush1.bf16.msra.mxu0 %v962
        %1191 = vmatprep.subr.bf16.mxu0 0
        %1192 = vmatpush1.bf16.msra.mxu0 %v961
        %1193 = vmatprep.subr.bf16.mxu0 0
        %1194 = vmatpush2.bf16.msra.mxu0 0
        %1195 = vmatprep.subr.bf16.mxu0 0
        %1196 = vmatpush2.bf16.msra.mxu0 0
        %1197 = vmatprep.subr.bf16.mxu0 0
        %1198 = vmatpush2.bf16.msra.mxu0 0
        %1199 = vmatprep.subr.bf16.mxu0 0
        %1200 = vmatpush2.bf16.msra.mxu0 0
        %1201 = vmatprep.subr.bf16.mxu0 0
        %1202 = vmatpush2.bf16.msra.mxu0 0
        %1203 = vmatprep.subr.bf16.mxu0 0
        %1204 = vmatpush2.bf16.msra.mxu0 0
        %1205 = vmatprep.subr.bf16.mxu0 0
        %1206 = vmatpush2.bf16.msra.mxu0 0
        %1207 = vmatprep.subr.bf16.mxu0 0
        %1208 = vmatpush2.bf16.msra.mxu0 0
        %1209 = vmatprep.mubr.bf16.mxu0 0
        %1210 = vmatmul.mubr.bf16.gmra.mxu0 %v1155
        %v1211 = vpop.f32.mrf.mxu0
        %v1212 = vadd.f32 0.0, %v1211
        %v1213 = vpop.f32.mrf.mxu0
        %v1214 = vpop.f32.mrf.mxu0
        %v1215 = vadd.f32 0.0, %v1214
        %v1216 = vpop.f32.mrf.mxu0
        %1217 = vdwg.mxu0
        %v1218 = vadd.f32 %v1175, %v1212
        %v1219 = vadd.f32 %v1176, %v1215
        %v1220 = vtanh.pop %v1218
        %v1221 = vtanh.pop %v1219
        %v1222 = vpack.c.bf16 %v1221, %v1220
        %v1224 = vunpack.c.l.b16 %v1222
        %v1225 = vunpack.c.h.b16 %v1222
        %v1226 = vpack.c.b16 %v1224, %v1224
        %v1227 = vpack.c.b16 %v1225, %v1225
        %s1230 = scalar_lea.vmem [#allocation3], 24
        %1231 = vst [vmem:[%s1230] sm:$0xf] %v1226
        %1232 = vst [vmem:[%s1230 + $0x4] sm:$0xf] %v1227
        %s1233 = scalar_lea.vmem [#allocation4], 32
        %1234 = vst [vmem:[%s1233] sm:$0xf] %v1226
        %1235 = vst [vmem:[%s1233 + $0x4] sm:$0xf] %v1227
        %v1236 = vld [vmem:[%s1172] sm:$0xff]
        %v1237 = vld [vmem:[%s1172 + $0x8] sm:$0xff]
        %v1238 = vld [vmem:[%s1169] sm:$0xff]
        %v1239 = vld [vmem:[%s1169 + $0x8] sm:$0xff]
        %v1240 = vsel %vm512, %v1236, %v1238
        %v1241 = vsel %vm512, %v1237, %v1239
        %1242 = vmatprep.subr.bf16.mxu0 0
        %1243 = vmatpush1.bf16.msra.mxu0 %v968
        %1244 = vmatprep.subr.bf16.mxu0 0
        %1245 = vmatpush1.bf16.msra.mxu0 %v967
        %1246 = vmatprep.subr.bf16.mxu0 0
        %1247 = vmatpush1.bf16.msra.mxu0 %v966
        %1248 = vmatprep.subr.bf16.mxu0 0
        %1249 = vmatpush1.bf16.msra.mxu0 %v965
        %1250 = vmatprep.subr.bf16.mxu0 0
        %1251 = vmatpush1.bf16.msra.mxu0 %v964
        %1252 = vmatprep.subr.bf16.mxu0 0
        %1253 = vmatpush1.bf16.msra.mxu0 %v963
        %1254 = vmatprep.subr.bf16.mxu0 0
        %1255 = vmatpush1.bf16.msra.mxu0 %v962
        %1256 = vmatprep.subr.bf16.mxu0 0
        %1257 = vmatpush1.bf16.msra.mxu0 %v961
        %1258 = vmatprep.subr.bf16.mxu0 0
        %1259 = vmatpush2.bf16.msra.mxu0 0
        %1260 = vmatprep.subr.bf16.mxu0 0
        %1261 = vmatpush2.bf16.msra.mxu0 0
        %1262 = vmatprep.subr.bf16.mxu0 0
        %1263 = vmatpush2.bf16.msra.mxu0 0
        %1264 = vmatprep.subr.bf16.mxu0 0
        %1265 = vmatpush2.bf16.msra.mxu0 0
        %1266 = vmatprep.subr.bf16.mxu0 0
        %1267 = vmatpush2.bf16.msra.mxu0 0
        %1268 = vmatprep.subr.bf16.mxu0 0
        %1269 = vmatpush2.bf16.msra.mxu0 0
        %1270 = vmatprep.subr.bf16.mxu0 0
        %1271 = vmatpush2.bf16.msra.mxu0 0
        %1272 = vmatprep.subr.bf16.mxu0 0
        %1273 = vmatpush2.bf16.msra.mxu0 0
        %1274 = vmatprep.mubr.bf16.mxu0 0
        %1275 = vmatmul.mubr.bf16.gmra.mxu0 %v1222
        %v1276 = vpop.f32.mrf.mxu0
        %v1277 = vadd.f32 0.0, %v1276
        %v1278 = vpop.f32.mrf.mxu0
        %v1279 = vpop.f32.mrf.mxu0
        %v1280 = vadd.f32 0.0, %v1279
        %v1281 = vpop.f32.mrf.mxu0
        %1282 = vdwg.mxu0
        %v1283 = vadd.f32 %v1240, %v1277
        %v1284 = vadd.f32 %v1241, %v1280
        %v1285 = vtanh.pop %v1283
        %v1286 = vtanh.pop %v1284
        %v1287 = vpack.c.bf16 %v1286, %v1285
        %v1289 = vunpack.c.l.b16 %v1287
        %v1290 = vunpack.c.h.b16 %v1287
        %v1291 = vpack.c.b16 %v1289, %v1289
        %v1292 = vpack.c.b16 %v1290, %v1290
        %s1295 = scalar_lea.vmem [#allocation3], 32
        %1296 = vst [vmem:[%s1295] sm:$0xf] %v1291
        %1297 = vst [vmem:[%s1295 + $0x4] sm:$0xf] %v1292
        %s1298 = scalar_lea.vmem [#allocation4], 24
        %1299 = vst [vmem:[%s1298] sm:$0xf] %v1291
        %1300 = vst [vmem:[%s1298 + $0x4] sm:$0xf] %v1292
        %v1301 = vld [vmem:[%s1105] sm:$0xff]
        %v1302 = vld [vmem:[%s1105 + $0x8] sm:$0xff]
        %v1303 = vld [vmem:[%s1102] sm:$0xff]
        %v1304 = vld [vmem:[%s1102 + $0x8] sm:$0xff]
        %v1305 = vsel %vm512, %v1301, %v1303
        %v1306 = vsel %vm512, %v1302, %v1304
        %1307 = vmatprep.subr.bf16.mxu0 0
        %1308 = vmatpush1.bf16.msra.mxu0 %v968
        %1309 = vmatprep.subr.bf16.mxu0 0
        %1310 = vmatpush1.bf16.msra.mxu0 %v967
        %1311 = vmatprep.subr.bf16.mxu0 0
        %1312 = vmatpush1.bf16.msra.mxu0 %v966
        %1313 = vmatprep.subr.bf16.mxu0 0
        %1314 = vmatpush1.bf16.msra.mxu0 %v965
        %1315 = vmatprep.subr.bf16.mxu0 0
        %1316 = vmatpush1.bf16.msra.mxu0 %v964
        %1317 = vmatprep.subr.bf16.mxu0 0
        %1318 = vmatpush1.bf16.msra.mxu0 %v963
        %1319 = vmatprep.subr.bf16.mxu0 0
        %1320 = vmatpush1.bf16.msra.mxu0 %v962
        %1321 = vmatprep.subr.bf16.mxu0 0
        %1322 = vmatpush1.bf16.msra.mxu0 %v961
        %1323 = vmatprep.subr.bf16.mxu0 0
        %1324 = vmatpush2.bf16.msra.mxu0 0
        %1325 = vmatprep.subr.bf16.mxu0 0
        %1326 = vmatpush2.bf16.msra.mxu0 0
        %1327 = vmatprep.subr.bf16.mxu0 0
        %1328 = vmatpush2.bf16.msra.mxu0 0
        %1329 = vmatprep.subr.bf16.mxu0 0
        %1330 = vmatpush2.bf16.msra.mxu0 0
        %1331 = vmatprep.subr.bf16.mxu0 0
        %1332 = vmatpush2.bf16.msra.mxu0 0
        %1333 = vmatprep.subr.bf16.mxu0 0
        %1334 = vmatpush2.bf16.msra.mxu0 0
        %1335 = vmatprep.subr.bf16.mxu0 0
        %1336 = vmatpush2.bf16.msra.mxu0 0
        %1337 = vmatprep.subr.bf16.mxu0 0
        %1338 = vmatpush2.bf16.msra.mxu0 0
        %1339 = vmatprep.mubr.bf16.mxu0 0
        %1340 = vmatmul.mubr.bf16.gmra.mxu0 %v1287
        %v1341 = vpop.f32.mrf.mxu0
        %v1342 = vadd.f32 0.0, %v1341
        %v1343 = vpop.f32.mrf.mxu0
        %v1344 = vpop.f32.mrf.mxu0
        %v1345 = vadd.f32 0.0, %v1344
        %v1346 = vpop.f32.mrf.mxu0
        %1347 = vdwg.mxu0
        %v1348 = vadd.f32 %v1305, %v1342
        %v1349 = vadd.f32 %v1306, %v1345
        %v1350 = vtanh.pop %v1348
        %v1351 = vtanh.pop %v1349
        %v1352 = vpack.c.bf16 %v1351, %v1350
        %v1354 = vunpack.c.l.b16 %v1352
        %v1355 = vunpack.c.h.b16 %v1352
        %v1356 = vpack.c.b16 %v1354, %v1354
        %v1357 = vpack.c.b16 %v1355, %v1355
        %s1360 = scalar_lea.vmem [#allocation3], 40
        %1361 = vst [vmem:[%s1360] sm:$0xf] %v1356
        %1362 = vst [vmem:[%s1360 + $0x4] sm:$0xf] %v1357
        %s1363 = scalar_lea.vmem [#allocation4], 16
        %1364 = vst [vmem:[%s1363] sm:$0xf] %v1356
        %1365 = vst [vmem:[%s1363 + $0x4] sm:$0xf] %v1357
        %v1366 = vld [vmem:[%s1038] sm:$0xff]
        %v1367 = vld [vmem:[%s1038 + $0x8] sm:$0xff]
        %v1368 = vld [vmem:[%s1035] sm:$0xff]
        %v1369 = vld [vmem:[%s1035 + $0x8] sm:$0xff]
        %v1370 = vsel %vm512, %v1366, %v1368
        %v1371 = vsel %vm512, %v1367, %v1369
        %1372 = vmatprep.subr.bf16.mxu0 0
        %1373 = vmatpush1.bf16.msra.mxu0 %v968
        %1374 = vmatprep.subr.bf16.mxu0 0
        %1375 = vmatpush1.bf16.msra.mxu0 %v967
        %1376 = vmatprep.subr.bf16.mxu0 0
        %1377 = vmatpush1.bf16.msra.mxu0 %v966
        %1378 = vmatprep.subr.bf16.mxu0 0
        %1379 = vmatpush1.bf16.msra.mxu0 %v965
        %1380 = vmatprep.subr.bf16.mxu0 0
        %1381 = vmatpush1.bf16.msra.mxu0 %v964
        %1382 = vmatprep.subr.bf16.mxu0 0
        %1383 = vmatpush1.bf16.msra.mxu0 %v963
        %1384 = vmatprep.subr.bf16.mxu0 0
        %1385 = vmatpush1.bf16.msra.mxu0 %v962
        %1386 = vmatprep.subr.bf16.mxu0 0
        %1387 = vmatpush1.bf16.msra.mxu0 %v961
        %1388 = vmatprep.subr.bf16.mxu0 0
        %1389 = vmatpush2.bf16.msra.mxu0 0
        %1390 = vmatprep.subr.bf16.mxu0 0
        %1391 = vmatpush2.bf16.msra.mxu0 0
        %1392 = vmatprep.subr.bf16.mxu0 0
        %1393 = vmatpush2.bf16.msra.mxu0 0
        %1394 = vmatprep.subr.bf16.mxu0 0
        %1395 = vmatpush2.bf16.msra.mxu0 0
        %1396 = vmatprep.subr.bf16.mxu0 0
        %1397 = vmatpush2.bf16.msra.mxu0 0
        %1398 = vmatprep.subr.bf16.mxu0 0
        %1399 = vmatpush2.bf16.msra.mxu0 0
        %1400 = vmatprep.subr.bf16.mxu0 0
        %1401 = vmatpush2.bf16.msra.mxu0 0
        %1402 = vmatprep.subr.bf16.mxu0 0
        %1403 = vmatpush2.bf16.msra.mxu0 0
        %1404 = vmatprep.mubr.bf16.mxu0 0
        %1405 = vmatmul.mubr.bf16.gmra.mxu0 %v1352
        %v1406 = vpop.f32.mrf.mxu0
        %v1407 = vadd.f32 0.0, %v1406
        %v1408 = vpop.f32.mrf.mxu0
        %v1409 = vpop.f32.mrf.mxu0
        %v1410 = vadd.f32 0.0, %v1409
        %v1411 = vpop.f32.mrf.mxu0
        %1412 = vdwg.mxu0
        %v1413 = vadd.f32 %v1370, %v1407
        %v1414 = vadd.f32 %v1371, %v1410
        %v1415 = vtanh.pop %v1413
        %v1416 = vtanh.pop %v1414
        %v1417 = vpack.c.bf16 %v1416, %v1415
        %v1419 = vunpack.c.l.b16 %v1417
        %v1420 = vunpack.c.h.b16 %v1417
        %v1421 = vpack.c.b16 %v1419, %v1419
        %v1422 = vpack.c.b16 %v1420, %v1420
        %s1425 = scalar_lea.vmem [#allocation3], 48
        %1426 = vst [vmem:[%s1425] sm:$0xf] %v1421
        %1427 = vst [vmem:[%s1425 + $0x4] sm:$0xf] %v1422
        %s1428 = scalar_lea.vmem [#allocation4], 8
        %1429 = vst [vmem:[%s1428] sm:$0xf] %v1421
        %1430 = vst [vmem:[%s1428 + $0x4] sm:$0xf] %v1422
        %v1431 = vld [vmem:[%s924] sm:$0xff]
        %v1432 = vld [vmem:[%s924 + $0x8] sm:$0xff]
        %v1433 = vld [vmem:[#allocation2] sm:$0xff]
        %v1434 = vld [vmem:[#allocation2 + $0x8] sm:$0xff]
        %v1435 = vsel %vm512, %v1431, %v1433
        %v1436 = vsel %vm512, %v1432, %v1434
        %1437 = vmatprep.subr.bf16.mxu0 0
        %1438 = vmatpush1.bf16.msra.mxu0 %v968
        %1439 = vmatprep.subr.bf16.mxu0 0
        %1440 = vmatpush1.bf16.msra.mxu0 %v967
        %1441 = vmatprep.subr.bf16.mxu0 0
        %1442 = vmatpush1.bf16.msra.mxu0 %v966
        %1443 = vmatprep.subr.bf16.mxu0 0
        %1444 = vmatpush1.bf16.msra.mxu0 %v965
        %1445 = vmatprep.subr.bf16.mxu0 0
        %1446 = vmatpush1.bf16.msra.mxu0 %v964
        %1447 = vmatprep.subr.bf16.mxu0 0
        %1448 = vmatpush1.bf16.msra.mxu0 %v963
        %1449 = vmatprep.subr.bf16.mxu0 0
        %1450 = vmatpush1.bf16.msra.mxu0 %v962
        %1451 = vmatprep.subr.bf16.mxu0 0
        %1452 = vmatpush1.bf16.msra.mxu0 %v961
        %1453 = vmatprep.subr.bf16.mxu0 0
        %1454 = vmatpush2.bf16.msra.mxu0 0
        %1455 = vmatprep.subr.bf16.mxu0 0
        %1456 = vmatpush2.bf16.msra.mxu0 0
        %1457 = vmatprep.subr.bf16.mxu0 0
        %1458 = vmatpush2.bf16.msra.mxu0 0
        %1459 = vmatprep.subr.bf16.mxu0 0
        %1460 = vmatpush2.bf16.msra.mxu0 0
        %1461 = vmatprep.subr.bf16.mxu0 0
        %1462 = vmatpush2.bf16.msra.mxu0 0
        %1463 = vmatprep.subr.bf16.mxu0 0
        %1464 = vmatpush2.bf16.msra.mxu0 0
        %1465 = vmatprep.subr.bf16.mxu0 0
        %1466 = vmatpush2.bf16.msra.mxu0 0
        %1467 = vmatprep.subr.bf16.mxu0 0
        %1468 = vmatpush2.bf16.msra.mxu0 0
        %1469 = vmatprep.mubr.bf16.mxu0 0
        %1470 = vmatmul.mubr.bf16.gmra.mxu0 %v1417
        %v1471 = vpop.f32.mrf.mxu0
        %v1472 = vadd.f32 0.0, %v1471
        %v1473 = vpop.f32.mrf.mxu0
        %v1474 = vpop.f32.mrf.mxu0
        %v1475 = vadd.f32 0.0, %v1474
        %v1476 = vpop.f32.mrf.mxu0
        %1477 = vdwg.mxu0
        %v1478 = vadd.f32 %v1435, %v1472
        %v1479 = vadd.f32 %v1436, %v1475
        %v1480 = vtanh.pop %v1478
        %v1481 = vtanh.pop %v1479
        %v1482 = vpack.c.bf16 %v1481, %v1480
        %v1484 = vunpack.c.l.b16 %v1482
        %v1485 = vunpack.c.h.b16 %v1482
        %v1486 = vpack.c.b16 %v1484, %v1484
        %v1487 = vpack.c.b16 %v1485, %v1485
        %s1490 = scalar_lea.vmem [#allocation3], 56
        %1491 = vst [vmem:[%s1490] sm:$0xf] %v1486
        %1492 = vst [vmem:[%s1490 + $0x4] sm:$0xf] %v1487
        %1493 = vst [vmem:[#allocation4] sm:$0xf] %v1486
        %1494 = vst [vmem:[#allocation4 + $0x4] sm:$0xf] %v1487
        %v1495 = vld [vmem:[#allocation3] sm:$0xf]
        %v1496 = vld [vmem:[#allocation3 + $0x4] sm:$0xf]
        %v1497 = vld [vmem:[#allocation3 + $0x8] sm:$0xf]
        %v1498 = vld [vmem:[#allocation3 + $0xc] sm:$0xf]
        %v1499 = vld [vmem:[#allocation3 + $0x10] sm:$0xf]
        %v1500 = vld [vmem:[#allocation3 + $0x14] sm:$0xf]
        %v1501 = vld [vmem:[#allocation3 + $0x18] sm:$0xf]
        %v1502 = vld [vmem:[#allocation3 + $0x1c] sm:$0xf]
        %v1503 = vld [vmem:[#allocation3 + $0x20] sm:$0xf]
        %v1504 = vld [vmem:[#allocation3 + $0x24] sm:$0xf]
        %v1505 = vld [vmem:[#allocation3 + $0x28] sm:$0xf]
        %v1506 = vld [vmem:[#allocation3 + $0x2c] sm:$0xf]
        %v1507 = vld [vmem:[#allocation3 + $0x30] sm:$0xf]
        %v1508 = vld [vmem:[#allocation3 + $0x34] sm:$0xf]
        %v1509 = vld [vmem:[#allocation3 + $0x38] sm:$0xf]
        %v1510 = vld [vmem:[#allocation3 + $0x3c] sm:$0xf]
        %v1511 = vld [vmem:[#allocation4] sm:$0xf]
        %v1512 = vld [vmem:[#allocation4 + $0x4] sm:$0xf]
        %v1513 = vld [vmem:[#allocation4 + $0x8] sm:$0xf]
        %v1514 = vld [vmem:[#allocation4 + $0xc] sm:$0xf]
        %v1515 = vld [vmem:[#allocation4 + $0x10] sm:$0xf]
        %v1516 = vld [vmem:[#allocation4 + $0x14] sm:$0xf]
        %v1517 = vld [vmem:[#allocation4 + $0x18] sm:$0xf]
        %v1518 = vld [vmem:[#allocation4 + $0x1c] sm:$0xf]
        %v1519 = vld [vmem:[#allocation4 + $0x20] sm:$0xf]
        %v1520 = vld [vmem:[#allocation4 + $0x24] sm:$0xf]
        %v1521 = vld [vmem:[#allocation4 + $0x28] sm:$0xf]
        %v1522 = vld [vmem:[#allocation4 + $0x2c] sm:$0xf]
        %v1523 = vld [vmem:[#allocation4 + $0x30] sm:$0xf]
        %v1524 = vld [vmem:[#allocation4 + $0x34] sm:$0xf]
        %v1525 = vld [vmem:[#allocation4 + $0x38] sm:$0xf]
        %v1526 = vld [vmem:[#allocation4 + $0x3c] sm:$0xf]
        %vm1527 = vmpackc.low %vm512, %vm512
        %v1528 = vsel %vm1527, %v1495, %v1511
        %v1529 = vsel %vm1527, %v1496, %v1512
        %v1530 = vsel %vm1527, %v1497, %v1513
        %v1531 = vsel %vm1527, %v1498, %v1514
        %v1532 = vsel %vm1527, %v1499, %v1515
        %v1533 = vsel %vm1527, %v1500, %v1516
        %v1534 = vsel %vm1527, %v1501, %v1517
        %v1535 = vsel %vm1527, %v1502, %v1518
        %v1536 = vsel %vm1527, %v1503, %v1519
        %v1537 = vsel %vm1527, %v1504, %v1520
        %v1538 = vsel %vm1527, %v1505, %v1521
        %v1539 = vsel %vm1527, %v1506, %v1522
        %v1540 = vsel %vm1527, %v1507, %v1523
        %v1541 = vsel %vm1527, %v1508, %v1524
        %v1542 = vsel %vm1527, %v1509, %v1525
        %v1543 = vsel %vm1527, %v1510, %v1526
        %v1544 = vld [vmem:[#allocation13] sm:$0xf]
        %v1545 = vld [vmem:[#allocation13 + $0x4] sm:$0xf]
        %v1546 = vld [vmem:[#allocation13 + $0x8] sm:$0xf]
        %v1547 = vld [vmem:[#allocation13 + $0xc] sm:$0xf]
        %v1548 = vld [vmem:[#allocation13 + $0x10] sm:$0xf]
        %v1549 = vld [vmem:[#allocation13 + $0x14] sm:$0xf]
        %v1550 = vld [vmem:[#allocation13 + $0x18] sm:$0xf]
        %v1551 = vld [vmem:[#allocation13 + $0x1c] sm:$0xf]
        %v1552 = vld [vmem:[#allocation13 + $0x20] sm:$0xf]
        %v1553 = vld [vmem:[#allocation13 + $0x24] sm:$0xf]
        %v1554 = vld [vmem:[#allocation13 + $0x28] sm:$0xf]
        %v1555 = vld [vmem:[#allocation13 + $0x2c] sm:$0xf]
        %v1556 = vld [vmem:[#allocation13 + $0x30] sm:$0xf]
        %v1557 = vld [vmem:[#allocation13 + $0x34] sm:$0xf]
        %v1558 = vld [vmem:[#allocation13 + $0x38] sm:$0xf]
        %v1559 = vld [vmem:[#allocation13 + $0x3c] sm:$0xf]
        %v1560 = vld [vmem:[%s8] sm:$0x1]
        %v1562 = vlaneseq
        %v1563 = vshrl.u32 %v1562, 7
        %v1564 = vsub.s32 0, %v1563
        %v1565 = vrot.slane %v1560, %v1564
        %v1583 = vunpack.c.l.b16 %v1528
        %v1584 = vunpack.c.l.b16 %v1529
        %v1585 = vunpack.c.l.b16 %v1530
        %v1586 = vunpack.c.l.b16 %v1531
        %v1587 = vunpack.c.l.b16 %v1532
        %v1588 = vunpack.c.l.b16 %v1533
        %v1589 = vunpack.c.l.b16 %v1534
        %v1590 = vunpack.c.l.b16 %v1535
        %v1591 = vunpack.c.l.b16 %v1536
        %v1592 = vunpack.c.l.b16 %v1537
        %v1593 = vunpack.c.l.b16 %v1538
        %v1594 = vunpack.c.l.b16 %v1539
        %v1595 = vunpack.c.l.b16 %v1540
        %v1596 = vunpack.c.l.b16 %v1541
        %v1597 = vunpack.c.l.b16 %v1542
        %v1598 = vunpack.c.l.b16 %v1543
        %v1599 = vpack.c.b16 %v1584, %v1583
        %v1600 = vpack.c.b16 %v1586, %v1585
        %v1601 = vpack.c.b16 %v1588, %v1587
        %v1602 = vpack.c.b16 %v1590, %v1589
        %v1603 = vpack.c.b16 %v1592, %v1591
        %v1604 = vpack.c.b16 %v1594, %v1593
        %v1605 = vpack.c.b16 %v1596, %v1595
        %v1606 = vpack.c.b16 %v1598, %v1597
        %v1631 = vunpack.c.l.b16 %v1544
        %v1632 = vunpack.c.l.b16 %v1545
        %v1633 = vunpack.c.l.b16 %v1546
        %v1634 = vunpack.c.l.b16 %v1547
        %v1635 = vunpack.c.l.b16 %v1548
        %v1636 = vunpack.c.l.b16 %v1549
        %v1637 = vunpack.c.l.b16 %v1550
        %v1638 = vunpack.c.l.b16 %v1551
        %v1639 = vunpack.c.l.b16 %v1552
        %v1640 = vunpack.c.l.b16 %v1553
        %v1641 = vunpack.c.l.b16 %v1554
        %v1642 = vunpack.c.l.b16 %v1555
        %v1643 = vunpack.c.l.b16 %v1556
        %v1644 = vunpack.c.l.b16 %v1557
        %v1645 = vunpack.c.l.b16 %v1558
        %v1646 = vunpack.c.l.b16 %v1559
        %v1647 = vpack.c.b16 %v1632, %v1631
        %v1648 = vpack.c.b16 %v1634, %v1633
        %v1649 = vpack.c.b16 %v1636, %v1635
        %v1650 = vpack.c.b16 %v1638, %v1637
        %v1651 = vpack.c.b16 %v1640, %v1639
        %v1652 = vpack.c.b16 %v1642, %v1641
        %v1653 = vpack.c.b16 %v1644, %v1643
        %v1654 = vpack.c.b16 %v1646, %v1645
        %1663 = vmatprep.subr.bf16.mxu0 0
        %1664 = vmatpush1.bf16.msra.mxu0 %v1654
        %1665 = vmatprep.subr.bf16.mxu0 0
        %1666 = vmatpush1.bf16.msra.mxu0 %v1653
        %1667 = vmatprep.subr.bf16.mxu0 0
        %1668 = vmatpush1.bf16.msra.mxu0 %v1652
        %1669 = vmatprep.subr.bf16.mxu0 0
        %1670 = vmatpush1.bf16.msra.mxu0 %v1651
        %1671 = vmatprep.subr.bf16.mxu0 0
        %1672 = vmatpush1.bf16.msra.mxu0 %v1650
        %1673 = vmatprep.subr.bf16.mxu0 0
        %1674 = vmatpush1.bf16.msra.mxu0 %v1649
        %1675 = vmatprep.subr.bf16.mxu0 0
        %1676 = vmatpush1.bf16.msra.mxu0 %v1648
        %1677 = vmatprep.subr.bf16.mxu0 0
        %1678 = vmatpush1.bf16.msra.mxu0 %v1647
        %1679 = vmatprep.subr.bf16.mxu0 0
        %1680 = vmatpush2.bf16.msra.mxu0 0
        %1681 = vmatprep.subr.bf16.mxu0 0
        %1682 = vmatpush2.bf16.msra.mxu0 0
        %1683 = vmatprep.subr.bf16.mxu0 0
        %1684 = vmatpush2.bf16.msra.mxu0 0
        %1685 = vmatprep.subr.bf16.mxu0 0
        %1686 = vmatpush2.bf16.msra.mxu0 0
        %1687 = vmatprep.subr.bf16.mxu0 0
        %1688 = vmatpush2.bf16.msra.mxu0 0
        %1689 = vmatprep.subr.bf16.mxu0 0
        %1690 = vmatpush2.bf16.msra.mxu0 0
        %1691 = vmatprep.subr.bf16.mxu0 0
        %1692 = vmatpush2.bf16.msra.mxu0 0
        %1693 = vmatprep.subr.bf16.mxu0 0
        %1694 = vmatpush2.bf16.msra.mxu0 0
        %1695 = vmatprep.mubr.bf16.mxu0 0
        %1696 = vmatmul.mubr.bf16.gmra.mxu0 %v1599
        %v1697 = vpop.f32.mrf.mxu0
        %v1698 = vadd.f32 %v1565, %v1697
        %v1699 = vpop.f32.mrf.mxu0
        %v1700 = vpop.f32.mrf.mxu0
        %v1701 = vadd.f32 %v1565, %v1700
        %v1702 = vpop.f32.mrf.mxu0
        %1703 = vmatprep.mubr.bf16.mxu0 0
        %1704 = vmatmul.mubr.bf16.gmra.mxu0 %v1600
        %v1705 = vpop.f32.mrf.mxu0
        %v1706 = vadd.f32 %v1565, %v1705
        %v1707 = vpop.f32.mrf.mxu0
        %v1708 = vpop.f32.mrf.mxu0
        %v1709 = vadd.f32 %v1565, %v1708
        %v1710 = vpop.f32.mrf.mxu0
        %1711 = vmatprep.mubr.bf16.mxu0 0
        %1712 = vmatmul.mubr.bf16.gmra.mxu0 %v1601
        %v1713 = vpop.f32.mrf.mxu0
        %v1714 = vadd.f32 %v1565, %v1713
        %v1715 = vpop.f32.mrf.mxu0
        %v1716 = vpop.f32.mrf.mxu0
        %v1717 = vadd.f32 %v1565, %v1716
        %v1718 = vpop.f32.mrf.mxu0
        %1719 = vmatprep.mubr.bf16.mxu0 0
        %1720 = vmatmul.mubr.bf16.gmra.mxu0 %v1602
        %v1721 = vpop.f32.mrf.mxu0
        %v1722 = vadd.f32 %v1565, %v1721
        %v1723 = vpop.f32.mrf.mxu0
        %v1724 = vpop.f32.mrf.mxu0
        %v1725 = vadd.f32 %v1565, %v1724
        %v1726 = vpop.f32.mrf.mxu0
        %1727 = vmatprep.mubr.bf16.mxu0 0
        %1728 = vmatmul.mubr.bf16.gmra.mxu0 %v1603
        %v1729 = vpop.f32.mrf.mxu0
        %v1730 = vadd.f32 %v1565, %v1729
        %v1731 = vpop.f32.mrf.mxu0
        %v1732 = vpop.f32.mrf.mxu0
        %v1733 = vadd.f32 %v1565, %v1732
        %v1734 = vpop.f32.mrf.mxu0
        %1735 = vmatprep.mubr.bf16.mxu0 0
        %1736 = vmatmul.mubr.bf16.gmra.mxu0 %v1604
        %v1737 = vpop.f32.mrf.mxu0
        %v1738 = vadd.f32 %v1565, %v1737
        %v1739 = vpop.f32.mrf.mxu0
        %v1740 = vpop.f32.mrf.mxu0
        %v1741 = vadd.f32 %v1565, %v1740
        %v1742 = vpop.f32.mrf.mxu0
        %1743 = vmatprep.mubr.bf16.mxu0 0
        %1744 = vmatmul.mubr.bf16.gmra.mxu0 %v1605
        %v1745 = vpop.f32.mrf.mxu0
        %v1746 = vadd.f32 %v1565, %v1745
        %v1747 = vpop.f32.mrf.mxu0
        %v1748 = vpop.f32.mrf.mxu0
        %v1749 = vadd.f32 %v1565, %v1748
        %v1750 = vpop.f32.mrf.mxu0
        %1751 = vmatprep.mubr.bf16.mxu0 0
        %1752 = vmatmul.mubr.bf16.gmra.mxu0 %v1606
        %v1753 = vpop.f32.mrf.mxu0
        %v1754 = vadd.f32 %v1565, %v1753
        %v1755 = vpop.f32.mrf.mxu0
        %v1756 = vpop.f32.mrf.mxu0
        %v1757 = vadd.f32 %v1565, %v1756
        %v1758 = vpop.f32.mrf.mxu0
        %1759 = vdwg.mxu0
        %1760 = vst [vmem:[#allocation2] sm:$0xff] %v1698
        %1761 = vst [vmem:[#allocation2 + $0x8] sm:$0xff] %v1701
        %1762 = vst [vmem:[#allocation2 + $0x10] sm:$0xff] %v1706
        %1763 = vst [vmem:[#allocation2 + $0x18] sm:$0xff] %v1709
        %1764 = vst [vmem:[#allocation2 + $0x20] sm:$0xff] %v1714
        %1765 = vst [vmem:[#allocation2 + $0x28] sm:$0xff] %v1717
        %1766 = vst [vmem:[#allocation2 + $0x30] sm:$0xff] %v1722
        %1767 = vst [vmem:[#allocation2 + $0x38] sm:$0xff] %v1725
        %1768 = vst [vmem:[#allocation2 + $0x40] sm:$0xff] %v1730
        %1769 = vst [vmem:[#allocation2 + $0x48] sm:$0xff] %v1733
        %1770 = vst [vmem:[#allocation2 + $0x50] sm:$0xff] %v1738
        %1771 = vst [vmem:[#allocation2 + $0x58] sm:$0xff] %v1741
        %1772 = vst [vmem:[#allocation2 + $0x60] sm:$0xff] %v1746
        %1773 = vst [vmem:[#allocation2 + $0x68] sm:$0xff] %v1749
        %1774 = vst [vmem:[#allocation2 + $0x70] sm:$0xff] %v1754
        %1775 = vst [vmem:[#allocation2 + $0x78] sm:$0xff] %v1757
        %v1776 = vld [vmem:[#allocation14] sm:$0xf]
        %v1777 = vld [vmem:[#allocation14 + $0x4] sm:$0xf]
        %v1778 = vld [vmem:[#allocation14 + $0x8] sm:$0xf]
        %v1779 = vld [vmem:[#allocation14 + $0xc] sm:$0xf]
        %v1780 = vld [vmem:[#allocation14 + $0x10] sm:$0xf]
        %v1781 = vld [vmem:[#allocation14 + $0x14] sm:$0xf]
        %v1782 = vld [vmem:[#allocation14 + $0x18] sm:$0xf]
        %v1783 = vld [vmem:[#allocation14 + $0x1c] sm:$0xf]
        %v1784 = vld [vmem:[#allocation14 + $0x20] sm:$0xf]
        %v1785 = vld [vmem:[#allocation14 + $0x24] sm:$0xf]
        %v1786 = vld [vmem:[#allocation14 + $0x28] sm:$0xf]
        %v1787 = vld [vmem:[#allocation14 + $0x2c] sm:$0xf]
        %v1788 = vld [vmem:[#allocation14 + $0x30] sm:$0xf]
        %v1789 = vld [vmem:[#allocation14 + $0x34] sm:$0xf]
        %v1790 = vld [vmem:[#allocation14 + $0x38] sm:$0xf]
        %v1791 = vld [vmem:[#allocation14 + $0x3c] sm:$0xf]
        %v1792 = vld [vmem:[#allocation2] sm:$0xff]
        %v1793 = vld [vmem:[#allocation2 + $0x8] sm:$0xff]
        %v1794 = vld [vmem:[%s924] sm:$0xff]
        %v1795 = vld [vmem:[%s924 + $0x8] sm:$0xff]
        %v1796 = vsel %vm512, %v1792, %v1794
        %v1797 = vsel %vm512, %v1793, %v1795
        %v1814 = vunpack.c.l.b16 %v1776
        %v1815 = vunpack.c.l.b16 %v1777
        %v1816 = vunpack.c.l.b16 %v1778
        %v1817 = vunpack.c.l.b16 %v1779
        %v1818 = vunpack.c.l.b16 %v1780
        %v1819 = vunpack.c.l.b16 %v1781
        %v1820 = vunpack.c.l.b16 %v1782
        %v1821 = vunpack.c.l.b16 %v1783
        %v1822 = vunpack.c.l.b16 %v1784
        %v1823 = vunpack.c.l.b16 %v1785
        %v1824 = vunpack.c.l.b16 %v1786
        %v1825 = vunpack.c.l.b16 %v1787
        %v1826 = vunpack.c.l.b16 %v1788
        %v1827 = vunpack.c.l.b16 %v1789
        %v1828 = vunpack.c.l.b16 %v1790
        %v1829 = vunpack.c.l.b16 %v1791
        %v1830 = vpack.c.b16 %v1815, %v1814
        %v1831 = vpack.c.b16 %v1817, %v1816
        %v1832 = vpack.c.b16 %v1819, %v1818
        %v1833 = vpack.c.b16 %v1821, %v1820
        %v1834 = vpack.c.b16 %v1823, %v1822
        %v1835 = vpack.c.b16 %v1825, %v1824
        %v1836 = vpack.c.b16 %v1827, %v1826
        %v1837 = vpack.c.b16 %v1829, %v1828
        %1846 = vmatprep.subr.bf16.mxu0 0
        %1847 = vmatpush1.bf16.msra.mxu0 %v1837
        %1848 = vmatprep.subr.bf16.mxu0 0
        %1849 = vmatpush1.bf16.msra.mxu0 %v1836
        %1850 = vmatprep.subr.bf16.mxu0 0
        %1851 = vmatpush1.bf16.msra.mxu0 %v1835
        %1852 = vmatprep.subr.bf16.mxu0 0
        %1853 = vmatpush1.bf16.msra.mxu0 %v1834
        %1854 = vmatprep.subr.bf16.mxu0 0
        %1855 = vmatpush1.bf16.msra.mxu0 %v1833
        %1856 = vmatprep.subr.bf16.mxu0 0
        %1857 = vmatpush1.bf16.msra.mxu0 %v1832
        %1858 = vmatprep.subr.bf16.mxu0 0
        %1859 = vmatpush1.bf16.msra.mxu0 %v1831
        %1860 = vmatprep.subr.bf16.mxu0 0
        %1861 = vmatpush1.bf16.msra.mxu0 %v1830
        %1862 = vmatprep.subr.bf16.mxu0 0
        %1863 = vmatpush2.bf16.msra.mxu0 0
        %1864 = vmatprep.subr.bf16.mxu0 0
        %1865 = vmatpush2.bf16.msra.mxu0 0
        %1866 = vmatprep.subr.bf16.mxu0 0
        %1867 = vmatpush2.bf16.msra.mxu0 0
        %1868 = vmatprep.subr.bf16.mxu0 0
        %1869 = vmatpush2.bf16.msra.mxu0 0
        %1870 = vmatprep.subr.bf16.mxu0 0
        %1871 = vmatpush2.bf16.msra.mxu0 0
        %1872 = vmatprep.subr.bf16.mxu0 0
        %1873 = vmatpush2.bf16.msra.mxu0 0
        %1874 = vmatprep.subr.bf16.mxu0 0
        %1875 = vmatpush2.bf16.msra.mxu0 0
        %1876 = vmatprep.subr.bf16.mxu0 0
        %1877 = vmatpush2.bf16.msra.mxu0 0
        %1878 = vmatprep.mubr.bf16.mxu0 0
        %1879 = vmatmul.mubr.bf16.gmra.mxu0 0
        %v1880 = vpop.f32.mrf.mxu0
        %v1881 = vadd.f32 0.0, %v1880
        %v1882 = vpop.f32.mrf.mxu0
        %v1883 = vpop.f32.mrf.mxu0
        %v1884 = vadd.f32 0.0, %v1883
        %v1885 = vpop.f32.mrf.mxu0
        %1886 = vdwg.mxu0
        %v1887 = vadd.f32 %v1796, %v1881
        %v1888 = vadd.f32 %v1797, %v1884
        %v1889 = vtanh.pop %v1887
        %v1890 = vtanh.pop %v1888
        %v1891 = vpack.c.bf16 %v1890, %v1889
        %v1893 = vunpack.c.l.b16 %v1891
        %v1894 = vunpack.c.h.b16 %v1891
        %v1895 = vpack.c.b16 %v1893, %v1893
        %v1896 = vpack.c.b16 %v1894, %v1894
        %1899 = vst [vmem:[#allocation3] sm:$0xf] %v1895
        %1900 = vst [vmem:[#allocation3 + $0x4] sm:$0xf] %v1896
        %1901 = vst [vmem:[%s1032] sm:$0xf] %v1895
        %1902 = vst [vmem:[%s1032 + $0x4] sm:$0xf] %v1896
        %v1903 = vld [vmem:[%s1035] sm:$0xff]
        %v1904 = vld [vmem:[%s1035 + $0x8] sm:$0xff]
        %v1905 = vld [vmem:[%s1038] sm:$0xff]
        %v1906 = vld [vmem:[%s1038 + $0x8] sm:$0xff]
        %v1907 = vsel %vm512, %v1903, %v1905
        %v1908 = vsel %vm512, %v1904, %v1906
        %1909 = vmatprep.subr.bf16.mxu0 0
        %1910 = vmatpush1.bf16.msra.mxu0 %v1837
        %1911 = vmatprep.subr.bf16.mxu0 0
        %1912 = vmatpush1.bf16.msra.mxu0 %v1836
        %1913 = vmatprep.subr.bf16.mxu0 0
        %1914 = vmatpush1.bf16.msra.mxu0 %v1835
        %1915 = vmatprep.subr.bf16.mxu0 0
        %1916 = vmatpush1.bf16.msra.mxu0 %v1834
        %1917 = vmatprep.subr.bf16.mxu0 0
        %1918 = vmatpush1.bf16.msra.mxu0 %v1833
        %1919 = vmatprep.subr.bf16.mxu0 0
        %1920 = vmatpush1.bf16.msra.mxu0 %v1832
        %1921 = vmatprep.subr.bf16.mxu0 0
        %1922 = vmatpush1.bf16.msra.mxu0 %v1831
        %1923 = vmatprep.subr.bf16.mxu0 0
        %1924 = vmatpush1.bf16.msra.mxu0 %v1830
        %1925 = vmatprep.subr.bf16.mxu0 0
        %1926 = vmatpush2.bf16.msra.mxu0 0
        %1927 = vmatprep.subr.bf16.mxu0 0
        %1928 = vmatpush2.bf16.msra.mxu0 0
        %1929 = vmatprep.subr.bf16.mxu0 0
        %1930 = vmatpush2.bf16.msra.mxu0 0
        %1931 = vmatprep.subr.bf16.mxu0 0
        %1932 = vmatpush2.bf16.msra.mxu0 0
        %1933 = vmatprep.subr.bf16.mxu0 0
        %1934 = vmatpush2.bf16.msra.mxu0 0
        %1935 = vmatprep.subr.bf16.mxu0 0
        %1936 = vmatpush2.bf16.msra.mxu0 0
        %1937 = vmatprep.subr.bf16.mxu0 0
        %1938 = vmatpush2.bf16.msra.mxu0 0
        %1939 = vmatprep.subr.bf16.mxu0 0
        %1940 = vmatpush2.bf16.msra.mxu0 0
        %1941 = vmatprep.mubr.bf16.mxu0 0
        %1942 = vmatmul.mubr.bf16.gmra.mxu0 %v1891
        %v1943 = vpop.f32.mrf.mxu0
        %v1944 = vadd.f32 0.0, %v1943
        %v1945 = vpop.f32.mrf.mxu0
        %v1946 = vpop.f32.mrf.mxu0
        %v1947 = vadd.f32 0.0, %v1946
        %v1948 = vpop.f32.mrf.mxu0
        %1949 = vdwg.mxu0
        %v1950 = vadd.f32 %v1907, %v1944
        %v1951 = vadd.f32 %v1908, %v1947
        %v1952 = vtanh.pop %v1950
        %v1953 = vtanh.pop %v1951
        %v1954 = vpack.c.bf16 %v1953, %v1952
        %v1956 = vunpack.c.l.b16 %v1954
        %v1957 = vunpack.c.h.b16 %v1954
        %v1958 = vpack.c.b16 %v1956, %v1956
        %v1959 = vpack.c.b16 %v1957, %v1957
        %1962 = vst [vmem:[%s1096] sm:$0xf] %v1958
        %1963 = vst [vmem:[%s1096 + $0x4] sm:$0xf] %v1959
        %1964 = vst [vmem:[%s1099] sm:$0xf] %v1958
        %1965 = vst [vmem:[%s1099 + $0x4] sm:$0xf] %v1959
        %v1966 = vld [vmem:[%s1102] sm:$0xff]
        %v1967 = vld [vmem:[%s1102 + $0x8] sm:$0xff]
        %v1968 = vld [vmem:[%s1105] sm:$0xff]
        %v1969 = vld [vmem:[%s1105 + $0x8] sm:$0xff]
        %v1970 = vsel %vm512, %v1966, %v1968
        %v1971 = vsel %vm512, %v1967, %v1969
        %1972 = vmatprep.subr.bf16.mxu0 0
        %1973 = vmatpush1.bf16.msra.mxu0 %v1837
        %1974 = vmatprep.subr.bf16.mxu0 0
        %1975 = vmatpush1.bf16.msra.mxu0 %v1836
        %1976 = vmatprep.subr.bf16.mxu0 0
        %1977 = vmatpush1.bf16.msra.mxu0 %v1835
        %1978 = vmatprep.subr.bf16.mxu0 0
        %1979 = vmatpush1.bf16.msra.mxu0 %v1834
        %1980 = vmatprep.subr.bf16.mxu0 0
        %1981 = vmatpush1.bf16.msra.mxu0 %v1833
        %1982 = vmatprep.subr.bf16.mxu0 0
        %1983 = vmatpush1.bf16.msra.mxu0 %v1832
        %1984 = vmatprep.subr.bf16.mxu0 0
        %1985 = vmatpush1.bf16.msra.mxu0 %v1831
        %1986 = vmatprep.subr.bf16.mxu0 0
        %1987 = vmatpush1.bf16.msra.mxu0 %v1830
        %1988 = vmatprep.subr.bf16.mxu0 0
        %1989 = vmatpush2.bf16.msra.mxu0 0
        %1990 = vmatprep.subr.bf16.mxu0 0
        %1991 = vmatpush2.bf16.msra.mxu0 0
        %1992 = vmatprep.subr.bf16.mxu0 0
        %1993 = vmatpush2.bf16.msra.mxu0 0
        %1994 = vmatprep.subr.bf16.mxu0 0
        %1995 = vmatpush2.bf16.msra.mxu0 0
        %1996 = vmatprep.subr.bf16.mxu0 0
        %1997 = vmatpush2.bf16.msra.mxu0 0
        %1998 = vmatprep.subr.bf16.mxu0 0
        %1999 = vmatpush2.bf16.msra.mxu0 0
        %2000 = vmatprep.subr.bf16.mxu0 0
        %2001 = vmatpush2.bf16.msra.mxu0 0
        %2002 = vmatprep.subr.bf16.mxu0 0
        %2003 = vmatpush2.bf16.msra.mxu0 0
        %2004 = vmatprep.mubr.bf16.mxu0 0
        %2005 = vmatmul.mubr.bf16.gmra.mxu0 %v1954
        %v2006 = vpop.f32.mrf.mxu0
        %v2007 = vadd.f32 0.0, %v2006
        %v2008 = vpop.f32.mrf.mxu0
        %v2009 = vpop.f32.mrf.mxu0
        %v2010 = vadd.f32 0.0, %v2009
        %v2011 = vpop.f32.mrf.mxu0
        %2012 = vdwg.mxu0
        %v2013 = vadd.f32 %v1970, %v2007
        %v2014 = vadd.f32 %v1971, %v2010
        %v2015 = vtanh.pop %v2013
        %v2016 = vtanh.pop %v2014
        %v2017 = vpack.c.bf16 %v2016, %v2015
        %v2019 = vunpack.c.l.b16 %v2017
        %v2020 = vunpack.c.h.b16 %v2017
        %v2021 = vpack.c.b16 %v2019, %v2019
        %v2022 = vpack.c.b16 %v2020, %v2020
        %2025 = vst [vmem:[%s1163] sm:$0xf] %v2021
        %2026 = vst [vmem:[%s1163 + $0x4] sm:$0xf] %v2022
        %2027 = vst [vmem:[%s1166] sm:$0xf] %v2021
        %2028 = vst [vmem:[%s1166 + $0x4] sm:$0xf] %v2022
        %v2029 = vld [vmem:[%s1169] sm:$0xff]
        %v2030 = vld [vmem:[%s1169 + $0x8] sm:$0xff]
        %v2031 = vld [vmem:[%s1172] sm:$0xff]
        %v2032 = vld [vmem:[%s1172 + $0x8] sm:$0xff]
        %v2033 = vsel %vm512, %v2029, %v2031
        %v2034 = vsel %vm512, %v2030, %v2032
        %2035 = vmatprep.subr.bf16.mxu0 0
        %2036 = vmatpush1.bf16.msra.mxu0 %v1837
        %2037 = vmatprep.subr.bf16.mxu0 0
        %2038 = vmatpush1.bf16.msra.mxu0 %v1836
        %2039 = vmatprep.subr.bf16.mxu0 0
        %2040 = vmatpush1.bf16.msra.mxu0 %v1835
        %2041 = vmatprep.subr.bf16.mxu0 0
        %2042 = vmatpush1.bf16.msra.mxu0 %v1834
        %2043 = vmatprep.subr.bf16.mxu0 0
        %2044 = vmatpush1.bf16.msra.mxu0 %v1833
        %2045 = vmatprep.subr.bf16.mxu0 0
        %2046 = vmatpush1.bf16.msra.mxu0 %v1832
        %2047 = vmatprep.subr.bf16.mxu0 0
        %2048 = vmatpush1.bf16.msra.mxu0 %v1831
        %2049 = vmatprep.subr.bf16.mxu0 0
        %2050 = vmatpush1.bf16.msra.mxu0 %v1830
        %2051 = vmatprep.subr.bf16.mxu0 0
        %2052 = vmatpush2.bf16.msra.mxu0 0
        %2053 = vmatprep.subr.bf16.mxu0 0
        %2054 = vmatpush2.bf16.msra.mxu0 0
        %2055 = vmatprep.subr.bf16.mxu0 0
        %2056 = vmatpush2.bf16.msra.mxu0 0
        %2057 = vmatprep.subr.bf16.mxu0 0
        %2058 = vmatpush2.bf16.msra.mxu0 0
        %2059 = vmatprep.subr.bf16.mxu0 0
        %2060 = vmatpush2.bf16.msra.mxu0 0
        %2061 = vmatprep.subr.bf16.mxu0 0
        %2062 = vmatpush2.bf16.msra.mxu0 0
        %2063 = vmatprep.subr.bf16.mxu0 0
        %2064 = vmatpush2.bf16.msra.mxu0 0
        %2065 = vmatprep.subr.bf16.mxu0 0
        %2066 = vmatpush2.bf16.msra.mxu0 0
        %2067 = vmatprep.mubr.bf16.mxu0 0
        %2068 = vmatmul.mubr.bf16.gmra.mxu0 %v2017
        %v2069 = vpop.f32.mrf.mxu0
        %v2070 = vadd.f32 0.0, %v2069
        %v2071 = vpop.f32.mrf.mxu0
        %v2072 = vpop.f32.mrf.mxu0
        %v2073 = vadd.f32 0.0, %v2072
        %v2074 = vpop.f32.mrf.mxu0
        %2075 = vdwg.mxu0
        %v2076 = vadd.f32 %v2033, %v2070
        %v2077 = vadd.f32 %v2034, %v2073
        %v2078 = vtanh.pop %v2076
        %v2079 = vtanh.pop %v2077
        %v2080 = vpack.c.bf16 %v2079, %v2078
        %v2082 = vunpack.c.l.b16 %v2080
        %v2083 = vunpack.c.h.b16 %v2080
        %v2084 = vpack.c.b16 %v2082, %v2082
        %v2085 = vpack.c.b16 %v2083, %v2083
        %2088 = vst [vmem:[%s1230] sm:$0xf] %v2084
        %2089 = vst [vmem:[%s1230 + $0x4] sm:$0xf] %v2085
        %2090 = vst [vmem:[%s1233] sm:$0xf] %v2084
        %2091 = vst [vmem:[%s1233 + $0x4] sm:$0xf] %v2085
        %v2092 = vld [vmem:[%s1172] sm:$0xff]
        %v2093 = vld [vmem:[%s1172 + $0x8] sm:$0xff]
        %v2094 = vld [vmem:[%s1169] sm:$0xff]
        %v2095 = vld [vmem:[%s1169 + $0x8] sm:$0xff]
        %v2096 = vsel %vm512, %v2092, %v2094
        %v2097 = vsel %vm512, %v2093, %v2095
        %2098 = vmatprep.subr.bf16.mxu0 0
        %2099 = vmatpush1.bf16.msra.mxu0 %v1837
        %2100 = vmatprep.subr.bf16.mxu0 0
        %2101 = vmatpush1.bf16.msra.mxu0 %v1836
        %2102 = vmatprep.subr.bf16.mxu0 0
        %2103 = vmatpush1.bf16.msra.mxu0 %v1835
        %2104 = vmatprep.subr.bf16.mxu0 0
        %2105 = vmatpush1.bf16.msra.mxu0 %v1834
        %2106 = vmatprep.subr.bf16.mxu0 0
        %2107 = vmatpush1.bf16.msra.mxu0 %v1833
        %2108 = vmatprep.subr.bf16.mxu0 0
        %2109 = vmatpush1.bf16.msra.mxu0 %v1832
        %2110 = vmatprep.subr.bf16.mxu0 0
        %2111 = vmatpush1.bf16.msra.mxu0 %v1831
        %2112 = vmatprep.subr.bf16.mxu0 0
        %2113 = vmatpush1.bf16.msra.mxu0 %v1830
        %2114 = vmatprep.subr.bf16.mxu0 0
        %2115 = vmatpush2.bf16.msra.mxu0 0
        %2116 = vmatprep.subr.bf16.mxu0 0
        %2117 = vmatpush2.bf16.msra.mxu0 0
        %2118 = vmatprep.subr.bf16.mxu0 0
        %2119 = vmatpush2.bf16.msra.mxu0 0
        %2120 = vmatprep.subr.bf16.mxu0 0
        %2121 = vmatpush2.bf16.msra.mxu0 0
        %2122 = vmatprep.subr.bf16.mxu0 0
        %2123 = vmatpush2.bf16.msra.mxu0 0
        %2124 = vmatprep.subr.bf16.mxu0 0
        %2125 = vmatpush2.bf16.msra.mxu0 0
        %2126 = vmatprep.subr.bf16.mxu0 0
        %2127 = vmatpush2.bf16.msra.mxu0 0
        %2128 = vmatprep.subr.bf16.mxu0 0
        %2129 = vmatpush2.bf16.msra.mxu0 0
        %2130 = vmatprep.mubr.bf16.mxu0 0
        %2131 = vmatmul.mubr.bf16.gmra.mxu0 %v2080
        %v2132 = vpop.f32.mrf.mxu0
        %v2133 = vadd.f32 0.0, %v2132
        %v2134 = vpop.f32.mrf.mxu0
        %v2135 = vpop.f32.mrf.mxu0
        %v2136 = vadd.f32 0.0, %v2135
        %v2137 = vpop.f32.mrf.mxu0
        %2138 = vdwg.mxu0
        %v2139 = vadd.f32 %v2096, %v2133
        %v2140 = vadd.f32 %v2097, %v2136
        %v2141 = vtanh.pop %v2139
        %v2142 = vtanh.pop %v2140
        %v2143 = vpack.c.bf16 %v2142, %v2141
        %v2145 = vunpack.c.l.b16 %v2143
        %v2146 = vunpack.c.h.b16 %v2143
        %v2147 = vpack.c.b16 %v2145, %v2145
        %v2148 = vpack.c.b16 %v2146, %v2146
        %2151 = vst [vmem:[%s1295] sm:$0xf] %v2147
        %2152 = vst [vmem:[%s1295 + $0x4] sm:$0xf] %v2148
        %2153 = vst [vmem:[%s1298] sm:$0xf] %v2147
        %2154 = vst [vmem:[%s1298 + $0x4] sm:$0xf] %v2148
        %v2155 = vld [vmem:[%s1105] sm:$0xff]
        %v2156 = vld [vmem:[%s1105 + $0x8] sm:$0xff]
        %v2157 = vld [vmem:[%s1102] sm:$0xff]
        %v2158 = vld [vmem:[%s1102 + $0x8] sm:$0xff]
        %v2159 = vsel %vm512, %v2155, %v2157
        %v2160 = vsel %vm512, %v2156, %v2158
        %2161 = vmatprep.subr.bf16.mxu0 0
        %2162 = vmatpush1.bf16.msra.mxu0 %v1837
        %2163 = vmatprep.subr.bf16.mxu0 0
        %2164 = vmatpush1.bf16.msra.mxu0 %v1836
        %2165 = vmatprep.subr.bf16.mxu0 0
        %2166 = vmatpush1.bf16.msra.mxu0 %v1835
        %2167 = vmatprep.subr.bf16.mxu0 0
        %2168 = vmatpush1.bf16.msra.mxu0 %v1834
        %2169 = vmatprep.subr.bf16.mxu0 0
        %2170 = vmatpush1.bf16.msra.mxu0 %v1833
        %2171 = vmatprep.subr.bf16.mxu0 0
        %2172 = vmatpush1.bf16.msra.mxu0 %v1832
        %2173 = vmatprep.subr.bf16.mxu0 0
        %2174 = vmatpush1.bf16.msra.mxu0 %v1831
        %2175 = vmatprep.subr.bf16.mxu0 0
        %2176 = vmatpush1.bf16.msra.mxu0 %v1830
        %2177 = vmatprep.subr.bf16.mxu0 0
        %2178 = vmatpush2.bf16.msra.mxu0 0
        %2179 = vmatprep.subr.bf16.mxu0 0
        %2180 = vmatpush2.bf16.msra.mxu0 0
        %2181 = vmatprep.subr.bf16.mxu0 0
        %2182 = vmatpush2.bf16.msra.mxu0 0
        %2183 = vmatprep.subr.bf16.mxu0 0
        %2184 = vmatpush2.bf16.msra.mxu0 0
        %2185 = vmatprep.subr.bf16.mxu0 0
        %2186 = vmatpush2.bf16.msra.mxu0 0
        %2187 = vmatprep.subr.bf16.mxu0 0
        %2188 = vmatpush2.bf16.msra.mxu0 0
        %2189 = vmatprep.subr.bf16.mxu0 0
        %2190 = vmatpush2.bf16.msra.mxu0 0
        %2191 = vmatprep.subr.bf16.mxu0 0
        %2192 = vmatpush2.bf16.msra.mxu0 0
        %2193 = vmatprep.mubr.bf16.mxu0 0
        %2194 = vmatmul.mubr.bf16.gmra.mxu0 %v2143
        %v2195 = vpop.f32.mrf.mxu0
        %v2196 = vadd.f32 0.0, %v2195
        %v2197 = vpop.f32.mrf.mxu0
        %v2198 = vpop.f32.mrf.mxu0
        %v2199 = vadd.f32 0.0, %v2198
        %v2200 = vpop.f32.mrf.mxu0
        %2201 = vdwg.mxu0
        %v2202 = vadd.f32 %v2159, %v2196
        %v2203 = vadd.f32 %v2160, %v2199
        %v2204 = vtanh.pop %v2202
        %v2205 = vtanh.pop %v2203
        %v2206 = vpack.c.bf16 %v2205, %v2204
        %v2208 = vunpack.c.l.b16 %v2206
        %v2209 = vunpack.c.h.b16 %v2206
        %v2210 = vpack.c.b16 %v2208, %v2208
        %v2211 = vpack.c.b16 %v2209, %v2209
        %2214 = vst [vmem:[%s1360] sm:$0xf] %v2210
        %2215 = vst [vmem:[%s1360 + $0x4] sm:$0xf] %v2211
        %2216 = vst [vmem:[%s1363] sm:$0xf] %v2210
        %2217 = vst [vmem:[%s1363 + $0x4] sm:$0xf] %v2211
        %v2218 = vld [vmem:[%s1038] sm:$0xff]
        %v2219 = vld [vmem:[%s1038 + $0x8] sm:$0xff]
        %v2220 = vld [vmem:[%s1035] sm:$0xff]
        %v2221 = vld [vmem:[%s1035 + $0x8] sm:$0xff]
        %v2222 = vsel %vm512, %v2218, %v2220
        %v2223 = vsel %vm512, %v2219, %v2221
        %2224 = vmatprep.subr.bf16.mxu0 0
        %2225 = vmatpush1.bf16.msra.mxu0 %v1837
        %2226 = vmatprep.subr.bf16.mxu0 0
        %2227 = vmatpush1.bf16.msra.mxu0 %v1836
        %2228 = vmatprep.subr.bf16.mxu0 0
        %2229 = vmatpush1.bf16.msra.mxu0 %v1835
        %2230 = vmatprep.subr.bf16.mxu0 0
        %2231 = vmatpush1.bf16.msra.mxu0 %v1834
        %2232 = vmatprep.subr.bf16.mxu0 0
        %2233 = vmatpush1.bf16.msra.mxu0 %v1833
        %2234 = vmatprep.subr.bf16.mxu0 0
        %2235 = vmatpush1.bf16.msra.mxu0 %v1832
        %2236 = vmatprep.subr.bf16.mxu0 0
        %2237 = vmatpush1.bf16.msra.mxu0 %v1831
        %2238 = vmatprep.subr.bf16.mxu0 0
        %2239 = vmatpush1.bf16.msra.mxu0 %v1830
        %2240 = vmatprep.subr.bf16.mxu0 0
        %2241 = vmatpush2.bf16.msra.mxu0 0
        %2242 = vmatprep.subr.bf16.mxu0 0
        %2243 = vmatpush2.bf16.msra.mxu0 0
        %2244 = vmatprep.subr.bf16.mxu0 0
        %2245 = vmatpush2.bf16.msra.mxu0 0
        %2246 = vmatprep.subr.bf16.mxu0 0
        %2247 = vmatpush2.bf16.msra.mxu0 0
        %2248 = vmatprep.subr.bf16.mxu0 0
        %2249 = vmatpush2.bf16.msra.mxu0 0
        %2250 = vmatprep.subr.bf16.mxu0 0
        %2251 = vmatpush2.bf16.msra.mxu0 0
        %2252 = vmatprep.subr.bf16.mxu0 0
        %2253 = vmatpush2.bf16.msra.mxu0 0
        %2254 = vmatprep.subr.bf16.mxu0 0
        %2255 = vmatpush2.bf16.msra.mxu0 0
        %2256 = vmatprep.mubr.bf16.mxu0 0
        %2257 = vmatmul.mubr.bf16.gmra.mxu0 %v2206
        %v2258 = vpop.f32.mrf.mxu0
        %v2259 = vadd.f32 0.0, %v2258
        %v2260 = vpop.f32.mrf.mxu0
        %v2261 = vpop.f32.mrf.mxu0
        %v2262 = vadd.f32 0.0, %v2261
        %v2263 = vpop.f32.mrf.mxu0
        %2264 = vdwg.mxu0
        %v2265 = vadd.f32 %v2222, %v2259
        %v2266 = vadd.f32 %v2223, %v2262
        %v2267 = vtanh.pop %v2265
        %v2268 = vtanh.pop %v2266
        %v2269 = vpack.c.bf16 %v2268, %v2267
        %v2271 = vunpack.c.l.b16 %v2269
        %v2272 = vunpack.c.h.b16 %v2269
        %v2273 = vpack.c.b16 %v2271, %v2271
        %v2274 = vpack.c.b16 %v2272, %v2272
        %2277 = vst [vmem:[%s1425] sm:$0xf] %v2273
        %2278 = vst [vmem:[%s1425 + $0x4] sm:$0xf] %v2274
        %2279 = vst [vmem:[%s1428] sm:$0xf] %v2273
        %2280 = vst [vmem:[%s1428 + $0x4] sm:$0xf] %v2274
        %v2281 = vld [vmem:[%s924] sm:$0xff]
        %v2282 = vld [vmem:[%s924 + $0x8] sm:$0xff]
        %v2283 = vld [vmem:[#allocation2] sm:$0xff]
        %v2284 = vld [vmem:[#allocation2 + $0x8] sm:$0xff]
        %v2285 = vsel %vm512, %v2281, %v2283
        %v2286 = vsel %vm512, %v2282, %v2284
        %2287 = vmatprep.subr.bf16.mxu0 0
        %2288 = vmatpush1.bf16.msra.mxu0 %v1837
        %2289 = vmatprep.subr.bf16.mxu0 0
        %2290 = vmatpush1.bf16.msra.mxu0 %v1836
        %2291 = vmatprep.subr.bf16.mxu0 0
        %2292 = vmatpush1.bf16.msra.mxu0 %v1835
        %2293 = vmatprep.subr.bf16.mxu0 0
        %2294 = vmatpush1.bf16.msra.mxu0 %v1834
        %2295 = vmatprep.subr.bf16.mxu0 0
        %2296 = vmatpush1.bf16.msra.mxu0 %v1833
        %2297 = vmatprep.subr.bf16.mxu0 0
        %2298 = vmatpush1.bf16.msra.mxu0 %v1832
        %2299 = vmatprep.subr.bf16.mxu0 0
        %2300 = vmatpush1.bf16.msra.mxu0 %v1831
        %2301 = vmatprep.subr.bf16.mxu0 0
        %2302 = vmatpush1.bf16.msra.mxu0 %v1830
        %2303 = vmatprep.subr.bf16.mxu0 0
        %2304 = vmatpush2.bf16.msra.mxu0 0
        %2305 = vmatprep.subr.bf16.mxu0 0
        %2306 = vmatpush2.bf16.msra.mxu0 0
        %2307 = vmatprep.subr.bf16.mxu0 0
        %2308 = vmatpush2.bf16.msra.mxu0 0
        %2309 = vmatprep.subr.bf16.mxu0 0
        %2310 = vmatpush2.bf16.msra.mxu0 0
        %2311 = vmatprep.subr.bf16.mxu0 0
        %2312 = vmatpush2.bf16.msra.mxu0 0
        %2313 = vmatprep.subr.bf16.mxu0 0
        %2314 = vmatpush2.bf16.msra.mxu0 0
        %2315 = vmatprep.subr.bf16.mxu0 0
        %2316 = vmatpush2.bf16.msra.mxu0 0
        %2317 = vmatprep.subr.bf16.mxu0 0
        %2318 = vmatpush2.bf16.msra.mxu0 0
        %2319 = vmatprep.mubr.bf16.mxu0 0
        %2320 = vmatmul.mubr.bf16.gmra.mxu0 %v2269
        %v2321 = vpop.f32.mrf.mxu0
        %v2322 = vadd.f32 0.0, %v2321
        %v2323 = vpop.f32.mrf.mxu0
        %v2324 = vpop.f32.mrf.mxu0
        %v2325 = vadd.f32 0.0, %v2324
        %v2326 = vpop.f32.mrf.mxu0
        %2327 = vdwg.mxu0
        %v2328 = vadd.f32 %v2285, %v2322
        %v2329 = vadd.f32 %v2286, %v2325
        %v2330 = vtanh.pop %v2328
        %v2331 = vtanh.pop %v2329
        %v2332 = vpack.c.bf16 %v2331, %v2330
        %v2334 = vunpack.c.l.b16 %v2332
        %v2335 = vunpack.c.h.b16 %v2332
        %v2336 = vpack.c.b16 %v2334, %v2334
        %v2337 = vpack.c.b16 %v2335, %v2335
        %2340 = vst [vmem:[%s1490] sm:$0xf] %v2336
        %2341 = vst [vmem:[%s1490 + $0x4] sm:$0xf] %v2337
        %2342 = vst [vmem:[#allocation4] sm:$0xf] %v2336
        %2343 = vst [vmem:[#allocation4 + $0x4] sm:$0xf] %v2337
        %v2344 = vld [vmem:[#allocation3] sm:$0xf]
        %v2345 = vld [vmem:[#allocation3 + $0x4] sm:$0xf]
        %v2346 = vld [vmem:[#allocation3 + $0x8] sm:$0xf]
        %v2347 = vld [vmem:[#allocation3 + $0xc] sm:$0xf]
        %v2348 = vld [vmem:[#allocation3 + $0x10] sm:$0xf]
        %v2349 = vld [vmem:[#allocation3 + $0x14] sm:$0xf]
        %v2350 = vld [vmem:[#allocation3 + $0x18] sm:$0xf]
        %v2351 = vld [vmem:[#allocation3 + $0x1c] sm:$0xf]
        %v2352 = vld [vmem:[#allocation3 + $0x20] sm:$0xf]
        %v2353 = vld [vmem:[#allocation3 + $0x24] sm:$0xf]
        %v2354 = vld [vmem:[#allocation3 + $0x28] sm:$0xf]
        %v2355 = vld [vmem:[#allocation3 + $0x2c] sm:$0xf]
        %v2356 = vld [vmem:[#allocation3 + $0x30] sm:$0xf]
        %v2357 = vld [vmem:[#allocation3 + $0x34] sm:$0xf]
        %v2358 = vld [vmem:[#allocation3 + $0x38] sm:$0xf]
        %v2359 = vld [vmem:[#allocation3 + $0x3c] sm:$0xf]
        %v2360 = vld [vmem:[#allocation4] sm:$0xf]
        %v2361 = vld [vmem:[#allocation4 + $0x4] sm:$0xf]
        %v2362 = vld [vmem:[#allocation4 + $0x8] sm:$0xf]
        %v2363 = vld [vmem:[#allocation4 + $0xc] sm:$0xf]
        %v2364 = vld [vmem:[#allocation4 + $0x10] sm:$0xf]
        %v2365 = vld [vmem:[#allocation4 + $0x14] sm:$0xf]
        %v2366 = vld [vmem:[#allocation4 + $0x18] sm:$0xf]
        %v2367 = vld [vmem:[#allocation4 + $0x1c] sm:$0xf]
        %v2368 = vld [vmem:[#allocation4 + $0x20] sm:$0xf]
        %v2369 = vld [vmem:[#allocation4 + $0x24] sm:$0xf]
        %v2370 = vld [vmem:[#allocation4 + $0x28] sm:$0xf]
        %v2371 = vld [vmem:[#allocation4 + $0x2c] sm:$0xf]
        %v2372 = vld [vmem:[#allocation4 + $0x30] sm:$0xf]
        %v2373 = vld [vmem:[#allocation4 + $0x34] sm:$0xf]
        %v2374 = vld [vmem:[#allocation4 + $0x38] sm:$0xf]
        %v2375 = vld [vmem:[#allocation4 + $0x3c] sm:$0xf]
        %v2376 = vsel %vm1527, %v2344, %v2360
        %v2377 = vsel %vm1527, %v2345, %v2361
        %v2378 = vsel %vm1527, %v2346, %v2362
        %v2379 = vsel %vm1527, %v2347, %v2363
        %v2380 = vsel %vm1527, %v2348, %v2364
        %v2381 = vsel %vm1527, %v2349, %v2365
        %v2382 = vsel %vm1527, %v2350, %v2366
        %v2383 = vsel %vm1527, %v2351, %v2367
        %v2384 = vsel %vm1527, %v2352, %v2368
        %v2385 = vsel %vm1527, %v2353, %v2369
        %v2386 = vsel %vm1527, %v2354, %v2370
        %v2387 = vsel %vm1527, %v2355, %v2371
        %v2388 = vsel %vm1527, %v2356, %v2372
        %v2389 = vsel %vm1527, %v2357, %v2373
        %v2390 = vsel %vm1527, %v2358, %v2374
        %v2391 = vsel %vm1527, %v2359, %v2375
        %v2392 = vunpack.c.l.bf16 %v2376
        %v2393 = vunpack.c.l.bf16 %v2377
        %v2394 = vunpack.c.l.bf16 %v2378
        %v2395 = vunpack.c.l.bf16 %v2379
        %v2396 = vunpack.c.l.bf16 %v2380
        %v2397 = vunpack.c.l.bf16 %v2381
        %v2398 = vunpack.c.l.bf16 %v2382
        %v2399 = vunpack.c.l.bf16 %v2383
        %v2400 = vunpack.c.l.bf16 %v2384
        %v2401 = vunpack.c.l.bf16 %v2385
        %v2402 = vunpack.c.l.bf16 %v2386
        %v2403 = vunpack.c.l.bf16 %v2387
        %v2404 = vunpack.c.l.bf16 %v2388
        %v2405 = vunpack.c.l.bf16 %v2389
        %v2406 = vunpack.c.l.bf16 %v2390
        %v2407 = vunpack.c.l.bf16 %v2391
        %v2408 = vld [vmem:[%s9] sm:$0x1]
        %v2409 = vunpack.c.l.bf16 %v2408
        %v2410 = vlaneseq
        %v2411 = vshrl.u32 %v2410, 7
        %v2412 = vsub.s32 0, %v2411
        %v2413 = vrot.slane %v2409, %v2412
        %v2414 = vmul.f32 %v2392, %v2413
        %v2415 = vmul.f32 %v2393, %v2413
        %v2416 = vmul.f32 %v2394, %v2413
        %v2417 = vmul.f32 %v2395, %v2413
        %v2418 = vmul.f32 %v2396, %v2413
        %v2419 = vmul.f32 %v2397, %v2413
        %v2420 = vmul.f32 %v2398, %v2413
        %v2421 = vmul.f32 %v2399, %v2413
        %v2422 = vmul.f32 %v2400, %v2413
        %v2423 = vmul.f32 %v2401, %v2413
        %v2424 = vmul.f32 %v2402, %v2413
        %v2425 = vmul.f32 %v2403, %v2413
        %v2426 = vmul.f32 %v2404, %v2413
        %v2427 = vmul.f32 %v2405, %v2413
        %v2428 = vmul.f32 %v2406, %v2413
        %v2429 = vmul.f32 %v2407, %v2413
        %2430 = vadd.xlane.f32.xlu0 %v2414
        %v2431 = vpop.xlane.xlu0 %2430
        %2432 = vadd.xlane.f32.xlu0 %v2415
        %v2433 = vpop.xlane.xlu0 %2432
        %2434 = vadd.xlane.f32.xlu0 %v2416
        %v2435 = vpop.xlane.xlu0 %2434
        %2436 = vadd.xlane.f32.xlu0 %v2417
        %v2437 = vpop.xlane.xlu0 %2436
        %2438 = vadd.xlane.f32.xlu0 %v2418
        %v2439 = vpop.xlane.xlu0 %2438
        %2440 = vadd.xlane.f32.xlu0 %v2419
        %v2441 = vpop.xlane.xlu0 %2440
        %2442 = vadd.xlane.f32.xlu0 %v2420
        %v2443 = vpop.xlane.xlu0 %2442
        %2444 = vadd.xlane.f32.xlu0 %v2421
        %v2445 = vpop.xlane.xlu0 %2444
        %2446 = vadd.xlane.f32.xlu0 %v2422
        %v2447 = vpop.xlane.xlu0 %2446
        %2448 = vadd.xlane.f32.xlu0 %v2423
        %v2449 = vpop.xlane.xlu0 %2448
        %2450 = vadd.xlane.f32.xlu0 %v2424
        %v2451 = vpop.xlane.xlu0 %2450
        %2452 = vadd.xlane.f32.xlu0 %v2425
        %v2453 = vpop.xlane.xlu0 %2452
        %2454 = vadd.xlane.f32.xlu0 %v2426
        %v2455 = vpop.xlane.xlu0 %2454
        %2456 = vadd.xlane.f32.xlu0 %v2427
        %v2457 = vpop.xlane.xlu0 %2456
        %2458 = vadd.xlane.f32.xlu0 %v2428
        %v2459 = vpop.xlane.xlu0 %2458
        %2460 = vadd.xlane.f32.xlu0 %v2429
        %v2461 = vpop.xlane.xlu0 %2460
        %v2462 = vld [vmem:[#allocation5] sm:$0x1]
        %v2464 = vlaneseq
        %v2465 = vshrl.u32 %v2464, 7
        %v2466 = vsub.s32 0, %v2465
        %v2467 = vrot.slane %v2462, %v2466
        %2468 = vset.pattern.permute.xlu0 0
        %2469 = vperm.xlu0 %2468, %v2467
        %v2470 = vpop.permute.xlu0 %2469
        %v2472 = vadd.f32 %v2431, %v2470
        %v2473 = vadd.f32 %v2433, %v2470
        %v2474 = vadd.f32 %v2435, %v2470
        %v2475 = vadd.f32 %v2437, %v2470
        %v2476 = vadd.f32 %v2439, %v2470
        %v2477 = vadd.f32 %v2441, %v2470
        %v2478 = vadd.f32 %v2443, %v2470
        %v2479 = vadd.f32 %v2445, %v2470
        %v2480 = vadd.f32 %v2447, %v2470
        %v2481 = vadd.f32 %v2449, %v2470
        %v2482 = vadd.f32 %v2451, %v2470
        %v2483 = vadd.f32 %v2453, %v2470
        %v2484 = vadd.f32 %v2455, %v2470
        %v2485 = vadd.f32 %v2457, %v2470
        %v2486 = vadd.f32 %v2459, %v2470
        %v2487 = vadd.f32 %v2461, %v2470
        %v2488 = vxor.u32 %v2472, 2147483648
        %v2489 = vxor.u32 %v2473, 2147483648
        %v2490 = vxor.u32 %v2474, 2147483648
        %v2491 = vxor.u32 %v2475, 2147483648
        %v2492 = vxor.u32 %v2476, 2147483648
        %v2493 = vxor.u32 %v2477, 2147483648
        %v2494 = vxor.u32 %v2478, 2147483648
        %v2495 = vxor.u32 %v2479, 2147483648
        %v2496 = vxor.u32 %v2480, 2147483648
        %v2497 = vxor.u32 %v2481, 2147483648
        %v2498 = vxor.u32 %v2482, 2147483648
        %v2499 = vxor.u32 %v2483, 2147483648
        %v2500 = vxor.u32 %v2484, 2147483648
        %v2501 = vxor.u32 %v2485, 2147483648
        %v2502 = vxor.u32 %v2486, 2147483648
        %v2503 = vxor.u32 %v2487, 2147483648
        %v2504 = vmul.f32 %v2488, 1.442695
        %v2505 = vpow.pop %v2504
        %v2506 = vmul.f32 %v2489, 1.442695
        %v2507 = vpow.pop %v2506
        %v2508 = vmul.f32 %v2490, 1.442695
        %v2509 = vpow.pop %v2508
        %v2510 = vmul.f32 %v2491, 1.442695
        %v2511 = vpow.pop %v2510
        %v2512 = vmul.f32 %v2492, 1.442695
        %v2513 = vpow.pop %v2512
        %v2514 = vmul.f32 %v2493, 1.442695
        %v2515 = vpow.pop %v2514
        %v2516 = vmul.f32 %v2494, 1.442695
        %v2517 = vpow.pop %v2516
        %v2518 = vmul.f32 %v2495, 1.442695
        %v2519 = vpow.pop %v2518
        %v2520 = vmul.f32 %v2496, 1.442695
        %v2521 = vpow.pop %v2520
        %v2522 = vmul.f32 %v2497, 1.442695
        %v2523 = vpow.pop %v2522
        %v2524 = vmul.f32 %v2498, 1.442695
        %v2525 = vpow.pop %v2524
        %v2526 = vmul.f32 %v2499, 1.442695
        %v2527 = vpow.pop %v2526
        %v2528 = vmul.f32 %v2500, 1.442695
        %v2529 = vpow.pop %v2528
        %v2530 = vmul.f32 %v2501, 1.442695
        %v2531 = vpow.pop %v2530
        %v2532 = vmul.f32 %v2502, 1.442695
        %v2533 = vpow.pop %v2532
        %v2534 = vmul.f32 %v2503, 1.442695
        %v2535 = vpow.pop %v2534
        %v2536 = vadd.f32 %v2505, 1.0
        %v2537 = vadd.f32 %v2507, 1.0
        %v2538 = vadd.f32 %v2509, 1.0
        %v2539 = vadd.f32 %v2511, 1.0
        %v2540 = vadd.f32 %v2513, 1.0
        %v2541 = vadd.f32 %v2515, 1.0
        %v2542 = vadd.f32 %v2517, 1.0
        %v2543 = vadd.f32 %v2519, 1.0
        %v2544 = vadd.f32 %v2521, 1.0
        %v2545 = vadd.f32 %v2523, 1.0
        %v2546 = vadd.f32 %v2525, 1.0
        %v2547 = vadd.f32 %v2527, 1.0
        %v2548 = vadd.f32 %v2529, 1.0
        %v2549 = vadd.f32 %v2531, 1.0
        %v2550 = vadd.f32 %v2533, 1.0
        %v2551 = vadd.f32 %v2535, 1.0
        %v2552 = vrcp.pop %v2536
        %v2553 = vmul.f32 1.0, %v2552
        %v2554 = vrcp.pop %v2537
        %v2555 = vmul.f32 1.0, %v2554
        %v2556 = vrcp.pop %v2538
        %v2557 = vmul.f32 1.0, %v2556
        %v2558 = vrcp.pop %v2539
        %v2559 = vmul.f32 1.0, %v2558
        %v2560 = vrcp.pop %v2540
        %v2561 = vmul.f32 1.0, %v2560
        %v2562 = vrcp.pop %v2541
        %v2563 = vmul.f32 1.0, %v2562
        %v2564 = vrcp.pop %v2542
        %v2565 = vmul.f32 1.0, %v2564
        %v2566 = vrcp.pop %v2543
        %v2567 = vmul.f32 1.0, %v2566
        %v2568 = vrcp.pop %v2544
        %v2569 = vmul.f32 1.0, %v2568
        %v2570 = vrcp.pop %v2545
        %v2571 = vmul.f32 1.0, %v2570
        %v2572 = vrcp.pop %v2546
        %v2573 = vmul.f32 1.0, %v2572
        %v2574 = vrcp.pop %v2547
        %v2575 = vmul.f32 1.0, %v2574
        %v2576 = vrcp.pop %v2548
        %v2577 = vmul.f32 1.0, %v2576
        %v2578 = vrcp.pop %v2549
        %v2579 = vmul.f32 1.0, %v2578
        %v2580 = vrcp.pop %v2550
        %v2581 = vmul.f32 1.0, %v2580
        %v2582 = vrcp.pop %v2551
        %v2583 = vmul.f32 1.0, %v2582
        %v2600 = vlaneseq
        %v2601 = vshrl.u32 %v2600, 7
        %v2602 = vsub.s32 %v511, %v2601
        %v2603 = vrot.slane %v2553, %v2602
        %v2604 = vadd.s32 %v511, 4294967288
        %v2605 = vlaneseq
        %v2606 = vshrl.u32 %v2605, 7
        %v2607 = vsub.s32 %v2604, %v2606
        %v2608 = vrot.slane %v2555, %v2607
        %vm2609 = vcmask 130112
        %v2610 = vsel %vm2609, %v2608, %v2603
        %v2611 = vlaneseq
        %v2612 = vshrl.u32 %v2611, 7
        %v2613 = vsub.s32 %v511, %v2612
        %v2614 = vrot.slane %v2557, %v2613
        %v2615 = vlaneseq
        %v2616 = vshrl.u32 %v2615, 7
        %v2617 = vsub.s32 %v2604, %v2616
        %v2618 = vrot.slane %v2559, %v2617
        %v2619 = vsel %vm2609, %v2618, %v2614
        %v2620 = vlaneseq
        %v2621 = vshrl.u32 %v2620, 7
        %v2622 = vsub.s32 %v511, %v2621
        %v2623 = vrot.slane %v2561, %v2622
        %v2624 = vlaneseq
        %v2625 = vshrl.u32 %v2624, 7
        %v2626 = vsub.s32 %v2604, %v2625
        %v2627 = vrot.slane %v2563, %v2626
        %v2628 = vsel %vm2609, %v2627, %v2623
        %v2629 = vlaneseq
        %v2630 = vshrl.u32 %v2629, 7
        %v2631 = vsub.s32 %v511, %v2630
        %v2632 = vrot.slane %v2565, %v2631
        %v2633 = vlaneseq
        %v2634 = vshrl.u32 %v2633, 7
        %v2635 = vsub.s32 %v2604, %v2634
        %v2636 = vrot.slane %v2567, %v2635
        %v2637 = vsel %vm2609, %v2636, %v2632
        %v2638 = vlaneseq
        %v2639 = vshrl.u32 %v2638, 7
        %v2640 = vsub.s32 %v511, %v2639
        %v2641 = vrot.slane %v2569, %v2640
        %v2642 = vlaneseq
        %v2643 = vshrl.u32 %v2642, 7
        %v2644 = vsub.s32 %v2604, %v2643
        %v2645 = vrot.slane %v2571, %v2644
        %v2646 = vsel %vm2609, %v2645, %v2641
        %v2647 = vlaneseq
        %v2648 = vshrl.u32 %v2647, 7
        %v2649 = vsub.s32 %v511, %v2648
        %v2650 = vrot.slane %v2573, %v2649
        %v2651 = vlaneseq
        %v2652 = vshrl.u32 %v2651, 7
        %v2653 = vsub.s32 %v2604, %v2652
        %v2654 = vrot.slane %v2575, %v2653
        %v2655 = vsel %vm2609, %v2654, %v2650
        %v2656 = vlaneseq
        %v2657 = vshrl.u32 %v2656, 7
        %v2658 = vsub.s32 %v511, %v2657
        %v2659 = vrot.slane %v2577, %v2658
        %v2660 = vlaneseq
        %v2661 = vshrl.u32 %v2660, 7
        %v2662 = vsub.s32 %v2604, %v2661
        %v2663 = vrot.slane %v2579, %v2662
        %v2664 = vsel %vm2609, %v2663, %v2659
        %v2665 = vlaneseq
        %v2666 = vshrl.u32 %v2665, 7
        %v2667 = vsub.s32 %v511, %v2666
        %v2668 = vrot.slane %v2581, %v2667
        %v2669 = vlaneseq
        %v2670 = vshrl.u32 %v2669, 7
        %v2671 = vsub.s32 %v2604, %v2670
        %v2672 = vrot.slane %v2583, %v2671
        %v2673 = vsel %vm2609, %v2672, %v2668
        %vm2674 = vcmask 1041409
        %v2675 = vsel %vm2674, %v2619, %v2610
        %vm2676 = vcmask 1042434
        %v2677 = vsel %vm2676, %v2628, %v2675
        %vm2678 = vcmask 1043459
        %v2679 = vsel %vm2678, %v2637, %v2677
        %vm2680 = vcmask 1044484
        %v2681 = vsel %vm2680, %v2646, %v2679
        %vm2682 = vcmask 1045509
        %v2683 = vsel %vm2682, %v2655, %v2681
        %vm2684 = vcmask 1046534
        %v2685 = vsel %vm2684, %v2664, %v2683
        %vm2686 = vcmask 1047559
        %v2687 = vsel %vm2686, %v2673, %v2685
        %2689 = vxpose.xlu0.b32.start [1/16] %v2687, 128
        %2690 = vxpose.xlu0.b32.cont [2/16] 0.0, 128
        %2691 = vxpose.xlu0.b32.cont [3/16] 0.0, 128
        %2692 = vxpose.xlu0.b32.cont [4/16] 0.0, 128
        %2693 = vxpose.xlu0.b32.cont [5/16] 0.0, 128
        %2694 = vxpose.xlu0.b32.cont [6/16] 0.0, 128
        %2695 = vxpose.xlu0.b32.cont [7/16] 0.0, 128
        %2696 = vxpose.xlu0.b32.cont [8/16] 0.0, 128
        %2697 = vxpose.xlu0.b32.cont [9/16] 0.0, 128
        %2698 = vxpose.xlu0.b32.cont [10/16] 0.0, 128
        %2699 = vxpose.xlu0.b32.cont [11/16] 0.0, 128
        %2700 = vxpose.xlu0.b32.cont [12/16] 0.0, 128
        %2701 = vxpose.xlu0.b32.cont [13/16] 0.0, 128
        %2702 = vxpose.xlu0.b32.cont [14/16] 0.0, 128
        %2703 = vxpose.xlu0.b32.cont [15/16] 0.0, 128
        %2704 = vxpose.xlu0.b32.end [16/16] 0.0, 128
        %v2705 = vpop.trf.xlu0
        %v2706 = vpop.trf.xlu0
        %v2707 = vpop.trf.xlu0
        %v2708 = vpop.trf.xlu0
        %v2709 = vpop.trf.xlu0
        %v2710 = vpop.trf.xlu0
        %v2711 = vpop.trf.xlu0
        %v2712 = vpop.trf.xlu0
        %v2713 = vpop.trf.xlu0
        %v2714 = vpop.trf.xlu0
        %v2715 = vpop.trf.xlu0
        %v2716 = vpop.trf.xlu0
        %v2717 = vpop.trf.xlu0
        %v2718 = vpop.trf.xlu0
        %v2719 = vpop.trf.xlu0
        %v2720 = vpop.trf.xlu0
        %vm2721 = vcmask 64512
        %2722 = vst.msk [vmem:[%s507] sm:$0xff] %vm2721, %v2705
        %2723 = vst.msk [vmem:[%s507 + $0x8] sm:$0xff] %vm2721, %v2706
        %s2724 = smul.u32 2, %s30
        %p2725 = scmp.lt.s32.totalorder %s2724, 3
        %s2726 = scalar_select %p2725, %s2724, 3
        %s2727 = smul.addr %s2726, 8
        %s2728 = scalar_lea.vmem %s11, %s2727
        // Predicated region
        $region89: #{tpu_custom_call.1} parent=63 // pred_check
          %p2729 = pneg %p284
        $region90: #{tpu_custom_call.1} parent=63 // pred_check_branch
          %2731 = sbr.rel (%p2729) target = $region92
        $region91: #{tpu_custom_call.1} parent=63 // pred_region
          %s2732 = smul.u32 2, %s30
        $region92: #{tpu_custom_call.1} parent=63 // pred_fallthru
          _
      $region64: #{tpu_custom_call.1} parent=5 // pred_fallthru
        _
      %p2733 = scmp.le.s32.totalorder 2, %s25
      // Predicated region
      $region93: #{tpu_custom_call.1} parent=5 // pred_check
        %p2734 = pneg %p2733
      $region94: #{tpu_custom_call.1} parent=5 // pred_check_branch
        %2736 = sbr.rel (%p2734) target = $region96
      $region95: #{tpu_custom_call.1} parent=5 // pred_region
        %s2737 = ssub.s32 %s25, 2
        // Predicated region
        $region97: #{tpu_custom_call.1} parent=95 // pred_check
          %p2738 = pneg %p290
        $region98: #{tpu_custom_call.1} parent=95 // pred_check_branch
          %2740 = sbr.rel (%p2738) target = $region100
        $region99: #{tpu_custom_call.1} parent=95 // pred_region
          %s2741 = smul.u32 2, %s31
          %p2742 = scmp.lt.s32.totalorder %s2741, 3
          %s2743 = scalar_select %p2742, %s2741, 3
          %s2744 = smul.addr %s2743, 8
          %s2745 = scalar_lea.vmem %s11, %s2744
        $region100: #{tpu_custom_call.1} parent=95 // pred_fallthru
          _
      $region96: #{tpu_custom_call.1} parent=5 // pred_fallthru
        _
    $region6: #{tpu_custom_call.1} parent=1 // loop_footer
      %s29 = sadd.s32 1, %s25
    $region7: #{tpu_custom_call.1} parent=1 // loop_footer_branch
      %24 = sbr.rel target = $region3
    $region8: #{tpu_custom_call.1} parent=1 // loop_exit
      _
    %2746 = vsyncpa [#allocation7], 1
    %s2747 = scalar_lea.sflag [#allocation7], 1
    %2748 = vsyncpa %s2747, 1
    %2749 = vsyncpa [#allocation9], 1
    %2750 = vsyncpa [#allocation12], 1
    %2751 = vsyncpa [#allocation15], 1

</llo_original>
